<compile_context>
chip_gen: v6e
topology: v6e:2x2x1
jax: 0.10.0
libtpu: 0.0.40
codegen_flags: <defaults>
</compile_context>

<pallas_src>
import numpy as np
import jax
import jax.numpy as jnp
from jax import lax
from jax.experimental import pallas as pl
from jax.experimental.pallas import tpu as pltpu

# ---- model_params ----
EMBEDDING_DIM = 32
HEAD_NUM = 4
QKV_DIM = 8
MS_HIDDEN_DIM = 16
FF_HIDDEN_DIM = 64
HD = HEAD_NUM * QKV_DIM
SQRT_QKV = float(np.sqrt(QKV_DIM))
LN_EPS = 1e-5

# Flat offsets into the packed SMEM scalar table (mixed-score MLP params + Wr/Wc).
_OFF_M1W = 0
_OFF_M1B = _OFF_M1W + 2 * HEAD_NUM * 2 * MS_HIDDEN_DIM
_OFF_M2W = _OFF_M1B + 2 * HEAD_NUM * MS_HIDDEN_DIM
_OFF_M2B = _OFF_M2W + 2 * HEAD_NUM * MS_HIDDEN_DIM
_OFF_WRC = _OFF_M2B + 2 * HEAD_NUM
_SCALAR_TOTAL = _OFF_WRC + 2

# dot_general dimension numbers (2-D operands)
_DN_NT = (((1,), (1,)), ((), ()))   # contract last dims of both  (rhs "transposed")
_DN_TN = (((0,), (0,)), ((), ()))   # contract first dims of both (lhs "transposed")


def _layer_norm(x, g, b):
    mu = jnp.mean(x, axis=-1, keepdims=True)
    xc = x - mu
    var = jnp.mean(xc * xc, axis=-1, keepdims=True)
    return xc * lax.rsqrt(var + LN_EPS) * g[None, :] + b[None, :]


def pre_encoder_kernel(
    row_ref, col_ref, cost_ref,                   # (TB,I,D) (TB,J,D) (TB,I,J)
    row_w_ref, col_w_ref,                         # (D, 2*H*D) fused [score | value*combine]
    comb_b_ref,                                   # (2, D)
    ln_g_ref, ln_b_ref,                           # (4, D): [rLN1, rLN2, cLN1, cLN2]
    ff_w1_ref, ff_b1_ref, ff_w2_ref, ff_b2_ref,   # (2,D,FF) (2,FF) (2,FF,D) (2,D)
    scal_ref,                                     # SMEM f32[_SCALAR_TOTAL]
    rout_ref, cout_ref, edge_ref,                 # (TB,I,D) (TB,J,D) (TB,I,J)
):
    TB, I, D = row_ref.shape
    J = col_ref.shape[1]
    HXD = HEAD_NUM * D
    f32 = jnp.float32

    def mixed_score(dot_s, cost_s, blk, h):
        # MS hidden units statically unrolled -> working set stays (Ns, Nt) vregs.
        base1 = _OFF_M1W + (blk * HEAD_NUM + h) * 2 * MS_HIDDEN_DIM
        base1b = _OFF_M1B + (blk * HEAD_NUM + h) * MS_HIDDEN_DIM
        base2 = _OFF_M2W + (blk * HEAD_NUM + h) * MS_HIDDEN_DIM
        acc = jnp.zeros_like(dot_s)
        for s in range(MS_HIDDEN_DIM):
            w_dot = scal_ref[base1 + s]
            w_cost = scal_ref[base1 + MS_HIDDEN_DIM + s]
            b1 = scal_ref[base1b + s]
            w2 = scal_ref[base2 + s]
            hidden = jnp.maximum(dot_s * w_dot + cost_s * w_cost + b1, 0.0)
            acc = acc + hidden * w2
        return acc + scal_ref[_OFF_M2B + blk * HEAD_NUM + h]

    def feed_forward(blk, x):
        hid = jnp.maximum(
            jnp.dot(x, ff_w1_ref[blk], preferred_element_type=f32)
            + ff_b1_ref[blk][None, :], 0.0)
        return (jnp.dot(hid, ff_w2_ref[blk], preferred_element_type=f32)
                + ff_b2_ref[blk][None, :])

    wr_s = scal_ref[_OFF_WRC] * (1.0 / HEAD_NUM)
    wc_s = scal_ref[_OFF_WRC + 1] * (1.0 / HEAD_NUM)

    for tb in range(TB):                           # static unroll over the batch tile
        row = row_ref[tb]      # (I, D)
        col = col_ref[tb]      # (J, D)
        cost = cost_ref[tb]    # (I, J)

        row_norm = _layer_norm(row, ln_g_ref[0], ln_b_ref[0])
        col_norm = _layer_norm(col, ln_g_ref[2], ln_b_ref[2])

        # One fused projection per normalized input (K=D, N=2*H*D=256).
        row_proj = jnp.dot(row_norm, row_w_ref[...], preferred_element_type=f32)  # (I,256)
        col_proj = jnp.dot(col_norm, col_w_ref[...], preferred_element_type=f32)  # (J,256)

        mh0 = jnp.zeros((I, D), f32)     # row-block multi-head output (pre-bias)
        mh1 = jnp.zeros((J, D), f32)     # col-block multi-head output (pre-bias)
        edge0 = jnp.zeros((I, J), f32)   # sum over heads of row-block mixed scores
        edge1 = jnp.zeros((I, J), f32)   # sum over heads of col-block mixed scores (I-major)

        for h in range(HEAD_NUM):        # static unroll over heads
            qa0 = row_proj[:, h * D:(h + 1) * D]                # (I, D)
            vc0 = col_proj[:, HXD + h * D:HXD + (h + 1) * D]    # (J, D)
            qa1 = col_proj[:, h * D:(h + 1) * D]                # (J, D)
            vc1 = row_proj[:, HXD + h * D:HXD + (h + 1) * D]    # (I, D)

            # -- row-encoding block: queries=rows, keys=cols; softmax over J (lanes).
            s0 = lax.dot_general(qa0, col_norm, _DN_NT, preferred_element_type=f32)
            ms0 = mixed_score(s0, cost, 0, h)
            edge0 = edge0 + ms0
            ex0 = jnp.exp(ms0 - jnp.max(ms0, axis=-1, keepdims=True))
            attn0 = ex0 / jnp.sum(ex0, axis=-1, keepdims=True)
            mh0 = mh0 + jnp.dot(attn0, vc0, preferred_element_type=f32)

            # -- col-encoding block, kept in (I, J) orientation (no cost.T / edge.T):
            #    s1[i, j] = score(query=col j, key=row i); softmax over I (axis 0).
            s1 = lax.dot_general(row_norm, qa1, _DN_NT, preferred_element_type=f32)
            ms1 = mixed_score(s1, cost, 1, h)
            edge1 = edge1 + ms1
            ex1 = jnp.exp(ms1 - jnp.max(ms1, axis=0, keepdims=True))
            attn1 = ex1 / jnp.sum(ex1, axis=0, keepdims=True)
            mh1 = mh1 + lax.dot_general(attn1, vc1, _DN_TN, preferred_element_type=f32)

        mh0 = mh0 + comb_b_ref[0][None, :]
        mh1 = mh1 + comb_b_ref[1][None, :]

        rout1 = row + mh0
        rout4 = feed_forward(0, _layer_norm(rout1, ln_g_ref[1], ln_b_ref[1])) + rout1
        cout1 = col + mh1
        cout4 = feed_forward(1, _layer_norm(cout1, ln_g_ref[3], ln_b_ref[3])) + cout1

        # TODO(synk): MixedScore_MultiHeadAttention source not given; edge_out is
        # assumed to be the head-mean of the pre-softmax mixed scores (matches reference).
        rout_ref[tb] = rout4
        cout_ref[tb] = cout4
        edge_ref[tb] = edge0 * wr_s + edge1 * wc_s


def _pick_batch_tile(B, desired=8):
    divisors = [t for t in range(1, B + 1) if B % t == 0 and t <= desired]
    # keep >= 2 grid programs when possible so both v7x TensorCores get work
    multi = [t for t in divisors if B // t >= 2]
    return max(multi) if multi else max(divisors)


def _pack_weights(p):
    f32 = jnp.float32
    qkv_w = p['qkv_w'].astype(f32)              # (2, 3, HD, D)  (PyTorch Linear layout)
    wq_t = jnp.swapaxes(qkv_w[:, 0], 1, 2)      # (2, D, HD)
    wk_t = jnp.swapaxes(qkv_w[:, 1], 1, 2)
    wv_t = jnp.swapaxes(qkv_w[:, 2], 1, 2)
    cw_t = jnp.swapaxes(p['comb_w'].astype(f32), 1, 2)   # (2, HD, D)
    scale = 1.0 / SQRT_QKV

    fused = []
    for blk in range(2):
        score_cols, value_cols = [], []
        for h in range(HEAD_NUM):
            sl = slice(h * QKV_DIM, (h + 1) * QKV_DIM)
            score_cols.append((wq_t[blk][:, sl] @ wk_t[blk][:, sl].T) * scale)  # (D, D)
            value_cols.append(wv_t[blk][:, sl] @ cw_t[blk][sl, :])              # (D, D)
        fused.append((jnp.concatenate(score_cols, axis=1),
                      jnp.concatenate(value_cols, axis=1)))
    (a0, m0), (a1, m1) = fused
    row_w = jnp.concatenate([a0, m1], axis=1)   # row_norm feeds blk0 queries, blk1 keys/values
    col_w = jnp.concatenate([a1, m0], axis=1)   # col_norm feeds blk1 queries, blk0 keys/values

    ff_w1_t = jnp.swapaxes(p['ff_w1'].astype(f32), 1, 2)   # (2, D, FF)
    ff_w2_t = jnp.swapaxes(p['ff_w2'].astype(f32), 1, 2)   # (2, FF, D)

    scalars = jnp.concatenate([
        p['mix1_w'].reshape(-1), p['mix1_b'].reshape(-1),
        p['mix2_w'].reshape(-1), p['mix2_b'].reshape(-1),
        p['wrc'].reshape(-1),
    ]).astype(f32)
    assert scalars.shape[0] == _SCALAR_TOTAL

    vmem_weights = [row_w, col_w, p['comb_b'].astype(f32),
                    p['ln_g'].astype(f32), p['ln_b'].astype(f32),
                    ff_w1_t, p['ff_b1'].astype(f32), ff_w2_t, p['ff_b2'].astype(f32)]
    return vmem_weights, scalars


def pre_encoder_layer(row_emb, col_emb, cost_mat, params, *, batch_tile=8):
    B, I, D = row_emb.shape
    J = col_emb.shape[1]
    f32 = jnp.float32

    TB = _pick_batch_tile(B, batch_tile)
    vmem_weights, scalars = _pack_weights(params)

    def rep_spec(a):   # full-array block, kept resident across the batch grid
        nd = a.ndim
        return pl.BlockSpec(a.shape, lambda b, _nd=nd: (0,) * _nd)

    in_specs = [
        pl.BlockSpec((TB, I, D), lambda b: (b, 0, 0)),
        pl.BlockSpec((TB, J, D), lambda b: (b, 0, 0)),
        pl.BlockSpec((TB, I, J), lambda b: (b, 0, 0)),
    ] + [rep_spec(w) for w in vmem_weights] + [
        pl.BlockSpec(memory_space=pltpu.MemorySpace.SMEM),   # packed scalar table
    ]
    out_specs = (
        pl.BlockSpec((TB, I, D), lambda b: (b, 0, 0)),
        pl.BlockSpec((TB, J, D), lambda b: (b, 0, 0)),
        pl.BlockSpec((TB, I, J), lambda b: (b, 0, 0)),
    )
    out_shape = (
        jax.ShapeDtypeStruct((B, I, D), f32),
        jax.ShapeDtypeStruct((B, J, D), f32),
        jax.ShapeDtypeStruct((B, I, J), f32),
    )

    # Scoped-VMEM budget: double-buffered I/O blocks + resident weights + headroom,
    # capped at v7x's 64 MiB physical VMEM.
    io_bytes = 4 * TB * (I * D + J * D + I * J)
    w_bytes = sum(int(np.prod(w.shape)) * 4 for w in vmem_weights)
    vmem_limit = int(min(max(4 * io_bytes + 2 * w_bytes + (8 << 20), 32 << 20), 64 << 20))

    return pl.pallas_call(
        pre_encoder_kernel,
        grid=(B // TB,),
        in_specs=in_specs,
        out_specs=out_specs,
        out_shape=out_shape,
        compiler_params=pltpu.CompilerParams(
            dimension_semantics=("parallel",),
            vmem_limit_bytes=vmem_limit,
        ),
    )(row_emb, col_emb, cost_mat, *vmem_weights, scalars)


def init_params(key):
    ks = list(jax.random.split(key, 16))
    it = iter(ks)

    def u(shape, scale):
        return jax.random.uniform(next(it), shape, jnp.float32, -scale, scale)

    lin_d = 1.0 / np.sqrt(EMBEDDING_DIM)
    lin_hd = 1.0 / np.sqrt(HD)
    lin_ff = 1.0 / np.sqrt(FF_HIDDEN_DIM)
    mix1_s = float(np.sqrt(0.5))
    mix2_s = float(np.sqrt(1.0 / 16.0))

    # Leading dim 2 packs the row-encoding block (0) and col-encoding block (1).
    return dict(
        qkv_w=u((2, 3, HD, EMBEDDING_DIM), lin_d),            # Wq/Wk/Wv (no bias)
        comb_w=u((2, EMBEDDING_DIM, HD), lin_hd),
        comb_b=u((2, EMBEDDING_DIM), lin_hd),
        mix1_w=u((2, HEAD_NUM, 2, MS_HIDDEN_DIM), mix1_s),
        mix1_b=u((2, HEAD_NUM, MS_HIDDEN_DIM), mix1_s),
        mix2_w=u((2, HEAD_NUM, MS_HIDDEN_DIM), mix2_s),       # (H, MS, 1) squeezed
        mix2_b=u((2, HEAD_NUM), mix2_s),                      # (H, 1) squeezed
        ln_g=jnp.ones((4, EMBEDDING_DIM), jnp.float32),       # [rLN1, rLN2, cLN1, cLN2]
        ln_b=jnp.zeros((4, EMBEDDING_DIM), jnp.float32),
        ff_w1=u((2, FF_HIDDEN_DIM, EMBEDDING_DIM), lin_d),
        ff_b1=u((2, FF_HIDDEN_DIM), lin_d),
        ff_w2=u((2, EMBEDDING_DIM, FF_HIDDEN_DIM), lin_ff),
        ff_b2=u((2, EMBEDDING_DIM), lin_ff),
        wrc=u((1, 2), 0.5),                                   # [Wr, Wc]
    )


def reference_forward(row_emb, col_emb, cost_mat, p):
    """Plain-JAX mirror of the PyTorch forward (same packed params)."""
    def layer_norm(x, g, b):
        mu = x.mean(-1, keepdims=True)
        var = ((x - mu) ** 2).mean(-1, keepdims=True)
        return (x - mu) / jnp.sqrt(var + LN_EPS) * g + b

    def encode(blk, src, tgt, cost):
        wq, wk, wv = p['qkv_w'][blk, 0], p['qkv_w'][blk, 1], p['qkv_w'][blk, 2]
        q, k, v = src @ wq.T, tgt @ wk.T, tgt @ wv.T
        B_ = q.shape[0]

        def rh(x):  # reshape_by_heads
            return x.reshape(B_, x.shape[1], HEAD_NUM, QKV_DIM).transpose(0, 2, 1, 3)

        qh, kh, vh = rh(q), rh(k), rh(v)
        dot = jnp.einsum('bhid,bhjd->bhij', qh, kh) / SQRT_QKV
        cm = jnp.broadcast_to(cost[:, None], dot.shape)
        two = jnp.stack([dot, cm], axis=-1)                       # (B,H,Ns,Nt,2)
        ms1 = jnp.einsum('bhijt,hts->bhijs', two, p['mix1_w'][blk]) \
            + p['mix1_b'][blk][None, :, None, None, :]
        ms1 = jnp.maximum(ms1, 0.0)
        ms2 = jnp.einsum('bhijs,hs->bhij', ms1, p['mix2_w'][blk]) \
            + p['mix2_b'][blk][None, :, None, None]
        attn = jax.nn.softmax(ms2, axis=-1)
        out = jnp.einsum('bhij,bhjd->bhid', attn, vh)
        oc = out.transpose(0, 2, 1, 3).reshape(B_, q.shape[1], HD)
        mh = oc @ p['comb_w'][blk].T + p['comb_b'][blk]
        return mh, ms2.mean(axis=1)

    rn = layer_norm(row_emb, p['ln_g'][0], p['ln_b'][0])
    cn = layer_norm(col_emb, p['ln_g'][2], p['ln_b'][2])
    r_mh, r_edge = encode(0, rn, cn, cost_mat)
    c_mh, c_edge = encode(1, cn, rn, cost_mat.transpose(0, 2, 1))

    def ff(blk, x):
        h = jnp.maximum(x @ p['ff_w1'][blk].T + p['ff_b1'][blk], 0.0)
        return h @ p['ff_w2'][blk].T + p['ff_b2'][blk]

    rout1 = row_emb + r_mh
    rout4 = ff(0, layer_norm(rout1, p['ln_g'][1], p['ln_b'][1])) + rout1
    cout1 = col_emb + c_mh
    cout4 = ff(1, layer_norm(cout1, p['ln_g'][3], p['ln_b'][3])) + cout1
    edge = p['wrc'][0, 0] * r_edge + p['wrc'][0, 1] * c_edge.transpose(0, 2, 1)
    return rout4, cout4, edge


if __name__ == "__main__":
    B, I, J = 2, 8, 16
    key = jax.random.PRNGKey(0)
    kp, kr, kc, km = jax.random.split(key, 4)

    params = init_params(kp)
    row_emb = jax.random.normal(kr, (B, I, EMBEDDING_DIM), jnp.float32)
    col_emb = jax.random.normal(kc, (B, J, EMBEDDING_DIM), jnp.float32)
    cost_mat = jax.random.uniform(km, (B, I, J), jnp.float32)

    fwd = jax.jit(lambda r, c, m: pre_encoder_layer(r, c, m, params))
    rout, cout, edge = jax.block_until_ready(fwd(row_emb, col_emb, cost_mat))

    r_ref, c_ref, e_ref = reference_forward(row_emb, col_emb, cost_mat, params)
    assert np.allclose(np.asarray(rout), np.asarray(r_ref), rtol=2e-3, atol=2e-3)
    assert np.allclose(np.asarray(cout), np.asarray(c_ref), rtol=2e-3, atol=2e-3)
    assert np.allclose(np.asarray(edge), np.asarray(e_ref), rtol=2e-3, atol=2e-3)

    print("KERNEL_OK")
</pallas_src>

<mosaic_0001>
module attributes {stable_mosaic.version = 11 : i64} {
  func.func @pre_encoder_kernel(%arg0: i32, %arg1: memref<1x8x32xf32, #tpu.memory_space<vmem>>, %arg2: memref<1x16x32xf32, #tpu.memory_space<vmem>>, %arg3: memref<1x8x16xf32, #tpu.memory_space<vmem>>, %arg4: memref<32x256xf32, #tpu.memory_space<vmem>>, %arg5: memref<32x256xf32, #tpu.memory_space<vmem>>, %arg6: memref<2x32xf32, #tpu.memory_space<vmem>>, %arg7: memref<4x32xf32, #tpu.memory_space<vmem>>, %arg8: memref<4x32xf32, #tpu.memory_space<vmem>>, %arg9: memref<2x32x64xf32, #tpu.memory_space<vmem>>, %arg10: memref<2x64xf32, #tpu.memory_space<vmem>>, %arg11: memref<2x64x32xf32, #tpu.memory_space<vmem>>, %arg12: memref<2x32xf32, #tpu.memory_space<vmem>>, %arg13: memref<522xf32, #tpu.memory_space<smem>>, %arg14: memref<1x8x32xf32, #tpu.memory_space<vmem>>, %arg15: memref<1x16x32xf32, #tpu.memory_space<vmem>>, %arg16: memref<1x8x16xf32, #tpu.memory_space<vmem>>) attributes {dimension_semantics = [#tpu.dimension_semantics<parallel>], iteration_bounds = array<i64: 2>, scalar_prefetch = 0 : i64, scratch_operands = 0 : i64, tpu.core_type = #tpu.core_type<tc>, window_params = [{transform_indices = @transform_0, window_bounds = array<i64: 1, 8, 32>}, {transform_indices = @transform_1, window_bounds = array<i64: 1, 16, 32>}, {transform_indices = @transform_2, window_bounds = array<i64: 1, 8, 16>}, {pipeline_mode = #tpu.pipeline_mode<synchronous>, transform_indices = @transform_3, window_bounds = array<i64: 32, 256>}, {pipeline_mode = #tpu.pipeline_mode<synchronous>, transform_indices = @transform_4, window_bounds = array<i64: 32, 256>}, {pipeline_mode = #tpu.pipeline_mode<synchronous>, transform_indices = @transform_5, window_bounds = array<i64: 2, 32>}, {pipeline_mode = #tpu.pipeline_mode<synchronous>, transform_indices = @transform_6, window_bounds = array<i64: 4, 32>}, {pipeline_mode = #tpu.pipeline_mode<synchronous>, transform_indices = @transform_7, window_bounds = array<i64: 4, 32>}, {pipeline_mode = #tpu.pipeline_mode<synchronous>, transform_indices = @transform_8, window_bounds = array<i64: 2, 32, 64>}, {pipeline_mode = #tpu.pipeline_mode<synchronous>, transform_indices = @transform_9, window_bounds = array<i64: 2, 64>}, {pipeline_mode = #tpu.pipeline_mode<synchronous>, transform_indices = @transform_10, window_bounds = array<i64: 2, 64, 32>}, {pipeline_mode = #tpu.pipeline_mode<synchronous>, transform_indices = @transform_11, window_bounds = array<i64: 2, 32>}, {transform_indices = @transform_12, window_bounds = array<i64: 522>}, {transform_indices = @transform_13, window_bounds = array<i64: 1, 8, 32>}, {transform_indices = @transform_14, window_bounds = array<i64: 1, 16, 32>}, {transform_indices = @transform_15, window_bounds = array<i64: 1, 8, 16>}]} {
    %c520 = arith.constant 520 : index
    %0 = memref.load %arg13[%c520] : memref<522xf32, #tpu.memory_space<smem>>
    %cst = arith.constant 2.500000e-01 : f32
    %1 = arith.mulf %0, %cst : f32
    %c521 = arith.constant 521 : index
    %2 = memref.load %arg13[%c521] : memref<522xf32, #tpu.memory_space<smem>>
    %cst_0 = arith.constant 2.500000e-01 : f32
    %3 = arith.mulf %2, %cst_0 : f32
    %c0 = arith.constant 0 : index
    %c0_1 = arith.constant 0 : index
    %c0_2 = arith.constant 0 : index
    %4 = vector.load %arg1[%c0, %c0_1, %c0_2] : memref<1x8x32xf32, #tpu.memory_space<vmem>>, vector<1x8x32xf32>
    %5 = vector.shape_cast %4 : vector<1x8x32xf32> to vector<8x32xf32>
    %c0_3 = arith.constant 0 : index
    %c0_4 = arith.constant 0 : index
    %c0_5 = arith.constant 0 : index
    %6 = vector.load %arg2[%c0_3, %c0_4, %c0_5] : memref<1x16x32xf32, #tpu.memory_space<vmem>>, vector<1x16x32xf32>
    %7 = vector.shape_cast %6 : vector<1x16x32xf32> to vector<16x32xf32>
    %c0_6 = arith.constant 0 : index
    %c0_7 = arith.constant 0 : index
    %c0_8 = arith.constant 0 : index
    %8 = vector.load %arg3[%c0_6, %c0_7, %c0_8] : memref<1x8x16xf32, #tpu.memory_space<vmem>>, vector<1x8x16xf32>
    %9 = vector.shape_cast %8 : vector<1x8x16xf32> to vector<8x16xf32>
    %c0_9 = arith.constant 0 : index
    %c0_10 = arith.constant 0 : index
    %10 = vector.load %arg7[%c0_9, %c0_10] : memref<4x32xf32, #tpu.memory_space<vmem>>, vector<1x32xf32>
    %11 = vector.shape_cast %10 : vector<1x32xf32> to vector<32xf32>
    %c0_11 = arith.constant 0 : index
    %c0_12 = arith.constant 0 : index
    %12 = vector.load %arg8[%c0_11, %c0_12] : memref<4x32xf32, #tpu.memory_space<vmem>>, vector<1x32xf32>
    %13 = vector.shape_cast %12 : vector<1x32xf32> to vector<32xf32>
    %cst_13 = arith.constant dense<0.000000e+00> : vector<8xf32>
    %14 = vector.multi_reduction <add>, %5, %cst_13 [1] : vector<8x32xf32> to vector<8xf32>
    %15 = vector.shape_cast %14 : vector<8xf32> to vector<8x1xf32>
    %cst_14 = arith.constant 3.200000e+01 : f32
    %16 = vector.broadcast %cst_14 : f32 to vector<8x1xf32>
    %17 = arith.divf %15, %16 : vector<8x1xf32>
    %18 = vector.broadcast %17 : vector<8x1xf32> to vector<8x32xf32>
    %19 = arith.subf %5, %18 : vector<8x32xf32>
    %20 = arith.mulf %19, %19 : vector<8x32xf32>
    %cst_15 = arith.constant dense<0.000000e+00> : vector<8xf32>
    %21 = vector.multi_reduction <add>, %20, %cst_15 [1] : vector<8x32xf32> to vector<8xf32>
    %22 = vector.shape_cast %21 : vector<8xf32> to vector<8x1xf32>
    %cst_16 = arith.constant 3.200000e+01 : f32
    %23 = vector.broadcast %cst_16 : f32 to vector<8x1xf32>
    %24 = arith.divf %22, %23 : vector<8x1xf32>
    %cst_17 = arith.constant 9.99999974E-6 : f32
    %25 = vector.broadcast %cst_17 : f32 to vector<8x1xf32>
    %26 = arith.addf %24, %25 : vector<8x1xf32>
    %27 = math.rsqrt %26 : vector<8x1xf32>
    %28 = vector.broadcast %27 : vector<8x1xf32> to vector<8x32xf32>
    %29 = arith.mulf %19, %28 : vector<8x32xf32>
    %30 = vector.shape_cast %11 : vector<32xf32> to vector<1x32xf32>
    %31 = vector.broadcast %30 : vector<1x32xf32> to vector<8x32xf32>
    %32 = arith.mulf %29, %31 : vector<8x32xf32>
    %33 = vector.shape_cast %13 : vector<32xf32> to vector<1x32xf32>
    %34 = vector.broadcast %33 : vector<1x32xf32> to vector<8x32xf32>
    %35 = arith.addf %32, %34 : vector<8x32xf32>
    %c2 = arith.constant 2 : index
    %c0_18 = arith.constant 0 : index
    %36 = vector.load %arg7[%c2, %c0_18] : memref<4x32xf32, #tpu.memory_space<vmem>>, vector<1x32xf32>
    %37 = vector.shape_cast %36 : vector<1x32xf32> to vector<32xf32>
    %c2_19 = arith.constant 2 : index
    %c0_20 = arith.constant 0 : index
    %38 = vector.load %arg8[%c2_19, %c0_20] : memref<4x32xf32, #tpu.memory_space<vmem>>, vector<1x32xf32>
    %39 = vector.shape_cast %38 : vector<1x32xf32> to vector<32xf32>
    %cst_21 = arith.constant dense<0.000000e+00> : vector<16xf32>
    %40 = vector.multi_reduction <add>, %7, %cst_21 [1] : vector<16x32xf32> to vector<16xf32>
    %41 = vector.shape_cast %40 : vector<16xf32> to vector<16x1xf32>
    %cst_22 = arith.constant 3.200000e+01 : f32
    %42 = vector.broadcast %cst_22 : f32 to vector<16x1xf32>
    %43 = arith.divf %41, %42 : vector<16x1xf32>
    %44 = vector.broadcast %43 : vector<16x1xf32> to vector<16x32xf32>
    %45 = arith.subf %7, %44 : vector<16x32xf32>
    %46 = arith.mulf %45, %45 : vector<16x32xf32>
    %cst_23 = arith.constant dense<0.000000e+00> : vector<16xf32>
    %47 = vector.multi_reduction <add>, %46, %cst_23 [1] : vector<16x32xf32> to vector<16xf32>
    %48 = vector.shape_cast %47 : vector<16xf32> to vector<16x1xf32>
    %cst_24 = arith.constant 3.200000e+01 : f32
    %49 = vector.broadcast %cst_24 : f32 to vector<16x1xf32>
    %50 = arith.divf %48, %49 : vector<16x1xf32>
    %cst_25 = arith.constant 9.99999974E-6 : f32
    %51 = vector.broadcast %cst_25 : f32 to vector<16x1xf32>
    %52 = arith.addf %50, %51 : vector<16x1xf32>
    %53 = math.rsqrt %52 : vector<16x1xf32>
    %54 = vector.broadcast %53 : vector<16x1xf32> to vector<16x32xf32>
    %55 = arith.mulf %45, %54 : vector<16x32xf32>
    %56 = vector.shape_cast %37 : vector<32xf32> to vector<1x32xf32>
    %57 = vector.broadcast %56 : vector<1x32xf32> to vector<16x32xf32>
    %58 = arith.mulf %55, %57 : vector<16x32xf32>
    %59 = vector.shape_cast %39 : vector<32xf32> to vector<1x32xf32>
    %60 = vector.broadcast %59 : vector<1x32xf32> to vector<16x32xf32>
    %61 = arith.addf %58, %60 : vector<16x32xf32>
    %c0_26 = arith.constant 0 : index
    %c0_27 = arith.constant 0 : index
    %62 = vector.load %arg4[%c0_26, %c0_27] : memref<32x256xf32, #tpu.memory_space<vmem>>, vector<32x256xf32>
    %cst_28 = arith.constant dense<0.000000e+00> : vector<8x256xf32>
    %63 = tpu.matmul %35, %62, %cst_28 {dimension_numbers = #tpu.dot_dimension_numbers<[1], [0], [0], [1], [0, 0, 1, 1], [], []>} : vector<8x32xf32>, vector<32x256xf32>, vector<8x256xf32> -> vector<8x256xf32>
    %c0_29 = arith.constant 0 : index
    %c0_30 = arith.constant 0 : index
    %64 = vector.load %arg5[%c0_29, %c0_30] : memref<32x256xf32, #tpu.memory_space<vmem>>, vector<32x256xf32>
    %cst_31 = arith.constant dense<0.000000e+00> : vector<16x256xf32>
    %65 = tpu.matmul %61, %64, %cst_31 {dimension_numbers = #tpu.dot_dimension_numbers<[1], [0], [0], [1], [0, 0, 1, 1], [], []>} : vector<16x32xf32>, vector<32x256xf32>, vector<16x256xf32> -> vector<16x256xf32>
    %cst_32 = arith.constant 0.000000e+00 : f32
    %66 = vector.broadcast %cst_32 : f32 to vector<8x32xf32>
    %cst_33 = arith.constant 0.000000e+00 : f32
    %67 = vector.broadcast %cst_33 : f32 to vector<16x32xf32>
    %cst_34 = arith.constant 0.000000e+00 : f32
    %68 = vector.broadcast %cst_34 : f32 to vector<8x16xf32>
    %cst_35 = arith.constant 0.000000e+00 : f32
    %69 = vector.broadcast %cst_35 : f32 to vector<8x16xf32>
    %70 = vector.extract_strided_slice %63 {offsets = [0, 0], sizes = [8, 32], strides = [1, 1]} : vector<8x256xf32> to vector<8x32xf32>
    %71 = vector.extract_strided_slice %65 {offsets = [0, 128], sizes = [16, 32], strides = [1, 1]} : vector<16x256xf32> to vector<16x32xf32>
    %72 = vector.extract_strided_slice %65 {offsets = [0, 0], sizes = [16, 32], strides = [1, 1]} : vector<16x256xf32> to vector<16x32xf32>
    %73 = vector.extract_strided_slice %63 {offsets = [0, 128], sizes = [8, 32], strides = [1, 1]} : vector<8x256xf32> to vector<8x32xf32>
    %cst_36 = arith.constant dense<0.000000e+00> : vector<8x16xf32>
    %74 = tpu.matmul %70, %61, %cst_36 {dimension_numbers = #tpu.dot_dimension_numbers<[1], [1], [0], [0], [0, 0, 1, 0], [], []>} : vector<8x32xf32>, vector<16x32xf32>, vector<8x16xf32> -> vector<8x16xf32>
    %cst_37 = arith.constant 0.000000e+00 : f32
    %75 = vector.broadcast %cst_37 : f32 to vector<8x16xf32>
    %c0_38 = arith.constant 0 : index
    %76 = memref.load %arg13[%c0_38] : memref<522xf32, #tpu.memory_space<smem>>
    %c16 = arith.constant 16 : index
    %77 = memref.load %arg13[%c16] : memref<522xf32, #tpu.memory_space<smem>>
    %c256 = arith.constant 256 : index
    %78 = memref.load %arg13[%c256] : memref<522xf32, #tpu.memory_space<smem>>
    %c384 = arith.constant 384 : index
    %79 = memref.load %arg13[%c384] : memref<522xf32, #tpu.memory_space<smem>>
    %80 = vector.broadcast %76 : f32 to vector<8x16xf32>
    %81 = arith.mulf %74, %80 : vector<8x16xf32>
    %82 = vector.broadcast %77 : f32 to vector<8x16xf32>
    %83 = arith.mulf %9, %82 : vector<8x16xf32>
    %84 = arith.addf %81, %83 : vector<8x16xf32>
    %85 = vector.broadcast %78 : f32 to vector<8x16xf32>
    %86 = arith.addf %84, %85 : vector<8x16xf32>
    %cst_39 = arith.constant 0.000000e+00 : f32
    %87 = vector.broadcast %cst_39 : f32 to vector<8x16xf32>
    %88 = arith.maximumf %86, %87 : vector<8x16xf32>
    %89 = vector.broadcast %79 : f32 to vector<8x16xf32>
    %90 = arith.mulf %88, %89 : vector<8x16xf32>
    %91 = arith.addf %75, %90 : vector<8x16xf32>
    %c1 = arith.constant 1 : index
    %92 = memref.load %arg13[%c1] : memref<522xf32, #tpu.memory_space<smem>>
    %c17 = arith.constant 17 : index
    %93 = memref.load %arg13[%c17] : memref<522xf32, #tpu.memory_space<smem>>
    %c257 = arith.constant 257 : index
    %94 = memref.load %arg13[%c257] : memref<522xf32, #tpu.memory_space<smem>>
    %c385 = arith.constant 385 : index
    %95 = memref.load %arg13[%c385] : memref<522xf32, #tpu.memory_space<smem>>
    %96 = vector.broadcast %92 : f32 to vector<8x16xf32>
    %97 = arith.mulf %74, %96 : vector<8x16xf32>
    %98 = vector.broadcast %93 : f32 to vector<8x16xf32>
    %99 = arith.mulf %9, %98 : vector<8x16xf32>
    %100 = arith.addf %97, %99 : vector<8x16xf32>
    %101 = vector.broadcast %94 : f32 to vector<8x16xf32>
    %102 = arith.addf %100, %101 : vector<8x16xf32>
    %cst_40 = arith.constant 0.000000e+00 : f32
    %103 = vector.broadcast %cst_40 : f32 to vector<8x16xf32>
    %104 = arith.maximumf %102, %103 : vector<8x16xf32>
    %105 = vector.broadcast %95 : f32 to vector<8x16xf32>
    %106 = arith.mulf %104, %105 : vector<8x16xf32>
    %107 = arith.addf %91, %106 : vector<8x16xf32>
    %c2_41 = arith.constant 2 : index
    %108 = memref.load %arg13[%c2_41] : memref<522xf32, #tpu.memory_space<smem>>
    %c18 = arith.constant 18 : index
    %109 = memref.load %arg13[%c18] : memref<522xf32, #tpu.memory_space<smem>>
    %c258 = arith.constant 258 : index
    %110 = memref.load %arg13[%c258] : memref<522xf32, #tpu.memory_space<smem>>
    %c386 = arith.constant 386 : index
    %111 = memref.load %arg13[%c386] : memref<522xf32, #tpu.memory_space<smem>>
    %112 = vector.broadcast %108 : f32 to vector<8x16xf32>
    %113 = arith.mulf %74, %112 : vector<8x16xf32>
    %114 = vector.broadcast %109 : f32 to vector<8x16xf32>
    %115 = arith.mulf %9, %114 : vector<8x16xf32>
    %116 = arith.addf %113, %115 : vector<8x16xf32>
    %117 = vector.broadcast %110 : f32 to vector<8x16xf32>
    %118 = arith.addf %116, %117 : vector<8x16xf32>
    %cst_42 = arith.constant 0.000000e+00 : f32
    %119 = vector.broadcast %cst_42 : f32 to vector<8x16xf32>
    %120 = arith.maximumf %118, %119 : vector<8x16xf32>
    %121 = vector.broadcast %111 : f32 to vector<8x16xf32>
    %122 = arith.mulf %120, %121 : vector<8x16xf32>
    %123 = arith.addf %107, %122 : vector<8x16xf32>
    %c3 = arith.constant 3 : index
    %124 = memref.load %arg13[%c3] : memref<522xf32, #tpu.memory_space<smem>>
    %c19 = arith.constant 19 : index
    %125 = memref.load %arg13[%c19] : memref<522xf32, #tpu.memory_space<smem>>
    %c259 = arith.constant 259 : index
    %126 = memref.load %arg13[%c259] : memref<522xf32, #tpu.memory_space<smem>>
    %c387 = arith.constant 387 : index
    %127 = memref.load %arg13[%c387] : memref<522xf32, #tpu.memory_space<smem>>
    %128 = vector.broadcast %124 : f32 to vector<8x16xf32>
    %129 = arith.mulf %74, %128 : vector<8x16xf32>
    %130 = vector.broadcast %125 : f32 to vector<8x16xf32>
    %131 = arith.mulf %9, %130 : vector<8x16xf32>
    %132 = arith.addf %129, %131 : vector<8x16xf32>
    %133 = vector.broadcast %126 : f32 to vector<8x16xf32>
    %134 = arith.addf %132, %133 : vector<8x16xf32>
    %cst_43 = arith.constant 0.000000e+00 : f32
    %135 = vector.broadcast %cst_43 : f32 to vector<8x16xf32>
    %136 = arith.maximumf %134, %135 : vector<8x16xf32>
    %137 = vector.broadcast %127 : f32 to vector<8x16xf32>
    %138 = arith.mulf %136, %137 : vector<8x16xf32>
    %139 = arith.addf %123, %138 : vector<8x16xf32>
    %c4 = arith.constant 4 : index
    %140 = memref.load %arg13[%c4] : memref<522xf32, #tpu.memory_space<smem>>
    %c20 = arith.constant 20 : index
    %141 = memref.load %arg13[%c20] : memref<522xf32, #tpu.memory_space<smem>>
    %c260 = arith.constant 260 : index
    %142 = memref.load %arg13[%c260] : memref<522xf32, #tpu.memory_space<smem>>
    %c388 = arith.constant 388 : index
    %143 = memref.load %arg13[%c388] : memref<522xf32, #tpu.memory_space<smem>>
    %144 = vector.broadcast %140 : f32 to vector<8x16xf32>
    %145 = arith.mulf %74, %144 : vector<8x16xf32>
    %146 = vector.broadcast %141 : f32 to vector<8x16xf32>
    %147 = arith.mulf %9, %146 : vector<8x16xf32>
    %148 = arith.addf %145, %147 : vector<8x16xf32>
    %149 = vector.broadcast %142 : f32 to vector<8x16xf32>
    %150 = arith.addf %148, %149 : vector<8x16xf32>
    %cst_44 = arith.constant 0.000000e+00 : f32
    %151 = vector.broadcast %cst_44 : f32 to vector<8x16xf32>
    %152 = arith.maximumf %150, %151 : vector<8x16xf32>
    %153 = vector.broadcast %143 : f32 to vector<8x16xf32>
    %154 = arith.mulf %152, %153 : vector<8x16xf32>
    %155 = arith.addf %139, %154 : vector<8x16xf32>
    %c5 = arith.constant 5 : index
    %156 = memref.load %arg13[%c5] : memref<522xf32, #tpu.memory_space<smem>>
    %c21 = arith.constant 21 : index
    %157 = memref.load %arg13[%c21] : memref<522xf32, #tpu.memory_space<smem>>
    %c261 = arith.constant 261 : index
    %158 = memref.load %arg13[%c261] : memref<522xf32, #tpu.memory_space<smem>>
    %c389 = arith.constant 389 : index
    %159 = memref.load %arg13[%c389] : memref<522xf32, #tpu.memory_space<smem>>
    %160 = vector.broadcast %156 : f32 to vector<8x16xf32>
    %161 = arith.mulf %74, %160 : vector<8x16xf32>
    %162 = vector.broadcast %157 : f32 to vector<8x16xf32>
    %163 = arith.mulf %9, %162 : vector<8x16xf32>
    %164 = arith.addf %161, %163 : vector<8x16xf32>
    %165 = vector.broadcast %158 : f32 to vector<8x16xf32>
    %166 = arith.addf %164, %165 : vector<8x16xf32>
    %cst_45 = arith.constant 0.000000e+00 : f32
    %167 = vector.broadcast %cst_45 : f32 to vector<8x16xf32>
    %168 = arith.maximumf %166, %167 : vector<8x16xf32>
    %169 = vector.broadcast %159 : f32 to vector<8x16xf32>
    %170 = arith.mulf %168, %169 : vector<8x16xf32>
    %171 = arith.addf %155, %170 : vector<8x16xf32>
    %c6 = arith.constant 6 : index
    %172 = memref.load %arg13[%c6] : memref<522xf32, #tpu.memory_space<smem>>
    %c22 = arith.constant 22 : index
    %173 = memref.load %arg13[%c22] : memref<522xf32, #tpu.memory_space<smem>>
    %c262 = arith.constant 262 : index
    %174 = memref.load %arg13[%c262] : memref<522xf32, #tpu.memory_space<smem>>
    %c390 = arith.constant 390 : index
    %175 = memref.load %arg13[%c390] : memref<522xf32, #tpu.memory_space<smem>>
    %176 = vector.broadcast %172 : f32 to vector<8x16xf32>
    %177 = arith.mulf %74, %176 : vector<8x16xf32>
    %178 = vector.broadcast %173 : f32 to vector<8x16xf32>
    %179 = arith.mulf %9, %178 : vector<8x16xf32>
    %180 = arith.addf %177, %179 : vector<8x16xf32>
    %181 = vector.broadcast %174 : f32 to vector<8x16xf32>
    %182 = arith.addf %180, %181 : vector<8x16xf32>
    %cst_46 = arith.constant 0.000000e+00 : f32
    %183 = vector.broadcast %cst_46 : f32 to vector<8x16xf32>
    %184 = arith.maximumf %182, %183 : vector<8x16xf32>
    %185 = vector.broadcast %175 : f32 to vector<8x16xf32>
    %186 = arith.mulf %184, %185 : vector<8x16xf32>
    %187 = arith.addf %171, %186 : vector<8x16xf32>
    %c7 = arith.constant 7 : index
    %188 = memref.load %arg13[%c7] : memref<522xf32, #tpu.memory_space<smem>>
    %c23 = arith.constant 23 : index
    %189 = memref.load %arg13[%c23] : memref<522xf32, #tpu.memory_space<smem>>
    %c263 = arith.constant 263 : index
    %190 = memref.load %arg13[%c263] : memref<522xf32, #tpu.memory_space<smem>>
    %c391 = arith.constant 391 : index
    %191 = memref.load %arg13[%c391] : memref<522xf32, #tpu.memory_space<smem>>
    %192 = vector.broadcast %188 : f32 to vector<8x16xf32>
    %193 = arith.mulf %74, %192 : vector<8x16xf32>
    %194 = vector.broadcast %189 : f32 to vector<8x16xf32>
    %195 = arith.mulf %9, %194 : vector<8x16xf32>
    %196 = arith.addf %193, %195 : vector<8x16xf32>
    %197 = vector.broadcast %190 : f32 to vector<8x16xf32>
    %198 = arith.addf %196, %197 : vector<8x16xf32>
    %cst_47 = arith.constant 0.000000e+00 : f32
    %199 = vector.broadcast %cst_47 : f32 to vector<8x16xf32>
    %200 = arith.maximumf %198, %199 : vector<8x16xf32>
    %201 = vector.broadcast %191 : f32 to vector<8x16xf32>
    %202 = arith.mulf %200, %201 : vector<8x16xf32>
    %203 = arith.addf %187, %202 : vector<8x16xf32>
    %c8 = arith.constant 8 : index
    %204 = memref.load %arg13[%c8] : memref<522xf32, #tpu.memory_space<smem>>
    %c24 = arith.constant 24 : index
    %205 = memref.load %arg13[%c24] : memref<522xf32, #tpu.memory_space<smem>>
    %c264 = arith.constant 264 : index
    %206 = memref.load %arg13[%c264] : memref<522xf32, #tpu.memory_space<smem>>
    %c392 = arith.constant 392 : index
    %207 = memref.load %arg13[%c392] : memref<522xf32, #tpu.memory_space<smem>>
    %208 = vector.broadcast %204 : f32 to vector<8x16xf32>
    %209 = arith.mulf %74, %208 : vector<8x16xf32>
    %210 = vector.broadcast %205 : f32 to vector<8x16xf32>
    %211 = arith.mulf %9, %210 : vector<8x16xf32>
    %212 = arith.addf %209, %211 : vector<8x16xf32>
    %213 = vector.broadcast %206 : f32 to vector<8x16xf32>
    %214 = arith.addf %212, %213 : vector<8x16xf32>
    %cst_48 = arith.constant 0.000000e+00 : f32
    %215 = vector.broadcast %cst_48 : f32 to vector<8x16xf32>
    %216 = arith.maximumf %214, %215 : vector<8x16xf32>
    %217 = vector.broadcast %207 : f32 to vector<8x16xf32>
    %218 = arith.mulf %216, %217 : vector<8x16xf32>
    %219 = arith.addf %203, %218 : vector<8x16xf32>
    %c9 = arith.constant 9 : index
    %220 = memref.load %arg13[%c9] : memref<522xf32, #tpu.memory_space<smem>>
    %c25 = arith.constant 25 : index
    %221 = memref.load %arg13[%c25] : memref<522xf32, #tpu.memory_space<smem>>
    %c265 = arith.constant 265 : index
    %222 = memref.load %arg13[%c265] : memref<522xf32, #tpu.memory_space<smem>>
    %c393 = arith.constant 393 : index
    %223 = memref.load %arg13[%c393] : memref<522xf32, #tpu.memory_space<smem>>
    %224 = vector.broadcast %220 : f32 to vector<8x16xf32>
    %225 = arith.mulf %74, %224 : vector<8x16xf32>
    %226 = vector.broadcast %221 : f32 to vector<8x16xf32>
    %227 = arith.mulf %9, %226 : vector<8x16xf32>
    %228 = arith.addf %225, %227 : vector<8x16xf32>
    %229 = vector.broadcast %222 : f32 to vector<8x16xf32>
    %230 = arith.addf %228, %229 : vector<8x16xf32>
    %cst_49 = arith.constant 0.000000e+00 : f32
    %231 = vector.broadcast %cst_49 : f32 to vector<8x16xf32>
    %232 = arith.maximumf %230, %231 : vector<8x16xf32>
    %233 = vector.broadcast %223 : f32 to vector<8x16xf32>
    %234 = arith.mulf %232, %233 : vector<8x16xf32>
    %235 = arith.addf %219, %234 : vector<8x16xf32>
    %c10 = arith.constant 10 : index
    %236 = memref.load %arg13[%c10] : memref<522xf32, #tpu.memory_space<smem>>
    %c26 = arith.constant 26 : index
    %237 = memref.load %arg13[%c26] : memref<522xf32, #tpu.memory_space<smem>>
    %c266 = arith.constant 266 : index
    %238 = memref.load %arg13[%c266] : memref<522xf32, #tpu.memory_space<smem>>
    %c394 = arith.constant 394 : index
    %239 = memref.load %arg13[%c394] : memref<522xf32, #tpu.memory_space<smem>>
    %240 = vector.broadcast %236 : f32 to vector<8x16xf32>
    %241 = arith.mulf %74, %240 : vector<8x16xf32>
    %242 = vector.broadcast %237 : f32 to vector<8x16xf32>
    %243 = arith.mulf %9, %242 : vector<8x16xf32>
    %244 = arith.addf %241, %243 : vector<8x16xf32>
    %245 = vector.broadcast %238 : f32 to vector<8x16xf32>
    %246 = arith.addf %244, %245 : vector<8x16xf32>
    %cst_50 = arith.constant 0.000000e+00 : f32
    %247 = vector.broadcast %cst_50 : f32 to vector<8x16xf32>
    %248 = arith.maximumf %246, %247 : vector<8x16xf32>
    %249 = vector.broadcast %239 : f32 to vector<8x16xf32>
    %250 = arith.mulf %248, %249 : vector<8x16xf32>
    %251 = arith.addf %235, %250 : vector<8x16xf32>
    %c11 = arith.constant 11 : index
    %252 = memref.load %arg13[%c11] : memref<522xf32, #tpu.memory_space<smem>>
    %c27 = arith.constant 27 : index
    %253 = memref.load %arg13[%c27] : memref<522xf32, #tpu.memory_space<smem>>
    %c267 = arith.constant 267 : index
    %254 = memref.load %arg13[%c267] : memref<522xf32, #tpu.memory_space<smem>>
    %c395 = arith.constant 395 : index
    %255 = memref.load %arg13[%c395] : memref<522xf32, #tpu.memory_space<smem>>
    %256 = vector.broadcast %252 : f32 to vector<8x16xf32>
    %257 = arith.mulf %74, %256 : vector<8x16xf32>
    %258 = vector.broadcast %253 : f32 to vector<8x16xf32>
    %259 = arith.mulf %9, %258 : vector<8x16xf32>
    %260 = arith.addf %257, %259 : vector<8x16xf32>
    %261 = vector.broadcast %254 : f32 to vector<8x16xf32>
    %262 = arith.addf %260, %261 : vector<8x16xf32>
    %cst_51 = arith.constant 0.000000e+00 : f32
    %263 = vector.broadcast %cst_51 : f32 to vector<8x16xf32>
    %264 = arith.maximumf %262, %263 : vector<8x16xf32>
    %265 = vector.broadcast %255 : f32 to vector<8x16xf32>
    %266 = arith.mulf %264, %265 : vector<8x16xf32>
    %267 = arith.addf %251, %266 : vector<8x16xf32>
    %c12 = arith.constant 12 : index
    %268 = memref.load %arg13[%c12] : memref<522xf32, #tpu.memory_space<smem>>
    %c28 = arith.constant 28 : index
    %269 = memref.load %arg13[%c28] : memref<522xf32, #tpu.memory_space<smem>>
    %c268 = arith.constant 268 : index
    %270 = memref.load %arg13[%c268] : memref<522xf32, #tpu.memory_space<smem>>
    %c396 = arith.constant 396 : index
    %271 = memref.load %arg13[%c396] : memref<522xf32, #tpu.memory_space<smem>>
    %272 = vector.broadcast %268 : f32 to vector<8x16xf32>
    %273 = arith.mulf %74, %272 : vector<8x16xf32>
    %274 = vector.broadcast %269 : f32 to vector<8x16xf32>
    %275 = arith.mulf %9, %274 : vector<8x16xf32>
    %276 = arith.addf %273, %275 : vector<8x16xf32>
    %277 = vector.broadcast %270 : f32 to vector<8x16xf32>
    %278 = arith.addf %276, %277 : vector<8x16xf32>
    %cst_52 = arith.constant 0.000000e+00 : f32
    %279 = vector.broadcast %cst_52 : f32 to vector<8x16xf32>
    %280 = arith.maximumf %278, %279 : vector<8x16xf32>
    %281 = vector.broadcast %271 : f32 to vector<8x16xf32>
    %282 = arith.mulf %280, %281 : vector<8x16xf32>
    %283 = arith.addf %267, %282 : vector<8x16xf32>
    %c13 = arith.constant 13 : index
    %284 = memref.load %arg13[%c13] : memref<522xf32, #tpu.memory_space<smem>>
    %c29 = arith.constant 29 : index
    %285 = memref.load %arg13[%c29] : memref<522xf32, #tpu.memory_space<smem>>
    %c269 = arith.constant 269 : index
    %286 = memref.load %arg13[%c269] : memref<522xf32, #tpu.memory_space<smem>>
    %c397 = arith.constant 397 : index
    %287 = memref.load %arg13[%c397] : memref<522xf32, #tpu.memory_space<smem>>
    %288 = vector.broadcast %284 : f32 to vector<8x16xf32>
    %289 = arith.mulf %74, %288 : vector<8x16xf32>
    %290 = vector.broadcast %285 : f32 to vector<8x16xf32>
    %291 = arith.mulf %9, %290 : vector<8x16xf32>
    %292 = arith.addf %289, %291 : vector<8x16xf32>
    %293 = vector.broadcast %286 : f32 to vector<8x16xf32>
    %294 = arith.addf %292, %293 : vector<8x16xf32>
    %cst_53 = arith.constant 0.000000e+00 : f32
    %295 = vector.broadcast %cst_53 : f32 to vector<8x16xf32>
    %296 = arith.maximumf %294, %295 : vector<8x16xf32>
    %297 = vector.broadcast %287 : f32 to vector<8x16xf32>
    %298 = arith.mulf %296, %297 : vector<8x16xf32>
    %299 = arith.addf %283, %298 : vector<8x16xf32>
    %c14 = arith.constant 14 : index
    %300 = memref.load %arg13[%c14] : memref<522xf32, #tpu.memory_space<smem>>
    %c30 = arith.constant 30 : index
    %301 = memref.load %arg13[%c30] : memref<522xf32, #tpu.memory_space<smem>>
    %c270 = arith.constant 270 : index
    %302 = memref.load %arg13[%c270] : memref<522xf32, #tpu.memory_space<smem>>
    %c398 = arith.constant 398 : index
    %303 = memref.load %arg13[%c398] : memref<522xf32, #tpu.memory_space<smem>>
    %304 = vector.broadcast %300 : f32 to vector<8x16xf32>
    %305 = arith.mulf %74, %304 : vector<8x16xf32>
    %306 = vector.broadcast %301 : f32 to vector<8x16xf32>
    %307 = arith.mulf %9, %306 : vector<8x16xf32>
    %308 = arith.addf %305, %307 : vector<8x16xf32>
    %309 = vector.broadcast %302 : f32 to vector<8x16xf32>
    %310 = arith.addf %308, %309 : vector<8x16xf32>
    %cst_54 = arith.constant 0.000000e+00 : f32
    %311 = vector.broadcast %cst_54 : f32 to vector<8x16xf32>
    %312 = arith.maximumf %310, %311 : vector<8x16xf32>
    %313 = vector.broadcast %303 : f32 to vector<8x16xf32>
    %314 = arith.mulf %312, %313 : vector<8x16xf32>
    %315 = arith.addf %299, %314 : vector<8x16xf32>
    %c15 = arith.constant 15 : index
    %316 = memref.load %arg13[%c15] : memref<522xf32, #tpu.memory_space<smem>>
    %c31 = arith.constant 31 : index
    %317 = memref.load %arg13[%c31] : memref<522xf32, #tpu.memory_space<smem>>
    %c271 = arith.constant 271 : index
    %318 = memref.load %arg13[%c271] : memref<522xf32, #tpu.memory_space<smem>>
    %c399 = arith.constant 399 : index
    %319 = memref.load %arg13[%c399] : memref<522xf32, #tpu.memory_space<smem>>
    %320 = vector.broadcast %316 : f32 to vector<8x16xf32>
    %321 = arith.mulf %74, %320 : vector<8x16xf32>
    %322 = vector.broadcast %317 : f32 to vector<8x16xf32>
    %323 = arith.mulf %9, %322 : vector<8x16xf32>
    %324 = arith.addf %321, %323 : vector<8x16xf32>
    %325 = vector.broadcast %318 : f32 to vector<8x16xf32>
    %326 = arith.addf %324, %325 : vector<8x16xf32>
    %cst_55 = arith.constant 0.000000e+00 : f32
    %327 = vector.broadcast %cst_55 : f32 to vector<8x16xf32>
    %328 = arith.maximumf %326, %327 : vector<8x16xf32>
    %329 = vector.broadcast %319 : f32 to vector<8x16xf32>
    %330 = arith.mulf %328, %329 : vector<8x16xf32>
    %331 = arith.addf %315, %330 : vector<8x16xf32>
    %c512 = arith.constant 512 : index
    %332 = memref.load %arg13[%c512] : memref<522xf32, #tpu.memory_space<smem>>
    %333 = vector.broadcast %332 : f32 to vector<8x16xf32>
    %334 = arith.addf %331, %333 : vector<8x16xf32>
    %335 = arith.addf %68, %334 : vector<8x16xf32>
    %cst_56 = arith.constant dense<0xFF800000> : vector<8xf32>
    %336 = vector.multi_reduction <maximumf>, %334, %cst_56 [1] : vector<8x16xf32> to vector<8xf32>
    %337 = vector.shape_cast %336 : vector<8xf32> to vector<8x1xf32>
    %338 = vector.broadcast %337 : vector<8x1xf32> to vector<8x16xf32>
    %339 = arith.subf %334, %338 : vector<8x16xf32>
    %340 = math.exp %339 : vector<8x16xf32>
    %cst_57 = arith.constant dense<0.000000e+00> : vector<8xf32>
    %341 = vector.multi_reduction <add>, %340, %cst_57 [1] : vector<8x16xf32> to vector<8xf32>
    %342 = vector.shape_cast %341 : vector<8xf32> to vector<8x1xf32>
    %343 = vector.broadcast %342 : vector<8x1xf32> to vector<8x16xf32>
    %344 = arith.divf %340, %343 : vector<8x16xf32>
    %cst_58 = arith.constant dense<0.000000e+00> : vector<8x32xf32>
    %345 = tpu.matmul %344, %71, %cst_58 {dimension_numbers = #tpu.dot_dimension_numbers<[1], [0], [0], [1], [0, 0, 1, 1], [], []>} : vector<8x16xf32>, vector<16x32xf32>, vector<8x32xf32> -> vector<8x32xf32>
    %346 = arith.addf %66, %345 : vector<8x32xf32>
    %cst_59 = arith.constant dense<0.000000e+00> : vector<8x16xf32>
    %347 = tpu.matmul %35, %72, %cst_59 {dimension_numbers = #tpu.dot_dimension_numbers<[1], [1], [0], [0], [0, 0, 1, 0], [], []>} : vector<8x32xf32>, vector<16x32xf32>, vector<8x16xf32> -> vector<8x16xf32>
    %cst_60 = arith.constant 0.000000e+00 : f32
    %348 = vector.broadcast %cst_60 : f32 to vector<8x16xf32>
    %c128 = arith.constant 128 : index
    %349 = memref.load %arg13[%c128] : memref<522xf32, #tpu.memory_space<smem>>
    %c144 = arith.constant 144 : index
    %350 = memref.load %arg13[%c144] : memref<522xf32, #tpu.memory_space<smem>>
    %c320 = arith.constant 320 : index
    %351 = memref.load %arg13[%c320] : memref<522xf32, #tpu.memory_space<smem>>
    %c448 = arith.constant 448 : index
    %352 = memref.load %arg13[%c448] : memref<522xf32, #tpu.memory_space<smem>>
    %353 = vector.broadcast %349 : f32 to vector<8x16xf32>
    %354 = arith.mulf %347, %353 : vector<8x16xf32>
    %355 = vector.broadcast %350 : f32 to vector<8x16xf32>
    %356 = arith.mulf %9, %355 : vector<8x16xf32>
    %357 = arith.addf %354, %356 : vector<8x16xf32>
    %358 = vector.broadcast %351 : f32 to vector<8x16xf32>
    %359 = arith.addf %357, %358 : vector<8x16xf32>
    %cst_61 = arith.constant 0.000000e+00 : f32
    %360 = vector.broadcast %cst_61 : f32 to vector<8x16xf32>
    %361 = arith.maximumf %359, %360 : vector<8x16xf32>
    %362 = vector.broadcast %352 : f32 to vector<8x16xf32>
    %363 = arith.mulf %361, %362 : vector<8x16xf32>
    %364 = arith.addf %348, %363 : vector<8x16xf32>
    %c129 = arith.constant 129 : index
    %365 = memref.load %arg13[%c129] : memref<522xf32, #tpu.memory_space<smem>>
    %c145 = arith.constant 145 : index
    %366 = memref.load %arg13[%c145] : memref<522xf32, #tpu.memory_space<smem>>
    %c321 = arith.constant 321 : index
    %367 = memref.load %arg13[%c321] : memref<522xf32, #tpu.memory_space<smem>>
    %c449 = arith.constant 449 : index
    %368 = memref.load %arg13[%c449] : memref<522xf32, #tpu.memory_space<smem>>
    %369 = vector.broadcast %365 : f32 to vector<8x16xf32>
    %370 = arith.mulf %347, %369 : vector<8x16xf32>
    %371 = vector.broadcast %366 : f32 to vector<8x16xf32>
    %372 = arith.mulf %9, %371 : vector<8x16xf32>
    %373 = arith.addf %370, %372 : vector<8x16xf32>
    %374 = vector.broadcast %367 : f32 to vector<8x16xf32>
    %375 = arith.addf %373, %374 : vector<8x16xf32>
    %cst_62 = arith.constant 0.000000e+00 : f32
    %376 = vector.broadcast %cst_62 : f32 to vector<8x16xf32>
    %377 = arith.maximumf %375, %376 : vector<8x16xf32>
    %378 = vector.broadcast %368 : f32 to vector<8x16xf32>
    %379 = arith.mulf %377, %378 : vector<8x16xf32>
    %380 = arith.addf %364, %379 : vector<8x16xf32>
    %c130 = arith.constant 130 : index
    %381 = memref.load %arg13[%c130] : memref<522xf32, #tpu.memory_space<smem>>
    %c146 = arith.constant 146 : index
    %382 = memref.load %arg13[%c146] : memref<522xf32, #tpu.memory_space<smem>>
    %c322 = arith.constant 322 : index
    %383 = memref.load %arg13[%c322] : memref<522xf32, #tpu.memory_space<smem>>
    %c450 = arith.constant 450 : index
    %384 = memref.load %arg13[%c450] : memref<522xf32, #tpu.memory_space<smem>>
    %385 = vector.broadcast %381 : f32 to vector<8x16xf32>
    %386 = arith.mulf %347, %385 : vector<8x16xf32>
    %387 = vector.broadcast %382 : f32 to vector<8x16xf32>
    %388 = arith.mulf %9, %387 : vector<8x16xf32>
    %389 = arith.addf %386, %388 : vector<8x16xf32>
    %390 = vector.broadcast %383 : f32 to vector<8x16xf32>
    %391 = arith.addf %389, %390 : vector<8x16xf32>
    %cst_63 = arith.constant 0.000000e+00 : f32
    %392 = vector.broadcast %cst_63 : f32 to vector<8x16xf32>
    %393 = arith.maximumf %391, %392 : vector<8x16xf32>
    %394 = vector.broadcast %384 : f32 to vector<8x16xf32>
    %395 = arith.mulf %393, %394 : vector<8x16xf32>
    %396 = arith.addf %380, %395 : vector<8x16xf32>
    %c131 = arith.constant 131 : index
    %397 = memref.load %arg13[%c131] : memref<522xf32, #tpu.memory_space<smem>>
    %c147 = arith.constant 147 : index
    %398 = memref.load %arg13[%c147] : memref<522xf32, #tpu.memory_space<smem>>
    %c323 = arith.constant 323 : index
    %399 = memref.load %arg13[%c323] : memref<522xf32, #tpu.memory_space<smem>>
    %c451 = arith.constant 451 : index
    %400 = memref.load %arg13[%c451] : memref<522xf32, #tpu.memory_space<smem>>
    %401 = vector.broadcast %397 : f32 to vector<8x16xf32>
    %402 = arith.mulf %347, %401 : vector<8x16xf32>
    %403 = vector.broadcast %398 : f32 to vector<8x16xf32>
    %404 = arith.mulf %9, %403 : vector<8x16xf32>
    %405 = arith.addf %402, %404 : vector<8x16xf32>
    %406 = vector.broadcast %399 : f32 to vector<8x16xf32>
    %407 = arith.addf %405, %406 : vector<8x16xf32>
    %cst_64 = arith.constant 0.000000e+00 : f32
    %408 = vector.broadcast %cst_64 : f32 to vector<8x16xf32>
    %409 = arith.maximumf %407, %408 : vector<8x16xf32>
    %410 = vector.broadcast %400 : f32 to vector<8x16xf32>
    %411 = arith.mulf %409, %410 : vector<8x16xf32>
    %412 = arith.addf %396, %411 : vector<8x16xf32>
    %c132 = arith.constant 132 : index
    %413 = memref.load %arg13[%c132] : memref<522xf32, #tpu.memory_space<smem>>
    %c148 = arith.constant 148 : index
    %414 = memref.load %arg13[%c148] : memref<522xf32, #tpu.memory_space<smem>>
    %c324 = arith.constant 324 : index
    %415 = memref.load %arg13[%c324] : memref<522xf32, #tpu.memory_space<smem>>
    %c452 = arith.constant 452 : index
    %416 = memref.load %arg13[%c452] : memref<522xf32, #tpu.memory_space<smem>>
    %417 = vector.broadcast %413 : f32 to vector<8x16xf32>
    %418 = arith.mulf %347, %417 : vector<8x16xf32>
    %419 = vector.broadcast %414 : f32 to vector<8x16xf32>
    %420 = arith.mulf %9, %419 : vector<8x16xf32>
    %421 = arith.addf %418, %420 : vector<8x16xf32>
    %422 = vector.broadcast %415 : f32 to vector<8x16xf32>
    %423 = arith.addf %421, %422 : vector<8x16xf32>
    %cst_65 = arith.constant 0.000000e+00 : f32
    %424 = vector.broadcast %cst_65 : f32 to vector<8x16xf32>
    %425 = arith.maximumf %423, %424 : vector<8x16xf32>
    %426 = vector.broadcast %416 : f32 to vector<8x16xf32>
    %427 = arith.mulf %425, %426 : vector<8x16xf32>
    %428 = arith.addf %412, %427 : vector<8x16xf32>
    %c133 = arith.constant 133 : index
    %429 = memref.load %arg13[%c133] : memref<522xf32, #tpu.memory_space<smem>>
    %c149 = arith.constant 149 : index
    %430 = memref.load %arg13[%c149] : memref<522xf32, #tpu.memory_space<smem>>
    %c325 = arith.constant 325 : index
    %431 = memref.load %arg13[%c325] : memref<522xf32, #tpu.memory_space<smem>>
    %c453 = arith.constant 453 : index
    %432 = memref.load %arg13[%c453] : memref<522xf32, #tpu.memory_space<smem>>
    %433 = vector.broadcast %429 : f32 to vector<8x16xf32>
    %434 = arith.mulf %347, %433 : vector<8x16xf32>
    %435 = vector.broadcast %430 : f32 to vector<8x16xf32>
    %436 = arith.mulf %9, %435 : vector<8x16xf32>
    %437 = arith.addf %434, %436 : vector<8x16xf32>
    %438 = vector.broadcast %431 : f32 to vector<8x16xf32>
    %439 = arith.addf %437, %438 : vector<8x16xf32>
    %cst_66 = arith.constant 0.000000e+00 : f32
    %440 = vector.broadcast %cst_66 : f32 to vector<8x16xf32>
    %441 = arith.maximumf %439, %440 : vector<8x16xf32>
    %442 = vector.broadcast %432 : f32 to vector<8x16xf32>
    %443 = arith.mulf %441, %442 : vector<8x16xf32>
    %444 = arith.addf %428, %443 : vector<8x16xf32>
    %c134 = arith.constant 134 : index
    %445 = memref.load %arg13[%c134] : memref<522xf32, #tpu.memory_space<smem>>
    %c150 = arith.constant 150 : index
    %446 = memref.load %arg13[%c150] : memref<522xf32, #tpu.memory_space<smem>>
    %c326 = arith.constant 326 : index
    %447 = memref.load %arg13[%c326] : memref<522xf32, #tpu.memory_space<smem>>
    %c454 = arith.constant 454 : index
    %448 = memref.load %arg13[%c454] : memref<522xf32, #tpu.memory_space<smem>>
    %449 = vector.broadcast %445 : f32 to vector<8x16xf32>
    %450 = arith.mulf %347, %449 : vector<8x16xf32>
    %451 = vector.broadcast %446 : f32 to vector<8x16xf32>
    %452 = arith.mulf %9, %451 : vector<8x16xf32>
    %453 = arith.addf %450, %452 : vector<8x16xf32>
    %454 = vector.broadcast %447 : f32 to vector<8x16xf32>
    %455 = arith.addf %453, %454 : vector<8x16xf32>
    %cst_67 = arith.constant 0.000000e+00 : f32
    %456 = vector.broadcast %cst_67 : f32 to vector<8x16xf32>
    %457 = arith.maximumf %455, %456 : vector<8x16xf32>
    %458 = vector.broadcast %448 : f32 to vector<8x16xf32>
    %459 = arith.mulf %457, %458 : vector<8x16xf32>
    %460 = arith.addf %444, %459 : vector<8x16xf32>
    %c135 = arith.constant 135 : index
    %461 = memref.load %arg13[%c135] : memref<522xf32, #tpu.memory_space<smem>>
    %c151 = arith.constant 151 : index
    %462 = memref.load %arg13[%c151] : memref<522xf32, #tpu.memory_space<smem>>
    %c327 = arith.constant 327 : index
    %463 = memref.load %arg13[%c327] : memref<522xf32, #tpu.memory_space<smem>>
    %c455 = arith.constant 455 : index
    %464 = memref.load %arg13[%c455] : memref<522xf32, #tpu.memory_space<smem>>
    %465 = vector.broadcast %461 : f32 to vector<8x16xf32>
    %466 = arith.mulf %347, %465 : vector<8x16xf32>
    %467 = vector.broadcast %462 : f32 to vector<8x16xf32>
    %468 = arith.mulf %9, %467 : vector<8x16xf32>
    %469 = arith.addf %466, %468 : vector<8x16xf32>
    %470 = vector.broadcast %463 : f32 to vector<8x16xf32>
    %471 = arith.addf %469, %470 : vector<8x16xf32>
    %cst_68 = arith.constant 0.000000e+00 : f32
    %472 = vector.broadcast %cst_68 : f32 to vector<8x16xf32>
    %473 = arith.maximumf %471, %472 : vector<8x16xf32>
    %474 = vector.broadcast %464 : f32 to vector<8x16xf32>
    %475 = arith.mulf %473, %474 : vector<8x16xf32>
    %476 = arith.addf %460, %475 : vector<8x16xf32>
    %c136 = arith.constant 136 : index
    %477 = memref.load %arg13[%c136] : memref<522xf32, #tpu.memory_space<smem>>
    %c152 = arith.constant 152 : index
    %478 = memref.load %arg13[%c152] : memref<522xf32, #tpu.memory_space<smem>>
    %c328 = arith.constant 328 : index
    %479 = memref.load %arg13[%c328] : memref<522xf32, #tpu.memory_space<smem>>
    %c456 = arith.constant 456 : index
    %480 = memref.load %arg13[%c456] : memref<522xf32, #tpu.memory_space<smem>>
    %481 = vector.broadcast %477 : f32 to vector<8x16xf32>
    %482 = arith.mulf %347, %481 : vector<8x16xf32>
    %483 = vector.broadcast %478 : f32 to vector<8x16xf32>
    %484 = arith.mulf %9, %483 : vector<8x16xf32>
    %485 = arith.addf %482, %484 : vector<8x16xf32>
    %486 = vector.broadcast %479 : f32 to vector<8x16xf32>
    %487 = arith.addf %485, %486 : vector<8x16xf32>
    %cst_69 = arith.constant 0.000000e+00 : f32
    %488 = vector.broadcast %cst_69 : f32 to vector<8x16xf32>
    %489 = arith.maximumf %487, %488 : vector<8x16xf32>
    %490 = vector.broadcast %480 : f32 to vector<8x16xf32>
    %491 = arith.mulf %489, %490 : vector<8x16xf32>
    %492 = arith.addf %476, %491 : vector<8x16xf32>
    %c137 = arith.constant 137 : index
    %493 = memref.load %arg13[%c137] : memref<522xf32, #tpu.memory_space<smem>>
    %c153 = arith.constant 153 : index
    %494 = memref.load %arg13[%c153] : memref<522xf32, #tpu.memory_space<smem>>
    %c329 = arith.constant 329 : index
    %495 = memref.load %arg13[%c329] : memref<522xf32, #tpu.memory_space<smem>>
    %c457 = arith.constant 457 : index
    %496 = memref.load %arg13[%c457] : memref<522xf32, #tpu.memory_space<smem>>
    %497 = vector.broadcast %493 : f32 to vector<8x16xf32>
    %498 = arith.mulf %347, %497 : vector<8x16xf32>
    %499 = vector.broadcast %494 : f32 to vector<8x16xf32>
    %500 = arith.mulf %9, %499 : vector<8x16xf32>
    %501 = arith.addf %498, %500 : vector<8x16xf32>
    %502 = vector.broadcast %495 : f32 to vector<8x16xf32>
    %503 = arith.addf %501, %502 : vector<8x16xf32>
    %cst_70 = arith.constant 0.000000e+00 : f32
    %504 = vector.broadcast %cst_70 : f32 to vector<8x16xf32>
    %505 = arith.maximumf %503, %504 : vector<8x16xf32>
    %506 = vector.broadcast %496 : f32 to vector<8x16xf32>
    %507 = arith.mulf %505, %506 : vector<8x16xf32>
    %508 = arith.addf %492, %507 : vector<8x16xf32>
    %c138 = arith.constant 138 : index
    %509 = memref.load %arg13[%c138] : memref<522xf32, #tpu.memory_space<smem>>
    %c154 = arith.constant 154 : index
    %510 = memref.load %arg13[%c154] : memref<522xf32, #tpu.memory_space<smem>>
    %c330 = arith.constant 330 : index
    %511 = memref.load %arg13[%c330] : memref<522xf32, #tpu.memory_space<smem>>
    %c458 = arith.constant 458 : index
    %512 = memref.load %arg13[%c458] : memref<522xf32, #tpu.memory_space<smem>>
    %513 = vector.broadcast %509 : f32 to vector<8x16xf32>
    %514 = arith.mulf %347, %513 : vector<8x16xf32>
    %515 = vector.broadcast %510 : f32 to vector<8x16xf32>
    %516 = arith.mulf %9, %515 : vector<8x16xf32>
    %517 = arith.addf %514, %516 : vector<8x16xf32>
    %518 = vector.broadcast %511 : f32 to vector<8x16xf32>
    %519 = arith.addf %517, %518 : vector<8x16xf32>
    %cst_71 = arith.constant 0.000000e+00 : f32
    %520 = vector.broadcast %cst_71 : f32 to vector<8x16xf32>
    %521 = arith.maximumf %519, %520 : vector<8x16xf32>
    %522 = vector.broadcast %512 : f32 to vector<8x16xf32>
    %523 = arith.mulf %521, %522 : vector<8x16xf32>
    %524 = arith.addf %508, %523 : vector<8x16xf32>
    %c139 = arith.constant 139 : index
    %525 = memref.load %arg13[%c139] : memref<522xf32, #tpu.memory_space<smem>>
    %c155 = arith.constant 155 : index
    %526 = memref.load %arg13[%c155] : memref<522xf32, #tpu.memory_space<smem>>
    %c331 = arith.constant 331 : index
    %527 = memref.load %arg13[%c331] : memref<522xf32, #tpu.memory_space<smem>>
    %c459 = arith.constant 459 : index
    %528 = memref.load %arg13[%c459] : memref<522xf32, #tpu.memory_space<smem>>
    %529 = vector.broadcast %525 : f32 to vector<8x16xf32>
    %530 = arith.mulf %347, %529 : vector<8x16xf32>
    %531 = vector.broadcast %526 : f32 to vector<8x16xf32>
    %532 = arith.mulf %9, %531 : vector<8x16xf32>
    %533 = arith.addf %530, %532 : vector<8x16xf32>
    %534 = vector.broadcast %527 : f32 to vector<8x16xf32>
    %535 = arith.addf %533, %534 : vector<8x16xf32>
    %cst_72 = arith.constant 0.000000e+00 : f32
    %536 = vector.broadcast %cst_72 : f32 to vector<8x16xf32>
    %537 = arith.maximumf %535, %536 : vector<8x16xf32>
    %538 = vector.broadcast %528 : f32 to vector<8x16xf32>
    %539 = arith.mulf %537, %538 : vector<8x16xf32>
    %540 = arith.addf %524, %539 : vector<8x16xf32>
    %c140 = arith.constant 140 : index
    %541 = memref.load %arg13[%c140] : memref<522xf32, #tpu.memory_space<smem>>
    %c156 = arith.constant 156 : index
    %542 = memref.load %arg13[%c156] : memref<522xf32, #tpu.memory_space<smem>>
    %c332 = arith.constant 332 : index
    %543 = memref.load %arg13[%c332] : memref<522xf32, #tpu.memory_space<smem>>
    %c460 = arith.constant 460 : index
    %544 = memref.load %arg13[%c460] : memref<522xf32, #tpu.memory_space<smem>>
    %545 = vector.broadcast %541 : f32 to vector<8x16xf32>
    %546 = arith.mulf %347, %545 : vector<8x16xf32>
    %547 = vector.broadcast %542 : f32 to vector<8x16xf32>
    %548 = arith.mulf %9, %547 : vector<8x16xf32>
    %549 = arith.addf %546, %548 : vector<8x16xf32>
    %550 = vector.broadcast %543 : f32 to vector<8x16xf32>
    %551 = arith.addf %549, %550 : vector<8x16xf32>
    %cst_73 = arith.constant 0.000000e+00 : f32
    %552 = vector.broadcast %cst_73 : f32 to vector<8x16xf32>
    %553 = arith.maximumf %551, %552 : vector<8x16xf32>
    %554 = vector.broadcast %544 : f32 to vector<8x16xf32>
    %555 = arith.mulf %553, %554 : vector<8x16xf32>
    %556 = arith.addf %540, %555 : vector<8x16xf32>
    %c141 = arith.constant 141 : index
    %557 = memref.load %arg13[%c141] : memref<522xf32, #tpu.memory_space<smem>>
    %c157 = arith.constant 157 : index
    %558 = memref.load %arg13[%c157] : memref<522xf32, #tpu.memory_space<smem>>
    %c333 = arith.constant 333 : index
    %559 = memref.load %arg13[%c333] : memref<522xf32, #tpu.memory_space<smem>>
    %c461 = arith.constant 461 : index
    %560 = memref.load %arg13[%c461] : memref<522xf32, #tpu.memory_space<smem>>
    %561 = vector.broadcast %557 : f32 to vector<8x16xf32>
    %562 = arith.mulf %347, %561 : vector<8x16xf32>
    %563 = vector.broadcast %558 : f32 to vector<8x16xf32>
    %564 = arith.mulf %9, %563 : vector<8x16xf32>
    %565 = arith.addf %562, %564 : vector<8x16xf32>
    %566 = vector.broadcast %559 : f32 to vector<8x16xf32>
    %567 = arith.addf %565, %566 : vector<8x16xf32>
    %cst_74 = arith.constant 0.000000e+00 : f32
    %568 = vector.broadcast %cst_74 : f32 to vector<8x16xf32>
    %569 = arith.maximumf %567, %568 : vector<8x16xf32>
    %570 = vector.broadcast %560 : f32 to vector<8x16xf32>
    %571 = arith.mulf %569, %570 : vector<8x16xf32>
    %572 = arith.addf %556, %571 : vector<8x16xf32>
    %c142 = arith.constant 142 : index
    %573 = memref.load %arg13[%c142] : memref<522xf32, #tpu.memory_space<smem>>
    %c158 = arith.constant 158 : index
    %574 = memref.load %arg13[%c158] : memref<522xf32, #tpu.memory_space<smem>>
    %c334 = arith.constant 334 : index
    %575 = memref.load %arg13[%c334] : memref<522xf32, #tpu.memory_space<smem>>
    %c462 = arith.constant 462 : index
    %576 = memref.load %arg13[%c462] : memref<522xf32, #tpu.memory_space<smem>>
    %577 = vector.broadcast %573 : f32 to vector<8x16xf32>
    %578 = arith.mulf %347, %577 : vector<8x16xf32>
    %579 = vector.broadcast %574 : f32 to vector<8x16xf32>
    %580 = arith.mulf %9, %579 : vector<8x16xf32>
    %581 = arith.addf %578, %580 : vector<8x16xf32>
    %582 = vector.broadcast %575 : f32 to vector<8x16xf32>
    %583 = arith.addf %581, %582 : vector<8x16xf32>
    %cst_75 = arith.constant 0.000000e+00 : f32
    %584 = vector.broadcast %cst_75 : f32 to vector<8x16xf32>
    %585 = arith.maximumf %583, %584 : vector<8x16xf32>
    %586 = vector.broadcast %576 : f32 to vector<8x16xf32>
    %587 = arith.mulf %585, %586 : vector<8x16xf32>
    %588 = arith.addf %572, %587 : vector<8x16xf32>
    %c143 = arith.constant 143 : index
    %589 = memref.load %arg13[%c143] : memref<522xf32, #tpu.memory_space<smem>>
    %c159 = arith.constant 159 : index
    %590 = memref.load %arg13[%c159] : memref<522xf32, #tpu.memory_space<smem>>
    %c335 = arith.constant 335 : index
    %591 = memref.load %arg13[%c335] : memref<522xf32, #tpu.memory_space<smem>>
    %c463 = arith.constant 463 : index
    %592 = memref.load %arg13[%c463] : memref<522xf32, #tpu.memory_space<smem>>
    %593 = vector.broadcast %589 : f32 to vector<8x16xf32>
    %594 = arith.mulf %347, %593 : vector<8x16xf32>
    %595 = vector.broadcast %590 : f32 to vector<8x16xf32>
    %596 = arith.mulf %9, %595 : vector<8x16xf32>
    %597 = arith.addf %594, %596 : vector<8x16xf32>
    %598 = vector.broadcast %591 : f32 to vector<8x16xf32>
    %599 = arith.addf %597, %598 : vector<8x16xf32>
    %cst_76 = arith.constant 0.000000e+00 : f32
    %600 = vector.broadcast %cst_76 : f32 to vector<8x16xf32>
    %601 = arith.maximumf %599, %600 : vector<8x16xf32>
    %602 = vector.broadcast %592 : f32 to vector<8x16xf32>
    %603 = arith.mulf %601, %602 : vector<8x16xf32>
    %604 = arith.addf %588, %603 : vector<8x16xf32>
    %c516 = arith.constant 516 : index
    %605 = memref.load %arg13[%c516] : memref<522xf32, #tpu.memory_space<smem>>
    %606 = vector.broadcast %605 : f32 to vector<8x16xf32>
    %607 = arith.addf %604, %606 : vector<8x16xf32>
    %608 = arith.addf %69, %607 : vector<8x16xf32>
    %cst_77 = arith.constant dense<0xFF800000> : vector<16xf32>
    %609 = vector.multi_reduction <maximumf>, %607, %cst_77 [0] : vector<8x16xf32> to vector<16xf32>
    %610 = vector.shape_cast %609 : vector<16xf32> to vector<1x16xf32>
    %611 = vector.broadcast %610 : vector<1x16xf32> to vector<8x16xf32>
    %612 = arith.subf %607, %611 : vector<8x16xf32>
    %613 = math.exp %612 : vector<8x16xf32>
    %cst_78 = arith.constant dense<0.000000e+00> : vector<16xf32>
    %614 = vector.multi_reduction <add>, %613, %cst_78 [0] : vector<8x16xf32> to vector<16xf32>
    %615 = vector.shape_cast %614 : vector<16xf32> to vector<1x16xf32>
    %616 = vector.broadcast %615 : vector<1x16xf32> to vector<8x16xf32>
    %617 = arith.divf %613, %616 : vector<8x16xf32>
    %cst_79 = arith.constant dense<0.000000e+00> : vector<16x32xf32>
    %618 = tpu.matmul %617, %73, %cst_79 {dimension_numbers = #tpu.dot_dimension_numbers<[0], [0], [1], [1], [0, 1, 1, 1], [], []>} : vector<8x16xf32>, vector<8x32xf32>, vector<16x32xf32> -> vector<16x32xf32>
    %619 = arith.addf %67, %618 : vector<16x32xf32>
    %620 = vector.extract_strided_slice %63 {offsets = [0, 32], sizes = [8, 32], strides = [1, 1]} : vector<8x256xf32> to vector<8x32xf32>
    %621 = vector.extract_strided_slice %65 {offsets = [0, 160], sizes = [16, 32], strides = [1, 1]} : vector<16x256xf32> to vector<16x32xf32>
    %622 = vector.extract_strided_slice %65 {offsets = [0, 32], sizes = [16, 32], strides = [1, 1]} : vector<16x256xf32> to vector<16x32xf32>
    %623 = vector.extract_strided_slice %63 {offsets = [0, 160], sizes = [8, 32], strides = [1, 1]} : vector<8x256xf32> to vector<8x32xf32>
    %cst_80 = arith.constant dense<0.000000e+00> : vector<8x16xf32>
    %624 = tpu.matmul %620, %61, %cst_80 {dimension_numbers = #tpu.dot_dimension_numbers<[1], [1], [0], [0], [0, 0, 1, 0], [], []>} : vector<8x32xf32>, vector<16x32xf32>, vector<8x16xf32> -> vector<8x16xf32>
    %cst_81 = arith.constant 0.000000e+00 : f32
    %625 = vector.broadcast %cst_81 : f32 to vector<8x16xf32>
    %c32 = arith.constant 32 : index
    %626 = memref.load %arg13[%c32] : memref<522xf32, #tpu.memory_space<smem>>
    %c48 = arith.constant 48 : index
    %627 = memref.load %arg13[%c48] : memref<522xf32, #tpu.memory_space<smem>>
    %c272 = arith.constant 272 : index
    %628 = memref.load %arg13[%c272] : memref<522xf32, #tpu.memory_space<smem>>
    %c400 = arith.constant 400 : index
    %629 = memref.load %arg13[%c400] : memref<522xf32, #tpu.memory_space<smem>>
    %630 = vector.broadcast %626 : f32 to vector<8x16xf32>
    %631 = arith.mulf %624, %630 : vector<8x16xf32>
    %632 = vector.broadcast %627 : f32 to vector<8x16xf32>
    %633 = arith.mulf %9, %632 : vector<8x16xf32>
    %634 = arith.addf %631, %633 : vector<8x16xf32>
    %635 = vector.broadcast %628 : f32 to vector<8x16xf32>
    %636 = arith.addf %634, %635 : vector<8x16xf32>
    %cst_82 = arith.constant 0.000000e+00 : f32
    %637 = vector.broadcast %cst_82 : f32 to vector<8x16xf32>
    %638 = arith.maximumf %636, %637 : vector<8x16xf32>
    %639 = vector.broadcast %629 : f32 to vector<8x16xf32>
    %640 = arith.mulf %638, %639 : vector<8x16xf32>
    %641 = arith.addf %625, %640 : vector<8x16xf32>
    %c33 = arith.constant 33 : index
    %642 = memref.load %arg13[%c33] : memref<522xf32, #tpu.memory_space<smem>>
    %c49 = arith.constant 49 : index
    %643 = memref.load %arg13[%c49] : memref<522xf32, #tpu.memory_space<smem>>
    %c273 = arith.constant 273 : index
    %644 = memref.load %arg13[%c273] : memref<522xf32, #tpu.memory_space<smem>>
    %c401 = arith.constant 401 : index
    %645 = memref.load %arg13[%c401] : memref<522xf32, #tpu.memory_space<smem>>
    %646 = vector.broadcast %642 : f32 to vector<8x16xf32>
    %647 = arith.mulf %624, %646 : vector<8x16xf32>
    %648 = vector.broadcast %643 : f32 to vector<8x16xf32>
    %649 = arith.mulf %9, %648 : vector<8x16xf32>
    %650 = arith.addf %647, %649 : vector<8x16xf32>
    %651 = vector.broadcast %644 : f32 to vector<8x16xf32>
    %652 = arith.addf %650, %651 : vector<8x16xf32>
    %cst_83 = arith.constant 0.000000e+00 : f32
    %653 = vector.broadcast %cst_83 : f32 to vector<8x16xf32>
    %654 = arith.maximumf %652, %653 : vector<8x16xf32>
    %655 = vector.broadcast %645 : f32 to vector<8x16xf32>
    %656 = arith.mulf %654, %655 : vector<8x16xf32>
    %657 = arith.addf %641, %656 : vector<8x16xf32>
    %c34 = arith.constant 34 : index
    %658 = memref.load %arg13[%c34] : memref<522xf32, #tpu.memory_space<smem>>
    %c50 = arith.constant 50 : index
    %659 = memref.load %arg13[%c50] : memref<522xf32, #tpu.memory_space<smem>>
    %c274 = arith.constant 274 : index
    %660 = memref.load %arg13[%c274] : memref<522xf32, #tpu.memory_space<smem>>
    %c402 = arith.constant 402 : index
    %661 = memref.load %arg13[%c402] : memref<522xf32, #tpu.memory_space<smem>>
    %662 = vector.broadcast %658 : f32 to vector<8x16xf32>
    %663 = arith.mulf %624, %662 : vector<8x16xf32>
    %664 = vector.broadcast %659 : f32 to vector<8x16xf32>
    %665 = arith.mulf %9, %664 : vector<8x16xf32>
    %666 = arith.addf %663, %665 : vector<8x16xf32>
    %667 = vector.broadcast %660 : f32 to vector<8x16xf32>
    %668 = arith.addf %666, %667 : vector<8x16xf32>
    %cst_84 = arith.constant 0.000000e+00 : f32
    %669 = vector.broadcast %cst_84 : f32 to vector<8x16xf32>
    %670 = arith.maximumf %668, %669 : vector<8x16xf32>
    %671 = vector.broadcast %661 : f32 to vector<8x16xf32>
    %672 = arith.mulf %670, %671 : vector<8x16xf32>
    %673 = arith.addf %657, %672 : vector<8x16xf32>
    %c35 = arith.constant 35 : index
    %674 = memref.load %arg13[%c35] : memref<522xf32, #tpu.memory_space<smem>>
    %c51 = arith.constant 51 : index
    %675 = memref.load %arg13[%c51] : memref<522xf32, #tpu.memory_space<smem>>
    %c275 = arith.constant 275 : index
    %676 = memref.load %arg13[%c275] : memref<522xf32, #tpu.memory_space<smem>>
    %c403 = arith.constant 403 : index
    %677 = memref.load %arg13[%c403] : memref<522xf32, #tpu.memory_space<smem>>
    %678 = vector.broadcast %674 : f32 to vector<8x16xf32>
    %679 = arith.mulf %624, %678 : vector<8x16xf32>
    %680 = vector.broadcast %675 : f32 to vector<8x16xf32>
    %681 = arith.mulf %9, %680 : vector<8x16xf32>
    %682 = arith.addf %679, %681 : vector<8x16xf32>
    %683 = vector.broadcast %676 : f32 to vector<8x16xf32>
    %684 = arith.addf %682, %683 : vector<8x16xf32>
    %cst_85 = arith.constant 0.000000e+00 : f32
    %685 = vector.broadcast %cst_85 : f32 to vector<8x16xf32>
    %686 = arith.maximumf %684, %685 : vector<8x16xf32>
    %687 = vector.broadcast %677 : f32 to vector<8x16xf32>
    %688 = arith.mulf %686, %687 : vector<8x16xf32>
    %689 = arith.addf %673, %688 : vector<8x16xf32>
    %c36 = arith.constant 36 : index
    %690 = memref.load %arg13[%c36] : memref<522xf32, #tpu.memory_space<smem>>
    %c52 = arith.constant 52 : index
    %691 = memref.load %arg13[%c52] : memref<522xf32, #tpu.memory_space<smem>>
    %c276 = arith.constant 276 : index
    %692 = memref.load %arg13[%c276] : memref<522xf32, #tpu.memory_space<smem>>
    %c404 = arith.constant 404 : index
    %693 = memref.load %arg13[%c404] : memref<522xf32, #tpu.memory_space<smem>>
    %694 = vector.broadcast %690 : f32 to vector<8x16xf32>
    %695 = arith.mulf %624, %694 : vector<8x16xf32>
    %696 = vector.broadcast %691 : f32 to vector<8x16xf32>
    %697 = arith.mulf %9, %696 : vector<8x16xf32>
    %698 = arith.addf %695, %697 : vector<8x16xf32>
    %699 = vector.broadcast %692 : f32 to vector<8x16xf32>
    %700 = arith.addf %698, %699 : vector<8x16xf32>
    %cst_86 = arith.constant 0.000000e+00 : f32
    %701 = vector.broadcast %cst_86 : f32 to vector<8x16xf32>
    %702 = arith.maximumf %700, %701 : vector<8x16xf32>
    %703 = vector.broadcast %693 : f32 to vector<8x16xf32>
    %704 = arith.mulf %702, %703 : vector<8x16xf32>
    %705 = arith.addf %689, %704 : vector<8x16xf32>
    %c37 = arith.constant 37 : index
    %706 = memref.load %arg13[%c37] : memref<522xf32, #tpu.memory_space<smem>>
    %c53 = arith.constant 53 : index
    %707 = memref.load %arg13[%c53] : memref<522xf32, #tpu.memory_space<smem>>
    %c277 = arith.constant 277 : index
    %708 = memref.load %arg13[%c277] : memref<522xf32, #tpu.memory_space<smem>>
    %c405 = arith.constant 405 : index
    %709 = memref.load %arg13[%c405] : memref<522xf32, #tpu.memory_space<smem>>
    %710 = vector.broadcast %706 : f32 to vector<8x16xf32>
    %711 = arith.mulf %624, %710 : vector<8x16xf32>
    %712 = vector.broadcast %707 : f32 to vector<8x16xf32>
    %713 = arith.mulf %9, %712 : vector<8x16xf32>
    %714 = arith.addf %711, %713 : vector<8x16xf32>
    %715 = vector.broadcast %708 : f32 to vector<8x16xf32>
    %716 = arith.addf %714, %715 : vector<8x16xf32>
    %cst_87 = arith.constant 0.000000e+00 : f32
    %717 = vector.broadcast %cst_87 : f32 to vector<8x16xf32>
    %718 = arith.maximumf %716, %717 : vector<8x16xf32>
    %719 = vector.broadcast %709 : f32 to vector<8x16xf32>
    %720 = arith.mulf %718, %719 : vector<8x16xf32>
    %721 = arith.addf %705, %720 : vector<8x16xf32>
    %c38 = arith.constant 38 : index
    %722 = memref.load %arg13[%c38] : memref<522xf32, #tpu.memory_space<smem>>
    %c54 = arith.constant 54 : index
    %723 = memref.load %arg13[%c54] : memref<522xf32, #tpu.memory_space<smem>>
    %c278 = arith.constant 278 : index
    %724 = memref.load %arg13[%c278] : memref<522xf32, #tpu.memory_space<smem>>
    %c406 = arith.constant 406 : index
    %725 = memref.load %arg13[%c406] : memref<522xf32, #tpu.memory_space<smem>>
    %726 = vector.broadcast %722 : f32 to vector<8x16xf32>
    %727 = arith.mulf %624, %726 : vector<8x16xf32>
    %728 = vector.broadcast %723 : f32 to vector<8x16xf32>
    %729 = arith.mulf %9, %728 : vector<8x16xf32>
    %730 = arith.addf %727, %729 : vector<8x16xf32>
    %731 = vector.broadcast %724 : f32 to vector<8x16xf32>
    %732 = arith.addf %730, %731 : vector<8x16xf32>
    %cst_88 = arith.constant 0.000000e+00 : f32
    %733 = vector.broadcast %cst_88 : f32 to vector<8x16xf32>
    %734 = arith.maximumf %732, %733 : vector<8x16xf32>
    %735 = vector.broadcast %725 : f32 to vector<8x16xf32>
    %736 = arith.mulf %734, %735 : vector<8x16xf32>
    %737 = arith.addf %721, %736 : vector<8x16xf32>
    %c39 = arith.constant 39 : index
    %738 = memref.load %arg13[%c39] : memref<522xf32, #tpu.memory_space<smem>>
    %c55 = arith.constant 55 : index
    %739 = memref.load %arg13[%c55] : memref<522xf32, #tpu.memory_space<smem>>
    %c279 = arith.constant 279 : index
    %740 = memref.load %arg13[%c279] : memref<522xf32, #tpu.memory_space<smem>>
    %c407 = arith.constant 407 : index
    %741 = memref.load %arg13[%c407] : memref<522xf32, #tpu.memory_space<smem>>
    %742 = vector.broadcast %738 : f32 to vector<8x16xf32>
    %743 = arith.mulf %624, %742 : vector<8x16xf32>
    %744 = vector.broadcast %739 : f32 to vector<8x16xf32>
    %745 = arith.mulf %9, %744 : vector<8x16xf32>
    %746 = arith.addf %743, %745 : vector<8x16xf32>
    %747 = vector.broadcast %740 : f32 to vector<8x16xf32>
    %748 = arith.addf %746, %747 : vector<8x16xf32>
    %cst_89 = arith.constant 0.000000e+00 : f32
    %749 = vector.broadcast %cst_89 : f32 to vector<8x16xf32>
    %750 = arith.maximumf %748, %749 : vector<8x16xf32>
    %751 = vector.broadcast %741 : f32 to vector<8x16xf32>
    %752 = arith.mulf %750, %751 : vector<8x16xf32>
    %753 = arith.addf %737, %752 : vector<8x16xf32>
    %c40 = arith.constant 40 : index
    %754 = memref.load %arg13[%c40] : memref<522xf32, #tpu.memory_space<smem>>
    %c56 = arith.constant 56 : index
    %755 = memref.load %arg13[%c56] : memref<522xf32, #tpu.memory_space<smem>>
    %c280 = arith.constant 280 : index
    %756 = memref.load %arg13[%c280] : memref<522xf32, #tpu.memory_space<smem>>
    %c408 = arith.constant 408 : index
    %757 = memref.load %arg13[%c408] : memref<522xf32, #tpu.memory_space<smem>>
    %758 = vector.broadcast %754 : f32 to vector<8x16xf32>
    %759 = arith.mulf %624, %758 : vector<8x16xf32>
    %760 = vector.broadcast %755 : f32 to vector<8x16xf32>
    %761 = arith.mulf %9, %760 : vector<8x16xf32>
    %762 = arith.addf %759, %761 : vector<8x16xf32>
    %763 = vector.broadcast %756 : f32 to vector<8x16xf32>
    %764 = arith.addf %762, %763 : vector<8x16xf32>
    %cst_90 = arith.constant 0.000000e+00 : f32
    %765 = vector.broadcast %cst_90 : f32 to vector<8x16xf32>
    %766 = arith.maximumf %764, %765 : vector<8x16xf32>
    %767 = vector.broadcast %757 : f32 to vector<8x16xf32>
    %768 = arith.mulf %766, %767 : vector<8x16xf32>
    %769 = arith.addf %753, %768 : vector<8x16xf32>
    %c41 = arith.constant 41 : index
    %770 = memref.load %arg13[%c41] : memref<522xf32, #tpu.memory_space<smem>>
    %c57 = arith.constant 57 : index
    %771 = memref.load %arg13[%c57] : memref<522xf32, #tpu.memory_space<smem>>
    %c281 = arith.constant 281 : index
    %772 = memref.load %arg13[%c281] : memref<522xf32, #tpu.memory_space<smem>>
    %c409 = arith.constant 409 : index
    %773 = memref.load %arg13[%c409] : memref<522xf32, #tpu.memory_space<smem>>
    %774 = vector.broadcast %770 : f32 to vector<8x16xf32>
    %775 = arith.mulf %624, %774 : vector<8x16xf32>
    %776 = vector.broadcast %771 : f32 to vector<8x16xf32>
    %777 = arith.mulf %9, %776 : vector<8x16xf32>
    %778 = arith.addf %775, %777 : vector<8x16xf32>
    %779 = vector.broadcast %772 : f32 to vector<8x16xf32>
    %780 = arith.addf %778, %779 : vector<8x16xf32>
    %cst_91 = arith.constant 0.000000e+00 : f32
    %781 = vector.broadcast %cst_91 : f32 to vector<8x16xf32>
    %782 = arith.maximumf %780, %781 : vector<8x16xf32>
    %783 = vector.broadcast %773 : f32 to vector<8x16xf32>
    %784 = arith.mulf %782, %783 : vector<8x16xf32>
    %785 = arith.addf %769, %784 : vector<8x16xf32>
    %c42 = arith.constant 42 : index
    %786 = memref.load %arg13[%c42] : memref<522xf32, #tpu.memory_space<smem>>
    %c58 = arith.constant 58 : index
    %787 = memref.load %arg13[%c58] : memref<522xf32, #tpu.memory_space<smem>>
    %c282 = arith.constant 282 : index
    %788 = memref.load %arg13[%c282] : memref<522xf32, #tpu.memory_space<smem>>
    %c410 = arith.constant 410 : index
    %789 = memref.load %arg13[%c410] : memref<522xf32, #tpu.memory_space<smem>>
    %790 = vector.broadcast %786 : f32 to vector<8x16xf32>
    %791 = arith.mulf %624, %790 : vector<8x16xf32>
    %792 = vector.broadcast %787 : f32 to vector<8x16xf32>
    %793 = arith.mulf %9, %792 : vector<8x16xf32>
    %794 = arith.addf %791, %793 : vector<8x16xf32>
    %795 = vector.broadcast %788 : f32 to vector<8x16xf32>
    %796 = arith.addf %794, %795 : vector<8x16xf32>
    %cst_92 = arith.constant 0.000000e+00 : f32
    %797 = vector.broadcast %cst_92 : f32 to vector<8x16xf32>
    %798 = arith.maximumf %796, %797 : vector<8x16xf32>
    %799 = vector.broadcast %789 : f32 to vector<8x16xf32>
    %800 = arith.mulf %798, %799 : vector<8x16xf32>
    %801 = arith.addf %785, %800 : vector<8x16xf32>
    %c43 = arith.constant 43 : index
    %802 = memref.load %arg13[%c43] : memref<522xf32, #tpu.memory_space<smem>>
    %c59 = arith.constant 59 : index
    %803 = memref.load %arg13[%c59] : memref<522xf32, #tpu.memory_space<smem>>
    %c283 = arith.constant 283 : index
    %804 = memref.load %arg13[%c283] : memref<522xf32, #tpu.memory_space<smem>>
    %c411 = arith.constant 411 : index
    %805 = memref.load %arg13[%c411] : memref<522xf32, #tpu.memory_space<smem>>
    %806 = vector.broadcast %802 : f32 to vector<8x16xf32>
    %807 = arith.mulf %624, %806 : vector<8x16xf32>
    %808 = vector.broadcast %803 : f32 to vector<8x16xf32>
    %809 = arith.mulf %9, %808 : vector<8x16xf32>
    %810 = arith.addf %807, %809 : vector<8x16xf32>
    %811 = vector.broadcast %804 : f32 to vector<8x16xf32>
    %812 = arith.addf %810, %811 : vector<8x16xf32>
    %cst_93 = arith.constant 0.000000e+00 : f32
    %813 = vector.broadcast %cst_93 : f32 to vector<8x16xf32>
    %814 = arith.maximumf %812, %813 : vector<8x16xf32>
    %815 = vector.broadcast %805 : f32 to vector<8x16xf32>
    %816 = arith.mulf %814, %815 : vector<8x16xf32>
    %817 = arith.addf %801, %816 : vector<8x16xf32>
    %c44 = arith.constant 44 : index
    %818 = memref.load %arg13[%c44] : memref<522xf32, #tpu.memory_space<smem>>
    %c60 = arith.constant 60 : index
    %819 = memref.load %arg13[%c60] : memref<522xf32, #tpu.memory_space<smem>>
    %c284 = arith.constant 284 : index
    %820 = memref.load %arg13[%c284] : memref<522xf32, #tpu.memory_space<smem>>
    %c412 = arith.constant 412 : index
    %821 = memref.load %arg13[%c412] : memref<522xf32, #tpu.memory_space<smem>>
    %822 = vector.broadcast %818 : f32 to vector<8x16xf32>
    %823 = arith.mulf %624, %822 : vector<8x16xf32>
    %824 = vector.broadcast %819 : f32 to vector<8x16xf32>
    %825 = arith.mulf %9, %824 : vector<8x16xf32>
    %826 = arith.addf %823, %825 : vector<8x16xf32>
    %827 = vector.broadcast %820 : f32 to vector<8x16xf32>
    %828 = arith.addf %826, %827 : vector<8x16xf32>
    %cst_94 = arith.constant 0.000000e+00 : f32
    %829 = vector.broadcast %cst_94 : f32 to vector<8x16xf32>
    %830 = arith.maximumf %828, %829 : vector<8x16xf32>
    %831 = vector.broadcast %821 : f32 to vector<8x16xf32>
    %832 = arith.mulf %830, %831 : vector<8x16xf32>
    %833 = arith.addf %817, %832 : vector<8x16xf32>
    %c45 = arith.constant 45 : index
    %834 = memref.load %arg13[%c45] : memref<522xf32, #tpu.memory_space<smem>>
    %c61 = arith.constant 61 : index
    %835 = memref.load %arg13[%c61] : memref<522xf32, #tpu.memory_space<smem>>
    %c285 = arith.constant 285 : index
    %836 = memref.load %arg13[%c285] : memref<522xf32, #tpu.memory_space<smem>>
    %c413 = arith.constant 413 : index
    %837 = memref.load %arg13[%c413] : memref<522xf32, #tpu.memory_space<smem>>
    %838 = vector.broadcast %834 : f32 to vector<8x16xf32>
    %839 = arith.mulf %624, %838 : vector<8x16xf32>
    %840 = vector.broadcast %835 : f32 to vector<8x16xf32>
    %841 = arith.mulf %9, %840 : vector<8x16xf32>
    %842 = arith.addf %839, %841 : vector<8x16xf32>
    %843 = vector.broadcast %836 : f32 to vector<8x16xf32>
    %844 = arith.addf %842, %843 : vector<8x16xf32>
    %cst_95 = arith.constant 0.000000e+00 : f32
    %845 = vector.broadcast %cst_95 : f32 to vector<8x16xf32>
    %846 = arith.maximumf %844, %845 : vector<8x16xf32>
    %847 = vector.broadcast %837 : f32 to vector<8x16xf32>
    %848 = arith.mulf %846, %847 : vector<8x16xf32>
    %849 = arith.addf %833, %848 : vector<8x16xf32>
    %c46 = arith.constant 46 : index
    %850 = memref.load %arg13[%c46] : memref<522xf32, #tpu.memory_space<smem>>
    %c62 = arith.constant 62 : index
    %851 = memref.load %arg13[%c62] : memref<522xf32, #tpu.memory_space<smem>>
    %c286 = arith.constant 286 : index
    %852 = memref.load %arg13[%c286] : memref<522xf32, #tpu.memory_space<smem>>
    %c414 = arith.constant 414 : index
    %853 = memref.load %arg13[%c414] : memref<522xf32, #tpu.memory_space<smem>>
    %854 = vector.broadcast %850 : f32 to vector<8x16xf32>
    %855 = arith.mulf %624, %854 : vector<8x16xf32>
    %856 = vector.broadcast %851 : f32 to vector<8x16xf32>
    %857 = arith.mulf %9, %856 : vector<8x16xf32>
    %858 = arith.addf %855, %857 : vector<8x16xf32>
    %859 = vector.broadcast %852 : f32 to vector<8x16xf32>
    %860 = arith.addf %858, %859 : vector<8x16xf32>
    %cst_96 = arith.constant 0.000000e+00 : f32
    %861 = vector.broadcast %cst_96 : f32 to vector<8x16xf32>
    %862 = arith.maximumf %860, %861 : vector<8x16xf32>
    %863 = vector.broadcast %853 : f32 to vector<8x16xf32>
    %864 = arith.mulf %862, %863 : vector<8x16xf32>
    %865 = arith.addf %849, %864 : vector<8x16xf32>
    %c47 = arith.constant 47 : index
    %866 = memref.load %arg13[%c47] : memref<522xf32, #tpu.memory_space<smem>>
    %c63 = arith.constant 63 : index
    %867 = memref.load %arg13[%c63] : memref<522xf32, #tpu.memory_space<smem>>
    %c287 = arith.constant 287 : index
    %868 = memref.load %arg13[%c287] : memref<522xf32, #tpu.memory_space<smem>>
    %c415 = arith.constant 415 : index
    %869 = memref.load %arg13[%c415] : memref<522xf32, #tpu.memory_space<smem>>
    %870 = vector.broadcast %866 : f32 to vector<8x16xf32>
    %871 = arith.mulf %624, %870 : vector<8x16xf32>
    %872 = vector.broadcast %867 : f32 to vector<8x16xf32>
    %873 = arith.mulf %9, %872 : vector<8x16xf32>
    %874 = arith.addf %871, %873 : vector<8x16xf32>
    %875 = vector.broadcast %868 : f32 to vector<8x16xf32>
    %876 = arith.addf %874, %875 : vector<8x16xf32>
    %cst_97 = arith.constant 0.000000e+00 : f32
    %877 = vector.broadcast %cst_97 : f32 to vector<8x16xf32>
    %878 = arith.maximumf %876, %877 : vector<8x16xf32>
    %879 = vector.broadcast %869 : f32 to vector<8x16xf32>
    %880 = arith.mulf %878, %879 : vector<8x16xf32>
    %881 = arith.addf %865, %880 : vector<8x16xf32>
    %c513 = arith.constant 513 : index
    %882 = memref.load %arg13[%c513] : memref<522xf32, #tpu.memory_space<smem>>
    %883 = vector.broadcast %882 : f32 to vector<8x16xf32>
    %884 = arith.addf %881, %883 : vector<8x16xf32>
    %885 = arith.addf %335, %884 : vector<8x16xf32>
    %cst_98 = arith.constant dense<0xFF800000> : vector<8xf32>
    %886 = vector.multi_reduction <maximumf>, %884, %cst_98 [1] : vector<8x16xf32> to vector<8xf32>
    %887 = vector.shape_cast %886 : vector<8xf32> to vector<8x1xf32>
    %888 = vector.broadcast %887 : vector<8x1xf32> to vector<8x16xf32>
    %889 = arith.subf %884, %888 : vector<8x16xf32>
    %890 = math.exp %889 : vector<8x16xf32>
    %cst_99 = arith.constant dense<0.000000e+00> : vector<8xf32>
    %891 = vector.multi_reduction <add>, %890, %cst_99 [1] : vector<8x16xf32> to vector<8xf32>
    %892 = vector.shape_cast %891 : vector<8xf32> to vector<8x1xf32>
    %893 = vector.broadcast %892 : vector<8x1xf32> to vector<8x16xf32>
    %894 = arith.divf %890, %893 : vector<8x16xf32>
    %cst_100 = arith.constant dense<0.000000e+00> : vector<8x32xf32>
    %895 = tpu.matmul %894, %621, %cst_100 {dimension_numbers = #tpu.dot_dimension_numbers<[1], [0], [0], [1], [0, 0, 1, 1], [], []>} : vector<8x16xf32>, vector<16x32xf32>, vector<8x32xf32> -> vector<8x32xf32>
    %896 = arith.addf %346, %895 : vector<8x32xf32>
    %cst_101 = arith.constant dense<0.000000e+00> : vector<8x16xf32>
    %897 = tpu.matmul %35, %622, %cst_101 {dimension_numbers = #tpu.dot_dimension_numbers<[1], [1], [0], [0], [0, 0, 1, 0], [], []>} : vector<8x32xf32>, vector<16x32xf32>, vector<8x16xf32> -> vector<8x16xf32>
    %cst_102 = arith.constant 0.000000e+00 : f32
    %898 = vector.broadcast %cst_102 : f32 to vector<8x16xf32>
    %c160 = arith.constant 160 : index
    %899 = memref.load %arg13[%c160] : memref<522xf32, #tpu.memory_space<smem>>
    %c176 = arith.constant 176 : index
    %900 = memref.load %arg13[%c176] : memref<522xf32, #tpu.memory_space<smem>>
    %c336 = arith.constant 336 : index
    %901 = memref.load %arg13[%c336] : memref<522xf32, #tpu.memory_space<smem>>
    %c464 = arith.constant 464 : index
    %902 = memref.load %arg13[%c464] : memref<522xf32, #tpu.memory_space<smem>>
    %903 = vector.broadcast %899 : f32 to vector<8x16xf32>
    %904 = arith.mulf %897, %903 : vector<8x16xf32>
    %905 = vector.broadcast %900 : f32 to vector<8x16xf32>
    %906 = arith.mulf %9, %905 : vector<8x16xf32>
    %907 = arith.addf %904, %906 : vector<8x16xf32>
    %908 = vector.broadcast %901 : f32 to vector<8x16xf32>
    %909 = arith.addf %907, %908 : vector<8x16xf32>
    %cst_103 = arith.constant 0.000000e+00 : f32
    %910 = vector.broadcast %cst_103 : f32 to vector<8x16xf32>
    %911 = arith.maximumf %909, %910 : vector<8x16xf32>
    %912 = vector.broadcast %902 : f32 to vector<8x16xf32>
    %913 = arith.mulf %911, %912 : vector<8x16xf32>
    %914 = arith.addf %898, %913 : vector<8x16xf32>
    %c161 = arith.constant 161 : index
    %915 = memref.load %arg13[%c161] : memref<522xf32, #tpu.memory_space<smem>>
    %c177 = arith.constant 177 : index
    %916 = memref.load %arg13[%c177] : memref<522xf32, #tpu.memory_space<smem>>
    %c337 = arith.constant 337 : index
    %917 = memref.load %arg13[%c337] : memref<522xf32, #tpu.memory_space<smem>>
    %c465 = arith.constant 465 : index
    %918 = memref.load %arg13[%c465] : memref<522xf32, #tpu.memory_space<smem>>
    %919 = vector.broadcast %915 : f32 to vector<8x16xf32>
    %920 = arith.mulf %897, %919 : vector<8x16xf32>
    %921 = vector.broadcast %916 : f32 to vector<8x16xf32>
    %922 = arith.mulf %9, %921 : vector<8x16xf32>
    %923 = arith.addf %920, %922 : vector<8x16xf32>
    %924 = vector.broadcast %917 : f32 to vector<8x16xf32>
    %925 = arith.addf %923, %924 : vector<8x16xf32>
    %cst_104 = arith.constant 0.000000e+00 : f32
    %926 = vector.broadcast %cst_104 : f32 to vector<8x16xf32>
    %927 = arith.maximumf %925, %926 : vector<8x16xf32>
    %928 = vector.broadcast %918 : f32 to vector<8x16xf32>
    %929 = arith.mulf %927, %928 : vector<8x16xf32>
    %930 = arith.addf %914, %929 : vector<8x16xf32>
    %c162 = arith.constant 162 : index
    %931 = memref.load %arg13[%c162] : memref<522xf32, #tpu.memory_space<smem>>
    %c178 = arith.constant 178 : index
    %932 = memref.load %arg13[%c178] : memref<522xf32, #tpu.memory_space<smem>>
    %c338 = arith.constant 338 : index
    %933 = memref.load %arg13[%c338] : memref<522xf32, #tpu.memory_space<smem>>
    %c466 = arith.constant 466 : index
    %934 = memref.load %arg13[%c466] : memref<522xf32, #tpu.memory_space<smem>>
    %935 = vector.broadcast %931 : f32 to vector<8x16xf32>
    %936 = arith.mulf %897, %935 : vector<8x16xf32>
    %937 = vector.broadcast %932 : f32 to vector<8x16xf32>
    %938 = arith.mulf %9, %937 : vector<8x16xf32>
    %939 = arith.addf %936, %938 : vector<8x16xf32>
    %940 = vector.broadcast %933 : f32 to vector<8x16xf32>
    %941 = arith.addf %939, %940 : vector<8x16xf32>
    %cst_105 = arith.constant 0.000000e+00 : f32
    %942 = vector.broadcast %cst_105 : f32 to vector<8x16xf32>
    %943 = arith.maximumf %941, %942 : vector<8x16xf32>
    %944 = vector.broadcast %934 : f32 to vector<8x16xf32>
    %945 = arith.mulf %943, %944 : vector<8x16xf32>
    %946 = arith.addf %930, %945 : vector<8x16xf32>
    %c163 = arith.constant 163 : index
    %947 = memref.load %arg13[%c163] : memref<522xf32, #tpu.memory_space<smem>>
    %c179 = arith.constant 179 : index
    %948 = memref.load %arg13[%c179] : memref<522xf32, #tpu.memory_space<smem>>
    %c339 = arith.constant 339 : index
    %949 = memref.load %arg13[%c339] : memref<522xf32, #tpu.memory_space<smem>>
    %c467 = arith.constant 467 : index
    %950 = memref.load %arg13[%c467] : memref<522xf32, #tpu.memory_space<smem>>
    %951 = vector.broadcast %947 : f32 to vector<8x16xf32>
    %952 = arith.mulf %897, %951 : vector<8x16xf32>
    %953 = vector.broadcast %948 : f32 to vector<8x16xf32>
    %954 = arith.mulf %9, %953 : vector<8x16xf32>
    %955 = arith.addf %952, %954 : vector<8x16xf32>
    %956 = vector.broadcast %949 : f32 to vector<8x16xf32>
    %957 = arith.addf %955, %956 : vector<8x16xf32>
    %cst_106 = arith.constant 0.000000e+00 : f32
    %958 = vector.broadcast %cst_106 : f32 to vector<8x16xf32>
    %959 = arith.maximumf %957, %958 : vector<8x16xf32>
    %960 = vector.broadcast %950 : f32 to vector<8x16xf32>
    %961 = arith.mulf %959, %960 : vector<8x16xf32>
    %962 = arith.addf %946, %961 : vector<8x16xf32>
    %c164 = arith.constant 164 : index
    %963 = memref.load %arg13[%c164] : memref<522xf32, #tpu.memory_space<smem>>
    %c180 = arith.constant 180 : index
    %964 = memref.load %arg13[%c180] : memref<522xf32, #tpu.memory_space<smem>>
    %c340 = arith.constant 340 : index
    %965 = memref.load %arg13[%c340] : memref<522xf32, #tpu.memory_space<smem>>
    %c468 = arith.constant 468 : index
    %966 = memref.load %arg13[%c468] : memref<522xf32, #tpu.memory_space<smem>>
    %967 = vector.broadcast %963 : f32 to vector<8x16xf32>
    %968 = arith.mulf %897, %967 : vector<8x16xf32>
    %969 = vector.broadcast %964 : f32 to vector<8x16xf32>
    %970 = arith.mulf %9, %969 : vector<8x16xf32>
    %971 = arith.addf %968, %970 : vector<8x16xf32>
    %972 = vector.broadcast %965 : f32 to vector<8x16xf32>
    %973 = arith.addf %971, %972 : vector<8x16xf32>
    %cst_107 = arith.constant 0.000000e+00 : f32
    %974 = vector.broadcast %cst_107 : f32 to vector<8x16xf32>
    %975 = arith.maximumf %973, %974 : vector<8x16xf32>
    %976 = vector.broadcast %966 : f32 to vector<8x16xf32>
    %977 = arith.mulf %975, %976 : vector<8x16xf32>
    %978 = arith.addf %962, %977 : vector<8x16xf32>
    %c165 = arith.constant 165 : index
    %979 = memref.load %arg13[%c165] : memref<522xf32, #tpu.memory_space<smem>>
    %c181 = arith.constant 181 : index
    %980 = memref.load %arg13[%c181] : memref<522xf32, #tpu.memory_space<smem>>
    %c341 = arith.constant 341 : index
    %981 = memref.load %arg13[%c341] : memref<522xf32, #tpu.memory_space<smem>>
    %c469 = arith.constant 469 : index
    %982 = memref.load %arg13[%c469] : memref<522xf32, #tpu.memory_space<smem>>
    %983 = vector.broadcast %979 : f32 to vector<8x16xf32>
    %984 = arith.mulf %897, %983 : vector<8x16xf32>
    %985 = vector.broadcast %980 : f32 to vector<8x16xf32>
    %986 = arith.mulf %9, %985 : vector<8x16xf32>
    %987 = arith.addf %984, %986 : vector<8x16xf32>
    %988 = vector.broadcast %981 : f32 to vector<8x16xf32>
    %989 = arith.addf %987, %988 : vector<8x16xf32>
    %cst_108 = arith.constant 0.000000e+00 : f32
    %990 = vector.broadcast %cst_108 : f32 to vector<8x16xf32>
    %991 = arith.maximumf %989, %990 : vector<8x16xf32>
    %992 = vector.broadcast %982 : f32 to vector<8x16xf32>
    %993 = arith.mulf %991, %992 : vector<8x16xf32>
    %994 = arith.addf %978, %993 : vector<8x16xf32>
    %c166 = arith.constant 166 : index
    %995 = memref.load %arg13[%c166] : memref<522xf32, #tpu.memory_space<smem>>
    %c182 = arith.constant 182 : index
    %996 = memref.load %arg13[%c182] : memref<522xf32, #tpu.memory_space<smem>>
    %c342 = arith.constant 342 : index
    %997 = memref.load %arg13[%c342] : memref<522xf32, #tpu.memory_space<smem>>
    %c470 = arith.constant 470 : index
    %998 = memref.load %arg13[%c470] : memref<522xf32, #tpu.memory_space<smem>>
    %999 = vector.broadcast %995 : f32 to vector<8x16xf32>
    %1000 = arith.mulf %897, %999 : vector<8x16xf32>
    %1001 = vector.broadcast %996 : f32 to vector<8x16xf32>
    %1002 = arith.mulf %9, %1001 : vector<8x16xf32>
    %1003 = arith.addf %1000, %1002 : vector<8x16xf32>
    %1004 = vector.broadcast %997 : f32 to vector<8x16xf32>
    %1005 = arith.addf %1003, %1004 : vector<8x16xf32>
    %cst_109 = arith.constant 0.000000e+00 : f32
    %1006 = vector.broadcast %cst_109 : f32 to vector<8x16xf32>
    %1007 = arith.maximumf %1005, %1006 : vector<8x16xf32>
    %1008 = vector.broadcast %998 : f32 to vector<8x16xf32>
    %1009 = arith.mulf %1007, %1008 : vector<8x16xf32>
    %1010 = arith.addf %994, %1009 : vector<8x16xf32>
    %c167 = arith.constant 167 : index
    %1011 = memref.load %arg13[%c167] : memref<522xf32, #tpu.memory_space<smem>>
    %c183 = arith.constant 183 : index
    %1012 = memref.load %arg13[%c183] : memref<522xf32, #tpu.memory_space<smem>>
    %c343 = arith.constant 343 : index
    %1013 = memref.load %arg13[%c343] : memref<522xf32, #tpu.memory_space<smem>>
    %c471 = arith.constant 471 : index
    %1014 = memref.load %arg13[%c471] : memref<522xf32, #tpu.memory_space<smem>>
    %1015 = vector.broadcast %1011 : f32 to vector<8x16xf32>
    %1016 = arith.mulf %897, %1015 : vector<8x16xf32>
    %1017 = vector.broadcast %1012 : f32 to vector<8x16xf32>
    %1018 = arith.mulf %9, %1017 : vector<8x16xf32>
    %1019 = arith.addf %1016, %1018 : vector<8x16xf32>
    %1020 = vector.broadcast %1013 : f32 to vector<8x16xf32>
    %1021 = arith.addf %1019, %1020 : vector<8x16xf32>
    %cst_110 = arith.constant 0.000000e+00 : f32
    %1022 = vector.broadcast %cst_110 : f32 to vector<8x16xf32>
    %1023 = arith.maximumf %1021, %1022 : vector<8x16xf32>
    %1024 = vector.broadcast %1014 : f32 to vector<8x16xf32>
    %1025 = arith.mulf %1023, %1024 : vector<8x16xf32>
    %1026 = arith.addf %1010, %1025 : vector<8x16xf32>
    %c168 = arith.constant 168 : index
    %1027 = memref.load %arg13[%c168] : memref<522xf32, #tpu.memory_space<smem>>
    %c184 = arith.constant 184 : index
    %1028 = memref.load %arg13[%c184] : memref<522xf32, #tpu.memory_space<smem>>
    %c344 = arith.constant 344 : index
    %1029 = memref.load %arg13[%c344] : memref<522xf32, #tpu.memory_space<smem>>
    %c472 = arith.constant 472 : index
    %1030 = memref.load %arg13[%c472] : memref<522xf32, #tpu.memory_space<smem>>
    %1031 = vector.broadcast %1027 : f32 to vector<8x16xf32>
    %1032 = arith.mulf %897, %1031 : vector<8x16xf32>
    %1033 = vector.broadcast %1028 : f32 to vector<8x16xf32>
    %1034 = arith.mulf %9, %1033 : vector<8x16xf32>
    %1035 = arith.addf %1032, %1034 : vector<8x16xf32>
    %1036 = vector.broadcast %1029 : f32 to vector<8x16xf32>
    %1037 = arith.addf %1035, %1036 : vector<8x16xf32>
    %cst_111 = arith.constant 0.000000e+00 : f32
    %1038 = vector.broadcast %cst_111 : f32 to vector<8x16xf32>
    %1039 = arith.maximumf %1037, %1038 : vector<8x16xf32>
    %1040 = vector.broadcast %1030 : f32 to vector<8x16xf32>
    %1041 = arith.mulf %1039, %1040 : vector<8x16xf32>
    %1042 = arith.addf %1026, %1041 : vector<8x16xf32>
    %c169 = arith.constant 169 : index
    %1043 = memref.load %arg13[%c169] : memref<522xf32, #tpu.memory_space<smem>>
    %c185 = arith.constant 185 : index
    %1044 = memref.load %arg13[%c185] : memref<522xf32, #tpu.memory_space<smem>>
    %c345 = arith.constant 345 : index
    %1045 = memref.load %arg13[%c345] : memref<522xf32, #tpu.memory_space<smem>>
    %c473 = arith.constant 473 : index
    %1046 = memref.load %arg13[%c473] : memref<522xf32, #tpu.memory_space<smem>>
    %1047 = vector.broadcast %1043 : f32 to vector<8x16xf32>
    %1048 = arith.mulf %897, %1047 : vector<8x16xf32>
    %1049 = vector.broadcast %1044 : f32 to vector<8x16xf32>
    %1050 = arith.mulf %9, %1049 : vector<8x16xf32>
    %1051 = arith.addf %1048, %1050 : vector<8x16xf32>
    %1052 = vector.broadcast %1045 : f32 to vector<8x16xf32>
    %1053 = arith.addf %1051, %1052 : vector<8x16xf32>
    %cst_112 = arith.constant 0.000000e+00 : f32
    %1054 = vector.broadcast %cst_112 : f32 to vector<8x16xf32>
    %1055 = arith.maximumf %1053, %1054 : vector<8x16xf32>
    %1056 = vector.broadcast %1046 : f32 to vector<8x16xf32>
    %1057 = arith.mulf %1055, %1056 : vector<8x16xf32>
    %1058 = arith.addf %1042, %1057 : vector<8x16xf32>
    %c170 = arith.constant 170 : index
    %1059 = memref.load %arg13[%c170] : memref<522xf32, #tpu.memory_space<smem>>
    %c186 = arith.constant 186 : index
    %1060 = memref.load %arg13[%c186] : memref<522xf32, #tpu.memory_space<smem>>
    %c346 = arith.constant 346 : index
    %1061 = memref.load %arg13[%c346] : memref<522xf32, #tpu.memory_space<smem>>
    %c474 = arith.constant 474 : index
    %1062 = memref.load %arg13[%c474] : memref<522xf32, #tpu.memory_space<smem>>
    %1063 = vector.broadcast %1059 : f32 to vector<8x16xf32>
    %1064 = arith.mulf %897, %1063 : vector<8x16xf32>
    %1065 = vector.broadcast %1060 : f32 to vector<8x16xf32>
    %1066 = arith.mulf %9, %1065 : vector<8x16xf32>
    %1067 = arith.addf %1064, %1066 : vector<8x16xf32>
    %1068 = vector.broadcast %1061 : f32 to vector<8x16xf32>
    %1069 = arith.addf %1067, %1068 : vector<8x16xf32>
    %cst_113 = arith.constant 0.000000e+00 : f32
    %1070 = vector.broadcast %cst_113 : f32 to vector<8x16xf32>
    %1071 = arith.maximumf %1069, %1070 : vector<8x16xf32>
    %1072 = vector.broadcast %1062 : f32 to vector<8x16xf32>
    %1073 = arith.mulf %1071, %1072 : vector<8x16xf32>
    %1074 = arith.addf %1058, %1073 : vector<8x16xf32>
    %c171 = arith.constant 171 : index
    %1075 = memref.load %arg13[%c171] : memref<522xf32, #tpu.memory_space<smem>>
    %c187 = arith.constant 187 : index
    %1076 = memref.load %arg13[%c187] : memref<522xf32, #tpu.memory_space<smem>>
    %c347 = arith.constant 347 : index
    %1077 = memref.load %arg13[%c347] : memref<522xf32, #tpu.memory_space<smem>>
    %c475 = arith.constant 475 : index
    %1078 = memref.load %arg13[%c475] : memref<522xf32, #tpu.memory_space<smem>>
    %1079 = vector.broadcast %1075 : f32 to vector<8x16xf32>
    %1080 = arith.mulf %897, %1079 : vector<8x16xf32>
    %1081 = vector.broadcast %1076 : f32 to vector<8x16xf32>
    %1082 = arith.mulf %9, %1081 : vector<8x16xf32>
    %1083 = arith.addf %1080, %1082 : vector<8x16xf32>
    %1084 = vector.broadcast %1077 : f32 to vector<8x16xf32>
    %1085 = arith.addf %1083, %1084 : vector<8x16xf32>
    %cst_114 = arith.constant 0.000000e+00 : f32
    %1086 = vector.broadcast %cst_114 : f32 to vector<8x16xf32>
    %1087 = arith.maximumf %1085, %1086 : vector<8x16xf32>
    %1088 = vector.broadcast %1078 : f32 to vector<8x16xf32>
    %1089 = arith.mulf %1087, %1088 : vector<8x16xf32>
    %1090 = arith.addf %1074, %1089 : vector<8x16xf32>
    %c172 = arith.constant 172 : index
    %1091 = memref.load %arg13[%c172] : memref<522xf32, #tpu.memory_space<smem>>
    %c188 = arith.constant 188 : index
    %1092 = memref.load %arg13[%c188] : memref<522xf32, #tpu.memory_space<smem>>
    %c348 = arith.constant 348 : index
    %1093 = memref.load %arg13[%c348] : memref<522xf32, #tpu.memory_space<smem>>
    %c476 = arith.constant 476 : index
    %1094 = memref.load %arg13[%c476] : memref<522xf32, #tpu.memory_space<smem>>
    %1095 = vector.broadcast %1091 : f32 to vector<8x16xf32>
    %1096 = arith.mulf %897, %1095 : vector<8x16xf32>
    %1097 = vector.broadcast %1092 : f32 to vector<8x16xf32>
    %1098 = arith.mulf %9, %1097 : vector<8x16xf32>
    %1099 = arith.addf %1096, %1098 : vector<8x16xf32>
    %1100 = vector.broadcast %1093 : f32 to vector<8x16xf32>
    %1101 = arith.addf %1099, %1100 : vector<8x16xf32>
    %cst_115 = arith.constant 0.000000e+00 : f32
    %1102 = vector.broadcast %cst_115 : f32 to vector<8x16xf32>
    %1103 = arith.maximumf %1101, %1102 : vector<8x16xf32>
    %1104 = vector.broadcast %1094 : f32 to vector<8x16xf32>
    %1105 = arith.mulf %1103, %1104 : vector<8x16xf32>
    %1106 = arith.addf %1090, %1105 : vector<8x16xf32>
    %c173 = arith.constant 173 : index
    %1107 = memref.load %arg13[%c173] : memref<522xf32, #tpu.memory_space<smem>>
    %c189 = arith.constant 189 : index
    %1108 = memref.load %arg13[%c189] : memref<522xf32, #tpu.memory_space<smem>>
    %c349 = arith.constant 349 : index
    %1109 = memref.load %arg13[%c349] : memref<522xf32, #tpu.memory_space<smem>>
    %c477 = arith.constant 477 : index
    %1110 = memref.load %arg13[%c477] : memref<522xf32, #tpu.memory_space<smem>>
    %1111 = vector.broadcast %1107 : f32 to vector<8x16xf32>
    %1112 = arith.mulf %897, %1111 : vector<8x16xf32>
    %1113 = vector.broadcast %1108 : f32 to vector<8x16xf32>
    %1114 = arith.mulf %9, %1113 : vector<8x16xf32>
    %1115 = arith.addf %1112, %1114 : vector<8x16xf32>
    %1116 = vector.broadcast %1109 : f32 to vector<8x16xf32>
    %1117 = arith.addf %1115, %1116 : vector<8x16xf32>
    %cst_116 = arith.constant 0.000000e+00 : f32
    %1118 = vector.broadcast %cst_116 : f32 to vector<8x16xf32>
    %1119 = arith.maximumf %1117, %1118 : vector<8x16xf32>
    %1120 = vector.broadcast %1110 : f32 to vector<8x16xf32>
    %1121 = arith.mulf %1119, %1120 : vector<8x16xf32>
    %1122 = arith.addf %1106, %1121 : vector<8x16xf32>
    %c174 = arith.constant 174 : index
    %1123 = memref.load %arg13[%c174] : memref<522xf32, #tpu.memory_space<smem>>
    %c190 = arith.constant 190 : index
    %1124 = memref.load %arg13[%c190] : memref<522xf32, #tpu.memory_space<smem>>
    %c350 = arith.constant 350 : index
    %1125 = memref.load %arg13[%c350] : memref<522xf32, #tpu.memory_space<smem>>
    %c478 = arith.constant 478 : index
    %1126 = memref.load %arg13[%c478] : memref<522xf32, #tpu.memory_space<smem>>
    %1127 = vector.broadcast %1123 : f32 to vector<8x16xf32>
    %1128 = arith.mulf %897, %1127 : vector<8x16xf32>
    %1129 = vector.broadcast %1124 : f32 to vector<8x16xf32>
    %1130 = arith.mulf %9, %1129 : vector<8x16xf32>
    %1131 = arith.addf %1128, %1130 : vector<8x16xf32>
    %1132 = vector.broadcast %1125 : f32 to vector<8x16xf32>
    %1133 = arith.addf %1131, %1132 : vector<8x16xf32>
    %cst_117 = arith.constant 0.000000e+00 : f32
    %1134 = vector.broadcast %cst_117 : f32 to vector<8x16xf32>
    %1135 = arith.maximumf %1133, %1134 : vector<8x16xf32>
    %1136 = vector.broadcast %1126 : f32 to vector<8x16xf32>
    %1137 = arith.mulf %1135, %1136 : vector<8x16xf32>
    %1138 = arith.addf %1122, %1137 : vector<8x16xf32>
    %c175 = arith.constant 175 : index
    %1139 = memref.load %arg13[%c175] : memref<522xf32, #tpu.memory_space<smem>>
    %c191 = arith.constant 191 : index
    %1140 = memref.load %arg13[%c191] : memref<522xf32, #tpu.memory_space<smem>>
    %c351 = arith.constant 351 : index
    %1141 = memref.load %arg13[%c351] : memref<522xf32, #tpu.memory_space<smem>>
    %c479 = arith.constant 479 : index
    %1142 = memref.load %arg13[%c479] : memref<522xf32, #tpu.memory_space<smem>>
    %1143 = vector.broadcast %1139 : f32 to vector<8x16xf32>
    %1144 = arith.mulf %897, %1143 : vector<8x16xf32>
    %1145 = vector.broadcast %1140 : f32 to vector<8x16xf32>
    %1146 = arith.mulf %9, %1145 : vector<8x16xf32>
    %1147 = arith.addf %1144, %1146 : vector<8x16xf32>
    %1148 = vector.broadcast %1141 : f32 to vector<8x16xf32>
    %1149 = arith.addf %1147, %1148 : vector<8x16xf32>
    %cst_118 = arith.constant 0.000000e+00 : f32
    %1150 = vector.broadcast %cst_118 : f32 to vector<8x16xf32>
    %1151 = arith.maximumf %1149, %1150 : vector<8x16xf32>
    %1152 = vector.broadcast %1142 : f32 to vector<8x16xf32>
    %1153 = arith.mulf %1151, %1152 : vector<8x16xf32>
    %1154 = arith.addf %1138, %1153 : vector<8x16xf32>
    %c517 = arith.constant 517 : index
    %1155 = memref.load %arg13[%c517] : memref<522xf32, #tpu.memory_space<smem>>
    %1156 = vector.broadcast %1155 : f32 to vector<8x16xf32>
    %1157 = arith.addf %1154, %1156 : vector<8x16xf32>
    %1158 = arith.addf %608, %1157 : vector<8x16xf32>
    %cst_119 = arith.constant dense<0xFF800000> : vector<16xf32>
    %1159 = vector.multi_reduction <maximumf>, %1157, %cst_119 [0] : vector<8x16xf32> to vector<16xf32>
    %1160 = vector.shape_cast %1159 : vector<16xf32> to vector<1x16xf32>
    %1161 = vector.broadcast %1160 : vector<1x16xf32> to vector<8x16xf32>
    %1162 = arith.subf %1157, %1161 : vector<8x16xf32>
    %1163 = math.exp %1162 : vector<8x16xf32>
    %cst_120 = arith.constant dense<0.000000e+00> : vector<16xf32>
    %1164 = vector.multi_reduction <add>, %1163, %cst_120 [0] : vector<8x16xf32> to vector<16xf32>
    %1165 = vector.shape_cast %1164 : vector<16xf32> to vector<1x16xf32>
    %1166 = vector.broadcast %1165 : vector<1x16xf32> to vector<8x16xf32>
    %1167 = arith.divf %1163, %1166 : vector<8x16xf32>
    %cst_121 = arith.constant dense<0.000000e+00> : vector<16x32xf32>
    %1168 = tpu.matmul %1167, %623, %cst_121 {dimension_numbers = #tpu.dot_dimension_numbers<[0], [0], [1], [1], [0, 1, 1, 1], [], []>} : vector<8x16xf32>, vector<8x32xf32>, vector<16x32xf32> -> vector<16x32xf32>
    %1169 = arith.addf %619, %1168 : vector<16x32xf32>
    %1170 = vector.extract_strided_slice %63 {offsets = [0, 64], sizes = [8, 32], strides = [1, 1]} : vector<8x256xf32> to vector<8x32xf32>
    %1171 = vector.extract_strided_slice %65 {offsets = [0, 192], sizes = [16, 32], strides = [1, 1]} : vector<16x256xf32> to vector<16x32xf32>
    %1172 = vector.extract_strided_slice %65 {offsets = [0, 64], sizes = [16, 32], strides = [1, 1]} : vector<16x256xf32> to vector<16x32xf32>
    %1173 = vector.extract_strided_slice %63 {offsets = [0, 192], sizes = [8, 32], strides = [1, 1]} : vector<8x256xf32> to vector<8x32xf32>
    %cst_122 = arith.constant dense<0.000000e+00> : vector<8x16xf32>
    %1174 = tpu.matmul %1170, %61, %cst_122 {dimension_numbers = #tpu.dot_dimension_numbers<[1], [1], [0], [0], [0, 0, 1, 0], [], []>} : vector<8x32xf32>, vector<16x32xf32>, vector<8x16xf32> -> vector<8x16xf32>
    %cst_123 = arith.constant 0.000000e+00 : f32
    %1175 = vector.broadcast %cst_123 : f32 to vector<8x16xf32>
    %c64 = arith.constant 64 : index
    %1176 = memref.load %arg13[%c64] : memref<522xf32, #tpu.memory_space<smem>>
    %c80 = arith.constant 80 : index
    %1177 = memref.load %arg13[%c80] : memref<522xf32, #tpu.memory_space<smem>>
    %c288 = arith.constant 288 : index
    %1178 = memref.load %arg13[%c288] : memref<522xf32, #tpu.memory_space<smem>>
    %c416 = arith.constant 416 : index
    %1179 = memref.load %arg13[%c416] : memref<522xf32, #tpu.memory_space<smem>>
    %1180 = vector.broadcast %1176 : f32 to vector<8x16xf32>
    %1181 = arith.mulf %1174, %1180 : vector<8x16xf32>
    %1182 = vector.broadcast %1177 : f32 to vector<8x16xf32>
    %1183 = arith.mulf %9, %1182 : vector<8x16xf32>
    %1184 = arith.addf %1181, %1183 : vector<8x16xf32>
    %1185 = vector.broadcast %1178 : f32 to vector<8x16xf32>
    %1186 = arith.addf %1184, %1185 : vector<8x16xf32>
    %cst_124 = arith.constant 0.000000e+00 : f32
    %1187 = vector.broadcast %cst_124 : f32 to vector<8x16xf32>
    %1188 = arith.maximumf %1186, %1187 : vector<8x16xf32>
    %1189 = vector.broadcast %1179 : f32 to vector<8x16xf32>
    %1190 = arith.mulf %1188, %1189 : vector<8x16xf32>
    %1191 = arith.addf %1175, %1190 : vector<8x16xf32>
    %c65 = arith.constant 65 : index
    %1192 = memref.load %arg13[%c65] : memref<522xf32, #tpu.memory_space<smem>>
    %c81 = arith.constant 81 : index
    %1193 = memref.load %arg13[%c81] : memref<522xf32, #tpu.memory_space<smem>>
    %c289 = arith.constant 289 : index
    %1194 = memref.load %arg13[%c289] : memref<522xf32, #tpu.memory_space<smem>>
    %c417 = arith.constant 417 : index
    %1195 = memref.load %arg13[%c417] : memref<522xf32, #tpu.memory_space<smem>>
    %1196 = vector.broadcast %1192 : f32 to vector<8x16xf32>
    %1197 = arith.mulf %1174, %1196 : vector<8x16xf32>
    %1198 = vector.broadcast %1193 : f32 to vector<8x16xf32>
    %1199 = arith.mulf %9, %1198 : vector<8x16xf32>
    %1200 = arith.addf %1197, %1199 : vector<8x16xf32>
    %1201 = vector.broadcast %1194 : f32 to vector<8x16xf32>
    %1202 = arith.addf %1200, %1201 : vector<8x16xf32>
    %cst_125 = arith.constant 0.000000e+00 : f32
    %1203 = vector.broadcast %cst_125 : f32 to vector<8x16xf32>
    %1204 = arith.maximumf %1202, %1203 : vector<8x16xf32>
    %1205 = vector.broadcast %1195 : f32 to vector<8x16xf32>
    %1206 = arith.mulf %1204, %1205 : vector<8x16xf32>
    %1207 = arith.addf %1191, %1206 : vector<8x16xf32>
    %c66 = arith.constant 66 : index
    %1208 = memref.load %arg13[%c66] : memref<522xf32, #tpu.memory_space<smem>>
    %c82 = arith.constant 82 : index
    %1209 = memref.load %arg13[%c82] : memref<522xf32, #tpu.memory_space<smem>>
    %c290 = arith.constant 290 : index
    %1210 = memref.load %arg13[%c290] : memref<522xf32, #tpu.memory_space<smem>>
    %c418 = arith.constant 418 : index
    %1211 = memref.load %arg13[%c418] : memref<522xf32, #tpu.memory_space<smem>>
    %1212 = vector.broadcast %1208 : f32 to vector<8x16xf32>
    %1213 = arith.mulf %1174, %1212 : vector<8x16xf32>
    %1214 = vector.broadcast %1209 : f32 to vector<8x16xf32>
    %1215 = arith.mulf %9, %1214 : vector<8x16xf32>
    %1216 = arith.addf %1213, %1215 : vector<8x16xf32>
    %1217 = vector.broadcast %1210 : f32 to vector<8x16xf32>
    %1218 = arith.addf %1216, %1217 : vector<8x16xf32>
    %cst_126 = arith.constant 0.000000e+00 : f32
    %1219 = vector.broadcast %cst_126 : f32 to vector<8x16xf32>
    %1220 = arith.maximumf %1218, %1219 : vector<8x16xf32>
    %1221 = vector.broadcast %1211 : f32 to vector<8x16xf32>
    %1222 = arith.mulf %1220, %1221 : vector<8x16xf32>
    %1223 = arith.addf %1207, %1222 : vector<8x16xf32>
    %c67 = arith.constant 67 : index
    %1224 = memref.load %arg13[%c67] : memref<522xf32, #tpu.memory_space<smem>>
    %c83 = arith.constant 83 : index
    %1225 = memref.load %arg13[%c83] : memref<522xf32, #tpu.memory_space<smem>>
    %c291 = arith.constant 291 : index
    %1226 = memref.load %arg13[%c291] : memref<522xf32, #tpu.memory_space<smem>>
    %c419 = arith.constant 419 : index
    %1227 = memref.load %arg13[%c419] : memref<522xf32, #tpu.memory_space<smem>>
    %1228 = vector.broadcast %1224 : f32 to vector<8x16xf32>
    %1229 = arith.mulf %1174, %1228 : vector<8x16xf32>
    %1230 = vector.broadcast %1225 : f32 to vector<8x16xf32>
    %1231 = arith.mulf %9, %1230 : vector<8x16xf32>
    %1232 = arith.addf %1229, %1231 : vector<8x16xf32>
    %1233 = vector.broadcast %1226 : f32 to vector<8x16xf32>
    %1234 = arith.addf %1232, %1233 : vector<8x16xf32>
    %cst_127 = arith.constant 0.000000e+00 : f32
    %1235 = vector.broadcast %cst_127 : f32 to vector<8x16xf32>
    %1236 = arith.maximumf %1234, %1235 : vector<8x16xf32>
    %1237 = vector.broadcast %1227 : f32 to vector<8x16xf32>
    %1238 = arith.mulf %1236, %1237 : vector<8x16xf32>
    %1239 = arith.addf %1223, %1238 : vector<8x16xf32>
    %c68 = arith.constant 68 : index
    %1240 = memref.load %arg13[%c68] : memref<522xf32, #tpu.memory_space<smem>>
    %c84 = arith.constant 84 : index
    %1241 = memref.load %arg13[%c84] : memref<522xf32, #tpu.memory_space<smem>>
    %c292 = arith.constant 292 : index
    %1242 = memref.load %arg13[%c292] : memref<522xf32, #tpu.memory_space<smem>>
    %c420 = arith.constant 420 : index
    %1243 = memref.load %arg13[%c420] : memref<522xf32, #tpu.memory_space<smem>>
    %1244 = vector.broadcast %1240 : f32 to vector<8x16xf32>
    %1245 = arith.mulf %1174, %1244 : vector<8x16xf32>
    %1246 = vector.broadcast %1241 : f32 to vector<8x16xf32>
    %1247 = arith.mulf %9, %1246 : vector<8x16xf32>
    %1248 = arith.addf %1245, %1247 : vector<8x16xf32>
    %1249 = vector.broadcast %1242 : f32 to vector<8x16xf32>
    %1250 = arith.addf %1248, %1249 : vector<8x16xf32>
    %cst_128 = arith.constant 0.000000e+00 : f32
    %1251 = vector.broadcast %cst_128 : f32 to vector<8x16xf32>
    %1252 = arith.maximumf %1250, %1251 : vector<8x16xf32>
    %1253 = vector.broadcast %1243 : f32 to vector<8x16xf32>
    %1254 = arith.mulf %1252, %1253 : vector<8x16xf32>
    %1255 = arith.addf %1239, %1254 : vector<8x16xf32>
    %c69 = arith.constant 69 : index
    %1256 = memref.load %arg13[%c69] : memref<522xf32, #tpu.memory_space<smem>>
    %c85 = arith.constant 85 : index
    %1257 = memref.load %arg13[%c85] : memref<522xf32, #tpu.memory_space<smem>>
    %c293 = arith.constant 293 : index
    %1258 = memref.load %arg13[%c293] : memref<522xf32, #tpu.memory_space<smem>>
    %c421 = arith.constant 421 : index
    %1259 = memref.load %arg13[%c421] : memref<522xf32, #tpu.memory_space<smem>>
    %1260 = vector.broadcast %1256 : f32 to vector<8x16xf32>
    %1261 = arith.mulf %1174, %1260 : vector<8x16xf32>
    %1262 = vector.broadcast %1257 : f32 to vector<8x16xf32>
    %1263 = arith.mulf %9, %1262 : vector<8x16xf32>
    %1264 = arith.addf %1261, %1263 : vector<8x16xf32>
    %1265 = vector.broadcast %1258 : f32 to vector<8x16xf32>
    %1266 = arith.addf %1264, %1265 : vector<8x16xf32>
    %cst_129 = arith.constant 0.000000e+00 : f32
    %1267 = vector.broadcast %cst_129 : f32 to vector<8x16xf32>
    %1268 = arith.maximumf %1266, %1267 : vector<8x16xf32>
    %1269 = vector.broadcast %1259 : f32 to vector<8x16xf32>
    %1270 = arith.mulf %1268, %1269 : vector<8x16xf32>
    %1271 = arith.addf %1255, %1270 : vector<8x16xf32>
    %c70 = arith.constant 70 : index
    %1272 = memref.load %arg13[%c70] : memref<522xf32, #tpu.memory_space<smem>>
    %c86 = arith.constant 86 : index
    %1273 = memref.load %arg13[%c86] : memref<522xf32, #tpu.memory_space<smem>>
    %c294 = arith.constant 294 : index
    %1274 = memref.load %arg13[%c294] : memref<522xf32, #tpu.memory_space<smem>>
    %c422 = arith.constant 422 : index
    %1275 = memref.load %arg13[%c422] : memref<522xf32, #tpu.memory_space<smem>>
    %1276 = vector.broadcast %1272 : f32 to vector<8x16xf32>
    %1277 = arith.mulf %1174, %1276 : vector<8x16xf32>
    %1278 = vector.broadcast %1273 : f32 to vector<8x16xf32>
    %1279 = arith.mulf %9, %1278 : vector<8x16xf32>
    %1280 = arith.addf %1277, %1279 : vector<8x16xf32>
    %1281 = vector.broadcast %1274 : f32 to vector<8x16xf32>
    %1282 = arith.addf %1280, %1281 : vector<8x16xf32>
    %cst_130 = arith.constant 0.000000e+00 : f32
    %1283 = vector.broadcast %cst_130 : f32 to vector<8x16xf32>
    %1284 = arith.maximumf %1282, %1283 : vector<8x16xf32>
    %1285 = vector.broadcast %1275 : f32 to vector<8x16xf32>
    %1286 = arith.mulf %1284, %1285 : vector<8x16xf32>
    %1287 = arith.addf %1271, %1286 : vector<8x16xf32>
    %c71 = arith.constant 71 : index
    %1288 = memref.load %arg13[%c71] : memref<522xf32, #tpu.memory_space<smem>>
    %c87 = arith.constant 87 : index
    %1289 = memref.load %arg13[%c87] : memref<522xf32, #tpu.memory_space<smem>>
    %c295 = arith.constant 295 : index
    %1290 = memref.load %arg13[%c295] : memref<522xf32, #tpu.memory_space<smem>>
    %c423 = arith.constant 423 : index
    %1291 = memref.load %arg13[%c423] : memref<522xf32, #tpu.memory_space<smem>>
    %1292 = vector.broadcast %1288 : f32 to vector<8x16xf32>
    %1293 = arith.mulf %1174, %1292 : vector<8x16xf32>
    %1294 = vector.broadcast %1289 : f32 to vector<8x16xf32>
    %1295 = arith.mulf %9, %1294 : vector<8x16xf32>
    %1296 = arith.addf %1293, %1295 : vector<8x16xf32>
    %1297 = vector.broadcast %1290 : f32 to vector<8x16xf32>
    %1298 = arith.addf %1296, %1297 : vector<8x16xf32>
    %cst_131 = arith.constant 0.000000e+00 : f32
    %1299 = vector.broadcast %cst_131 : f32 to vector<8x16xf32>
    %1300 = arith.maximumf %1298, %1299 : vector<8x16xf32>
    %1301 = vector.broadcast %1291 : f32 to vector<8x16xf32>
    %1302 = arith.mulf %1300, %1301 : vector<8x16xf32>
    %1303 = arith.addf %1287, %1302 : vector<8x16xf32>
    %c72 = arith.constant 72 : index
    %1304 = memref.load %arg13[%c72] : memref<522xf32, #tpu.memory_space<smem>>
    %c88 = arith.constant 88 : index
    %1305 = memref.load %arg13[%c88] : memref<522xf32, #tpu.memory_space<smem>>
    %c296 = arith.constant 296 : index
    %1306 = memref.load %arg13[%c296] : memref<522xf32, #tpu.memory_space<smem>>
    %c424 = arith.constant 424 : index
    %1307 = memref.load %arg13[%c424] : memref<522xf32, #tpu.memory_space<smem>>
    %1308 = vector.broadcast %1304 : f32 to vector<8x16xf32>
    %1309 = arith.mulf %1174, %1308 : vector<8x16xf32>
    %1310 = vector.broadcast %1305 : f32 to vector<8x16xf32>
    %1311 = arith.mulf %9, %1310 : vector<8x16xf32>
    %1312 = arith.addf %1309, %1311 : vector<8x16xf32>
    %1313 = vector.broadcast %1306 : f32 to vector<8x16xf32>
    %1314 = arith.addf %1312, %1313 : vector<8x16xf32>
    %cst_132 = arith.constant 0.000000e+00 : f32
    %1315 = vector.broadcast %cst_132 : f32 to vector<8x16xf32>
    %1316 = arith.maximumf %1314, %1315 : vector<8x16xf32>
    %1317 = vector.broadcast %1307 : f32 to vector<8x16xf32>
    %1318 = arith.mulf %1316, %1317 : vector<8x16xf32>
    %1319 = arith.addf %1303, %1318 : vector<8x16xf32>
    %c73 = arith.constant 73 : index
    %1320 = memref.load %arg13[%c73] : memref<522xf32, #tpu.memory_space<smem>>
    %c89 = arith.constant 89 : index
    %1321 = memref.load %arg13[%c89] : memref<522xf32, #tpu.memory_space<smem>>
    %c297 = arith.constant 297 : index
    %1322 = memref.load %arg13[%c297] : memref<522xf32, #tpu.memory_space<smem>>
    %c425 = arith.constant 425 : index
    %1323 = memref.load %arg13[%c425] : memref<522xf32, #tpu.memory_space<smem>>
    %1324 = vector.broadcast %1320 : f32 to vector<8x16xf32>
    %1325 = arith.mulf %1174, %1324 : vector<8x16xf32>
    %1326 = vector.broadcast %1321 : f32 to vector<8x16xf32>
    %1327 = arith.mulf %9, %1326 : vector<8x16xf32>
    %1328 = arith.addf %1325, %1327 : vector<8x16xf32>
    %1329 = vector.broadcast %1322 : f32 to vector<8x16xf32>
    %1330 = arith.addf %1328, %1329 : vector<8x16xf32>
    %cst_133 = arith.constant 0.000000e+00 : f32
    %1331 = vector.broadcast %cst_133 : f32 to vector<8x16xf32>
    %1332 = arith.maximumf %1330, %1331 : vector<8x16xf32>
    %1333 = vector.broadcast %1323 : f32 to vector<8x16xf32>
    %1334 = arith.mulf %1332, %1333 : vector<8x16xf32>
    %1335 = arith.addf %1319, %1334 : vector<8x16xf32>
    %c74 = arith.constant 74 : index
    %1336 = memref.load %arg13[%c74] : memref<522xf32, #tpu.memory_space<smem>>
    %c90 = arith.constant 90 : index
    %1337 = memref.load %arg13[%c90] : memref<522xf32, #tpu.memory_space<smem>>
    %c298 = arith.constant 298 : index
    %1338 = memref.load %arg13[%c298] : memref<522xf32, #tpu.memory_space<smem>>
    %c426 = arith.constant 426 : index
    %1339 = memref.load %arg13[%c426] : memref<522xf32, #tpu.memory_space<smem>>
    %1340 = vector.broadcast %1336 : f32 to vector<8x16xf32>
    %1341 = arith.mulf %1174, %1340 : vector<8x16xf32>
    %1342 = vector.broadcast %1337 : f32 to vector<8x16xf32>
    %1343 = arith.mulf %9, %1342 : vector<8x16xf32>
    %1344 = arith.addf %1341, %1343 : vector<8x16xf32>
    %1345 = vector.broadcast %1338 : f32 to vector<8x16xf32>
    %1346 = arith.addf %1344, %1345 : vector<8x16xf32>
    %cst_134 = arith.constant 0.000000e+00 : f32
    %1347 = vector.broadcast %cst_134 : f32 to vector<8x16xf32>
    %1348 = arith.maximumf %1346, %1347 : vector<8x16xf32>
    %1349 = vector.broadcast %1339 : f32 to vector<8x16xf32>
    %1350 = arith.mulf %1348, %1349 : vector<8x16xf32>
    %1351 = arith.addf %1335, %1350 : vector<8x16xf32>
    %c75 = arith.constant 75 : index
    %1352 = memref.load %arg13[%c75] : memref<522xf32, #tpu.memory_space<smem>>
    %c91 = arith.constant 91 : index
    %1353 = memref.load %arg13[%c91] : memref<522xf32, #tpu.memory_space<smem>>
    %c299 = arith.constant 299 : index
    %1354 = memref.load %arg13[%c299] : memref<522xf32, #tpu.memory_space<smem>>
    %c427 = arith.constant 427 : index
    %1355 = memref.load %arg13[%c427] : memref<522xf32, #tpu.memory_space<smem>>
    %1356 = vector.broadcast %1352 : f32 to vector<8x16xf32>
    %1357 = arith.mulf %1174, %1356 : vector<8x16xf32>
    %1358 = vector.broadcast %1353 : f32 to vector<8x16xf32>
    %1359 = arith.mulf %9, %1358 : vector<8x16xf32>
    %1360 = arith.addf %1357, %1359 : vector<8x16xf32>
    %1361 = vector.broadcast %1354 : f32 to vector<8x16xf32>
    %1362 = arith.addf %1360, %1361 : vector<8x16xf32>
    %cst_135 = arith.constant 0.000000e+00 : f32
    %1363 = vector.broadcast %cst_135 : f32 to vector<8x16xf32>
    %1364 = arith.maximumf %1362, %1363 : vector<8x16xf32>
    %1365 = vector.broadcast %1355 : f32 to vector<8x16xf32>
    %1366 = arith.mulf %1364, %1365 : vector<8x16xf32>
    %1367 = arith.addf %1351, %1366 : vector<8x16xf32>
    %c76 = arith.constant 76 : index
    %1368 = memref.load %arg13[%c76] : memref<522xf32, #tpu.memory_space<smem>>
    %c92 = arith.constant 92 : index
    %1369 = memref.load %arg13[%c92] : memref<522xf32, #tpu.memory_space<smem>>
    %c300 = arith.constant 300 : index
    %1370 = memref.load %arg13[%c300] : memref<522xf32, #tpu.memory_space<smem>>
    %c428 = arith.constant 428 : index
    %1371 = memref.load %arg13[%c428] : memref<522xf32, #tpu.memory_space<smem>>
    %1372 = vector.broadcast %1368 : f32 to vector<8x16xf32>
    %1373 = arith.mulf %1174, %1372 : vector<8x16xf32>
    %1374 = vector.broadcast %1369 : f32 to vector<8x16xf32>
    %1375 = arith.mulf %9, %1374 : vector<8x16xf32>
    %1376 = arith.addf %1373, %1375 : vector<8x16xf32>
    %1377 = vector.broadcast %1370 : f32 to vector<8x16xf32>
    %1378 = arith.addf %1376, %1377 : vector<8x16xf32>
    %cst_136 = arith.constant 0.000000e+00 : f32
    %1379 = vector.broadcast %cst_136 : f32 to vector<8x16xf32>
    %1380 = arith.maximumf %1378, %1379 : vector<8x16xf32>
    %1381 = vector.broadcast %1371 : f32 to vector<8x16xf32>
    %1382 = arith.mulf %1380, %1381 : vector<8x16xf32>
    %1383 = arith.addf %1367, %1382 : vector<8x16xf32>
    %c77 = arith.constant 77 : index
    %1384 = memref.load %arg13[%c77] : memref<522xf32, #tpu.memory_space<smem>>
    %c93 = arith.constant 93 : index
    %1385 = memref.load %arg13[%c93] : memref<522xf32, #tpu.memory_space<smem>>
    %c301 = arith.constant 301 : index
    %1386 = memref.load %arg13[%c301] : memref<522xf32, #tpu.memory_space<smem>>
    %c429 = arith.constant 429 : index
    %1387 = memref.load %arg13[%c429] : memref<522xf32, #tpu.memory_space<smem>>
    %1388 = vector.broadcast %1384 : f32 to vector<8x16xf32>
    %1389 = arith.mulf %1174, %1388 : vector<8x16xf32>
    %1390 = vector.broadcast %1385 : f32 to vector<8x16xf32>
    %1391 = arith.mulf %9, %1390 : vector<8x16xf32>
    %1392 = arith.addf %1389, %1391 : vector<8x16xf32>
    %1393 = vector.broadcast %1386 : f32 to vector<8x16xf32>
    %1394 = arith.addf %1392, %1393 : vector<8x16xf32>
    %cst_137 = arith.constant 0.000000e+00 : f32
    %1395 = vector.broadcast %cst_137 : f32 to vector<8x16xf32>
    %1396 = arith.maximumf %1394, %1395 : vector<8x16xf32>
    %1397 = vector.broadcast %1387 : f32 to vector<8x16xf32>
    %1398 = arith.mulf %1396, %1397 : vector<8x16xf32>
    %1399 = arith.addf %1383, %1398 : vector<8x16xf32>
    %c78 = arith.constant 78 : index
    %1400 = memref.load %arg13[%c78] : memref<522xf32, #tpu.memory_space<smem>>
    %c94 = arith.constant 94 : index
    %1401 = memref.load %arg13[%c94] : memref<522xf32, #tpu.memory_space<smem>>
    %c302 = arith.constant 302 : index
    %1402 = memref.load %arg13[%c302] : memref<522xf32, #tpu.memory_space<smem>>
    %c430 = arith.constant 430 : index
    %1403 = memref.load %arg13[%c430] : memref<522xf32, #tpu.memory_space<smem>>
    %1404 = vector.broadcast %1400 : f32 to vector<8x16xf32>
    %1405 = arith.mulf %1174, %1404 : vector<8x16xf32>
    %1406 = vector.broadcast %1401 : f32 to vector<8x16xf32>
    %1407 = arith.mulf %9, %1406 : vector<8x16xf32>
    %1408 = arith.addf %1405, %1407 : vector<8x16xf32>
    %1409 = vector.broadcast %1402 : f32 to vector<8x16xf32>
    %1410 = arith.addf %1408, %1409 : vector<8x16xf32>
    %cst_138 = arith.constant 0.000000e+00 : f32
    %1411 = vector.broadcast %cst_138 : f32 to vector<8x16xf32>
    %1412 = arith.maximumf %1410, %1411 : vector<8x16xf32>
    %1413 = vector.broadcast %1403 : f32 to vector<8x16xf32>
    %1414 = arith.mulf %1412, %1413 : vector<8x16xf32>
    %1415 = arith.addf %1399, %1414 : vector<8x16xf32>
    %c79 = arith.constant 79 : index
    %1416 = memref.load %arg13[%c79] : memref<522xf32, #tpu.memory_space<smem>>
    %c95 = arith.constant 95 : index
    %1417 = memref.load %arg13[%c95] : memref<522xf32, #tpu.memory_space<smem>>
    %c303 = arith.constant 303 : index
    %1418 = memref.load %arg13[%c303] : memref<522xf32, #tpu.memory_space<smem>>
    %c431 = arith.constant 431 : index
    %1419 = memref.load %arg13[%c431] : memref<522xf32, #tpu.memory_space<smem>>
    %1420 = vector.broadcast %1416 : f32 to vector<8x16xf32>
    %1421 = arith.mulf %1174, %1420 : vector<8x16xf32>
    %1422 = vector.broadcast %1417 : f32 to vector<8x16xf32>
    %1423 = arith.mulf %9, %1422 : vector<8x16xf32>
    %1424 = arith.addf %1421, %1423 : vector<8x16xf32>
    %1425 = vector.broadcast %1418 : f32 to vector<8x16xf32>
    %1426 = arith.addf %1424, %1425 : vector<8x16xf32>
    %cst_139 = arith.constant 0.000000e+00 : f32
    %1427 = vector.broadcast %cst_139 : f32 to vector<8x16xf32>
    %1428 = arith.maximumf %1426, %1427 : vector<8x16xf32>
    %1429 = vector.broadcast %1419 : f32 to vector<8x16xf32>
    %1430 = arith.mulf %1428, %1429 : vector<8x16xf32>
    %1431 = arith.addf %1415, %1430 : vector<8x16xf32>
    %c514 = arith.constant 514 : index
    %1432 = memref.load %arg13[%c514] : memref<522xf32, #tpu.memory_space<smem>>
    %1433 = vector.broadcast %1432 : f32 to vector<8x16xf32>
    %1434 = arith.addf %1431, %1433 : vector<8x16xf32>
    %1435 = arith.addf %885, %1434 : vector<8x16xf32>
    %cst_140 = arith.constant dense<0xFF800000> : vector<8xf32>
    %1436 = vector.multi_reduction <maximumf>, %1434, %cst_140 [1] : vector<8x16xf32> to vector<8xf32>
    %1437 = vector.shape_cast %1436 : vector<8xf32> to vector<8x1xf32>
    %1438 = vector.broadcast %1437 : vector<8x1xf32> to vector<8x16xf32>
    %1439 = arith.subf %1434, %1438 : vector<8x16xf32>
    %1440 = math.exp %1439 : vector<8x16xf32>
    %cst_141 = arith.constant dense<0.000000e+00> : vector<8xf32>
    %1441 = vector.multi_reduction <add>, %1440, %cst_141 [1] : vector<8x16xf32> to vector<8xf32>
    %1442 = vector.shape_cast %1441 : vector<8xf32> to vector<8x1xf32>
    %1443 = vector.broadcast %1442 : vector<8x1xf32> to vector<8x16xf32>
    %1444 = arith.divf %1440, %1443 : vector<8x16xf32>
    %cst_142 = arith.constant dense<0.000000e+00> : vector<8x32xf32>
    %1445 = tpu.matmul %1444, %1171, %cst_142 {dimension_numbers = #tpu.dot_dimension_numbers<[1], [0], [0], [1], [0, 0, 1, 1], [], []>} : vector<8x16xf32>, vector<16x32xf32>, vector<8x32xf32> -> vector<8x32xf32>
    %1446 = arith.addf %896, %1445 : vector<8x32xf32>
    %cst_143 = arith.constant dense<0.000000e+00> : vector<8x16xf32>
    %1447 = tpu.matmul %35, %1172, %cst_143 {dimension_numbers = #tpu.dot_dimension_numbers<[1], [1], [0], [0], [0, 0, 1, 0], [], []>} : vector<8x32xf32>, vector<16x32xf32>, vector<8x16xf32> -> vector<8x16xf32>
    %cst_144 = arith.constant 0.000000e+00 : f32
    %1448 = vector.broadcast %cst_144 : f32 to vector<8x16xf32>
    %c192 = arith.constant 192 : index
    %1449 = memref.load %arg13[%c192] : memref<522xf32, #tpu.memory_space<smem>>
    %c208 = arith.constant 208 : index
    %1450 = memref.load %arg13[%c208] : memref<522xf32, #tpu.memory_space<smem>>
    %c352 = arith.constant 352 : index
    %1451 = memref.load %arg13[%c352] : memref<522xf32, #tpu.memory_space<smem>>
    %c480 = arith.constant 480 : index
    %1452 = memref.load %arg13[%c480] : memref<522xf32, #tpu.memory_space<smem>>
    %1453 = vector.broadcast %1449 : f32 to vector<8x16xf32>
    %1454 = arith.mulf %1447, %1453 : vector<8x16xf32>
    %1455 = vector.broadcast %1450 : f32 to vector<8x16xf32>
    %1456 = arith.mulf %9, %1455 : vector<8x16xf32>
    %1457 = arith.addf %1454, %1456 : vector<8x16xf32>
    %1458 = vector.broadcast %1451 : f32 to vector<8x16xf32>
    %1459 = arith.addf %1457, %1458 : vector<8x16xf32>
    %cst_145 = arith.constant 0.000000e+00 : f32
    %1460 = vector.broadcast %cst_145 : f32 to vector<8x16xf32>
    %1461 = arith.maximumf %1459, %1460 : vector<8x16xf32>
    %1462 = vector.broadcast %1452 : f32 to vector<8x16xf32>
    %1463 = arith.mulf %1461, %1462 : vector<8x16xf32>
    %1464 = arith.addf %1448, %1463 : vector<8x16xf32>
    %c193 = arith.constant 193 : index
    %1465 = memref.load %arg13[%c193] : memref<522xf32, #tpu.memory_space<smem>>
    %c209 = arith.constant 209 : index
    %1466 = memref.load %arg13[%c209] : memref<522xf32, #tpu.memory_space<smem>>
    %c353 = arith.constant 353 : index
    %1467 = memref.load %arg13[%c353] : memref<522xf32, #tpu.memory_space<smem>>
    %c481 = arith.constant 481 : index
    %1468 = memref.load %arg13[%c481] : memref<522xf32, #tpu.memory_space<smem>>
    %1469 = vector.broadcast %1465 : f32 to vector<8x16xf32>
    %1470 = arith.mulf %1447, %1469 : vector<8x16xf32>
    %1471 = vector.broadcast %1466 : f32 to vector<8x16xf32>
    %1472 = arith.mulf %9, %1471 : vector<8x16xf32>
    %1473 = arith.addf %1470, %1472 : vector<8x16xf32>
    %1474 = vector.broadcast %1467 : f32 to vector<8x16xf32>
    %1475 = arith.addf %1473, %1474 : vector<8x16xf32>
    %cst_146 = arith.constant 0.000000e+00 : f32
    %1476 = vector.broadcast %cst_146 : f32 to vector<8x16xf32>
    %1477 = arith.maximumf %1475, %1476 : vector<8x16xf32>
    %1478 = vector.broadcast %1468 : f32 to vector<8x16xf32>
    %1479 = arith.mulf %1477, %1478 : vector<8x16xf32>
    %1480 = arith.addf %1464, %1479 : vector<8x16xf32>
    %c194 = arith.constant 194 : index
    %1481 = memref.load %arg13[%c194] : memref<522xf32, #tpu.memory_space<smem>>
    %c210 = arith.constant 210 : index
    %1482 = memref.load %arg13[%c210] : memref<522xf32, #tpu.memory_space<smem>>
    %c354 = arith.constant 354 : index
    %1483 = memref.load %arg13[%c354] : memref<522xf32, #tpu.memory_space<smem>>
    %c482 = arith.constant 482 : index
    %1484 = memref.load %arg13[%c482] : memref<522xf32, #tpu.memory_space<smem>>
    %1485 = vector.broadcast %1481 : f32 to vector<8x16xf32>
    %1486 = arith.mulf %1447, %1485 : vector<8x16xf32>
    %1487 = vector.broadcast %1482 : f32 to vector<8x16xf32>
    %1488 = arith.mulf %9, %1487 : vector<8x16xf32>
    %1489 = arith.addf %1486, %1488 : vector<8x16xf32>
    %1490 = vector.broadcast %1483 : f32 to vector<8x16xf32>
    %1491 = arith.addf %1489, %1490 : vector<8x16xf32>
    %cst_147 = arith.constant 0.000000e+00 : f32
    %1492 = vector.broadcast %cst_147 : f32 to vector<8x16xf32>
    %1493 = arith.maximumf %1491, %1492 : vector<8x16xf32>
    %1494 = vector.broadcast %1484 : f32 to vector<8x16xf32>
    %1495 = arith.mulf %1493, %1494 : vector<8x16xf32>
    %1496 = arith.addf %1480, %1495 : vector<8x16xf32>
    %c195 = arith.constant 195 : index
    %1497 = memref.load %arg13[%c195] : memref<522xf32, #tpu.memory_space<smem>>
    %c211 = arith.constant 211 : index
    %1498 = memref.load %arg13[%c211] : memref<522xf32, #tpu.memory_space<smem>>
    %c355 = arith.constant 355 : index
    %1499 = memref.load %arg13[%c355] : memref<522xf32, #tpu.memory_space<smem>>
    %c483 = arith.constant 483 : index
    %1500 = memref.load %arg13[%c483] : memref<522xf32, #tpu.memory_space<smem>>
    %1501 = vector.broadcast %1497 : f32 to vector<8x16xf32>
    %1502 = arith.mulf %1447, %1501 : vector<8x16xf32>
    %1503 = vector.broadcast %1498 : f32 to vector<8x16xf32>
    %1504 = arith.mulf %9, %1503 : vector<8x16xf32>
    %1505 = arith.addf %1502, %1504 : vector<8x16xf32>
    %1506 = vector.broadcast %1499 : f32 to vector<8x16xf32>
    %1507 = arith.addf %1505, %1506 : vector<8x16xf32>
    %cst_148 = arith.constant 0.000000e+00 : f32
    %1508 = vector.broadcast %cst_148 : f32 to vector<8x16xf32>
    %1509 = arith.maximumf %1507, %1508 : vector<8x16xf32>
    %1510 = vector.broadcast %1500 : f32 to vector<8x16xf32>
    %1511 = arith.mulf %1509, %1510 : vector<8x16xf32>
    %1512 = arith.addf %1496, %1511 : vector<8x16xf32>
    %c196 = arith.constant 196 : index
    %1513 = memref.load %arg13[%c196] : memref<522xf32, #tpu.memory_space<smem>>
    %c212 = arith.constant 212 : index
    %1514 = memref.load %arg13[%c212] : memref<522xf32, #tpu.memory_space<smem>>
    %c356 = arith.constant 356 : index
    %1515 = memref.load %arg13[%c356] : memref<522xf32, #tpu.memory_space<smem>>
    %c484 = arith.constant 484 : index
    %1516 = memref.load %arg13[%c484] : memref<522xf32, #tpu.memory_space<smem>>
    %1517 = vector.broadcast %1513 : f32 to vector<8x16xf32>
    %1518 = arith.mulf %1447, %1517 : vector<8x16xf32>
    %1519 = vector.broadcast %1514 : f32 to vector<8x16xf32>
    %1520 = arith.mulf %9, %1519 : vector<8x16xf32>
    %1521 = arith.addf %1518, %1520 : vector<8x16xf32>
    %1522 = vector.broadcast %1515 : f32 to vector<8x16xf32>
    %1523 = arith.addf %1521, %1522 : vector<8x16xf32>
    %cst_149 = arith.constant 0.000000e+00 : f32
    %1524 = vector.broadcast %cst_149 : f32 to vector<8x16xf32>
    %1525 = arith.maximumf %1523, %1524 : vector<8x16xf32>
    %1526 = vector.broadcast %1516 : f32 to vector<8x16xf32>
    %1527 = arith.mulf %1525, %1526 : vector<8x16xf32>
    %1528 = arith.addf %1512, %1527 : vector<8x16xf32>
    %c197 = arith.constant 197 : index
    %1529 = memref.load %arg13[%c197] : memref<522xf32, #tpu.memory_space<smem>>
    %c213 = arith.constant 213 : index
    %1530 = memref.load %arg13[%c213] : memref<522xf32, #tpu.memory_space<smem>>
    %c357 = arith.constant 357 : index
    %1531 = memref.load %arg13[%c357] : memref<522xf32, #tpu.memory_space<smem>>
    %c485 = arith.constant 485 : index
    %1532 = memref.load %arg13[%c485] : memref<522xf32, #tpu.memory_space<smem>>
    %1533 = vector.broadcast %1529 : f32 to vector<8x16xf32>
    %1534 = arith.mulf %1447, %1533 : vector<8x16xf32>
    %1535 = vector.broadcast %1530 : f32 to vector<8x16xf32>
    %1536 = arith.mulf %9, %1535 : vector<8x16xf32>
    %1537 = arith.addf %1534, %1536 : vector<8x16xf32>
    %1538 = vector.broadcast %1531 : f32 to vector<8x16xf32>
    %1539 = arith.addf %1537, %1538 : vector<8x16xf32>
    %cst_150 = arith.constant 0.000000e+00 : f32
    %1540 = vector.broadcast %cst_150 : f32 to vector<8x16xf32>
    %1541 = arith.maximumf %1539, %1540 : vector<8x16xf32>
    %1542 = vector.broadcast %1532 : f32 to vector<8x16xf32>
    %1543 = arith.mulf %1541, %1542 : vector<8x16xf32>
    %1544 = arith.addf %1528, %1543 : vector<8x16xf32>
    %c198 = arith.constant 198 : index
    %1545 = memref.load %arg13[%c198] : memref<522xf32, #tpu.memory_space<smem>>
    %c214 = arith.constant 214 : index
    %1546 = memref.load %arg13[%c214] : memref<522xf32, #tpu.memory_space<smem>>
    %c358 = arith.constant 358 : index
    %1547 = memref.load %arg13[%c358] : memref<522xf32, #tpu.memory_space<smem>>
    %c486 = arith.constant 486 : index
    %1548 = memref.load %arg13[%c486] : memref<522xf32, #tpu.memory_space<smem>>
    %1549 = vector.broadcast %1545 : f32 to vector<8x16xf32>
    %1550 = arith.mulf %1447, %1549 : vector<8x16xf32>
    %1551 = vector.broadcast %1546 : f32 to vector<8x16xf32>
    %1552 = arith.mulf %9, %1551 : vector<8x16xf32>
    %1553 = arith.addf %1550, %1552 : vector<8x16xf32>
    %1554 = vector.broadcast %1547 : f32 to vector<8x16xf32>
    %1555 = arith.addf %1553, %1554 : vector<8x16xf32>
    %cst_151 = arith.constant 0.000000e+00 : f32
    %1556 = vector.broadcast %cst_151 : f32 to vector<8x16xf32>
    %1557 = arith.maximumf %1555, %1556 : vector<8x16xf32>
    %1558 = vector.broadcast %1548 : f32 to vector<8x16xf32>
    %1559 = arith.mulf %1557, %1558 : vector<8x16xf32>
    %1560 = arith.addf %1544, %1559 : vector<8x16xf32>
    %c199 = arith.constant 199 : index
    %1561 = memref.load %arg13[%c199] : memref<522xf32, #tpu.memory_space<smem>>
    %c215 = arith.constant 215 : index
    %1562 = memref.load %arg13[%c215] : memref<522xf32, #tpu.memory_space<smem>>
    %c359 = arith.constant 359 : index
    %1563 = memref.load %arg13[%c359] : memref<522xf32, #tpu.memory_space<smem>>
    %c487 = arith.constant 487 : index
    %1564 = memref.load %arg13[%c487] : memref<522xf32, #tpu.memory_space<smem>>
    %1565 = vector.broadcast %1561 : f32 to vector<8x16xf32>
    %1566 = arith.mulf %1447, %1565 : vector<8x16xf32>
    %1567 = vector.broadcast %1562 : f32 to vector<8x16xf32>
    %1568 = arith.mulf %9, %1567 : vector<8x16xf32>
    %1569 = arith.addf %1566, %1568 : vector<8x16xf32>
    %1570 = vector.broadcast %1563 : f32 to vector<8x16xf32>
    %1571 = arith.addf %1569, %1570 : vector<8x16xf32>
    %cst_152 = arith.constant 0.000000e+00 : f32
    %1572 = vector.broadcast %cst_152 : f32 to vector<8x16xf32>
    %1573 = arith.maximumf %1571, %1572 : vector<8x16xf32>
    %1574 = vector.broadcast %1564 : f32 to vector<8x16xf32>
    %1575 = arith.mulf %1573, %1574 : vector<8x16xf32>
    %1576 = arith.addf %1560, %1575 : vector<8x16xf32>
    %c200 = arith.constant 200 : index
    %1577 = memref.load %arg13[%c200] : memref<522xf32, #tpu.memory_space<smem>>
    %c216 = arith.constant 216 : index
    %1578 = memref.load %arg13[%c216] : memref<522xf32, #tpu.memory_space<smem>>
    %c360 = arith.constant 360 : index
    %1579 = memref.load %arg13[%c360] : memref<522xf32, #tpu.memory_space<smem>>
    %c488 = arith.constant 488 : index
    %1580 = memref.load %arg13[%c488] : memref<522xf32, #tpu.memory_space<smem>>
    %1581 = vector.broadcast %1577 : f32 to vector<8x16xf32>
    %1582 = arith.mulf %1447, %1581 : vector<8x16xf32>
    %1583 = vector.broadcast %1578 : f32 to vector<8x16xf32>
    %1584 = arith.mulf %9, %1583 : vector<8x16xf32>
    %1585 = arith.addf %1582, %1584 : vector<8x16xf32>
    %1586 = vector.broadcast %1579 : f32 to vector<8x16xf32>
    %1587 = arith.addf %1585, %1586 : vector<8x16xf32>
    %cst_153 = arith.constant 0.000000e+00 : f32
    %1588 = vector.broadcast %cst_153 : f32 to vector<8x16xf32>
    %1589 = arith.maximumf %1587, %1588 : vector<8x16xf32>
    %1590 = vector.broadcast %1580 : f32 to vector<8x16xf32>
    %1591 = arith.mulf %1589, %1590 : vector<8x16xf32>
    %1592 = arith.addf %1576, %1591 : vector<8x16xf32>
    %c201 = arith.constant 201 : index
    %1593 = memref.load %arg13[%c201] : memref<522xf32, #tpu.memory_space<smem>>
    %c217 = arith.constant 217 : index
    %1594 = memref.load %arg13[%c217] : memref<522xf32, #tpu.memory_space<smem>>
    %c361 = arith.constant 361 : index
    %1595 = memref.load %arg13[%c361] : memref<522xf32, #tpu.memory_space<smem>>
    %c489 = arith.constant 489 : index
    %1596 = memref.load %arg13[%c489] : memref<522xf32, #tpu.memory_space<smem>>
    %1597 = vector.broadcast %1593 : f32 to vector<8x16xf32>
    %1598 = arith.mulf %1447, %1597 : vector<8x16xf32>
    %1599 = vector.broadcast %1594 : f32 to vector<8x16xf32>
    %1600 = arith.mulf %9, %1599 : vector<8x16xf32>
    %1601 = arith.addf %1598, %1600 : vector<8x16xf32>
    %1602 = vector.broadcast %1595 : f32 to vector<8x16xf32>
    %1603 = arith.addf %1601, %1602 : vector<8x16xf32>
    %cst_154 = arith.constant 0.000000e+00 : f32
    %1604 = vector.broadcast %cst_154 : f32 to vector<8x16xf32>
    %1605 = arith.maximumf %1603, %1604 : vector<8x16xf32>
    %1606 = vector.broadcast %1596 : f32 to vector<8x16xf32>
    %1607 = arith.mulf %1605, %1606 : vector<8x16xf32>
    %1608 = arith.addf %1592, %1607 : vector<8x16xf32>
    %c202 = arith.constant 202 : index
    %1609 = memref.load %arg13[%c202] : memref<522xf32, #tpu.memory_space<smem>>
    %c218 = arith.constant 218 : index
    %1610 = memref.load %arg13[%c218] : memref<522xf32, #tpu.memory_space<smem>>
    %c362 = arith.constant 362 : index
    %1611 = memref.load %arg13[%c362] : memref<522xf32, #tpu.memory_space<smem>>
    %c490 = arith.constant 490 : index
    %1612 = memref.load %arg13[%c490] : memref<522xf32, #tpu.memory_space<smem>>
    %1613 = vector.broadcast %1609 : f32 to vector<8x16xf32>
    %1614 = arith.mulf %1447, %1613 : vector<8x16xf32>
    %1615 = vector.broadcast %1610 : f32 to vector<8x16xf32>
    %1616 = arith.mulf %9, %1615 : vector<8x16xf32>
    %1617 = arith.addf %1614, %1616 : vector<8x16xf32>
    %1618 = vector.broadcast %1611 : f32 to vector<8x16xf32>
    %1619 = arith.addf %1617, %1618 : vector<8x16xf32>
    %cst_155 = arith.constant 0.000000e+00 : f32
    %1620 = vector.broadcast %cst_155 : f32 to vector<8x16xf32>
    %1621 = arith.maximumf %1619, %1620 : vector<8x16xf32>
    %1622 = vector.broadcast %1612 : f32 to vector<8x16xf32>
    %1623 = arith.mulf %1621, %1622 : vector<8x16xf32>
    %1624 = arith.addf %1608, %1623 : vector<8x16xf32>
    %c203 = arith.constant 203 : index
    %1625 = memref.load %arg13[%c203] : memref<522xf32, #tpu.memory_space<smem>>
    %c219 = arith.constant 219 : index
    %1626 = memref.load %arg13[%c219] : memref<522xf32, #tpu.memory_space<smem>>
    %c363 = arith.constant 363 : index
    %1627 = memref.load %arg13[%c363] : memref<522xf32, #tpu.memory_space<smem>>
    %c491 = arith.constant 491 : index
    %1628 = memref.load %arg13[%c491] : memref<522xf32, #tpu.memory_space<smem>>
    %1629 = vector.broadcast %1625 : f32 to vector<8x16xf32>
    %1630 = arith.mulf %1447, %1629 : vector<8x16xf32>
    %1631 = vector.broadcast %1626 : f32 to vector<8x16xf32>
    %1632 = arith.mulf %9, %1631 : vector<8x16xf32>
    %1633 = arith.addf %1630, %1632 : vector<8x16xf32>
    %1634 = vector.broadcast %1627 : f32 to vector<8x16xf32>
    %1635 = arith.addf %1633, %1634 : vector<8x16xf32>
    %cst_156 = arith.constant 0.000000e+00 : f32
    %1636 = vector.broadcast %cst_156 : f32 to vector<8x16xf32>
    %1637 = arith.maximumf %1635, %1636 : vector<8x16xf32>
    %1638 = vector.broadcast %1628 : f32 to vector<8x16xf32>
    %1639 = arith.mulf %1637, %1638 : vector<8x16xf32>
    %1640 = arith.addf %1624, %1639 : vector<8x16xf32>
    %c204 = arith.constant 204 : index
    %1641 = memref.load %arg13[%c204] : memref<522xf32, #tpu.memory_space<smem>>
    %c220 = arith.constant 220 : index
    %1642 = memref.load %arg13[%c220] : memref<522xf32, #tpu.memory_space<smem>>
    %c364 = arith.constant 364 : index
    %1643 = memref.load %arg13[%c364] : memref<522xf32, #tpu.memory_space<smem>>
    %c492 = arith.constant 492 : index
    %1644 = memref.load %arg13[%c492] : memref<522xf32, #tpu.memory_space<smem>>
    %1645 = vector.broadcast %1641 : f32 to vector<8x16xf32>
    %1646 = arith.mulf %1447, %1645 : vector<8x16xf32>
    %1647 = vector.broadcast %1642 : f32 to vector<8x16xf32>
    %1648 = arith.mulf %9, %1647 : vector<8x16xf32>
    %1649 = arith.addf %1646, %1648 : vector<8x16xf32>
    %1650 = vector.broadcast %1643 : f32 to vector<8x16xf32>
    %1651 = arith.addf %1649, %1650 : vector<8x16xf32>
    %cst_157 = arith.constant 0.000000e+00 : f32
    %1652 = vector.broadcast %cst_157 : f32 to vector<8x16xf32>
    %1653 = arith.maximumf %1651, %1652 : vector<8x16xf32>
    %1654 = vector.broadcast %1644 : f32 to vector<8x16xf32>
    %1655 = arith.mulf %1653, %1654 : vector<8x16xf32>
    %1656 = arith.addf %1640, %1655 : vector<8x16xf32>
    %c205 = arith.constant 205 : index
    %1657 = memref.load %arg13[%c205] : memref<522xf32, #tpu.memory_space<smem>>
    %c221 = arith.constant 221 : index
    %1658 = memref.load %arg13[%c221] : memref<522xf32, #tpu.memory_space<smem>>
    %c365 = arith.constant 365 : index
    %1659 = memref.load %arg13[%c365] : memref<522xf32, #tpu.memory_space<smem>>
    %c493 = arith.constant 493 : index
    %1660 = memref.load %arg13[%c493] : memref<522xf32, #tpu.memory_space<smem>>
    %1661 = vector.broadcast %1657 : f32 to vector<8x16xf32>
    %1662 = arith.mulf %1447, %1661 : vector<8x16xf32>
    %1663 = vector.broadcast %1658 : f32 to vector<8x16xf32>
    %1664 = arith.mulf %9, %1663 : vector<8x16xf32>
    %1665 = arith.addf %1662, %1664 : vector<8x16xf32>
    %1666 = vector.broadcast %1659 : f32 to vector<8x16xf32>
    %1667 = arith.addf %1665, %1666 : vector<8x16xf32>
    %cst_158 = arith.constant 0.000000e+00 : f32
    %1668 = vector.broadcast %cst_158 : f32 to vector<8x16xf32>
    %1669 = arith.maximumf %1667, %1668 : vector<8x16xf32>
    %1670 = vector.broadcast %1660 : f32 to vector<8x16xf32>
    %1671 = arith.mulf %1669, %1670 : vector<8x16xf32>
    %1672 = arith.addf %1656, %1671 : vector<8x16xf32>
    %c206 = arith.constant 206 : index
    %1673 = memref.load %arg13[%c206] : memref<522xf32, #tpu.memory_space<smem>>
    %c222 = arith.constant 222 : index
    %1674 = memref.load %arg13[%c222] : memref<522xf32, #tpu.memory_space<smem>>
    %c366 = arith.constant 366 : index
    %1675 = memref.load %arg13[%c366] : memref<522xf32, #tpu.memory_space<smem>>
    %c494 = arith.constant 494 : index
    %1676 = memref.load %arg13[%c494] : memref<522xf32, #tpu.memory_space<smem>>
    %1677 = vector.broadcast %1673 : f32 to vector<8x16xf32>
    %1678 = arith.mulf %1447, %1677 : vector<8x16xf32>
    %1679 = vector.broadcast %1674 : f32 to vector<8x16xf32>
    %1680 = arith.mulf %9, %1679 : vector<8x16xf32>
    %1681 = arith.addf %1678, %1680 : vector<8x16xf32>
    %1682 = vector.broadcast %1675 : f32 to vector<8x16xf32>
    %1683 = arith.addf %1681, %1682 : vector<8x16xf32>
    %cst_159 = arith.constant 0.000000e+00 : f32
    %1684 = vector.broadcast %cst_159 : f32 to vector<8x16xf32>
    %1685 = arith.maximumf %1683, %1684 : vector<8x16xf32>
    %1686 = vector.broadcast %1676 : f32 to vector<8x16xf32>
    %1687 = arith.mulf %1685, %1686 : vector<8x16xf32>
    %1688 = arith.addf %1672, %1687 : vector<8x16xf32>
    %c207 = arith.constant 207 : index
    %1689 = memref.load %arg13[%c207] : memref<522xf32, #tpu.memory_space<smem>>
    %c223 = arith.constant 223 : index
    %1690 = memref.load %arg13[%c223] : memref<522xf32, #tpu.memory_space<smem>>
    %c367 = arith.constant 367 : index
    %1691 = memref.load %arg13[%c367] : memref<522xf32, #tpu.memory_space<smem>>
    %c495 = arith.constant 495 : index
    %1692 = memref.load %arg13[%c495] : memref<522xf32, #tpu.memory_space<smem>>
    %1693 = vector.broadcast %1689 : f32 to vector<8x16xf32>
    %1694 = arith.mulf %1447, %1693 : vector<8x16xf32>
    %1695 = vector.broadcast %1690 : f32 to vector<8x16xf32>
    %1696 = arith.mulf %9, %1695 : vector<8x16xf32>
    %1697 = arith.addf %1694, %1696 : vector<8x16xf32>
    %1698 = vector.broadcast %1691 : f32 to vector<8x16xf32>
    %1699 = arith.addf %1697, %1698 : vector<8x16xf32>
    %cst_160 = arith.constant 0.000000e+00 : f32
    %1700 = vector.broadcast %cst_160 : f32 to vector<8x16xf32>
    %1701 = arith.maximumf %1699, %1700 : vector<8x16xf32>
    %1702 = vector.broadcast %1692 : f32 to vector<8x16xf32>
    %1703 = arith.mulf %1701, %1702 : vector<8x16xf32>
    %1704 = arith.addf %1688, %1703 : vector<8x16xf32>
    %c518 = arith.constant 518 : index
    %1705 = memref.load %arg13[%c518] : memref<522xf32, #tpu.memory_space<smem>>
    %1706 = vector.broadcast %1705 : f32 to vector<8x16xf32>
    %1707 = arith.addf %1704, %1706 : vector<8x16xf32>
    %1708 = arith.addf %1158, %1707 : vector<8x16xf32>
    %cst_161 = arith.constant dense<0xFF800000> : vector<16xf32>
    %1709 = vector.multi_reduction <maximumf>, %1707, %cst_161 [0] : vector<8x16xf32> to vector<16xf32>
    %1710 = vector.shape_cast %1709 : vector<16xf32> to vector<1x16xf32>
    %1711 = vector.broadcast %1710 : vector<1x16xf32> to vector<8x16xf32>
    %1712 = arith.subf %1707, %1711 : vector<8x16xf32>
    %1713 = math.exp %1712 : vector<8x16xf32>
    %cst_162 = arith.constant dense<0.000000e+00> : vector<16xf32>
    %1714 = vector.multi_reduction <add>, %1713, %cst_162 [0] : vector<8x16xf32> to vector<16xf32>
    %1715 = vector.shape_cast %1714 : vector<16xf32> to vector<1x16xf32>
    %1716 = vector.broadcast %1715 : vector<1x16xf32> to vector<8x16xf32>
    %1717 = arith.divf %1713, %1716 : vector<8x16xf32>
    %cst_163 = arith.constant dense<0.000000e+00> : vector<16x32xf32>
    %1718 = tpu.matmul %1717, %1173, %cst_163 {dimension_numbers = #tpu.dot_dimension_numbers<[0], [0], [1], [1], [0, 1, 1, 1], [], []>} : vector<8x16xf32>, vector<8x32xf32>, vector<16x32xf32> -> vector<16x32xf32>
    %1719 = arith.addf %1169, %1718 : vector<16x32xf32>
    %1720 = vector.extract_strided_slice %63 {offsets = [0, 96], sizes = [8, 32], strides = [1, 1]} : vector<8x256xf32> to vector<8x32xf32>
    %1721 = vector.extract_strided_slice %65 {offsets = [0, 224], sizes = [16, 32], strides = [1, 1]} : vector<16x256xf32> to vector<16x32xf32>
    %1722 = vector.extract_strided_slice %65 {offsets = [0, 96], sizes = [16, 32], strides = [1, 1]} : vector<16x256xf32> to vector<16x32xf32>
    %1723 = vector.extract_strided_slice %63 {offsets = [0, 224], sizes = [8, 32], strides = [1, 1]} : vector<8x256xf32> to vector<8x32xf32>
    %cst_164 = arith.constant dense<0.000000e+00> : vector<8x16xf32>
    %1724 = tpu.matmul %1720, %61, %cst_164 {dimension_numbers = #tpu.dot_dimension_numbers<[1], [1], [0], [0], [0, 0, 1, 0], [], []>} : vector<8x32xf32>, vector<16x32xf32>, vector<8x16xf32> -> vector<8x16xf32>
    %cst_165 = arith.constant 0.000000e+00 : f32
    %1725 = vector.broadcast %cst_165 : f32 to vector<8x16xf32>
    %c96 = arith.constant 96 : index
    %1726 = memref.load %arg13[%c96] : memref<522xf32, #tpu.memory_space<smem>>
    %c112 = arith.constant 112 : index
    %1727 = memref.load %arg13[%c112] : memref<522xf32, #tpu.memory_space<smem>>
    %c304 = arith.constant 304 : index
    %1728 = memref.load %arg13[%c304] : memref<522xf32, #tpu.memory_space<smem>>
    %c432 = arith.constant 432 : index
    %1729 = memref.load %arg13[%c432] : memref<522xf32, #tpu.memory_space<smem>>
    %1730 = vector.broadcast %1726 : f32 to vector<8x16xf32>
    %1731 = arith.mulf %1724, %1730 : vector<8x16xf32>
    %1732 = vector.broadcast %1727 : f32 to vector<8x16xf32>
    %1733 = arith.mulf %9, %1732 : vector<8x16xf32>
    %1734 = arith.addf %1731, %1733 : vector<8x16xf32>
    %1735 = vector.broadcast %1728 : f32 to vector<8x16xf32>
    %1736 = arith.addf %1734, %1735 : vector<8x16xf32>
    %cst_166 = arith.constant 0.000000e+00 : f32
    %1737 = vector.broadcast %cst_166 : f32 to vector<8x16xf32>
    %1738 = arith.maximumf %1736, %1737 : vector<8x16xf32>
    %1739 = vector.broadcast %1729 : f32 to vector<8x16xf32>
    %1740 = arith.mulf %1738, %1739 : vector<8x16xf32>
    %1741 = arith.addf %1725, %1740 : vector<8x16xf32>
    %c97 = arith.constant 97 : index
    %1742 = memref.load %arg13[%c97] : memref<522xf32, #tpu.memory_space<smem>>
    %c113 = arith.constant 113 : index
    %1743 = memref.load %arg13[%c113] : memref<522xf32, #tpu.memory_space<smem>>
    %c305 = arith.constant 305 : index
    %1744 = memref.load %arg13[%c305] : memref<522xf32, #tpu.memory_space<smem>>
    %c433 = arith.constant 433 : index
    %1745 = memref.load %arg13[%c433] : memref<522xf32, #tpu.memory_space<smem>>
    %1746 = vector.broadcast %1742 : f32 to vector<8x16xf32>
    %1747 = arith.mulf %1724, %1746 : vector<8x16xf32>
    %1748 = vector.broadcast %1743 : f32 to vector<8x16xf32>
    %1749 = arith.mulf %9, %1748 : vector<8x16xf32>
    %1750 = arith.addf %1747, %1749 : vector<8x16xf32>
    %1751 = vector.broadcast %1744 : f32 to vector<8x16xf32>
    %1752 = arith.addf %1750, %1751 : vector<8x16xf32>
    %cst_167 = arith.constant 0.000000e+00 : f32
    %1753 = vector.broadcast %cst_167 : f32 to vector<8x16xf32>
    %1754 = arith.maximumf %1752, %1753 : vector<8x16xf32>
    %1755 = vector.broadcast %1745 : f32 to vector<8x16xf32>
    %1756 = arith.mulf %1754, %1755 : vector<8x16xf32>
    %1757 = arith.addf %1741, %1756 : vector<8x16xf32>
    %c98 = arith.constant 98 : index
    %1758 = memref.load %arg13[%c98] : memref<522xf32, #tpu.memory_space<smem>>
    %c114 = arith.constant 114 : index
    %1759 = memref.load %arg13[%c114] : memref<522xf32, #tpu.memory_space<smem>>
    %c306 = arith.constant 306 : index
    %1760 = memref.load %arg13[%c306] : memref<522xf32, #tpu.memory_space<smem>>
    %c434 = arith.constant 434 : index
    %1761 = memref.load %arg13[%c434] : memref<522xf32, #tpu.memory_space<smem>>
    %1762 = vector.broadcast %1758 : f32 to vector<8x16xf32>
    %1763 = arith.mulf %1724, %1762 : vector<8x16xf32>
    %1764 = vector.broadcast %1759 : f32 to vector<8x16xf32>
    %1765 = arith.mulf %9, %1764 : vector<8x16xf32>
    %1766 = arith.addf %1763, %1765 : vector<8x16xf32>
    %1767 = vector.broadcast %1760 : f32 to vector<8x16xf32>
    %1768 = arith.addf %1766, %1767 : vector<8x16xf32>
    %cst_168 = arith.constant 0.000000e+00 : f32
    %1769 = vector.broadcast %cst_168 : f32 to vector<8x16xf32>
    %1770 = arith.maximumf %1768, %1769 : vector<8x16xf32>
    %1771 = vector.broadcast %1761 : f32 to vector<8x16xf32>
    %1772 = arith.mulf %1770, %1771 : vector<8x16xf32>
    %1773 = arith.addf %1757, %1772 : vector<8x16xf32>
    %c99 = arith.constant 99 : index
    %1774 = memref.load %arg13[%c99] : memref<522xf32, #tpu.memory_space<smem>>
    %c115 = arith.constant 115 : index
    %1775 = memref.load %arg13[%c115] : memref<522xf32, #tpu.memory_space<smem>>
    %c307 = arith.constant 307 : index
    %1776 = memref.load %arg13[%c307] : memref<522xf32, #tpu.memory_space<smem>>
    %c435 = arith.constant 435 : index
    %1777 = memref.load %arg13[%c435] : memref<522xf32, #tpu.memory_space<smem>>
    %1778 = vector.broadcast %1774 : f32 to vector<8x16xf32>
    %1779 = arith.mulf %1724, %1778 : vector<8x16xf32>
    %1780 = vector.broadcast %1775 : f32 to vector<8x16xf32>
    %1781 = arith.mulf %9, %1780 : vector<8x16xf32>
    %1782 = arith.addf %1779, %1781 : vector<8x16xf32>
    %1783 = vector.broadcast %1776 : f32 to vector<8x16xf32>
    %1784 = arith.addf %1782, %1783 : vector<8x16xf32>
    %cst_169 = arith.constant 0.000000e+00 : f32
    %1785 = vector.broadcast %cst_169 : f32 to vector<8x16xf32>
    %1786 = arith.maximumf %1784, %1785 : vector<8x16xf32>
    %1787 = vector.broadcast %1777 : f32 to vector<8x16xf32>
    %1788 = arith.mulf %1786, %1787 : vector<8x16xf32>
    %1789 = arith.addf %1773, %1788 : vector<8x16xf32>
    %c100 = arith.constant 100 : index
    %1790 = memref.load %arg13[%c100] : memref<522xf32, #tpu.memory_space<smem>>
    %c116 = arith.constant 116 : index
    %1791 = memref.load %arg13[%c116] : memref<522xf32, #tpu.memory_space<smem>>
    %c308 = arith.constant 308 : index
    %1792 = memref.load %arg13[%c308] : memref<522xf32, #tpu.memory_space<smem>>
    %c436 = arith.constant 436 : index
    %1793 = memref.load %arg13[%c436] : memref<522xf32, #tpu.memory_space<smem>>
    %1794 = vector.broadcast %1790 : f32 to vector<8x16xf32>
    %1795 = arith.mulf %1724, %1794 : vector<8x16xf32>
    %1796 = vector.broadcast %1791 : f32 to vector<8x16xf32>
    %1797 = arith.mulf %9, %1796 : vector<8x16xf32>
    %1798 = arith.addf %1795, %1797 : vector<8x16xf32>
    %1799 = vector.broadcast %1792 : f32 to vector<8x16xf32>
    %1800 = arith.addf %1798, %1799 : vector<8x16xf32>
    %cst_170 = arith.constant 0.000000e+00 : f32
    %1801 = vector.broadcast %cst_170 : f32 to vector<8x16xf32>
    %1802 = arith.maximumf %1800, %1801 : vector<8x16xf32>
    %1803 = vector.broadcast %1793 : f32 to vector<8x16xf32>
    %1804 = arith.mulf %1802, %1803 : vector<8x16xf32>
    %1805 = arith.addf %1789, %1804 : vector<8x16xf32>
    %c101 = arith.constant 101 : index
    %1806 = memref.load %arg13[%c101] : memref<522xf32, #tpu.memory_space<smem>>
    %c117 = arith.constant 117 : index
    %1807 = memref.load %arg13[%c117] : memref<522xf32, #tpu.memory_space<smem>>
    %c309 = arith.constant 309 : index
    %1808 = memref.load %arg13[%c309] : memref<522xf32, #tpu.memory_space<smem>>
    %c437 = arith.constant 437 : index
    %1809 = memref.load %arg13[%c437] : memref<522xf32, #tpu.memory_space<smem>>
    %1810 = vector.broadcast %1806 : f32 to vector<8x16xf32>
    %1811 = arith.mulf %1724, %1810 : vector<8x16xf32>
    %1812 = vector.broadcast %1807 : f32 to vector<8x16xf32>
    %1813 = arith.mulf %9, %1812 : vector<8x16xf32>
    %1814 = arith.addf %1811, %1813 : vector<8x16xf32>
    %1815 = vector.broadcast %1808 : f32 to vector<8x16xf32>
    %1816 = arith.addf %1814, %1815 : vector<8x16xf32>
    %cst_171 = arith.constant 0.000000e+00 : f32
    %1817 = vector.broadcast %cst_171 : f32 to vector<8x16xf32>
    %1818 = arith.maximumf %1816, %1817 : vector<8x16xf32>
    %1819 = vector.broadcast %1809 : f32 to vector<8x16xf32>
    %1820 = arith.mulf %1818, %1819 : vector<8x16xf32>
    %1821 = arith.addf %1805, %1820 : vector<8x16xf32>
    %c102 = arith.constant 102 : index
    %1822 = memref.load %arg13[%c102] : memref<522xf32, #tpu.memory_space<smem>>
    %c118 = arith.constant 118 : index
    %1823 = memref.load %arg13[%c118] : memref<522xf32, #tpu.memory_space<smem>>
    %c310 = arith.constant 310 : index
    %1824 = memref.load %arg13[%c310] : memref<522xf32, #tpu.memory_space<smem>>
    %c438 = arith.constant 438 : index
    %1825 = memref.load %arg13[%c438] : memref<522xf32, #tpu.memory_space<smem>>
    %1826 = vector.broadcast %1822 : f32 to vector<8x16xf32>
    %1827 = arith.mulf %1724, %1826 : vector<8x16xf32>
    %1828 = vector.broadcast %1823 : f32 to vector<8x16xf32>
    %1829 = arith.mulf %9, %1828 : vector<8x16xf32>
    %1830 = arith.addf %1827, %1829 : vector<8x16xf32>
    %1831 = vector.broadcast %1824 : f32 to vector<8x16xf32>
    %1832 = arith.addf %1830, %1831 : vector<8x16xf32>
    %cst_172 = arith.constant 0.000000e+00 : f32
    %1833 = vector.broadcast %cst_172 : f32 to vector<8x16xf32>
    %1834 = arith.maximumf %1832, %1833 : vector<8x16xf32>
    %1835 = vector.broadcast %1825 : f32 to vector<8x16xf32>
    %1836 = arith.mulf %1834, %1835 : vector<8x16xf32>
    %1837 = arith.addf %1821, %1836 : vector<8x16xf32>
    %c103 = arith.constant 103 : index
    %1838 = memref.load %arg13[%c103] : memref<522xf32, #tpu.memory_space<smem>>
    %c119 = arith.constant 119 : index
    %1839 = memref.load %arg13[%c119] : memref<522xf32, #tpu.memory_space<smem>>
    %c311 = arith.constant 311 : index
    %1840 = memref.load %arg13[%c311] : memref<522xf32, #tpu.memory_space<smem>>
    %c439 = arith.constant 439 : index
    %1841 = memref.load %arg13[%c439] : memref<522xf32, #tpu.memory_space<smem>>
    %1842 = vector.broadcast %1838 : f32 to vector<8x16xf32>
    %1843 = arith.mulf %1724, %1842 : vector<8x16xf32>
    %1844 = vector.broadcast %1839 : f32 to vector<8x16xf32>
    %1845 = arith.mulf %9, %1844 : vector<8x16xf32>
    %1846 = arith.addf %1843, %1845 : vector<8x16xf32>
    %1847 = vector.broadcast %1840 : f32 to vector<8x16xf32>
    %1848 = arith.addf %1846, %1847 : vector<8x16xf32>
    %cst_173 = arith.constant 0.000000e+00 : f32
    %1849 = vector.broadcast %cst_173 : f32 to vector<8x16xf32>
    %1850 = arith.maximumf %1848, %1849 : vector<8x16xf32>
    %1851 = vector.broadcast %1841 : f32 to vector<8x16xf32>
    %1852 = arith.mulf %1850, %1851 : vector<8x16xf32>
    %1853 = arith.addf %1837, %1852 : vector<8x16xf32>
    %c104 = arith.constant 104 : index
    %1854 = memref.load %arg13[%c104] : memref<522xf32, #tpu.memory_space<smem>>
    %c120 = arith.constant 120 : index
    %1855 = memref.load %arg13[%c120] : memref<522xf32, #tpu.memory_space<smem>>
    %c312 = arith.constant 312 : index
    %1856 = memref.load %arg13[%c312] : memref<522xf32, #tpu.memory_space<smem>>
    %c440 = arith.constant 440 : index
    %1857 = memref.load %arg13[%c440] : memref<522xf32, #tpu.memory_space<smem>>
    %1858 = vector.broadcast %1854 : f32 to vector<8x16xf32>
    %1859 = arith.mulf %1724, %1858 : vector<8x16xf32>
    %1860 = vector.broadcast %1855 : f32 to vector<8x16xf32>
    %1861 = arith.mulf %9, %1860 : vector<8x16xf32>
    %1862 = arith.addf %1859, %1861 : vector<8x16xf32>
    %1863 = vector.broadcast %1856 : f32 to vector<8x16xf32>
    %1864 = arith.addf %1862, %1863 : vector<8x16xf32>
    %cst_174 = arith.constant 0.000000e+00 : f32
    %1865 = vector.broadcast %cst_174 : f32 to vector<8x16xf32>
    %1866 = arith.maximumf %1864, %1865 : vector<8x16xf32>
    %1867 = vector.broadcast %1857 : f32 to vector<8x16xf32>
    %1868 = arith.mulf %1866, %1867 : vector<8x16xf32>
    %1869 = arith.addf %1853, %1868 : vector<8x16xf32>
    %c105 = arith.constant 105 : index
    %1870 = memref.load %arg13[%c105] : memref<522xf32, #tpu.memory_space<smem>>
    %c121 = arith.constant 121 : index
    %1871 = memref.load %arg13[%c121] : memref<522xf32, #tpu.memory_space<smem>>
    %c313 = arith.constant 313 : index
    %1872 = memref.load %arg13[%c313] : memref<522xf32, #tpu.memory_space<smem>>
    %c441 = arith.constant 441 : index
    %1873 = memref.load %arg13[%c441] : memref<522xf32, #tpu.memory_space<smem>>
    %1874 = vector.broadcast %1870 : f32 to vector<8x16xf32>
    %1875 = arith.mulf %1724, %1874 : vector<8x16xf32>
    %1876 = vector.broadcast %1871 : f32 to vector<8x16xf32>
    %1877 = arith.mulf %9, %1876 : vector<8x16xf32>
    %1878 = arith.addf %1875, %1877 : vector<8x16xf32>
    %1879 = vector.broadcast %1872 : f32 to vector<8x16xf32>
    %1880 = arith.addf %1878, %1879 : vector<8x16xf32>
    %cst_175 = arith.constant 0.000000e+00 : f32
    %1881 = vector.broadcast %cst_175 : f32 to vector<8x16xf32>
    %1882 = arith.maximumf %1880, %1881 : vector<8x16xf32>
    %1883 = vector.broadcast %1873 : f32 to vector<8x16xf32>
    %1884 = arith.mulf %1882, %1883 : vector<8x16xf32>
    %1885 = arith.addf %1869, %1884 : vector<8x16xf32>
    %c106 = arith.constant 106 : index
    %1886 = memref.load %arg13[%c106] : memref<522xf32, #tpu.memory_space<smem>>
    %c122 = arith.constant 122 : index
    %1887 = memref.load %arg13[%c122] : memref<522xf32, #tpu.memory_space<smem>>
    %c314 = arith.constant 314 : index
    %1888 = memref.load %arg13[%c314] : memref<522xf32, #tpu.memory_space<smem>>
    %c442 = arith.constant 442 : index
    %1889 = memref.load %arg13[%c442] : memref<522xf32, #tpu.memory_space<smem>>
    %1890 = vector.broadcast %1886 : f32 to vector<8x16xf32>
    %1891 = arith.mulf %1724, %1890 : vector<8x16xf32>
    %1892 = vector.broadcast %1887 : f32 to vector<8x16xf32>
    %1893 = arith.mulf %9, %1892 : vector<8x16xf32>
    %1894 = arith.addf %1891, %1893 : vector<8x16xf32>
    %1895 = vector.broadcast %1888 : f32 to vector<8x16xf32>
    %1896 = arith.addf %1894, %1895 : vector<8x16xf32>
    %cst_176 = arith.constant 0.000000e+00 : f32
    %1897 = vector.broadcast %cst_176 : f32 to vector<8x16xf32>
    %1898 = arith.maximumf %1896, %1897 : vector<8x16xf32>
    %1899 = vector.broadcast %1889 : f32 to vector<8x16xf32>
    %1900 = arith.mulf %1898, %1899 : vector<8x16xf32>
    %1901 = arith.addf %1885, %1900 : vector<8x16xf32>
    %c107 = arith.constant 107 : index
    %1902 = memref.load %arg13[%c107] : memref<522xf32, #tpu.memory_space<smem>>
    %c123 = arith.constant 123 : index
    %1903 = memref.load %arg13[%c123] : memref<522xf32, #tpu.memory_space<smem>>
    %c315 = arith.constant 315 : index
    %1904 = memref.load %arg13[%c315] : memref<522xf32, #tpu.memory_space<smem>>
    %c443 = arith.constant 443 : index
    %1905 = memref.load %arg13[%c443] : memref<522xf32, #tpu.memory_space<smem>>
    %1906 = vector.broadcast %1902 : f32 to vector<8x16xf32>
    %1907 = arith.mulf %1724, %1906 : vector<8x16xf32>
    %1908 = vector.broadcast %1903 : f32 to vector<8x16xf32>
    %1909 = arith.mulf %9, %1908 : vector<8x16xf32>
    %1910 = arith.addf %1907, %1909 : vector<8x16xf32>
    %1911 = vector.broadcast %1904 : f32 to vector<8x16xf32>
    %1912 = arith.addf %1910, %1911 : vector<8x16xf32>
    %cst_177 = arith.constant 0.000000e+00 : f32
    %1913 = vector.broadcast %cst_177 : f32 to vector<8x16xf32>
    %1914 = arith.maximumf %1912, %1913 : vector<8x16xf32>
    %1915 = vector.broadcast %1905 : f32 to vector<8x16xf32>
    %1916 = arith.mulf %1914, %1915 : vector<8x16xf32>
    %1917 = arith.addf %1901, %1916 : vector<8x16xf32>
    %c108 = arith.constant 108 : index
    %1918 = memref.load %arg13[%c108] : memref<522xf32, #tpu.memory_space<smem>>
    %c124 = arith.constant 124 : index
    %1919 = memref.load %arg13[%c124] : memref<522xf32, #tpu.memory_space<smem>>
    %c316 = arith.constant 316 : index
    %1920 = memref.load %arg13[%c316] : memref<522xf32, #tpu.memory_space<smem>>
    %c444 = arith.constant 444 : index
    %1921 = memref.load %arg13[%c444] : memref<522xf32, #tpu.memory_space<smem>>
    %1922 = vector.broadcast %1918 : f32 to vector<8x16xf32>
    %1923 = arith.mulf %1724, %1922 : vector<8x16xf32>
    %1924 = vector.broadcast %1919 : f32 to vector<8x16xf32>
    %1925 = arith.mulf %9, %1924 : vector<8x16xf32>
    %1926 = arith.addf %1923, %1925 : vector<8x16xf32>
    %1927 = vector.broadcast %1920 : f32 to vector<8x16xf32>
    %1928 = arith.addf %1926, %1927 : vector<8x16xf32>
    %cst_178 = arith.constant 0.000000e+00 : f32
    %1929 = vector.broadcast %cst_178 : f32 to vector<8x16xf32>
    %1930 = arith.maximumf %1928, %1929 : vector<8x16xf32>
    %1931 = vector.broadcast %1921 : f32 to vector<8x16xf32>
    %1932 = arith.mulf %1930, %1931 : vector<8x16xf32>
    %1933 = arith.addf %1917, %1932 : vector<8x16xf32>
    %c109 = arith.constant 109 : index
    %1934 = memref.load %arg13[%c109] : memref<522xf32, #tpu.memory_space<smem>>
    %c125 = arith.constant 125 : index
    %1935 = memref.load %arg13[%c125] : memref<522xf32, #tpu.memory_space<smem>>
    %c317 = arith.constant 317 : index
    %1936 = memref.load %arg13[%c317] : memref<522xf32, #tpu.memory_space<smem>>
    %c445 = arith.constant 445 : index
    %1937 = memref.load %arg13[%c445] : memref<522xf32, #tpu.memory_space<smem>>
    %1938 = vector.broadcast %1934 : f32 to vector<8x16xf32>
    %1939 = arith.mulf %1724, %1938 : vector<8x16xf32>
    %1940 = vector.broadcast %1935 : f32 to vector<8x16xf32>
    %1941 = arith.mulf %9, %1940 : vector<8x16xf32>
    %1942 = arith.addf %1939, %1941 : vector<8x16xf32>
    %1943 = vector.broadcast %1936 : f32 to vector<8x16xf32>
    %1944 = arith.addf %1942, %1943 : vector<8x16xf32>
    %cst_179 = arith.constant 0.000000e+00 : f32
    %1945 = vector.broadcast %cst_179 : f32 to vector<8x16xf32>
    %1946 = arith.maximumf %1944, %1945 : vector<8x16xf32>
    %1947 = vector.broadcast %1937 : f32 to vector<8x16xf32>
    %1948 = arith.mulf %1946, %1947 : vector<8x16xf32>
    %1949 = arith.addf %1933, %1948 : vector<8x16xf32>
    %c110 = arith.constant 110 : index
    %1950 = memref.load %arg13[%c110] : memref<522xf32, #tpu.memory_space<smem>>
    %c126 = arith.constant 126 : index
    %1951 = memref.load %arg13[%c126] : memref<522xf32, #tpu.memory_space<smem>>
    %c318 = arith.constant 318 : index
    %1952 = memref.load %arg13[%c318] : memref<522xf32, #tpu.memory_space<smem>>
    %c446 = arith.constant 446 : index
    %1953 = memref.load %arg13[%c446] : memref<522xf32, #tpu.memory_space<smem>>
    %1954 = vector.broadcast %1950 : f32 to vector<8x16xf32>
    %1955 = arith.mulf %1724, %1954 : vector<8x16xf32>
    %1956 = vector.broadcast %1951 : f32 to vector<8x16xf32>
    %1957 = arith.mulf %9, %1956 : vector<8x16xf32>
    %1958 = arith.addf %1955, %1957 : vector<8x16xf32>
    %1959 = vector.broadcast %1952 : f32 to vector<8x16xf32>
    %1960 = arith.addf %1958, %1959 : vector<8x16xf32>
    %cst_180 = arith.constant 0.000000e+00 : f32
    %1961 = vector.broadcast %cst_180 : f32 to vector<8x16xf32>
    %1962 = arith.maximumf %1960, %1961 : vector<8x16xf32>
    %1963 = vector.broadcast %1953 : f32 to vector<8x16xf32>
    %1964 = arith.mulf %1962, %1963 : vector<8x16xf32>
    %1965 = arith.addf %1949, %1964 : vector<8x16xf32>
    %c111 = arith.constant 111 : index
    %1966 = memref.load %arg13[%c111] : memref<522xf32, #tpu.memory_space<smem>>
    %c127 = arith.constant 127 : index
    %1967 = memref.load %arg13[%c127] : memref<522xf32, #tpu.memory_space<smem>>
    %c319 = arith.constant 319 : index
    %1968 = memref.load %arg13[%c319] : memref<522xf32, #tpu.memory_space<smem>>
    %c447 = arith.constant 447 : index
    %1969 = memref.load %arg13[%c447] : memref<522xf32, #tpu.memory_space<smem>>
    %1970 = vector.broadcast %1966 : f32 to vector<8x16xf32>
    %1971 = arith.mulf %1724, %1970 : vector<8x16xf32>
    %1972 = vector.broadcast %1967 : f32 to vector<8x16xf32>
    %1973 = arith.mulf %9, %1972 : vector<8x16xf32>
    %1974 = arith.addf %1971, %1973 : vector<8x16xf32>
    %1975 = vector.broadcast %1968 : f32 to vector<8x16xf32>
    %1976 = arith.addf %1974, %1975 : vector<8x16xf32>
    %cst_181 = arith.constant 0.000000e+00 : f32
    %1977 = vector.broadcast %cst_181 : f32 to vector<8x16xf32>
    %1978 = arith.maximumf %1976, %1977 : vector<8x16xf32>
    %1979 = vector.broadcast %1969 : f32 to vector<8x16xf32>
    %1980 = arith.mulf %1978, %1979 : vector<8x16xf32>
    %1981 = arith.addf %1965, %1980 : vector<8x16xf32>
    %c515 = arith.constant 515 : index
    %1982 = memref.load %arg13[%c515] : memref<522xf32, #tpu.memory_space<smem>>
    %1983 = vector.broadcast %1982 : f32 to vector<8x16xf32>
    %1984 = arith.addf %1981, %1983 : vector<8x16xf32>
    %1985 = arith.addf %1435, %1984 : vector<8x16xf32>
    %cst_182 = arith.constant dense<0xFF800000> : vector<8xf32>
    %1986 = vector.multi_reduction <maximumf>, %1984, %cst_182 [1] : vector<8x16xf32> to vector<8xf32>
    %1987 = vector.shape_cast %1986 : vector<8xf32> to vector<8x1xf32>
    %1988 = vector.broadcast %1987 : vector<8x1xf32> to vector<8x16xf32>
    %1989 = arith.subf %1984, %1988 : vector<8x16xf32>
    %1990 = math.exp %1989 : vector<8x16xf32>
    %cst_183 = arith.constant dense<0.000000e+00> : vector<8xf32>
    %1991 = vector.multi_reduction <add>, %1990, %cst_183 [1] : vector<8x16xf32> to vector<8xf32>
    %1992 = vector.shape_cast %1991 : vector<8xf32> to vector<8x1xf32>
    %1993 = vector.broadcast %1992 : vector<8x1xf32> to vector<8x16xf32>
    %1994 = arith.divf %1990, %1993 : vector<8x16xf32>
    %cst_184 = arith.constant dense<0.000000e+00> : vector<8x32xf32>
    %1995 = tpu.matmul %1994, %1721, %cst_184 {dimension_numbers = #tpu.dot_dimension_numbers<[1], [0], [0], [1], [0, 0, 1, 1], [], []>} : vector<8x16xf32>, vector<16x32xf32>, vector<8x32xf32> -> vector<8x32xf32>
    %1996 = arith.addf %1446, %1995 : vector<8x32xf32>
    %cst_185 = arith.constant dense<0.000000e+00> : vector<8x16xf32>
    %1997 = tpu.matmul %35, %1722, %cst_185 {dimension_numbers = #tpu.dot_dimension_numbers<[1], [1], [0], [0], [0, 0, 1, 0], [], []>} : vector<8x32xf32>, vector<16x32xf32>, vector<8x16xf32> -> vector<8x16xf32>
    %cst_186 = arith.constant 0.000000e+00 : f32
    %1998 = vector.broadcast %cst_186 : f32 to vector<8x16xf32>
    %c224 = arith.constant 224 : index
    %1999 = memref.load %arg13[%c224] : memref<522xf32, #tpu.memory_space<smem>>
    %c240 = arith.constant 240 : index
    %2000 = memref.load %arg13[%c240] : memref<522xf32, #tpu.memory_space<smem>>
    %c368 = arith.constant 368 : index
    %2001 = memref.load %arg13[%c368] : memref<522xf32, #tpu.memory_space<smem>>
    %c496 = arith.constant 496 : index
    %2002 = memref.load %arg13[%c496] : memref<522xf32, #tpu.memory_space<smem>>
    %2003 = vector.broadcast %1999 : f32 to vector<8x16xf32>
    %2004 = arith.mulf %1997, %2003 : vector<8x16xf32>
    %2005 = vector.broadcast %2000 : f32 to vector<8x16xf32>
    %2006 = arith.mulf %9, %2005 : vector<8x16xf32>
    %2007 = arith.addf %2004, %2006 : vector<8x16xf32>
    %2008 = vector.broadcast %2001 : f32 to vector<8x16xf32>
    %2009 = arith.addf %2007, %2008 : vector<8x16xf32>
    %cst_187 = arith.constant 0.000000e+00 : f32
    %2010 = vector.broadcast %cst_187 : f32 to vector<8x16xf32>
    %2011 = arith.maximumf %2009, %2010 : vector<8x16xf32>
    %2012 = vector.broadcast %2002 : f32 to vector<8x16xf32>
    %2013 = arith.mulf %2011, %2012 : vector<8x16xf32>
    %2014 = arith.addf %1998, %2013 : vector<8x16xf32>
    %c225 = arith.constant 225 : index
    %2015 = memref.load %arg13[%c225] : memref<522xf32, #tpu.memory_space<smem>>
    %c241 = arith.constant 241 : index
    %2016 = memref.load %arg13[%c241] : memref<522xf32, #tpu.memory_space<smem>>
    %c369 = arith.constant 369 : index
    %2017 = memref.load %arg13[%c369] : memref<522xf32, #tpu.memory_space<smem>>
    %c497 = arith.constant 497 : index
    %2018 = memref.load %arg13[%c497] : memref<522xf32, #tpu.memory_space<smem>>
    %2019 = vector.broadcast %2015 : f32 to vector<8x16xf32>
    %2020 = arith.mulf %1997, %2019 : vector<8x16xf32>
    %2021 = vector.broadcast %2016 : f32 to vector<8x16xf32>
    %2022 = arith.mulf %9, %2021 : vector<8x16xf32>
    %2023 = arith.addf %2020, %2022 : vector<8x16xf32>
    %2024 = vector.broadcast %2017 : f32 to vector<8x16xf32>
    %2025 = arith.addf %2023, %2024 : vector<8x16xf32>
    %cst_188 = arith.constant 0.000000e+00 : f32
    %2026 = vector.broadcast %cst_188 : f32 to vector<8x16xf32>
    %2027 = arith.maximumf %2025, %2026 : vector<8x16xf32>
    %2028 = vector.broadcast %2018 : f32 to vector<8x16xf32>
    %2029 = arith.mulf %2027, %2028 : vector<8x16xf32>
    %2030 = arith.addf %2014, %2029 : vector<8x16xf32>
    %c226 = arith.constant 226 : index
    %2031 = memref.load %arg13[%c226] : memref<522xf32, #tpu.memory_space<smem>>
    %c242 = arith.constant 242 : index
    %2032 = memref.load %arg13[%c242] : memref<522xf32, #tpu.memory_space<smem>>
    %c370 = arith.constant 370 : index
    %2033 = memref.load %arg13[%c370] : memref<522xf32, #tpu.memory_space<smem>>
    %c498 = arith.constant 498 : index
    %2034 = memref.load %arg13[%c498] : memref<522xf32, #tpu.memory_space<smem>>
    %2035 = vector.broadcast %2031 : f32 to vector<8x16xf32>
    %2036 = arith.mulf %1997, %2035 : vector<8x16xf32>
    %2037 = vector.broadcast %2032 : f32 to vector<8x16xf32>
    %2038 = arith.mulf %9, %2037 : vector<8x16xf32>
    %2039 = arith.addf %2036, %2038 : vector<8x16xf32>
    %2040 = vector.broadcast %2033 : f32 to vector<8x16xf32>
    %2041 = arith.addf %2039, %2040 : vector<8x16xf32>
    %cst_189 = arith.constant 0.000000e+00 : f32
    %2042 = vector.broadcast %cst_189 : f32 to vector<8x16xf32>
    %2043 = arith.maximumf %2041, %2042 : vector<8x16xf32>
    %2044 = vector.broadcast %2034 : f32 to vector<8x16xf32>
    %2045 = arith.mulf %2043, %2044 : vector<8x16xf32>
    %2046 = arith.addf %2030, %2045 : vector<8x16xf32>
    %c227 = arith.constant 227 : index
    %2047 = memref.load %arg13[%c227] : memref<522xf32, #tpu.memory_space<smem>>
    %c243 = arith.constant 243 : index
    %2048 = memref.load %arg13[%c243] : memref<522xf32, #tpu.memory_space<smem>>
    %c371 = arith.constant 371 : index
    %2049 = memref.load %arg13[%c371] : memref<522xf32, #tpu.memory_space<smem>>
    %c499 = arith.constant 499 : index
    %2050 = memref.load %arg13[%c499] : memref<522xf32, #tpu.memory_space<smem>>
    %2051 = vector.broadcast %2047 : f32 to vector<8x16xf32>
    %2052 = arith.mulf %1997, %2051 : vector<8x16xf32>
    %2053 = vector.broadcast %2048 : f32 to vector<8x16xf32>
    %2054 = arith.mulf %9, %2053 : vector<8x16xf32>
    %2055 = arith.addf %2052, %2054 : vector<8x16xf32>
    %2056 = vector.broadcast %2049 : f32 to vector<8x16xf32>
    %2057 = arith.addf %2055, %2056 : vector<8x16xf32>
    %cst_190 = arith.constant 0.000000e+00 : f32
    %2058 = vector.broadcast %cst_190 : f32 to vector<8x16xf32>
    %2059 = arith.maximumf %2057, %2058 : vector<8x16xf32>
    %2060 = vector.broadcast %2050 : f32 to vector<8x16xf32>
    %2061 = arith.mulf %2059, %2060 : vector<8x16xf32>
    %2062 = arith.addf %2046, %2061 : vector<8x16xf32>
    %c228 = arith.constant 228 : index
    %2063 = memref.load %arg13[%c228] : memref<522xf32, #tpu.memory_space<smem>>
    %c244 = arith.constant 244 : index
    %2064 = memref.load %arg13[%c244] : memref<522xf32, #tpu.memory_space<smem>>
    %c372 = arith.constant 372 : index
    %2065 = memref.load %arg13[%c372] : memref<522xf32, #tpu.memory_space<smem>>
    %c500 = arith.constant 500 : index
    %2066 = memref.load %arg13[%c500] : memref<522xf32, #tpu.memory_space<smem>>
    %2067 = vector.broadcast %2063 : f32 to vector<8x16xf32>
    %2068 = arith.mulf %1997, %2067 : vector<8x16xf32>
    %2069 = vector.broadcast %2064 : f32 to vector<8x16xf32>
    %2070 = arith.mulf %9, %2069 : vector<8x16xf32>
    %2071 = arith.addf %2068, %2070 : vector<8x16xf32>
    %2072 = vector.broadcast %2065 : f32 to vector<8x16xf32>
    %2073 = arith.addf %2071, %2072 : vector<8x16xf32>
    %cst_191 = arith.constant 0.000000e+00 : f32
    %2074 = vector.broadcast %cst_191 : f32 to vector<8x16xf32>
    %2075 = arith.maximumf %2073, %2074 : vector<8x16xf32>
    %2076 = vector.broadcast %2066 : f32 to vector<8x16xf32>
    %2077 = arith.mulf %2075, %2076 : vector<8x16xf32>
    %2078 = arith.addf %2062, %2077 : vector<8x16xf32>
    %c229 = arith.constant 229 : index
    %2079 = memref.load %arg13[%c229] : memref<522xf32, #tpu.memory_space<smem>>
    %c245 = arith.constant 245 : index
    %2080 = memref.load %arg13[%c245] : memref<522xf32, #tpu.memory_space<smem>>
    %c373 = arith.constant 373 : index
    %2081 = memref.load %arg13[%c373] : memref<522xf32, #tpu.memory_space<smem>>
    %c501 = arith.constant 501 : index
    %2082 = memref.load %arg13[%c501] : memref<522xf32, #tpu.memory_space<smem>>
    %2083 = vector.broadcast %2079 : f32 to vector<8x16xf32>
    %2084 = arith.mulf %1997, %2083 : vector<8x16xf32>
    %2085 = vector.broadcast %2080 : f32 to vector<8x16xf32>
    %2086 = arith.mulf %9, %2085 : vector<8x16xf32>
    %2087 = arith.addf %2084, %2086 : vector<8x16xf32>
    %2088 = vector.broadcast %2081 : f32 to vector<8x16xf32>
    %2089 = arith.addf %2087, %2088 : vector<8x16xf32>
    %cst_192 = arith.constant 0.000000e+00 : f32
    %2090 = vector.broadcast %cst_192 : f32 to vector<8x16xf32>
    %2091 = arith.maximumf %2089, %2090 : vector<8x16xf32>
    %2092 = vector.broadcast %2082 : f32 to vector<8x16xf32>
    %2093 = arith.mulf %2091, %2092 : vector<8x16xf32>
    %2094 = arith.addf %2078, %2093 : vector<8x16xf32>
    %c230 = arith.constant 230 : index
    %2095 = memref.load %arg13[%c230] : memref<522xf32, #tpu.memory_space<smem>>
    %c246 = arith.constant 246 : index
    %2096 = memref.load %arg13[%c246] : memref<522xf32, #tpu.memory_space<smem>>
    %c374 = arith.constant 374 : index
    %2097 = memref.load %arg13[%c374] : memref<522xf32, #tpu.memory_space<smem>>
    %c502 = arith.constant 502 : index
    %2098 = memref.load %arg13[%c502] : memref<522xf32, #tpu.memory_space<smem>>
    %2099 = vector.broadcast %2095 : f32 to vector<8x16xf32>
    %2100 = arith.mulf %1997, %2099 : vector<8x16xf32>
    %2101 = vector.broadcast %2096 : f32 to vector<8x16xf32>
    %2102 = arith.mulf %9, %2101 : vector<8x16xf32>
    %2103 = arith.addf %2100, %2102 : vector<8x16xf32>
    %2104 = vector.broadcast %2097 : f32 to vector<8x16xf32>
    %2105 = arith.addf %2103, %2104 : vector<8x16xf32>
    %cst_193 = arith.constant 0.000000e+00 : f32
    %2106 = vector.broadcast %cst_193 : f32 to vector<8x16xf32>
    %2107 = arith.maximumf %2105, %2106 : vector<8x16xf32>
    %2108 = vector.broadcast %2098 : f32 to vector<8x16xf32>
    %2109 = arith.mulf %2107, %2108 : vector<8x16xf32>
    %2110 = arith.addf %2094, %2109 : vector<8x16xf32>
    %c231 = arith.constant 231 : index
    %2111 = memref.load %arg13[%c231] : memref<522xf32, #tpu.memory_space<smem>>
    %c247 = arith.constant 247 : index
    %2112 = memref.load %arg13[%c247] : memref<522xf32, #tpu.memory_space<smem>>
    %c375 = arith.constant 375 : index
    %2113 = memref.load %arg13[%c375] : memref<522xf32, #tpu.memory_space<smem>>
    %c503 = arith.constant 503 : index
    %2114 = memref.load %arg13[%c503] : memref<522xf32, #tpu.memory_space<smem>>
    %2115 = vector.broadcast %2111 : f32 to vector<8x16xf32>
    %2116 = arith.mulf %1997, %2115 : vector<8x16xf32>
    %2117 = vector.broadcast %2112 : f32 to vector<8x16xf32>
    %2118 = arith.mulf %9, %2117 : vector<8x16xf32>
    %2119 = arith.addf %2116, %2118 : vector<8x16xf32>
    %2120 = vector.broadcast %2113 : f32 to vector<8x16xf32>
    %2121 = arith.addf %2119, %2120 : vector<8x16xf32>
    %cst_194 = arith.constant 0.000000e+00 : f32
    %2122 = vector.broadcast %cst_194 : f32 to vector<8x16xf32>
    %2123 = arith.maximumf %2121, %2122 : vector<8x16xf32>
    %2124 = vector.broadcast %2114 : f32 to vector<8x16xf32>
    %2125 = arith.mulf %2123, %2124 : vector<8x16xf32>
    %2126 = arith.addf %2110, %2125 : vector<8x16xf32>
    %c232 = arith.constant 232 : index
    %2127 = memref.load %arg13[%c232] : memref<522xf32, #tpu.memory_space<smem>>
    %c248 = arith.constant 248 : index
    %2128 = memref.load %arg13[%c248] : memref<522xf32, #tpu.memory_space<smem>>
    %c376 = arith.constant 376 : index
    %2129 = memref.load %arg13[%c376] : memref<522xf32, #tpu.memory_space<smem>>
    %c504 = arith.constant 504 : index
    %2130 = memref.load %arg13[%c504] : memref<522xf32, #tpu.memory_space<smem>>
    %2131 = vector.broadcast %2127 : f32 to vector<8x16xf32>
    %2132 = arith.mulf %1997, %2131 : vector<8x16xf32>
    %2133 = vector.broadcast %2128 : f32 to vector<8x16xf32>
    %2134 = arith.mulf %9, %2133 : vector<8x16xf32>
    %2135 = arith.addf %2132, %2134 : vector<8x16xf32>
    %2136 = vector.broadcast %2129 : f32 to vector<8x16xf32>
    %2137 = arith.addf %2135, %2136 : vector<8x16xf32>
    %cst_195 = arith.constant 0.000000e+00 : f32
    %2138 = vector.broadcast %cst_195 : f32 to vector<8x16xf32>
    %2139 = arith.maximumf %2137, %2138 : vector<8x16xf32>
    %2140 = vector.broadcast %2130 : f32 to vector<8x16xf32>
    %2141 = arith.mulf %2139, %2140 : vector<8x16xf32>
    %2142 = arith.addf %2126, %2141 : vector<8x16xf32>
    %c233 = arith.constant 233 : index
    %2143 = memref.load %arg13[%c233] : memref<522xf32, #tpu.memory_space<smem>>
    %c249 = arith.constant 249 : index
    %2144 = memref.load %arg13[%c249] : memref<522xf32, #tpu.memory_space<smem>>
    %c377 = arith.constant 377 : index
    %2145 = memref.load %arg13[%c377] : memref<522xf32, #tpu.memory_space<smem>>
    %c505 = arith.constant 505 : index
    %2146 = memref.load %arg13[%c505] : memref<522xf32, #tpu.memory_space<smem>>
    %2147 = vector.broadcast %2143 : f32 to vector<8x16xf32>
    %2148 = arith.mulf %1997, %2147 : vector<8x16xf32>
    %2149 = vector.broadcast %2144 : f32 to vector<8x16xf32>
    %2150 = arith.mulf %9, %2149 : vector<8x16xf32>
    %2151 = arith.addf %2148, %2150 : vector<8x16xf32>
    %2152 = vector.broadcast %2145 : f32 to vector<8x16xf32>
    %2153 = arith.addf %2151, %2152 : vector<8x16xf32>
    %cst_196 = arith.constant 0.000000e+00 : f32
    %2154 = vector.broadcast %cst_196 : f32 to vector<8x16xf32>
    %2155 = arith.maximumf %2153, %2154 : vector<8x16xf32>
    %2156 = vector.broadcast %2146 : f32 to vector<8x16xf32>
    %2157 = arith.mulf %2155, %2156 : vector<8x16xf32>
    %2158 = arith.addf %2142, %2157 : vector<8x16xf32>
    %c234 = arith.constant 234 : index
    %2159 = memref.load %arg13[%c234] : memref<522xf32, #tpu.memory_space<smem>>
    %c250 = arith.constant 250 : index
    %2160 = memref.load %arg13[%c250] : memref<522xf32, #tpu.memory_space<smem>>
    %c378 = arith.constant 378 : index
    %2161 = memref.load %arg13[%c378] : memref<522xf32, #tpu.memory_space<smem>>
    %c506 = arith.constant 506 : index
    %2162 = memref.load %arg13[%c506] : memref<522xf32, #tpu.memory_space<smem>>
    %2163 = vector.broadcast %2159 : f32 to vector<8x16xf32>
    %2164 = arith.mulf %1997, %2163 : vector<8x16xf32>
    %2165 = vector.broadcast %2160 : f32 to vector<8x16xf32>
    %2166 = arith.mulf %9, %2165 : vector<8x16xf32>
    %2167 = arith.addf %2164, %2166 : vector<8x16xf32>
    %2168 = vector.broadcast %2161 : f32 to vector<8x16xf32>
    %2169 = arith.addf %2167, %2168 : vector<8x16xf32>
    %cst_197 = arith.constant 0.000000e+00 : f32
    %2170 = vector.broadcast %cst_197 : f32 to vector<8x16xf32>
    %2171 = arith.maximumf %2169, %2170 : vector<8x16xf32>
    %2172 = vector.broadcast %2162 : f32 to vector<8x16xf32>
    %2173 = arith.mulf %2171, %2172 : vector<8x16xf32>
    %2174 = arith.addf %2158, %2173 : vector<8x16xf32>
    %c235 = arith.constant 235 : index
    %2175 = memref.load %arg13[%c235] : memref<522xf32, #tpu.memory_space<smem>>
    %c251 = arith.constant 251 : index
    %2176 = memref.load %arg13[%c251] : memref<522xf32, #tpu.memory_space<smem>>
    %c379 = arith.constant 379 : index
    %2177 = memref.load %arg13[%c379] : memref<522xf32, #tpu.memory_space<smem>>
    %c507 = arith.constant 507 : index
    %2178 = memref.load %arg13[%c507] : memref<522xf32, #tpu.memory_space<smem>>
    %2179 = vector.broadcast %2175 : f32 to vector<8x16xf32>
    %2180 = arith.mulf %1997, %2179 : vector<8x16xf32>
    %2181 = vector.broadcast %2176 : f32 to vector<8x16xf32>
    %2182 = arith.mulf %9, %2181 : vector<8x16xf32>
    %2183 = arith.addf %2180, %2182 : vector<8x16xf32>
    %2184 = vector.broadcast %2177 : f32 to vector<8x16xf32>
    %2185 = arith.addf %2183, %2184 : vector<8x16xf32>
    %cst_198 = arith.constant 0.000000e+00 : f32
    %2186 = vector.broadcast %cst_198 : f32 to vector<8x16xf32>
    %2187 = arith.maximumf %2185, %2186 : vector<8x16xf32>
    %2188 = vector.broadcast %2178 : f32 to vector<8x16xf32>
    %2189 = arith.mulf %2187, %2188 : vector<8x16xf32>
    %2190 = arith.addf %2174, %2189 : vector<8x16xf32>
    %c236 = arith.constant 236 : index
    %2191 = memref.load %arg13[%c236] : memref<522xf32, #tpu.memory_space<smem>>
    %c252 = arith.constant 252 : index
    %2192 = memref.load %arg13[%c252] : memref<522xf32, #tpu.memory_space<smem>>
    %c380 = arith.constant 380 : index
    %2193 = memref.load %arg13[%c380] : memref<522xf32, #tpu.memory_space<smem>>
    %c508 = arith.constant 508 : index
    %2194 = memref.load %arg13[%c508] : memref<522xf32, #tpu.memory_space<smem>>
    %2195 = vector.broadcast %2191 : f32 to vector<8x16xf32>
    %2196 = arith.mulf %1997, %2195 : vector<8x16xf32>
    %2197 = vector.broadcast %2192 : f32 to vector<8x16xf32>
    %2198 = arith.mulf %9, %2197 : vector<8x16xf32>
    %2199 = arith.addf %2196, %2198 : vector<8x16xf32>
    %2200 = vector.broadcast %2193 : f32 to vector<8x16xf32>
    %2201 = arith.addf %2199, %2200 : vector<8x16xf32>
    %cst_199 = arith.constant 0.000000e+00 : f32
    %2202 = vector.broadcast %cst_199 : f32 to vector<8x16xf32>
    %2203 = arith.maximumf %2201, %2202 : vector<8x16xf32>
    %2204 = vector.broadcast %2194 : f32 to vector<8x16xf32>
    %2205 = arith.mulf %2203, %2204 : vector<8x16xf32>
    %2206 = arith.addf %2190, %2205 : vector<8x16xf32>
    %c237 = arith.constant 237 : index
    %2207 = memref.load %arg13[%c237] : memref<522xf32, #tpu.memory_space<smem>>
    %c253 = arith.constant 253 : index
    %2208 = memref.load %arg13[%c253] : memref<522xf32, #tpu.memory_space<smem>>
    %c381 = arith.constant 381 : index
    %2209 = memref.load %arg13[%c381] : memref<522xf32, #tpu.memory_space<smem>>
    %c509 = arith.constant 509 : index
    %2210 = memref.load %arg13[%c509] : memref<522xf32, #tpu.memory_space<smem>>
    %2211 = vector.broadcast %2207 : f32 to vector<8x16xf32>
    %2212 = arith.mulf %1997, %2211 : vector<8x16xf32>
    %2213 = vector.broadcast %2208 : f32 to vector<8x16xf32>
    %2214 = arith.mulf %9, %2213 : vector<8x16xf32>
    %2215 = arith.addf %2212, %2214 : vector<8x16xf32>
    %2216 = vector.broadcast %2209 : f32 to vector<8x16xf32>
    %2217 = arith.addf %2215, %2216 : vector<8x16xf32>
    %cst_200 = arith.constant 0.000000e+00 : f32
    %2218 = vector.broadcast %cst_200 : f32 to vector<8x16xf32>
    %2219 = arith.maximumf %2217, %2218 : vector<8x16xf32>
    %2220 = vector.broadcast %2210 : f32 to vector<8x16xf32>
    %2221 = arith.mulf %2219, %2220 : vector<8x16xf32>
    %2222 = arith.addf %2206, %2221 : vector<8x16xf32>
    %c238 = arith.constant 238 : index
    %2223 = memref.load %arg13[%c238] : memref<522xf32, #tpu.memory_space<smem>>
    %c254 = arith.constant 254 : index
    %2224 = memref.load %arg13[%c254] : memref<522xf32, #tpu.memory_space<smem>>
    %c382 = arith.constant 382 : index
    %2225 = memref.load %arg13[%c382] : memref<522xf32, #tpu.memory_space<smem>>
    %c510 = arith.constant 510 : index
    %2226 = memref.load %arg13[%c510] : memref<522xf32, #tpu.memory_space<smem>>
    %2227 = vector.broadcast %2223 : f32 to vector<8x16xf32>
    %2228 = arith.mulf %1997, %2227 : vector<8x16xf32>
    %2229 = vector.broadcast %2224 : f32 to vector<8x16xf32>
    %2230 = arith.mulf %9, %2229 : vector<8x16xf32>
    %2231 = arith.addf %2228, %2230 : vector<8x16xf32>
    %2232 = vector.broadcast %2225 : f32 to vector<8x16xf32>
    %2233 = arith.addf %2231, %2232 : vector<8x16xf32>
    %cst_201 = arith.constant 0.000000e+00 : f32
    %2234 = vector.broadcast %cst_201 : f32 to vector<8x16xf32>
    %2235 = arith.maximumf %2233, %2234 : vector<8x16xf32>
    %2236 = vector.broadcast %2226 : f32 to vector<8x16xf32>
    %2237 = arith.mulf %2235, %2236 : vector<8x16xf32>
    %2238 = arith.addf %2222, %2237 : vector<8x16xf32>
    %c239 = arith.constant 239 : index
    %2239 = memref.load %arg13[%c239] : memref<522xf32, #tpu.memory_space<smem>>
    %c255 = arith.constant 255 : index
    %2240 = memref.load %arg13[%c255] : memref<522xf32, #tpu.memory_space<smem>>
    %c383 = arith.constant 383 : index
    %2241 = memref.load %arg13[%c383] : memref<522xf32, #tpu.memory_space<smem>>
    %c511 = arith.constant 511 : index
    %2242 = memref.load %arg13[%c511] : memref<522xf32, #tpu.memory_space<smem>>
    %2243 = vector.broadcast %2239 : f32 to vector<8x16xf32>
    %2244 = arith.mulf %1997, %2243 : vector<8x16xf32>
    %2245 = vector.broadcast %2240 : f32 to vector<8x16xf32>
    %2246 = arith.mulf %9, %2245 : vector<8x16xf32>
    %2247 = arith.addf %2244, %2246 : vector<8x16xf32>
    %2248 = vector.broadcast %2241 : f32 to vector<8x16xf32>
    %2249 = arith.addf %2247, %2248 : vector<8x16xf32>
    %cst_202 = arith.constant 0.000000e+00 : f32
    %2250 = vector.broadcast %cst_202 : f32 to vector<8x16xf32>
    %2251 = arith.maximumf %2249, %2250 : vector<8x16xf32>
    %2252 = vector.broadcast %2242 : f32 to vector<8x16xf32>
    %2253 = arith.mulf %2251, %2252 : vector<8x16xf32>
    %2254 = arith.addf %2238, %2253 : vector<8x16xf32>
    %c519 = arith.constant 519 : index
    %2255 = memref.load %arg13[%c519] : memref<522xf32, #tpu.memory_space<smem>>
    %2256 = vector.broadcast %2255 : f32 to vector<8x16xf32>
    %2257 = arith.addf %2254, %2256 : vector<8x16xf32>
    %2258 = arith.addf %1708, %2257 : vector<8x16xf32>
    %cst_203 = arith.constant dense<0xFF800000> : vector<16xf32>
    %2259 = vector.multi_reduction <maximumf>, %2257, %cst_203 [0] : vector<8x16xf32> to vector<16xf32>
    %2260 = vector.shape_cast %2259 : vector<16xf32> to vector<1x16xf32>
    %2261 = vector.broadcast %2260 : vector<1x16xf32> to vector<8x16xf32>
    %2262 = arith.subf %2257, %2261 : vector<8x16xf32>
    %2263 = math.exp %2262 : vector<8x16xf32>
    %cst_204 = arith.constant dense<0.000000e+00> : vector<16xf32>
    %2264 = vector.multi_reduction <add>, %2263, %cst_204 [0] : vector<8x16xf32> to vector<16xf32>
    %2265 = vector.shape_cast %2264 : vector<16xf32> to vector<1x16xf32>
    %2266 = vector.broadcast %2265 : vector<1x16xf32> to vector<8x16xf32>
    %2267 = arith.divf %2263, %2266 : vector<8x16xf32>
    %cst_205 = arith.constant dense<0.000000e+00> : vector<16x32xf32>
    %2268 = tpu.matmul %2267, %1723, %cst_205 {dimension_numbers = #tpu.dot_dimension_numbers<[0], [0], [1], [1], [0, 1, 1, 1], [], []>} : vector<8x16xf32>, vector<8x32xf32>, vector<16x32xf32> -> vector<16x32xf32>
    %2269 = arith.addf %1719, %2268 : vector<16x32xf32>
    %c0_206 = arith.constant 0 : index
    %c0_207 = arith.constant 0 : index
    %2270 = vector.load %arg6[%c0_206, %c0_207] : memref<2x32xf32, #tpu.memory_space<vmem>>, vector<1x32xf32>
    %2271 = vector.shape_cast %2270 : vector<1x32xf32> to vector<32xf32>
    %2272 = vector.shape_cast %2271 : vector<32xf32> to vector<1x32xf32>
    %2273 = vector.broadcast %2272 : vector<1x32xf32> to vector<8x32xf32>
    %2274 = arith.addf %1996, %2273 : vector<8x32xf32>
    %c1_208 = arith.constant 1 : index
    %c0_209 = arith.constant 0 : index
    %2275 = vector.load %arg6[%c1_208, %c0_209] : memref<2x32xf32, #tpu.memory_space<vmem>>, vector<1x32xf32>
    %2276 = vector.shape_cast %2275 : vector<1x32xf32> to vector<32xf32>
    %2277 = vector.shape_cast %2276 : vector<32xf32> to vector<1x32xf32>
    %2278 = vector.broadcast %2277 : vector<1x32xf32> to vector<16x32xf32>
    %2279 = arith.addf %2269, %2278 : vector<16x32xf32>
    %2280 = arith.addf %5, %2274 : vector<8x32xf32>
    %c1_210 = arith.constant 1 : index
    %c0_211 = arith.constant 0 : index
    %2281 = vector.load %arg7[%c1_210, %c0_211] : memref<4x32xf32, #tpu.memory_space<vmem>>, vector<1x32xf32>
    %2282 = vector.shape_cast %2281 : vector<1x32xf32> to vector<32xf32>
    %c1_212 = arith.constant 1 : index
    %c0_213 = arith.constant 0 : index
    %2283 = vector.load %arg8[%c1_212, %c0_213] : memref<4x32xf32, #tpu.memory_space<vmem>>, vector<1x32xf32>
    %2284 = vector.shape_cast %2283 : vector<1x32xf32> to vector<32xf32>
    %cst_214 = arith.constant dense<0.000000e+00> : vector<8xf32>
    %2285 = vector.multi_reduction <add>, %2280, %cst_214 [1] : vector<8x32xf32> to vector<8xf32>
    %2286 = vector.shape_cast %2285 : vector<8xf32> to vector<8x1xf32>
    %cst_215 = arith.constant 3.200000e+01 : f32
    %2287 = vector.broadcast %cst_215 : f32 to vector<8x1xf32>
    %2288 = arith.divf %2286, %2287 : vector<8x1xf32>
    %2289 = vector.broadcast %2288 : vector<8x1xf32> to vector<8x32xf32>
    %2290 = arith.subf %2280, %2289 : vector<8x32xf32>
    %2291 = arith.mulf %2290, %2290 : vector<8x32xf32>
    %cst_216 = arith.constant dense<0.000000e+00> : vector<8xf32>
    %2292 = vector.multi_reduction <add>, %2291, %cst_216 [1] : vector<8x32xf32> to vector<8xf32>
    %2293 = vector.shape_cast %2292 : vector<8xf32> to vector<8x1xf32>
    %cst_217 = arith.constant 3.200000e+01 : f32
    %2294 = vector.broadcast %cst_217 : f32 to vector<8x1xf32>
    %2295 = arith.divf %2293, %2294 : vector<8x1xf32>
    %cst_218 = arith.constant 9.99999974E-6 : f32
    %2296 = vector.broadcast %cst_218 : f32 to vector<8x1xf32>
    %2297 = arith.addf %2295, %2296 : vector<8x1xf32>
    %2298 = math.rsqrt %2297 : vector<8x1xf32>
    %2299 = vector.broadcast %2298 : vector<8x1xf32> to vector<8x32xf32>
    %2300 = arith.mulf %2290, %2299 : vector<8x32xf32>
    %2301 = vector.shape_cast %2282 : vector<32xf32> to vector<1x32xf32>
    %2302 = vector.broadcast %2301 : vector<1x32xf32> to vector<8x32xf32>
    %2303 = arith.mulf %2300, %2302 : vector<8x32xf32>
    %2304 = vector.shape_cast %2284 : vector<32xf32> to vector<1x32xf32>
    %2305 = vector.broadcast %2304 : vector<1x32xf32> to vector<8x32xf32>
    %2306 = arith.addf %2303, %2305 : vector<8x32xf32>
    %c0_219 = arith.constant 0 : index
    %c0_220 = arith.constant 0 : index
    %c0_221 = arith.constant 0 : index
    %2307 = vector.load %arg9[%c0_219, %c0_220, %c0_221] : memref<2x32x64xf32, #tpu.memory_space<vmem>>, vector<1x32x64xf32>
    %2308 = vector.shape_cast %2307 : vector<1x32x64xf32> to vector<32x64xf32>
    %cst_222 = arith.constant dense<0.000000e+00> : vector<8x64xf32>
    %2309 = tpu.matmul %2306, %2308, %cst_222 {dimension_numbers = #tpu.dot_dimension_numbers<[1], [0], [0], [1], [0, 0, 1, 1], [], []>} : vector<8x32xf32>, vector<32x64xf32>, vector<8x64xf32> -> vector<8x64xf32>
    %c0_223 = arith.constant 0 : index
    %c0_224 = arith.constant 0 : index
    %2310 = vector.load %arg10[%c0_223, %c0_224] : memref<2x64xf32, #tpu.memory_space<vmem>>, vector<1x64xf32>
    %2311 = vector.shape_cast %2310 : vector<1x64xf32> to vector<64xf32>
    %2312 = vector.shape_cast %2311 : vector<64xf32> to vector<1x64xf32>
    %2313 = vector.broadcast %2312 : vector<1x64xf32> to vector<8x64xf32>
    %2314 = arith.addf %2309, %2313 : vector<8x64xf32>
    %cst_225 = arith.constant 0.000000e+00 : f32
    %2315 = vector.broadcast %cst_225 : f32 to vector<8x64xf32>
    %2316 = arith.maximumf %2314, %2315 : vector<8x64xf32>
    %c0_226 = arith.constant 0 : index
    %c0_227 = arith.constant 0 : index
    %c0_228 = arith.constant 0 : index
    %2317 = vector.load %arg11[%c0_226, %c0_227, %c0_228] : memref<2x64x32xf32, #tpu.memory_space<vmem>>, vector<1x64x32xf32>
    %2318 = vector.shape_cast %2317 : vector<1x64x32xf32> to vector<64x32xf32>
    %cst_229 = arith.constant dense<0.000000e+00> : vector<8x32xf32>
    %2319 = tpu.matmul %2316, %2318, %cst_229 {dimension_numbers = #tpu.dot_dimension_numbers<[1], [0], [0], [1], [0, 0, 1, 1], [], []>} : vector<8x64xf32>, vector<64x32xf32>, vector<8x32xf32> -> vector<8x32xf32>
    %c0_230 = arith.constant 0 : index
    %c0_231 = arith.constant 0 : index
    %2320 = vector.load %arg12[%c0_230, %c0_231] : memref<2x32xf32, #tpu.memory_space<vmem>>, vector<1x32xf32>
    %2321 = vector.shape_cast %2320 : vector<1x32xf32> to vector<32xf32>
    %2322 = vector.shape_cast %2321 : vector<32xf32> to vector<1x32xf32>
    %2323 = vector.broadcast %2322 : vector<1x32xf32> to vector<8x32xf32>
    %2324 = arith.addf %2319, %2323 : vector<8x32xf32>
    %2325 = arith.addf %2324, %2280 : vector<8x32xf32>
    %2326 = arith.addf %7, %2279 : vector<16x32xf32>
    %c3_232 = arith.constant 3 : index
    %c0_233 = arith.constant 0 : index
    %2327 = vector.load %arg7[%c3_232, %c0_233] : memref<4x32xf32, #tpu.memory_space<vmem>>, vector<1x32xf32>
    %2328 = vector.shape_cast %2327 : vector<1x32xf32> to vector<32xf32>
    %c3_234 = arith.constant 3 : index
    %c0_235 = arith.constant 0 : index
    %2329 = vector.load %arg8[%c3_234, %c0_235] : memref<4x32xf32, #tpu.memory_space<vmem>>, vector<1x32xf32>
    %2330 = vector.shape_cast %2329 : vector<1x32xf32> to vector<32xf32>
    %cst_236 = arith.constant dense<0.000000e+00> : vector<16xf32>
    %2331 = vector.multi_reduction <add>, %2326, %cst_236 [1] : vector<16x32xf32> to vector<16xf32>
    %2332 = vector.shape_cast %2331 : vector<16xf32> to vector<16x1xf32>
    %cst_237 = arith.constant 3.200000e+01 : f32
    %2333 = vector.broadcast %cst_237 : f32 to vector<16x1xf32>
    %2334 = arith.divf %2332, %2333 : vector<16x1xf32>
    %2335 = vector.broadcast %2334 : vector<16x1xf32> to vector<16x32xf32>
    %2336 = arith.subf %2326, %2335 : vector<16x32xf32>
    %2337 = arith.mulf %2336, %2336 : vector<16x32xf32>
    %cst_238 = arith.constant dense<0.000000e+00> : vector<16xf32>
    %2338 = vector.multi_reduction <add>, %2337, %cst_238 [1] : vector<16x32xf32> to vector<16xf32>
    %2339 = vector.shape_cast %2338 : vector<16xf32> to vector<16x1xf32>
    %cst_239 = arith.constant 3.200000e+01 : f32
    %2340 = vector.broadcast %cst_239 : f32 to vector<16x1xf32>
    %2341 = arith.divf %2339, %2340 : vector<16x1xf32>
    %cst_240 = arith.constant 9.99999974E-6 : f32
    %2342 = vector.broadcast %cst_240 : f32 to vector<16x1xf32>
    %2343 = arith.addf %2341, %2342 : vector<16x1xf32>
    %2344 = math.rsqrt %2343 : vector<16x1xf32>
    %2345 = vector.broadcast %2344 : vector<16x1xf32> to vector<16x32xf32>
    %2346 = arith.mulf %2336, %2345 : vector<16x32xf32>
    %2347 = vector.shape_cast %2328 : vector<32xf32> to vector<1x32xf32>
    %2348 = vector.broadcast %2347 : vector<1x32xf32> to vector<16x32xf32>
    %2349 = arith.mulf %2346, %2348 : vector<16x32xf32>
    %2350 = vector.shape_cast %2330 : vector<32xf32> to vector<1x32xf32>
    %2351 = vector.broadcast %2350 : vector<1x32xf32> to vector<16x32xf32>
    %2352 = arith.addf %2349, %2351 : vector<16x32xf32>
    %c1_241 = arith.constant 1 : index
    %c0_242 = arith.constant 0 : index
    %c0_243 = arith.constant 0 : index
    %2353 = vector.load %arg9[%c1_241, %c0_242, %c0_243] : memref<2x32x64xf32, #tpu.memory_space<vmem>>, vector<1x32x64xf32>
    %2354 = vector.shape_cast %2353 : vector<1x32x64xf32> to vector<32x64xf32>
    %cst_244 = arith.constant dense<0.000000e+00> : vector<16x64xf32>
    %2355 = tpu.matmul %2352, %2354, %cst_244 {dimension_numbers = #tpu.dot_dimension_numbers<[1], [0], [0], [1], [0, 0, 1, 1], [], []>} : vector<16x32xf32>, vector<32x64xf32>, vector<16x64xf32> -> vector<16x64xf32>
    %c1_245 = arith.constant 1 : index
    %c0_246 = arith.constant 0 : index
    %2356 = vector.load %arg10[%c1_245, %c0_246] : memref<2x64xf32, #tpu.memory_space<vmem>>, vector<1x64xf32>
    %2357 = vector.shape_cast %2356 : vector<1x64xf32> to vector<64xf32>
    %2358 = vector.shape_cast %2357 : vector<64xf32> to vector<1x64xf32>
    %2359 = vector.broadcast %2358 : vector<1x64xf32> to vector<16x64xf32>
    %2360 = arith.addf %2355, %2359 : vector<16x64xf32>
    %cst_247 = arith.constant 0.000000e+00 : f32
    %2361 = vector.broadcast %cst_247 : f32 to vector<16x64xf32>
    %2362 = arith.maximumf %2360, %2361 : vector<16x64xf32>
    %c1_248 = arith.constant 1 : index
    %c0_249 = arith.constant 0 : index
    %c0_250 = arith.constant 0 : index
    %2363 = vector.load %arg11[%c1_248, %c0_249, %c0_250] : memref<2x64x32xf32, #tpu.memory_space<vmem>>, vector<1x64x32xf32>
    %2364 = vector.shape_cast %2363 : vector<1x64x32xf32> to vector<64x32xf32>
    %cst_251 = arith.constant dense<0.000000e+00> : vector<16x32xf32>
    %2365 = tpu.matmul %2362, %2364, %cst_251 {dimension_numbers = #tpu.dot_dimension_numbers<[1], [0], [0], [1], [0, 0, 1, 1], [], []>} : vector<16x64xf32>, vector<64x32xf32>, vector<16x32xf32> -> vector<16x32xf32>
    %c1_252 = arith.constant 1 : index
    %c0_253 = arith.constant 0 : index
    %2366 = vector.load %arg12[%c1_252, %c0_253] : memref<2x32xf32, #tpu.memory_space<vmem>>, vector<1x32xf32>
    %2367 = vector.shape_cast %2366 : vector<1x32xf32> to vector<32xf32>
    %2368 = vector.shape_cast %2367 : vector<32xf32> to vector<1x32xf32>
    %2369 = vector.broadcast %2368 : vector<1x32xf32> to vector<16x32xf32>
    %2370 = arith.addf %2365, %2369 : vector<16x32xf32>
    %2371 = arith.addf %2370, %2326 : vector<16x32xf32>
    %c0_254 = arith.constant 0 : index
    %c0_255 = arith.constant 0 : index
    %c0_256 = arith.constant 0 : index
    %2372 = vector.load %arg14[%c0_254, %c0_255, %c0_256] : memref<1x8x32xf32, #tpu.memory_space<vmem>>, vector<1x8x32xf32>
    %2373 = vector.shape_cast %2372 : vector<1x8x32xf32> to vector<8x32xf32>
    %2374 = vector.shape_cast %2325 : vector<8x32xf32> to vector<1x8x32xf32>
    tpu.vector_store %arg14[%c0_254, %c0_255, %c0_256], %2374 {strides = array<i32>} : memref<1x8x32xf32, #tpu.memory_space<vmem>>, vector<1x8x32xf32>,
    %c0_257 = arith.constant 0 : index
    %c0_258 = arith.constant 0 : index
    %c0_259 = arith.constant 0 : index
    %2375 = vector.load %arg15[%c0_257, %c0_258, %c0_259] : memref<1x16x32xf32, #tpu.memory_space<vmem>>, vector<1x16x32xf32>
    %2376 = vector.shape_cast %2375 : vector<1x16x32xf32> to vector<16x32xf32>
    %2377 = vector.shape_cast %2371 : vector<16x32xf32> to vector<1x16x32xf32>
    tpu.vector_store %arg15[%c0_257, %c0_258, %c0_259], %2377 {strides = array<i32>} : memref<1x16x32xf32, #tpu.memory_space<vmem>>, vector<1x16x32xf32>,
    %2378 = vector.broadcast %1 : f32 to vector<8x16xf32>
    %2379 = arith.mulf %1985, %2378 : vector<8x16xf32>
    %2380 = vector.broadcast %3 : f32 to vector<8x16xf32>
    %2381 = arith.mulf %2258, %2380 : vector<8x16xf32>
    %2382 = arith.addf %2379, %2381 : vector<8x16xf32>
    %c0_260 = arith.constant 0 : index
    %c0_261 = arith.constant 0 : index
    %c0_262 = arith.constant 0 : index
    %2383 = vector.load %arg16[%c0_260, %c0_261, %c0_262] : memref<1x8x16xf32, #tpu.memory_space<vmem>>, vector<1x8x16xf32>
    %2384 = vector.shape_cast %2383 : vector<1x8x16xf32> to vector<8x16xf32>
    %2385 = vector.shape_cast %2382 : vector<8x16xf32> to vector<1x8x16xf32>
    tpu.vector_store %arg16[%c0_260, %c0_261, %c0_262], %2385 {strides = array<i32>} : memref<1x8x16xf32, #tpu.memory_space<vmem>>, vector<1x8x16xf32>,
    return
  }
  func.func @transform_0(%arg0: i32) -> (i32, i32, i32) {
    %c0_i32 = arith.constant 0 : i32
    %c0_i32_0 = arith.constant 0 : i32
    %c0_i32_1 = arith.constant 0 : i32
    return %arg0, %c0_i32, %c0_i32_0 : i32, i32, i32
  }
  func.func @transform_1(%arg0: i32) -> (i32, i32, i32) {
    %c0_i32 = arith.constant 0 : i32
    %c0_i32_0 = arith.constant 0 : i32
    %c0_i32_1 = arith.constant 0 : i32
    return %arg0, %c0_i32, %c0_i32_0 : i32, i32, i32
  }
  func.func @transform_2(%arg0: i32) -> (i32, i32, i32) {
    %c0_i32 = arith.constant 0 : i32
    %c0_i32_0 = arith.constant 0 : i32
    %c0_i32_1 = arith.constant 0 : i32
    return %arg0, %c0_i32, %c0_i32_0 : i32, i32, i32
  }
  func.func @transform_3(%arg0: i32) -> (i32, i32) {
    %c0_i32 = arith.constant 0 : i32
    %c0_i32_0 = arith.constant 0 : i32
    %c0_i32_1 = arith.constant 0 : i32
    return %c0_i32, %c0_i32_0 : i32, i32
  }
  func.func @transform_4(%arg0: i32) -> (i32, i32) {
    %c0_i32 = arith.constant 0 : i32
    %c0_i32_0 = arith.constant 0 : i32
    %c0_i32_1 = arith.constant 0 : i32
    return %c0_i32, %c0_i32_0 : i32, i32
  }
  func.func @transform_5(%arg0: i32) -> (i32, i32) {
    %c0_i32 = arith.constant 0 : i32
    %c0_i32_0 = arith.constant 0 : i32
    %c0_i32_1 = arith.constant 0 : i32
    return %c0_i32, %c0_i32_0 : i32, i32
  }
  func.func @transform_6(%arg0: i32) -> (i32, i32) {
    %c0_i32 = arith.constant 0 : i32
    %c0_i32_0 = arith.constant 0 : i32
    %c0_i32_1 = arith.constant 0 : i32
    return %c0_i32, %c0_i32_0 : i32, i32
  }
  func.func @transform_7(%arg0: i32) -> (i32, i32) {
    %c0_i32 = arith.constant 0 : i32
    %c0_i32_0 = arith.constant 0 : i32
    %c0_i32_1 = arith.constant 0 : i32
    return %c0_i32, %c0_i32_0 : i32, i32
  }
  func.func @transform_8(%arg0: i32) -> (i32, i32, i32) {
    %c0_i32 = arith.constant 0 : i32
    %c0_i32_0 = arith.constant 0 : i32
    %c0_i32_1 = arith.constant 0 : i32
    %c0_i32_2 = arith.constant 0 : i32
    return %c0_i32, %c0_i32_0, %c0_i32_1 : i32, i32, i32
  }
  func.func @transform_9(%arg0: i32) -> (i32, i32) {
    %c0_i32 = arith.constant 0 : i32
    %c0_i32_0 = arith.constant 0 : i32
    %c0_i32_1 = arith.constant 0 : i32
    return %c0_i32, %c0_i32_0 : i32, i32
  }
  func.func @transform_10(%arg0: i32) -> (i32, i32, i32) {
    %c0_i32 = arith.constant 0 : i32
    %c0_i32_0 = arith.constant 0 : i32
    %c0_i32_1 = arith.constant 0 : i32
    %c0_i32_2 = arith.constant 0 : i32
    return %c0_i32, %c0_i32_0, %c0_i32_1 : i32, i32, i32
  }
  func.func @transform_11(%arg0: i32) -> (i32, i32) {
    %c0_i32 = arith.constant 0 : i32
    %c0_i32_0 = arith.constant 0 : i32
    %c0_i32_1 = arith.constant 0 : i32
    return %c0_i32, %c0_i32_0 : i32, i32
  }
  func.func @transform_12(%arg0: i32) -> i32 {
    %c0_i32 = arith.constant 0 : i32
    %c0_i32_0 = arith.constant 0 : i32
    return %c0_i32 : i32
  }
  func.func @transform_13(%arg0: i32) -> (i32, i32, i32) {
    %c0_i32 = arith.constant 0 : i32
    %c0_i32_0 = arith.constant 0 : i32
    %c0_i32_1 = arith.constant 0 : i32
    return %arg0, %c0_i32, %c0_i32_0 : i32, i32, i32
  }
  func.func @transform_14(%arg0: i32) -> (i32, i32, i32) {
    %c0_i32 = arith.constant 0 : i32
    %c0_i32_0 = arith.constant 0 : i32
    %c0_i32_1 = arith.constant 0 : i32
    return %arg0, %c0_i32, %c0_i32_0 : i32, i32, i32
  }
  func.func @transform_15(%arg0: i32) -> (i32, i32, i32) {
    %c0_i32 = arith.constant 0 : i32
    %c0_i32_0 = arith.constant 0 : i32
    %c0_i32_1 = arith.constant 0 : i32
    return %arg0, %c0_i32, %c0_i32_0 : i32, i32, i32
  }
}

</mosaic_0001>

<llo_original>
// kernel: _lambda_.1
$region0: #{_lambda_.1}
  #allocation0 [shape = 'u32[]', space=smem, size = 0x4, offset = 0x4, fixed_abs, tag = 'smem constant byte address 0x4 - core index']
  #allocation1 [shape = 'u32[144,128]{1,0:T(1,128)}', space=vmem, size = 0x12000, scoped, tag = 'internal scratch']
  %s0 = inlined_call_operand.hbm [shape: f32[2,8,32], index: 0, kind: input, shape index: {}]
  %s1 = inlined_call_operand.hbm [shape: f32[2,16,32], index: 1, kind: input, shape index: {}]
  %s2 = inlined_call_operand.hbm [shape: f32[2,8,16], index: 2, kind: input, shape index: {}]
  %s3 = inlined_call_operand.hbm [shape: f32[32,256], index: 3, kind: input, shape index: {}]
  %s4 = inlined_call_operand.hbm [shape: f32[32,256], index: 4, kind: input, shape index: {}]
  %s5 = inlined_call_operand.vmem [shape: f32[2,32], index: 5, kind: input, shape index: {}]
  %s6 = inlined_call_operand.vmem [shape: f32[4,32], index: 6, kind: input, shape index: {}]
  %s7 = inlined_call_operand.vmem [shape: f32[4,32], index: 7, kind: input, shape index: {}]
  %s8 = inlined_call_operand.hbm [shape: f32[2,32,64], index: 8, kind: input, shape index: {}]
  %s9 = inlined_call_operand.vmem [shape: f32[2,64], index: 9, kind: input, shape index: {}]
  %s10 = inlined_call_operand.hbm [shape: f32[2,64,32], index: 10, kind: input, shape index: {}]
  %s11 = inlined_call_operand.vmem [shape: f32[2,32], index: 11, kind: input, shape index: {}]
  %s12 = inlined_call_operand.vmem [shape: f32[522], index: 12, kind: input, shape index: {}]
  %s13 = inlined_call_operand.hbm [shape: f32[2,8,32], index: 13, kind: output, shape index: {0}]
  %s14 = inlined_call_operand.hbm [shape: f32[2,16,32], index: 14, kind: output, shape index: {1}]
  %s15 = inlined_call_operand.hbm [shape: f32[2,8,16], index: 15, kind: output, shape index: {2}]
  %16 = xla_tuple %s13, %s14, %s15
  %s17 = sld [smem:[#allocation0]]
  $region133: #{_lambda_.1} parent=0
    _
  %s19 = ssub.s32 1, %s17
  %s20 = scalar_select 0, %s19, %s17
  $region1: #{_lambda_.1} parent=0
    #allocation2 [shape = 'u8[8192]{0}', space=vmem, size = 0x2000, scoped, tag = 'input window, operand 0']
    #allocation3 [shape = 's32[2]{0}', space=sflag, size = 0x8, scoped, tag = 'scoped memory for _lambda_.1']
    #allocation4 [shape = 's32[2]{0}', space=sflag, size = 0x8, scoped, tag = 'scoped memory for _lambda_.1']
    #allocation5 [shape = 's32[2]{0}', space=sflag, size = 0x8, scoped, tag = 'scoped memory for _lambda_.1']
    #allocation6 [shape = 'u8[16384]{0}', space=vmem, size = 0x4000, scoped, tag = 'input window, operand 1']
    #allocation7 [shape = 's32[2]{0}', space=sflag, size = 0x8, scoped, tag = 'scoped memory for _lambda_.1']
    #allocation8 [shape = 'u8[8192]{0}', space=vmem, size = 0x2000, scoped, tag = 'input window, operand 2']
    #allocation9 [shape = 'u8[32768]{0}', space=vmem, size = 0x8000, scoped, tag = 'input window, operand 3, single buffered']
    #allocation10 [shape = 's32[1]{0}', space=sflag, size = 0x4, scoped, tag = 'scoped memory for _lambda_.1']
    #allocation11 [shape = 'u8[32768]{0}', space=vmem, size = 0x8000, scoped, tag = 'input window, operand 4, single buffered']
    #allocation12 [shape = 'u8[32768]{0}', space=vmem, size = 0x8000, scoped, tag = 'input window, operand 8, single buffered']
    #allocation13 [shape = 's32[1]{0}', space=sflag, size = 0x4, scoped, tag = 'scoped memory for _lambda_.1']
    #allocation14 [shape = 'u8[65536]{0}', space=vmem, size = 0x10000, scoped, tag = 'input window, operand 10, single buffered']
    #allocation15 [shape = 'u8[2560]{0}', space=smem, size = 0xa00, scoped, tag = 'input window, operand 12, single buffered']
    #allocation16 [shape = 'u8[8192]{0}', space=vmem, size = 0x2000, scoped, tag = 'output window, operand 0']
    #allocation17 [shape = 'u8[16384]{0}', space=vmem, size = 0x4000, scoped, tag = 'output window, operand 1']
    #allocation18 [shape = 's32[2]{0}', space=sflag, size = 0x8, scoped, tag = 'scoped memory for _lambda_.1']
    #allocation19 [shape = 'u8[8192]{0}', space=vmem, size = 0x2000, scoped, tag = 'output window, operand 2']
    %21 = vsyncpa [#allocation3], 0
    %s22 = scalar_lea.sflag [#allocation3], 1
    %23 = vsyncpa %s22, 0
    %24 = vsyncpa [#allocation7], 0
    %s25 = scalar_lea.sflag [#allocation7], 1
    %26 = vsyncpa %s25, 0
    %27 = vsyncpa [#allocation10], 0
    %28 = vsyncpa [#allocation13], 0
    %29 = vsyncpa [#allocation5], 0
    %30 = vsyncpa [#allocation4], 0
    %s31 = scalar_lea.sflag [#allocation4], 1
    %32 = vsyncpa %s31, 0
    %33 = vsyncpa [#allocation18], 0
    %s34 = scalar_lea.sflag [#allocation18], 1
    %35 = vsyncpa %s34, 0
    loop: start=0, step=1, limit=4
    $region2: #{_lambda_.1} parent=1 // loop_pre_header
      _
    $region3: #{_lambda_.1} parent=1 // loop_header
      %s37 = sphi 0, %s41
      %p38 = scmp.ge.s32.totalorder %s37, 4
      %s47 = sphi 0, %s49
      %s50 = sphi 0, %s47
      %s51 = sphi 0, %s50
      %s67 = sphi 0, %s51
      %s73 = sphi 0, %s75
      %s76 = sphi 0, %s73
      %s77 = sphi 0, %s76
      %s93 = sphi 0, %s77
      %s99 = sphi 0, %s101
      %s102 = sphi 0, %s99
      %s103 = sphi 0, %s102
      %s119 = sphi 0, %s103
      %s123 = sphi 0, %s123
      %s125 = sphi 0, %s123
      %s126 = sphi 0, %s125
      %s140 = sphi 0, %s126
      %s144 = sphi 0, %s144
      %s146 = sphi 0, %s144
      %s147 = sphi 0, %s146
      %s161 = sphi 0, %s147
      %s165 = sphi 0, %s165
      %s167 = sphi 0, %s165
      %s168 = sphi 0, %s167
      %s182 = sphi 0, %s168
      %s186 = sphi 0, %s186
      %s188 = sphi 0, %s186
      %s189 = sphi 0, %s188
      %s203 = sphi 0, %s189
      %s207 = sphi 0, %s207
      %s209 = sphi 0, %s207
      %s210 = sphi 0, %s209
      %s224 = sphi 0, %s210
      %s228 = sphi 0, %s228
      %s230 = sphi 0, %s228
      %s231 = sphi 0, %s230
      %s245 = sphi 0, %s231
      %s249 = sphi 0, %s249
      %s251 = sphi 0, %s249
      %s252 = sphi 0, %s251
      %s266 = sphi 0, %s252
      %s270 = sphi 0, %s270
      %s272 = sphi 0, %s270
      %s273 = sphi 0, %s272
      %s287 = sphi 0, %s273
      %s291 = sphi 0, %s291
      %s293 = sphi 0, %s291
      %s294 = sphi 0, %s293
      %s308 = sphi 0, %s294
      %s312 = sphi 0, %s312
      %s314 = sphi 0, %s312
      %s315 = sphi 0, %s314
      %s329 = sphi 0, %s315
      %s335 = sphi 0, %s337
      %s338 = sphi 0, %s335
      %s339 = sphi 0, %s338
      %s355 = sphi 0, %s339
      %s361 = sphi 0, %s363
      %s364 = sphi 0, %s361
      %s365 = sphi 0, %s364
      %s381 = sphi 0, %s365
      %s387 = sphi 0, %s389
      %s390 = sphi 0, %s387
      %s391 = sphi 0, %s390
      %s407 = sphi 0, %s391
    $region4: #{_lambda_.1} parent=1 // loop_header_branch
      %40 = sbr.rel (%p38) target = $region8
    $region5: #{_lambda_.1} parent=1 // loop_body
      %s42 = ssub.s32 %s37, 1
      %s43 = ssub.s32 %s37, 2
      %s44 = sadd.s32 %s37, 1
      %s45 = ssub.s32 %s37, %s44
      %p46 = scmp.eq.s32.totalorder %s45, 0
      %s48 = sadd.s32 %s47, 1
      %s49 = scalar_select %p46, %s47, %s48
      %p52 = pneg %p46
      %p53 = scmp.eq.s32.totalorder %s37, 1
      %p54 = por %p52, %p53
      %p55 = scmp.ne.s32.totalorder %s47, %s50
      %p56 = scmp.eq.s32.totalorder %s37, 0
      %p57 = por %p55, %p56
      %p58 = scmp.ne.s32.totalorder %s47, %s50
      %p59 = scmp.eq.s32.totalorder %s42, 1
      %p60 = por %p58, %p59
      %p61 = scmp.ne.s32.totalorder %s50, %s51
      %p62 = scmp.eq.s32.totalorder %s42, 0
      %p63 = por %p61, %p62
      %p64 = scmp.ne.s32.totalorder %s50, %s51
      %p65 = scmp.eq.s32.totalorder %s43, 1
      %p66 = por %p64, %p65
      %p68 = scmp.ne.s32.totalorder %s51, %s67
      %p69 = scmp.eq.s32.totalorder %s43, 0
      %p70 = por %p68, %p69
      %s71 = ssub.s32 %s37, %s44
      %p72 = scmp.eq.s32.totalorder %s71, 0
      %s74 = sadd.s32 %s73, 1
      %s75 = scalar_select %p72, %s73, %s74
      %p78 = pneg %p72
      %p79 = scmp.eq.s32.totalorder %s37, 1
      %p80 = por %p78, %p79
      %p81 = scmp.ne.s32.totalorder %s73, %s76
      %p82 = scmp.eq.s32.totalorder %s37, 0
      %p83 = por %p81, %p82
      %p84 = scmp.ne.s32.totalorder %s73, %s76
      %p85 = scmp.eq.s32.totalorder %s42, 1
      %p86 = por %p84, %p85
      %p87 = scmp.ne.s32.totalorder %s76, %s77
      %p88 = scmp.eq.s32.totalorder %s42, 0
      %p89 = por %p87, %p88
      %p90 = scmp.ne.s32.totalorder %s76, %s77
      %p91 = scmp.eq.s32.totalorder %s43, 1
      %p92 = por %p90, %p91
      %p94 = scmp.ne.s32.totalorder %s77, %s93
      %p95 = scmp.eq.s32.totalorder %s43, 0
      %p96 = por %p94, %p95
      %s97 = ssub.s32 %s37, %s44
      %p98 = scmp.eq.s32.totalorder %s97, 0
      %s100 = sadd.s32 %s99, 1
      %s101 = scalar_select %p98, %s99, %s100
      %p104 = pneg %p98
      %p105 = scmp.eq.s32.totalorder %s37, 1
      %p106 = por %p104, %p105
      %p107 = scmp.ne.s32.totalorder %s99, %s102
      %p108 = scmp.eq.s32.totalorder %s37, 0
      %p109 = por %p107, %p108
      %p110 = scmp.ne.s32.totalorder %s99, %s102
      %p111 = scmp.eq.s32.totalorder %s42, 1
      %p112 = por %p110, %p111
      %p113 = scmp.ne.s32.totalorder %s102, %s103
      %p114 = scmp.eq.s32.totalorder %s42, 0
      %p115 = por %p113, %p114
      %p116 = scmp.ne.s32.totalorder %s102, %s103
      %p117 = scmp.eq.s32.totalorder %s43, 1
      %p118 = por %p116, %p117
      %p120 = scmp.ne.s32.totalorder %s103, %s119
      %p121 = scmp.eq.s32.totalorder %s43, 0
      %p122 = por %p120, %p121
      %s124 = sadd.s32 %s123, 1
      %p127 = scmp.eq.s32.totalorder %s37, 1
      %p128 = scmp.ne.s32.totalorder %s123, %s125
      %p129 = scmp.eq.s32.totalorder %s37, 0
      %p130 = por %p128, %p129
      %p131 = scmp.ne.s32.totalorder %s123, %s125
      %p132 = scmp.eq.s32.totalorder %s42, 1
      %p133 = por %p131, %p132
      %p134 = scmp.ne.s32.totalorder %s125, %s126
      %p135 = scmp.eq.s32.totalorder %s42, 0
      %p136 = por %p134, %p135
      %p137 = scmp.ne.s32.totalorder %s125, %s126
      %p138 = scmp.eq.s32.totalorder %s43, 1
      %p139 = por %p137, %p138
      %p141 = scmp.ne.s32.totalorder %s126, %s140
      %p142 = scmp.eq.s32.totalorder %s43, 0
      %p143 = por %p141, %p142
      %s145 = sadd.s32 %s144, 1
      %p148 = scmp.eq.s32.totalorder %s37, 1
      %p149 = scmp.ne.s32.totalorder %s144, %s146
      %p150 = scmp.eq.s32.totalorder %s37, 0
      %p151 = por %p149, %p150
      %p152 = scmp.ne.s32.totalorder %s144, %s146
      %p153 = scmp.eq.s32.totalorder %s42, 1
      %p154 = por %p152, %p153
      %p155 = scmp.ne.s32.totalorder %s146, %s147
      %p156 = scmp.eq.s32.totalorder %s42, 0
      %p157 = por %p155, %p156
      %p158 = scmp.ne.s32.totalorder %s146, %s147
      %p159 = scmp.eq.s32.totalorder %s43, 1
      %p160 = por %p158, %p159
      %p162 = scmp.ne.s32.totalorder %s147, %s161
      %p163 = scmp.eq.s32.totalorder %s43, 0
      %p164 = por %p162, %p163
      %s166 = sadd.s32 %s165, 1
      %p169 = scmp.eq.s32.totalorder %s37, 1
      %p170 = scmp.ne.s32.totalorder %s165, %s167
      %p171 = scmp.eq.s32.totalorder %s37, 0
      %p172 = por %p170, %p171
      %p173 = scmp.ne.s32.totalorder %s165, %s167
      %p174 = scmp.eq.s32.totalorder %s42, 1
      %p175 = por %p173, %p174
      %p176 = scmp.ne.s32.totalorder %s167, %s168
      %p177 = scmp.eq.s32.totalorder %s42, 0
      %p178 = por %p176, %p177
      %p179 = scmp.ne.s32.totalorder %s167, %s168
      %p180 = scmp.eq.s32.totalorder %s43, 1
      %p181 = por %p179, %p180
      %p183 = scmp.ne.s32.totalorder %s168, %s182
      %p184 = scmp.eq.s32.totalorder %s43, 0
      %p185 = por %p183, %p184
      %s187 = sadd.s32 %s186, 1
      %p190 = scmp.eq.s32.totalorder %s37, 1
      %p191 = scmp.ne.s32.totalorder %s186, %s188
      %p192 = scmp.eq.s32.totalorder %s37, 0
      %p193 = por %p191, %p192
      %p194 = scmp.ne.s32.totalorder %s186, %s188
      %p195 = scmp.eq.s32.totalorder %s42, 1
      %p196 = por %p194, %p195
      %p197 = scmp.ne.s32.totalorder %s188, %s189
      %p198 = scmp.eq.s32.totalorder %s42, 0
      %p199 = por %p197, %p198
      %p200 = scmp.ne.s32.totalorder %s188, %s189
      %p201 = scmp.eq.s32.totalorder %s43, 1
      %p202 = por %p200, %p201
      %p204 = scmp.ne.s32.totalorder %s189, %s203
      %p205 = scmp.eq.s32.totalorder %s43, 0
      %p206 = por %p204, %p205
      %s208 = sadd.s32 %s207, 1
      %p211 = scmp.eq.s32.totalorder %s37, 1
      %p212 = scmp.ne.s32.totalorder %s207, %s209
      %p213 = scmp.eq.s32.totalorder %s37, 0
      %p214 = por %p212, %p213
      %p215 = scmp.ne.s32.totalorder %s207, %s209
      %p216 = scmp.eq.s32.totalorder %s42, 1
      %p217 = por %p215, %p216
      %p218 = scmp.ne.s32.totalorder %s209, %s210
      %p219 = scmp.eq.s32.totalorder %s42, 0
      %p220 = por %p218, %p219
      %p221 = scmp.ne.s32.totalorder %s209, %s210
      %p222 = scmp.eq.s32.totalorder %s43, 1
      %p223 = por %p221, %p222
      %p225 = scmp.ne.s32.totalorder %s210, %s224
      %p226 = scmp.eq.s32.totalorder %s43, 0
      %p227 = por %p225, %p226
      %s229 = sadd.s32 %s228, 1
      %p232 = scmp.eq.s32.totalorder %s37, 1
      %p233 = scmp.ne.s32.totalorder %s228, %s230
      %p234 = scmp.eq.s32.totalorder %s37, 0
      %p235 = por %p233, %p234
      %p236 = scmp.ne.s32.totalorder %s228, %s230
      %p237 = scmp.eq.s32.totalorder %s42, 1
      %p238 = por %p236, %p237
      %p239 = scmp.ne.s32.totalorder %s230, %s231
      %p240 = scmp.eq.s32.totalorder %s42, 0
      %p241 = por %p239, %p240
      %p242 = scmp.ne.s32.totalorder %s230, %s231
      %p243 = scmp.eq.s32.totalorder %s43, 1
      %p244 = por %p242, %p243
      %p246 = scmp.ne.s32.totalorder %s231, %s245
      %p247 = scmp.eq.s32.totalorder %s43, 0
      %p248 = por %p246, %p247
      %s250 = sadd.s32 %s249, 1
      %p253 = scmp.eq.s32.totalorder %s37, 1
      %p254 = scmp.ne.s32.totalorder %s249, %s251
      %p255 = scmp.eq.s32.totalorder %s37, 0
      %p256 = por %p254, %p255
      %p257 = scmp.ne.s32.totalorder %s249, %s251
      %p258 = scmp.eq.s32.totalorder %s42, 1
      %p259 = por %p257, %p258
      %p260 = scmp.ne.s32.totalorder %s251, %s252
      %p261 = scmp.eq.s32.totalorder %s42, 0
      %p262 = por %p260, %p261
      %p263 = scmp.ne.s32.totalorder %s251, %s252
      %p264 = scmp.eq.s32.totalorder %s43, 1
      %p265 = por %p263, %p264
      %p267 = scmp.ne.s32.totalorder %s252, %s266
      %p268 = scmp.eq.s32.totalorder %s43, 0
      %p269 = por %p267, %p268
      %s271 = sadd.s32 %s270, 1
      %p274 = scmp.eq.s32.totalorder %s37, 1
      %p275 = scmp.ne.s32.totalorder %s270, %s272
      %p276 = scmp.eq.s32.totalorder %s37, 0
      %p277 = por %p275, %p276
      %p278 = scmp.ne.s32.totalorder %s270, %s272
      %p279 = scmp.eq.s32.totalorder %s42, 1
      %p280 = por %p278, %p279
      %p281 = scmp.ne.s32.totalorder %s272, %s273
      %p282 = scmp.eq.s32.totalorder %s42, 0
      %p283 = por %p281, %p282
      %p284 = scmp.ne.s32.totalorder %s272, %s273
      %p285 = scmp.eq.s32.totalorder %s43, 1
      %p286 = por %p284, %p285
      %p288 = scmp.ne.s32.totalorder %s273, %s287
      %p289 = scmp.eq.s32.totalorder %s43, 0
      %p290 = por %p288, %p289
      %s292 = sadd.s32 %s291, 1
      %p295 = scmp.eq.s32.totalorder %s37, 1
      %p296 = scmp.ne.s32.totalorder %s291, %s293
      %p297 = scmp.eq.s32.totalorder %s37, 0
      %p298 = por %p296, %p297
      %p299 = scmp.ne.s32.totalorder %s291, %s293
      %p300 = scmp.eq.s32.totalorder %s42, 1
      %p301 = por %p299, %p300
      %p302 = scmp.ne.s32.totalorder %s293, %s294
      %p303 = scmp.eq.s32.totalorder %s42, 0
      %p304 = por %p302, %p303
      %p305 = scmp.ne.s32.totalorder %s293, %s294
      %p306 = scmp.eq.s32.totalorder %s43, 1
      %p307 = por %p305, %p306
      %p309 = scmp.ne.s32.totalorder %s294, %s308
      %p310 = scmp.eq.s32.totalorder %s43, 0
      %p311 = por %p309, %p310
      %s313 = sadd.s32 %s312, 1
      %p316 = scmp.eq.s32.totalorder %s37, 1
      %p317 = scmp.ne.s32.totalorder %s312, %s314
      %p318 = scmp.eq.s32.totalorder %s37, 0
      %p319 = por %p317, %p318
      %p320 = scmp.ne.s32.totalorder %s312, %s314
      %p321 = scmp.eq.s32.totalorder %s42, 1
      %p322 = por %p320, %p321
      %p323 = scmp.ne.s32.totalorder %s314, %s315
      %p324 = scmp.eq.s32.totalorder %s42, 0
      %p325 = por %p323, %p324
      %p326 = scmp.ne.s32.totalorder %s314, %s315
      %p327 = scmp.eq.s32.totalorder %s43, 1
      %p328 = por %p326, %p327
      %p330 = scmp.ne.s32.totalorder %s315, %s329
      %p331 = scmp.eq.s32.totalorder %s43, 0
      %p332 = por %p330, %p331
      %s333 = ssub.s32 %s37, %s44
      %p334 = scmp.eq.s32.totalorder %s333, 0
      %s336 = sadd.s32 %s335, 1
      %s337 = scalar_select %p334, %s335, %s336
      %p340 = pneg %p334
      %p341 = scmp.eq.s32.totalorder %s37, 1
      %p342 = por %p340, %p341
      %p343 = scmp.ne.s32.totalorder %s335, %s338
      %p344 = scmp.eq.s32.totalorder %s37, 0
      %p345 = por %p343, %p344
      %p346 = scmp.ne.s32.totalorder %s335, %s338
      %p347 = scmp.eq.s32.totalorder %s42, 1
      %p348 = por %p346, %p347
      %p349 = scmp.ne.s32.totalorder %s338, %s339
      %p350 = scmp.eq.s32.totalorder %s42, 0
      %p351 = por %p349, %p350
      %p352 = scmp.ne.s32.totalorder %s338, %s339
      %p353 = scmp.eq.s32.totalorder %s43, 1
      %p354 = por %p352, %p353
      %p356 = scmp.ne.s32.totalorder %s339, %s355
      %p357 = scmp.eq.s32.totalorder %s43, 0
      %p358 = por %p356, %p357
      %s359 = ssub.s32 %s37, %s44
      %p360 = scmp.eq.s32.totalorder %s359, 0
      %s362 = sadd.s32 %s361, 1
      %s363 = scalar_select %p360, %s361, %s362
      %p366 = pneg %p360
      %p367 = scmp.eq.s32.totalorder %s37, 1
      %p368 = por %p366, %p367
      %p369 = scmp.ne.s32.totalorder %s361, %s364
      %p370 = scmp.eq.s32.totalorder %s37, 0
      %p371 = por %p369, %p370
      %p372 = scmp.ne.s32.totalorder %s361, %s364
      %p373 = scmp.eq.s32.totalorder %s42, 1
      %p374 = por %p372, %p373
      %p375 = scmp.ne.s32.totalorder %s364, %s365
      %p376 = scmp.eq.s32.totalorder %s42, 0
      %p377 = por %p375, %p376
      %p378 = scmp.ne.s32.totalorder %s364, %s365
      %p379 = scmp.eq.s32.totalorder %s43, 1
      %p380 = por %p378, %p379
      %p382 = scmp.ne.s32.totalorder %s365, %s381
      %p383 = scmp.eq.s32.totalorder %s43, 0
      %p384 = por %p382, %p383
      %s385 = ssub.s32 %s37, %s44
      %p386 = scmp.eq.s32.totalorder %s385, 0
      %s388 = sadd.s32 %s387, 1
      %s389 = scalar_select %p386, %s387, %s388
      %p392 = pneg %p386
      %p393 = scmp.eq.s32.totalorder %s37, 1
      %p394 = por %p392, %p393
      %p395 = scmp.ne.s32.totalorder %s387, %s390
      %p396 = scmp.eq.s32.totalorder %s37, 0
      %p397 = por %p395, %p396
      %p398 = scmp.ne.s32.totalorder %s387, %s390
      %p399 = scmp.eq.s32.totalorder %s42, 1
      %p400 = por %p398, %p399
      %p401 = scmp.ne.s32.totalorder %s390, %s391
      %p402 = scmp.eq.s32.totalorder %s42, 0
      %p403 = por %p401, %p402
      %p404 = scmp.ne.s32.totalorder %s390, %s391
      %p405 = scmp.eq.s32.totalorder %s43, 1
      %p406 = por %p404, %p405
      %p408 = scmp.ne.s32.totalorder %s391, %s407
      %p409 = scmp.eq.s32.totalorder %s43, 0
      %p410 = por %p408, %p409
      %p411 = scmp.le.s32.totalorder 1, %s37
      %p412 = scmp.lt.s32.totalorder %s37, 3
      %p413 = pnand %p411, %p412
      %p414 = pneg %p413
      // Predicated region
      $region9: #{_lambda_.1} parent=5 // pred_check
        _
      $region10: #{_lambda_.1} parent=5 // pred_check_branch
        %416 = sbr.rel (%p413) target = $region12
      $region11: #{_lambda_.1} parent=5 // pred_region
        %s417 = ssub.s32 %s37, 1
        // Predicated region
        $region13: #{_lambda_.1} parent=11 // pred_check
          %p418 = pneg %p136
        $region14: #{_lambda_.1} parent=11 // pred_check_branch
          %420 = sbr.rel (%p418) target = $region16
        $region15: #{_lambda_.1} parent=11 // pred_region
          %s422 = ssub.s32 1024, 1024
          %423 = vsyncadd [#allocation10], %s422
          %s424 = sshll.u32 [#allocation9], 4
          %s425 = int_to_ptr.vmem [resolvable:$true] %s424
          %430 = dma.hbm_to_vmem [thread:$0]  %s3, 1024, %s425, [#allocation10], 256, 256, 16
        $region16: #{_lambda_.1} parent=11 // pred_fallthru
          _
        // Predicated region
        $region17: #{_lambda_.1} parent=11 // pred_check
          %p431 = pneg %p157
        $region18: #{_lambda_.1} parent=11 // pred_check_branch
          %433 = sbr.rel (%p431) target = $region20
        $region19: #{_lambda_.1} parent=11 // pred_region
          %s435 = ssub.s32 1024, 1024
          %436 = vsyncadd [#allocation10], %s435
          %s437 = sshll.u32 [#allocation11], 4
          %s438 = int_to_ptr.vmem [resolvable:$true] %s437
          %443 = dma.hbm_to_vmem [thread:$0]  %s4, 1024, %s438, [#allocation10], 256, 256, 16
        $region20: #{_lambda_.1} parent=11 // pred_fallthru
          _
        // Predicated region
        $region21: #{_lambda_.1} parent=11 // pred_check
          %p444 = pneg %p178
        $region22: #{_lambda_.1} parent=11 // pred_check_branch
          %446 = sbr.rel (%p444) target = $region24
        $region23: #{_lambda_.1} parent=11 // pred_region
          _
        $region24: #{_lambda_.1} parent=11 // pred_fallthru
          _
        // Predicated region
        $region25: #{_lambda_.1} parent=11 // pred_check
          %p447 = pneg %p199
        $region26: #{_lambda_.1} parent=11 // pred_check_branch
          %449 = sbr.rel (%p447) target = $region28
        $region27: #{_lambda_.1} parent=11 // pred_region
          _
        $region28: #{_lambda_.1} parent=11 // pred_fallthru
          _
        // Predicated region
        $region29: #{_lambda_.1} parent=11 // pred_check
          %p450 = pneg %p220
        $region30: #{_lambda_.1} parent=11 // pred_check_branch
          %452 = sbr.rel (%p450) target = $region32
        $region31: #{_lambda_.1} parent=11 // pred_region
          _
        $region32: #{_lambda_.1} parent=11 // pred_fallthru
          _
        // Predicated region
        $region33: #{_lambda_.1} parent=11 // pred_check
          %p453 = pneg %p241
        $region34: #{_lambda_.1} parent=11 // pred_check_branch
          %455 = sbr.rel (%p453) target = $region36
        $region35: #{_lambda_.1} parent=11 // pred_region
          %s457 = ssub.s32 1024, 1024
          %458 = vsyncadd [#allocation13], %s457
          %s459 = sshll.u32 [#allocation12], 4
          %s460 = int_to_ptr.vmem [resolvable:$true] %s459
          %465 = dma.hbm_to_vmem [thread:$0]  %s8, 1024, %s460, [#allocation13], 128, 128, 8
        $region36: #{_lambda_.1} parent=11 // pred_fallthru
          _
        // Predicated region
        $region37: #{_lambda_.1} parent=11 // pred_check
          %p466 = pneg %p262
        $region38: #{_lambda_.1} parent=11 // pred_check_branch
          %468 = sbr.rel (%p466) target = $region40
        $region39: #{_lambda_.1} parent=11 // pred_region
          _
        $region40: #{_lambda_.1} parent=11 // pred_fallthru
          _
        // Predicated region
        $region41: #{_lambda_.1} parent=11 // pred_check
          %p469 = pneg %p283
        $region42: #{_lambda_.1} parent=11 // pred_check_branch
          %471 = sbr.rel (%p469) target = $region44
        $region43: #{_lambda_.1} parent=11 // pred_region
          %s473 = ssub.s32 2048, 2048
          %474 = vsyncadd [#allocation13], %s473
          %s475 = sshll.u32 [#allocation14], 4
          %s476 = int_to_ptr.vmem [resolvable:$true] %s475
          %481 = dma.hbm_to_vmem [thread:$0]  %s10, 2048, %s476, [#allocation13], 128, 128, 8
        $region44: #{_lambda_.1} parent=11 // pred_fallthru
          _
        // Predicated region
        $region45: #{_lambda_.1} parent=11 // pred_check
          %p482 = pneg %p304
        $region46: #{_lambda_.1} parent=11 // pred_check_branch
          %484 = sbr.rel (%p482) target = $region48
        $region47: #{_lambda_.1} parent=11 // pred_region
          _
        $region48: #{_lambda_.1} parent=11 // pred_fallthru
          _
        // Predicated region
        $region49: #{_lambda_.1} parent=11 // pred_check
          %p485 = pneg %p325
        $region50: #{_lambda_.1} parent=11 // pred_check_branch
          %487 = sbr.rel (%p485) target = $region52
        $region51: #{_lambda_.1} parent=11 // pred_region
          %s489 = ssub.s32 80, 80
          %490 = vsyncadd [#allocation5], %s489
          %s492 = sshll.u32 %s12, 4
          %s493 = int_to_ptr.vmem [resolvable:$true] %s492
          %495 = dma.vmem_to_smem %s493, 80, [#allocation15], [#allocation5]
        $region52: #{_lambda_.1} parent=11 // pred_fallthru
          _
      $region12: #{_lambda_.1} parent=5 // pred_fallthru
        _
      %p496 = scmp.lt.s32.totalorder %s37, 2
      // Predicated region
      $region53: #{_lambda_.1} parent=5 // pred_check
        %p497 = pneg %p496
      $region54: #{_lambda_.1} parent=5 // pred_check_branch
        %499 = sbr.rel (%p497) target = $region56
      $region55: #{_lambda_.1} parent=5 // pred_region
        // Predicated region
        $region57: #{_lambda_.1} parent=55 // pred_check
          %p500 = pneg %p57
        $region58: #{_lambda_.1} parent=55 // pred_check_branch
          %502 = sbr.rel (%p500) target = $region60
        $region59: #{_lambda_.1} parent=55 // pred_region
          %s503 = sand.u32 %s47, 1
          %s504 = scalar_lea.sflag [#allocation3], %s503
          %s505 = sand.u32 %s47, 1
          %s506 = smul.addr %s505, 8
          %s507 = scalar_lea.vmem [#allocation2], %s506
          %s509 = ssub.s32 128, 128
          %510 = vsyncadd %s504, %s509
          %s511 = smul.addr %s37, 128
          %s512 = scalar_lea.hbm %s0, %s511
          %s514 = sshll.u32 %s507, 4
          %s515 = int_to_ptr.vmem [resolvable:$true] %s514
          %517 = dma.hbm_to_vmem [thread:$0]  %s512, 128, %s515, %s504
        $region60: #{_lambda_.1} parent=55 // pred_fallthru
          _
        // Predicated region
        $region61: #{_lambda_.1} parent=55 // pred_check
          %p518 = pneg %p83
        $region62: #{_lambda_.1} parent=55 // pred_check_branch
          %520 = sbr.rel (%p518) target = $region64
        $region63: #{_lambda_.1} parent=55 // pred_region
          %s521 = sand.u32 %s37, 1
          %s522 = scalar_lea.sflag [#allocation7], %s521
          %s523 = sand.u32 %s73, 1
          %s524 = smul.addr %s523, 16
          %s525 = scalar_lea.vmem [#allocation6], %s524
          %s527 = ssub.s32 256, 256
          %528 = vsyncadd %s522, %s527
          %s529 = smul.addr %s37, 2
          %s530 = smul.addr %s529, 128
          %s531 = scalar_lea.hbm %s1, %s530
          %s532 = sshll.u32 %s525, 4
          %s533 = int_to_ptr.vmem [resolvable:$true] %s532
          %538 = dma.hbm_to_vmem [thread:$0]  %s531, 256, %s533, %s522, 128, 128, 8
        $region64: #{_lambda_.1} parent=55 // pred_fallthru
          _
        // Predicated region
        $region65: #{_lambda_.1} parent=55 // pred_check
          %p539 = pneg %p109
        $region66: #{_lambda_.1} parent=55 // pred_check_branch
          %541 = sbr.rel (%p539) target = $region68
        $region67: #{_lambda_.1} parent=55 // pred_region
          %s542 = sand.u32 %s37, 1
          %s543 = scalar_lea.sflag [#allocation7], %s542
          %s544 = sand.u32 %s99, 1
          %s545 = smul.addr %s544, 8
          %s546 = scalar_lea.vmem [#allocation8], %s545
          %s548 = ssub.s32 128, 128
          %549 = vsyncadd %s543, %s548
          %s550 = smul.addr %s37, 128
          %s551 = scalar_lea.hbm %s2, %s550
          %s553 = sshll.u32 %s546, 4
          %s554 = int_to_ptr.vmem [resolvable:$true] %s553
          %556 = dma.hbm_to_vmem [thread:$0]  %s551, 128, %s554, %s543
        $region68: #{_lambda_.1} parent=55 // pred_fallthru
          _
      $region56: #{_lambda_.1} parent=5 // pred_fallthru
        _
      %p557 = scmp.le.s32.totalorder 1, %s37
      %p558 = scmp.lt.s32.totalorder %s37, 3
      %p559 = pnand %p557, %p558
      %p560 = pneg %p559
      // Predicated region
      $region69: #{_lambda_.1} parent=5 // pred_check
        _
      $region70: #{_lambda_.1} parent=5 // pred_check_branch
        %562 = sbr.rel (%p559) target = $region72
      $region71: #{_lambda_.1} parent=5 // pred_region
        %s563 = ssub.s32 %s37, 1
        %s564 = sand.u32 %s50, 1
        %s565 = scalar_lea.sflag [#allocation3], %s564
        %s566 = sand.u32 %s50, 1
        %s567 = smul.addr %s566, 8
        %s568 = scalar_lea.vmem [#allocation2], %s567
        // Predicated region
        $region73: #{_lambda_.1} parent=71 // pred_check
          %p569 = pneg %p63
        $region74: #{_lambda_.1} parent=71 // pred_check_branch
          %571 = sbr.rel (%p569) target = $region76
        $region75: #{_lambda_.1} parent=71 // pred_region
          %572 = dma.done %s565, 128
        $region76: #{_lambda_.1} parent=71 // pred_fallthru
          _
        %s573 = sand.u32 %s42, 1
        %s574 = scalar_lea.sflag [#allocation7], %s573
        %s575 = sand.u32 %s76, 1
        %s576 = smul.addr %s575, 16
        %s577 = scalar_lea.vmem [#allocation6], %s576
        // Predicated region
        $region77: #{_lambda_.1} parent=71 // pred_check
          %p578 = pneg %p89
        $region78: #{_lambda_.1} parent=71 // pred_check_branch
          %580 = sbr.rel (%p578) target = $region80
        $region79: #{_lambda_.1} parent=71 // pred_region
          %581 = dma.done %s574, 256
        $region80: #{_lambda_.1} parent=71 // pred_fallthru
          _
        %s582 = sand.u32 %s42, 1
        %s583 = scalar_lea.sflag [#allocation7], %s582
        %s584 = sand.u32 %s102, 1
        %s585 = smul.addr %s584, 8
        %s586 = scalar_lea.vmem [#allocation8], %s585
        // Predicated region
        $region81: #{_lambda_.1} parent=71 // pred_check
          %p587 = pneg %p115
        $region82: #{_lambda_.1} parent=71 // pred_check_branch
          %589 = sbr.rel (%p587) target = $region84
        $region83: #{_lambda_.1} parent=71 // pred_region
          %590 = dma.done %s583, 128
        $region84: #{_lambda_.1} parent=71 // pred_fallthru
          _
        // Predicated region
        $region85: #{_lambda_.1} parent=71 // pred_check
          %p591 = pneg %p136
        $region86: #{_lambda_.1} parent=71 // pred_check_branch
          %593 = sbr.rel (%p591) target = $region88
        $region87: #{_lambda_.1} parent=71 // pred_region
          %594 = dma.done [#allocation10], 1024
        $region88: #{_lambda_.1} parent=71 // pred_fallthru
          _
        // Predicated region
        $region89: #{_lambda_.1} parent=71 // pred_check
          %p595 = pneg %p157
        $region90: #{_lambda_.1} parent=71 // pred_check_branch
          %597 = sbr.rel (%p595) target = $region92
        $region91: #{_lambda_.1} parent=71 // pred_region
          %598 = dma.done [#allocation10], 1024
        $region92: #{_lambda_.1} parent=71 // pred_fallthru
          _
        // Predicated region
        $region93: #{_lambda_.1} parent=71 // pred_check
          %p599 = pneg %p241
        $region94: #{_lambda_.1} parent=71 // pred_check_branch
          %601 = sbr.rel (%p599) target = $region96
        $region95: #{_lambda_.1} parent=71 // pred_region
          %602 = dma.done [#allocation13], 1024
        $region96: #{_lambda_.1} parent=71 // pred_fallthru
          _
        // Predicated region
        $region97: #{_lambda_.1} parent=71 // pred_check
          %p603 = pneg %p283
        $region98: #{_lambda_.1} parent=71 // pred_check_branch
          %605 = sbr.rel (%p603) target = $region100
        $region99: #{_lambda_.1} parent=71 // pred_region
          %606 = dma.done [#allocation13], 2048
        $region100: #{_lambda_.1} parent=71 // pred_fallthru
          _
        // Predicated region
        $region101: #{_lambda_.1} parent=71 // pred_check
          %p607 = pneg %p325
        $region102: #{_lambda_.1} parent=71 // pred_check_branch
          %609 = sbr.rel (%p607) target = $region104
        $region103: #{_lambda_.1} parent=71 // pred_region
          %610 = dma.done [#allocation5], 80
        $region104: #{_lambda_.1} parent=71 // pred_fallthru
          _
        %611 = sfence
        %s612 = sand.u32 %s50, 1
        %s613 = scalar_lea.sflag [#allocation3], %s612
        %s614 = sand.u32 %s50, 1
        %s615 = smul.addr %s614, 8
        %s616 = scalar_lea.vmem [#allocation2], %s615
        %p617 = pneg %p63
        %p618 = pneg %p60
        %s619 = sand.u32 %s42, 1
        %s620 = scalar_lea.sflag [#allocation7], %s619
        %s621 = sand.u32 %s76, 1
        %s622 = smul.addr %s621, 16
        %s623 = scalar_lea.vmem [#allocation6], %s622
        %p624 = pneg %p89
        %p625 = pneg %p86
        %s626 = sand.u32 %s42, 1
        %s627 = scalar_lea.sflag [#allocation7], %s626
        %s628 = sand.u32 %s102, 1
        %s629 = smul.addr %s628, 8
        %s630 = scalar_lea.vmem [#allocation8], %s629
        %p631 = pneg %p115
        %p632 = pneg %p112
        %p633 = pneg %p136
        %p634 = pneg %p133
        %p635 = pneg %p157
        %p636 = pneg %p154
        %p637 = pneg %p178
        %p638 = pneg %p175
        %p639 = pneg %p199
        %p640 = pneg %p196
        %p641 = pneg %p220
        %p642 = pneg %p217
        %p643 = pneg %p241
        %p644 = pneg %p238
        %p645 = pneg %p262
        %p646 = pneg %p259
        %p647 = pneg %p283
        %p648 = pneg %p280
        %p649 = pneg %p304
        %p650 = pneg %p301
        %p651 = pneg %p325
        %p652 = pneg %p322
        %p653 = pneg %p351
        %p654 = pneg %p348
        %s655 = sand.u32 %s338, 1
        %s656 = scalar_lea.sflag [#allocation4], %s655
        %s657 = sand.u32 %s338, 1
        %s658 = smul.addr %s657, 8
        %s659 = scalar_lea.vmem [#allocation16], %s658
        %p660 = pneg %p377
        %p661 = pneg %p374
        %s662 = sand.u32 %s42, 1
        %s663 = scalar_lea.sflag [#allocation18], %s662
        %s664 = sand.u32 %s364, 1
        %s665 = smul.addr %s664, 16
        %s666 = scalar_lea.vmem [#allocation17], %s665
        %p667 = pneg %p403
        %p668 = pneg %p400
        %s669 = sand.u32 %s42, 1
        %s670 = scalar_lea.sflag [#allocation18], %s669
        %s671 = sand.u32 %s390, 1
        %s672 = smul.addr %s671, 8
        %s673 = scalar_lea.vmem [#allocation19], %s672
        %s674 = sld [smem:[#allocation15 + $0x208]]
        %s675 = smul.f32 %s674, 0.25
        %s676 = sld [smem:[#allocation15 + $0x209]]
        %s677 = smul.f32 %s676, 0.25
        %v678 = vld [vmem:[%s568] sm:$0xff]
        %v679 = vld [vmem:[%s577] sm:$0xff]
        %v680 = vld [vmem:[%s577 + $0x8] sm:$0xff]
        %v681 = vld [vmem:[%s586] sm:$0xff]
        %v682 = vld [vmem:[%s6] sm:$0x1]
        %v683 = vld [vmem:[%s7] sm:$0x1]
        %vm684 = vcmask 261120
        %v685 = vsel %vm684, %v678, 0.0
        %686 = vadd.xlane.f32.xlu0 %v685
        %v687 = vpop.xlane.xlu0 %686
        %v688 = vrcp.pop 32.0
        %v689 = vmul.f32 %v687, %v688
        %v690 = vsub.f32 %v678, %v689
        %v691 = vmul.f32 %v690, %v690
        %v692 = vsel %vm684, %v691, 0.0
        %693 = vadd.xlane.f32.xlu0 %v692
        %v694 = vpop.xlane.xlu0 %693
        %v695 = vmul.f32 %v694, %v688
        %v696 = vadd.f32 %v695, 1e-05
        %v697 = vrsqrt.pop %v696
        %v698 = vmul.f32 %v690, %v697
        %v699 = vlaneseq
        %v700 = vshrl.u32 %v699, 7
        %v701 = vsub.s32 0, %v700
        %v702 = vrot.slane %v682, %v701
        %v703 = vmul.f32 %v698, %v702
        %v704 = vlaneseq
        %v705 = vshrl.u32 %v704, 7
        %v706 = vsub.s32 0, %v705
        %v707 = vrot.slane %v683, %v706
        %v708 = vadd.f32 %v703, %v707
        %v709 = vld [vmem:[%s6 + $0x2] sm:$0x1]
        %v710 = vld [vmem:[%s7 + $0x2] sm:$0x1]
        %v711 = vsel %vm684, %v679, 0.0
        %712 = vadd.xlane.f32.xlu0 %v711
        %v713 = vpop.xlane.xlu0 %712
        %v714 = vsel %vm684, %v680, 0.0
        %715 = vadd.xlane.f32.xlu0 %v714
        %v716 = vpop.xlane.xlu0 %715
        %v717 = vmul.f32 %v713, %v688
        %v718 = vmul.f32 %v716, %v688
        %v719 = vsub.f32 %v679, %v717
        %v720 = vsub.f32 %v680, %v718
        %v721 = vmul.f32 %v719, %v719
        %v722 = vmul.f32 %v720, %v720
        %v723 = vsel %vm684, %v721, 0.0
        %724 = vadd.xlane.f32.xlu0 %v723
        %v725 = vpop.xlane.xlu0 %724
        %v726 = vsel %vm684, %v722, 0.0
        %727 = vadd.xlane.f32.xlu0 %v726
        %v728 = vpop.xlane.xlu0 %727
        %v729 = vmul.f32 %v725, %v688
        %v730 = vmul.f32 %v728, %v688
        %v731 = vadd.f32 %v729, 1e-05
        %v732 = vadd.f32 %v730, 1e-05
        %v733 = vrsqrt.pop %v731
        %v734 = vrsqrt.pop %v732
        %v735 = vmul.f32 %v719, %v733
        %v736 = vmul.f32 %v720, %v734
        %v737 = vlaneseq
        %v738 = vshrl.u32 %v737, 7
        %v739 = vsub.s32 0, %v738
        %v740 = vrot.slane %v709, %v739
        %v741 = vmul.f32 %v735, %v740
        %v742 = vmul.f32 %v736, %v740
        %v743 = vlaneseq
        %v744 = vshrl.u32 %v743, 7
        %v745 = vsub.s32 0, %v744
        %v746 = vrot.slane %v710, %v745
        %v747 = vadd.f32 %v741, %v746
        %v748 = vadd.f32 %v742, %v746
        %v749 = vld [vmem:[#allocation9] sm:$0xff]
        %v750 = vld [vmem:[#allocation9 + $0x8] sm:$0xff]
        %v751 = vld [vmem:[#allocation9 + $0x10] sm:$0xff]
        %v752 = vld [vmem:[#allocation9 + $0x18] sm:$0xff]
        %v753 = vld [vmem:[#allocation9 + $0x20] sm:$0xff]
        %v754 = vld [vmem:[#allocation9 + $0x28] sm:$0xff]
        %v755 = vld [vmem:[#allocation9 + $0x30] sm:$0xff]
        %v756 = vld [vmem:[#allocation9 + $0x38] sm:$0xff]
        %v758 = vsel %vm684, %v708, 0
        %760 = vmatprep.subr.mxu0 0.0
        %761 = vmatpush1.msra.mxu0 0.0
        %762 = vmatprep.subr.mxu0 0.0
        %763 = vmatpush1.msra.mxu0 0.0
        %764 = vmatprep.subr.mxu0 0.0
        %765 = vmatpush1.msra.mxu0 0.0
        %766 = vmatprep.subr.mxu0 0.0
        %767 = vmatpush1.msra.mxu0 0.0
        %768 = vmatprep.subr.mxu0 0.0
        %769 = vmatpush1.msra.mxu0 0.0
        %770 = vmatprep.subr.mxu0 0.0
        %771 = vmatpush1.msra.mxu0 0.0
        %772 = vmatprep.subr.mxu0 0.0
        %773 = vmatpush1.msra.mxu0 0.0
        %774 = vmatprep.subr.mxu0 0.0
        %775 = vmatpush1.msra.mxu0 0.0
        %776 = vmatprep.subr.mxu0 0.0
        %777 = vmatpush1.msra.mxu0 0.0
        %778 = vmatprep.subr.mxu0 0.0
        %779 = vmatpush1.msra.mxu0 0.0
        %780 = vmatprep.subr.mxu0 0.0
        %781 = vmatpush1.msra.mxu0 0.0
        %782 = vmatprep.subr.mxu0 0.0
        %783 = vmatpush1.msra.mxu0 0.0
        %784 = vmatprep.subr.mxu0 %v756
        %785 = vmatpush1.msra.mxu0 %v755
        %786 = vmatprep.subr.mxu0 %v754
        %787 = vmatpush1.msra.mxu0 %v753
        %788 = vmatprep.subr.mxu0 %v752
        %789 = vmatpush1.msra.mxu0 %v751
        %790 = vmatprep.subr.mxu0 %v750
        %791 = vmatpush1.msra.mxu0 %v749
        %792 = vmatprep.subr.mxu0 0.0
        %793 = vmatpush2.msra.mxu0 0.0
        %794 = vmatprep.subr.mxu0 0.0
        %795 = vmatpush2.msra.mxu0 0.0
        %796 = vmatprep.subr.mxu0 0.0
        %797 = vmatpush2.msra.mxu0 0.0
        %798 = vmatprep.subr.mxu0 0.0
        %799 = vmatpush2.msra.mxu0 0.0
        %800 = vmatprep.subr.mxu0 0.0
        %801 = vmatpush2.msra.mxu0 0.0
        %802 = vmatprep.subr.mxu0 0.0
        %803 = vmatpush2.msra.mxu0 0.0
        %804 = vmatprep.subr.mxu0 0.0
        %805 = vmatpush2.msra.mxu0 0.0
        %806 = vmatprep.subr.mxu0 0.0
        %807 = vmatpush2.msra.mxu0 0.0
        %808 = vmatprep.subr.mxu0 0.0
        %809 = vmatpush2.msra.mxu0 0.0
        %810 = vmatprep.subr.mxu0 0.0
        %811 = vmatpush2.msra.mxu0 0.0
        %812 = vmatprep.subr.mxu0 0.0
        %813 = vmatpush2.msra.mxu0 0.0
        %814 = vmatprep.subr.mxu0 0.0
        %815 = vmatpush2.msra.mxu0 0.0
        %816 = vmatprep.subr.mxu0 0.0
        %817 = vmatpush2.msra.mxu0 0.0
        %818 = vmatprep.subr.mxu0 0.0
        %819 = vmatpush2.msra.mxu0 0.0
        %820 = vmatprep.subr.mxu0 0.0
        %821 = vmatpush2.msra.mxu0 0.0
        %822 = vmatprep.subr.mxu0 0.0
        %823 = vmatpush2.msra.mxu0 0.0
        %824 = vmatprep.mubr.f32.mxu0 0.0
        %825 = vmatmul.mubr.f32.gmra.mxu0 %v758
        %v826 = vpop.f32.mrf.mxu0
        %v827 = vadd.f32 0.0, %v826
        %v828 = vpop.f32.mrf.mxu0
        %v829 = vadd.f32 0.0, %v828
        %830 = vdwg.mxu0
        %v831 = vld [vmem:[#allocation11] sm:$0xff]
        %v832 = vld [vmem:[#allocation11 + $0x8] sm:$0xff]
        %v833 = vld [vmem:[#allocation11 + $0x10] sm:$0xff]
        %v834 = vld [vmem:[#allocation11 + $0x18] sm:$0xff]
        %v835 = vld [vmem:[#allocation11 + $0x20] sm:$0xff]
        %v836 = vld [vmem:[#allocation11 + $0x28] sm:$0xff]
        %v837 = vld [vmem:[#allocation11 + $0x30] sm:$0xff]
        %v838 = vld [vmem:[#allocation11 + $0x38] sm:$0xff]
        %v840 = vsel %vm684, %v747, 0
        %v843 = vsel %vm684, %v748, 0
        %845 = vmatprep.subr.mxu0 0.0
        %846 = vmatpush1.msra.mxu0 0.0
        %847 = vmatprep.subr.mxu0 0.0
        %848 = vmatpush1.msra.mxu0 0.0
        %849 = vmatprep.subr.mxu0 0.0
        %850 = vmatpush1.msra.mxu0 0.0
        %851 = vmatprep.subr.mxu0 0.0
        %852 = vmatpush1.msra.mxu0 0.0
        %853 = vmatprep.subr.mxu0 0.0
        %854 = vmatpush1.msra.mxu0 0.0
        %855 = vmatprep.subr.mxu0 0.0
        %856 = vmatpush1.msra.mxu0 0.0
        %857 = vmatprep.subr.mxu0 0.0
        %858 = vmatpush1.msra.mxu0 0.0
        %859 = vmatprep.subr.mxu0 0.0
        %860 = vmatpush1.msra.mxu0 0.0
        %861 = vmatprep.subr.mxu0 0.0
        %862 = vmatpush1.msra.mxu0 0.0
        %863 = vmatprep.subr.mxu0 0.0
        %864 = vmatpush1.msra.mxu0 0.0
        %865 = vmatprep.subr.mxu0 0.0
        %866 = vmatpush1.msra.mxu0 0.0
        %867 = vmatprep.subr.mxu0 0.0
        %868 = vmatpush1.msra.mxu0 0.0
        %869 = vmatprep.subr.mxu0 %v838
        %870 = vmatpush1.msra.mxu0 %v837
        %871 = vmatprep.subr.mxu0 %v836
        %872 = vmatpush1.msra.mxu0 %v835
        %873 = vmatprep.subr.mxu0 %v834
        %874 = vmatpush1.msra.mxu0 %v833
        %875 = vmatprep.subr.mxu0 %v832
        %876 = vmatpush1.msra.mxu0 %v831
        %877 = vmatprep.subr.mxu0 0.0
        %878 = vmatpush2.msra.mxu0 0.0
        %879 = vmatprep.subr.mxu0 0.0
        %880 = vmatpush2.msra.mxu0 0.0
        %881 = vmatprep.subr.mxu0 0.0
        %882 = vmatpush2.msra.mxu0 0.0
        %883 = vmatprep.subr.mxu0 0.0
        %884 = vmatpush2.msra.mxu0 0.0
        %885 = vmatprep.subr.mxu0 0.0
        %886 = vmatpush2.msra.mxu0 0.0
        %887 = vmatprep.subr.mxu0 0.0
        %888 = vmatpush2.msra.mxu0 0.0
        %889 = vmatprep.subr.mxu0 0.0
        %890 = vmatpush2.msra.mxu0 0.0
        %891 = vmatprep.subr.mxu0 0.0
        %892 = vmatpush2.msra.mxu0 0.0
        %893 = vmatprep.subr.mxu0 0.0
        %894 = vmatpush2.msra.mxu0 0.0
        %895 = vmatprep.subr.mxu0 0.0
        %896 = vmatpush2.msra.mxu0 0.0
        %897 = vmatprep.subr.mxu0 0.0
        %898 = vmatpush2.msra.mxu0 0.0
        %899 = vmatprep.subr.mxu0 0.0
        %900 = vmatpush2.msra.mxu0 0.0
        %901 = vmatprep.subr.mxu0 0.0
        %902 = vmatpush2.msra.mxu0 0.0
        %903 = vmatprep.subr.mxu0 0.0
        %904 = vmatpush2.msra.mxu0 0.0
        %905 = vmatprep.subr.mxu0 0.0
        %906 = vmatpush2.msra.mxu0 0.0
        %907 = vmatprep.subr.mxu0 0.0
        %908 = vmatpush2.msra.mxu0 0.0
        %909 = vmatprep.mubr.f32.mxu0 0.0
        %910 = vmatmul.mubr.f32.gmra.mxu0 %v840
        %v911 = vpop.f32.mrf.mxu0
        %v912 = vadd.f32 0.0, %v911
        %v913 = vpop.f32.mrf.mxu0
        %v914 = vadd.f32 0.0, %v913
        %915 = vmatprep.mubr.f32.mxu0 0.0
        %916 = vmatmul.mubr.f32.gmra.mxu0 %v843
        %v917 = vpop.f32.mrf.mxu0
        %v918 = vadd.f32 0.0, %v917
        %v919 = vpop.f32.mrf.mxu0
        %v920 = vadd.f32 0.0, %v919
        %921 = vdwg.mxu0
        %v923 = vsel %vm684, %v827, 0
        %925 = vmatprep.subr.mxu0 0.0
        %926 = vmatpush1.xpose.msra.mxu0 0.0
        %927 = vmatprep.subr.mxu0 0.0
        %928 = vmatpush1.xpose.msra.mxu0 0.0
        %929 = vmatprep.subr.mxu0 0.0
        %930 = vmatpush1.xpose.msra.mxu0 0.0
        %931 = vmatprep.subr.mxu0 0.0
        %932 = vmatpush1.xpose.msra.mxu0 0.0
        %933 = vmatprep.subr.mxu0 0.0
        %934 = vmatpush1.xpose.msra.mxu0 0.0
        %935 = vmatprep.subr.mxu0 0.0
        %936 = vmatpush1.xpose.msra.mxu0 0.0
        %937 = vmatprep.subr.mxu0 0.0
        %938 = vmatpush1.xpose.msra.mxu0 0.0
        %939 = vmatprep.subr.mxu0 0.0
        %940 = vmatpush1.xpose.msra.mxu0 0.0
        %941 = vmatprep.subr.mxu0 0.0
        %942 = vmatpush1.xpose.msra.mxu0 0.0
        %943 = vmatprep.subr.mxu0 0.0
        %944 = vmatpush1.xpose.msra.mxu0 0.0
        %945 = vmatprep.subr.mxu0 0.0
        %946 = vmatpush1.xpose.msra.mxu0 0.0
        %947 = vmatprep.subr.mxu0 0.0
        %948 = vmatpush1.xpose.msra.mxu0 0.0
        %949 = vmatprep.subr.mxu0 0.0
        %950 = vmatpush1.xpose.msra.mxu0 0.0
        %951 = vmatprep.subr.mxu0 0.0
        %952 = vmatpush1.xpose.msra.mxu0 0.0
        %953 = vmatprep.subr.mxu0 0.0
        %954 = vmatpush1.xpose.msra.mxu0 %v843
        %955 = vmatprep.subr.mxu0 0.0
        %956 = vmatpush1.xpose.msra.mxu0 %v840
        %957 = vmatprep.subr.mxu0 0.0
        %958 = vmatpush2.xpose.msra.mxu0 0.0
        %959 = vmatprep.subr.mxu0 0.0
        %960 = vmatpush2.xpose.msra.mxu0 0.0
        %961 = vmatprep.subr.mxu0 0.0
        %962 = vmatpush2.xpose.msra.mxu0 0.0
        %963 = vmatprep.subr.mxu0 0.0
        %964 = vmatpush2.xpose.msra.mxu0 0.0
        %965 = vmatprep.subr.mxu0 0.0
        %966 = vmatpush2.xpose.msra.mxu0 0.0
        %967 = vmatprep.subr.mxu0 0.0
        %968 = vmatpush2.xpose.msra.mxu0 0.0
        %969 = vmatprep.subr.mxu0 0.0
        %970 = vmatpush2.xpose.msra.mxu0 0.0
        %971 = vmatprep.subr.mxu0 0.0
        %972 = vmatpush2.xpose.msra.mxu0 0.0
        %973 = vmatprep.subr.mxu0 0.0
        %974 = vmatpush2.xpose.msra.mxu0 0.0
        %975 = vmatprep.subr.mxu0 0.0
        %976 = vmatpush2.xpose.msra.mxu0 0.0
        %977 = vmatprep.subr.mxu0 0.0
        %978 = vmatpush2.xpose.msra.mxu0 0.0
        %979 = vmatprep.subr.mxu0 0.0
        %980 = vmatpush2.xpose.msra.mxu0 0.0
        %981 = vmatprep.subr.mxu0 0.0
        %982 = vmatpush2.xpose.msra.mxu0 0.0
        %983 = vmatprep.subr.mxu0 0.0
        %984 = vmatpush2.xpose.msra.mxu0 0.0
        %985 = vmatprep.subr.mxu0 0.0
        %986 = vmatpush2.xpose.msra.mxu0 0.0
        %987 = vmatprep.subr.mxu0 0.0
        %988 = vmatpush2.xpose.msra.mxu0 0.0
        %989 = vmatprep.mubr.f32.mxu0 0.0
        %990 = vmatmul.mubr.f32.gmra.mxu0 %v923
        %v991 = vpop.f32.mrf.mxu0
        %v992 = vadd.f32 0.0, %v991
        %v993 = vpop.f32.mrf.mxu0
        %994 = vdwg.mxu0
        %s995 = sld [smem:[#allocation15]]
        %s996 = sld [smem:[#allocation15 + $0x10]]
        %s997 = sld [smem:[#allocation15 + $0x100]]
        %s998 = sld [smem:[#allocation15 + $0x180]]
        %v999 = vstv %s995
        %v1000 = vmul.f32 %v992, %v999
        %v1001 = vstv %s996
        %v1002 = vmul.f32 %v681, %v1001
        %v1003 = vadd.f32 %v1000, %v1002
        %v1004 = vstv %s997
        %v1005 = vadd.f32 %v1003, %v1004
        %v1006 = vmax.f32 %v1005, 0.0
        %v1007 = vstv %s998
        %v1008 = vmul.f32 %v1006, %v1007
        %v1009 = vadd.f32 %v1008, 0.0
        %s1010 = sld [smem:[#allocation15 + $0x1]]
        %s1011 = sld [smem:[#allocation15 + $0x11]]
        %s1012 = sld [smem:[#allocation15 + $0x101]]
        %s1013 = sld [smem:[#allocation15 + $0x181]]
        %v1014 = vstv %s1010
        %v1015 = vmul.f32 %v992, %v1014
        %v1016 = vstv %s1011
        %v1017 = vmul.f32 %v681, %v1016
        %v1018 = vadd.f32 %v1015, %v1017
        %v1019 = vstv %s1012
        %v1020 = vadd.f32 %v1018, %v1019
        %v1021 = vmax.f32 %v1020, 0.0
        %v1022 = vstv %s1013
        %v1023 = vmul.f32 %v1021, %v1022
        %v1024 = vadd.f32 %v1009, %v1023
        %s1025 = sld [smem:[#allocation15 + $0x2]]
        %s1026 = sld [smem:[#allocation15 + $0x12]]
        %s1027 = sld [smem:[#allocation15 + $0x102]]
        %s1028 = sld [smem:[#allocation15 + $0x182]]
        %v1029 = vstv %s1025
        %v1030 = vmul.f32 %v992, %v1029
        %v1031 = vstv %s1026
        %v1032 = vmul.f32 %v681, %v1031
        %v1033 = vadd.f32 %v1030, %v1032
        %v1034 = vstv %s1027
        %v1035 = vadd.f32 %v1033, %v1034
        %v1036 = vmax.f32 %v1035, 0.0
        %v1037 = vstv %s1028
        %v1038 = vmul.f32 %v1036, %v1037
        %v1039 = vadd.f32 %v1024, %v1038
        %s1040 = sld [smem:[#allocation15 + $0x3]]
        %s1041 = sld [smem:[#allocation15 + $0x13]]
        %s1042 = sld [smem:[#allocation15 + $0x103]]
        %s1043 = sld [smem:[#allocation15 + $0x183]]
        %v1044 = vstv %s1040
        %v1045 = vmul.f32 %v992, %v1044
        %v1046 = vstv %s1041
        %v1047 = vmul.f32 %v681, %v1046
        %v1048 = vadd.f32 %v1045, %v1047
        %v1049 = vstv %s1042
        %v1050 = vadd.f32 %v1048, %v1049
        %v1051 = vmax.f32 %v1050, 0.0
        %v1052 = vstv %s1043
        %v1053 = vmul.f32 %v1051, %v1052
        %v1054 = vadd.f32 %v1039, %v1053
        %s1055 = sld [smem:[#allocation15 + $0x4]]
        %s1056 = sld [smem:[#allocation15 + $0x14]]
        %s1057 = sld [smem:[#allocation15 + $0x104]]
        %s1058 = sld [smem:[#allocation15 + $0x184]]
        %v1059 = vstv %s1055
        %v1060 = vmul.f32 %v992, %v1059
        %v1061 = vstv %s1056
        %v1062 = vmul.f32 %v681, %v1061
        %v1063 = vadd.f32 %v1060, %v1062
        %v1064 = vstv %s1057
        %v1065 = vadd.f32 %v1063, %v1064
        %v1066 = vmax.f32 %v1065, 0.0
        %v1067 = vstv %s1058
        %v1068 = vmul.f32 %v1066, %v1067
        %v1069 = vadd.f32 %v1054, %v1068
        %s1070 = sld [smem:[#allocation15 + $0x5]]
        %s1071 = sld [smem:[#allocation15 + $0x15]]
        %s1072 = sld [smem:[#allocation15 + $0x105]]
        %s1073 = sld [smem:[#allocation15 + $0x185]]
        %v1074 = vstv %s1070
        %v1075 = vmul.f32 %v992, %v1074
        %v1076 = vstv %s1071
        %v1077 = vmul.f32 %v681, %v1076
        %v1078 = vadd.f32 %v1075, %v1077
        %v1079 = vstv %s1072
        %v1080 = vadd.f32 %v1078, %v1079
        %v1081 = vmax.f32 %v1080, 0.0
        %v1082 = vstv %s1073
        %v1083 = vmul.f32 %v1081, %v1082
        %v1084 = vadd.f32 %v1069, %v1083
        %s1085 = sld [smem:[#allocation15 + $0x6]]
        %s1086 = sld [smem:[#allocation15 + $0x16]]
        %s1087 = sld [smem:[#allocation15 + $0x106]]
        %s1088 = sld [smem:[#allocation15 + $0x186]]
        %v1089 = vstv %s1085
        %v1090 = vmul.f32 %v992, %v1089
        %v1091 = vstv %s1086
        %v1092 = vmul.f32 %v681, %v1091
        %v1093 = vadd.f32 %v1090, %v1092
        %v1094 = vstv %s1087
        %v1095 = vadd.f32 %v1093, %v1094
        %v1096 = vmax.f32 %v1095, 0.0
        %v1097 = vstv %s1088
        %v1098 = vmul.f32 %v1096, %v1097
        %v1099 = vadd.f32 %v1084, %v1098
        %s1100 = sld [smem:[#allocation15 + $0x7]]
        %s1101 = sld [smem:[#allocation15 + $0x17]]
        %s1102 = sld [smem:[#allocation15 + $0x107]]
        %s1103 = sld [smem:[#allocation15 + $0x187]]
        %v1104 = vstv %s1100
        %v1105 = vmul.f32 %v992, %v1104
        %v1106 = vstv %s1101
        %v1107 = vmul.f32 %v681, %v1106
        %v1108 = vadd.f32 %v1105, %v1107
        %v1109 = vstv %s1102
        %v1110 = vadd.f32 %v1108, %v1109
        %v1111 = vmax.f32 %v1110, 0.0
        %v1112 = vstv %s1103
        %v1113 = vmul.f32 %v1111, %v1112
        %v1114 = vadd.f32 %v1099, %v1113
        %s1115 = sld [smem:[#allocation15 + $0x8]]
        %s1116 = sld [smem:[#allocation15 + $0x18]]
        %s1117 = sld [smem:[#allocation15 + $0x108]]
        %s1118 = sld [smem:[#allocation15 + $0x188]]
        %v1119 = vstv %s1115
        %v1120 = vmul.f32 %v992, %v1119
        %v1121 = vstv %s1116
        %v1122 = vmul.f32 %v681, %v1121
        %v1123 = vadd.f32 %v1120, %v1122
        %v1124 = vstv %s1117
        %v1125 = vadd.f32 %v1123, %v1124
        %v1126 = vmax.f32 %v1125, 0.0
        %v1127 = vstv %s1118
        %v1128 = vmul.f32 %v1126, %v1127
        %v1129 = vadd.f32 %v1114, %v1128
        %s1130 = sld [smem:[#allocation15 + $0x9]]
        %s1131 = sld [smem:[#allocation15 + $0x19]]
        %s1132 = sld [smem:[#allocation15 + $0x109]]
        %s1133 = sld [smem:[#allocation15 + $0x189]]
        %v1134 = vstv %s1130
        %v1135 = vmul.f32 %v992, %v1134
        %v1136 = vstv %s1131
        %v1137 = vmul.f32 %v681, %v1136
        %v1138 = vadd.f32 %v1135, %v1137
        %v1139 = vstv %s1132
        %v1140 = vadd.f32 %v1138, %v1139
        %v1141 = vmax.f32 %v1140, 0.0
        %v1142 = vstv %s1133
        %v1143 = vmul.f32 %v1141, %v1142
        %v1144 = vadd.f32 %v1129, %v1143
        %s1145 = sld [smem:[#allocation15 + $0xa]]
        %s1146 = sld [smem:[#allocation15 + $0x1a]]
        %s1147 = sld [smem:[#allocation15 + $0x10a]]
        %s1148 = sld [smem:[#allocation15 + $0x18a]]
        %v1149 = vstv %s1145
        %v1150 = vmul.f32 %v992, %v1149
        %v1151 = vstv %s1146
        %v1152 = vmul.f32 %v681, %v1151
        %v1153 = vadd.f32 %v1150, %v1152
        %v1154 = vstv %s1147
        %v1155 = vadd.f32 %v1153, %v1154
        %v1156 = vmax.f32 %v1155, 0.0
        %v1157 = vstv %s1148
        %v1158 = vmul.f32 %v1156, %v1157
        %v1159 = vadd.f32 %v1144, %v1158
        %s1160 = sld [smem:[#allocation15 + $0xb]]
        %s1161 = sld [smem:[#allocation15 + $0x1b]]
        %s1162 = sld [smem:[#allocation15 + $0x10b]]
        %s1163 = sld [smem:[#allocation15 + $0x18b]]
        %v1164 = vstv %s1160
        %v1165 = vmul.f32 %v992, %v1164
        %v1166 = vstv %s1161
        %v1167 = vmul.f32 %v681, %v1166
        %v1168 = vadd.f32 %v1165, %v1167
        %v1169 = vstv %s1162
        %v1170 = vadd.f32 %v1168, %v1169
        %v1171 = vmax.f32 %v1170, 0.0
        %v1172 = vstv %s1163
        %v1173 = vmul.f32 %v1171, %v1172
        %v1174 = vadd.f32 %v1159, %v1173
        %s1175 = sld [smem:[#allocation15 + $0xc]]
        %s1176 = sld [smem:[#allocation15 + $0x1c]]
        %s1177 = sld [smem:[#allocation15 + $0x10c]]
        %s1178 = sld [smem:[#allocation15 + $0x18c]]
        %v1179 = vstv %s1175
        %v1180 = vmul.f32 %v992, %v1179
        %v1181 = vstv %s1176
        %v1182 = vmul.f32 %v681, %v1181
        %v1183 = vadd.f32 %v1180, %v1182
        %v1184 = vstv %s1177
        %v1185 = vadd.f32 %v1183, %v1184
        %v1186 = vmax.f32 %v1185, 0.0
        %v1187 = vstv %s1178
        %v1188 = vmul.f32 %v1186, %v1187
        %v1189 = vadd.f32 %v1174, %v1188
        %s1190 = sld [smem:[#allocation15 + $0xd]]
        %s1191 = sld [smem:[#allocation15 + $0x1d]]
        %s1192 = sld [smem:[#allocation15 + $0x10d]]
        %s1193 = sld [smem:[#allocation15 + $0x18d]]
        %v1194 = vstv %s1190
        %v1195 = vmul.f32 %v992, %v1194
        %v1196 = vstv %s1191
        %v1197 = vmul.f32 %v681, %v1196
        %v1198 = vadd.f32 %v1195, %v1197
        %v1199 = vstv %s1192
        %v1200 = vadd.f32 %v1198, %v1199
        %v1201 = vmax.f32 %v1200, 0.0
        %v1202 = vstv %s1193
        %v1203 = vmul.f32 %v1201, %v1202
        %v1204 = vadd.f32 %v1189, %v1203
        %s1205 = sld [smem:[#allocation15 + $0xe]]
        %s1206 = sld [smem:[#allocation15 + $0x1e]]
        %s1207 = sld [smem:[#allocation15 + $0x10e]]
        %s1208 = sld [smem:[#allocation15 + $0x18e]]
        %v1209 = vstv %s1205
        %v1210 = vmul.f32 %v992, %v1209
        %v1211 = vstv %s1206
        %v1212 = vmul.f32 %v681, %v1211
        %v1213 = vadd.f32 %v1210, %v1212
        %v1214 = vstv %s1207
        %v1215 = vadd.f32 %v1213, %v1214
        %v1216 = vmax.f32 %v1215, 0.0
        %v1217 = vstv %s1208
        %v1218 = vmul.f32 %v1216, %v1217
        %v1219 = vadd.f32 %v1204, %v1218
        %s1220 = sld [smem:[#allocation15 + $0xf]]
        %s1221 = sld [smem:[#allocation15 + $0x1f]]
        %s1222 = sld [smem:[#allocation15 + $0x10f]]
        %s1223 = sld [smem:[#allocation15 + $0x18f]]
        %v1224 = vstv %s1220
        %v1225 = vmul.f32 %v992, %v1224
        %v1226 = vstv %s1221
        %v1227 = vmul.f32 %v681, %v1226
        %v1228 = vadd.f32 %v1225, %v1227
        %v1229 = vstv %s1222
        %v1230 = vadd.f32 %v1228, %v1229
        %v1231 = vmax.f32 %v1230, 0.0
        %v1232 = vstv %s1223
        %v1233 = vmul.f32 %v1231, %v1232
        %v1234 = vadd.f32 %v1219, %v1233
        %s1235 = sld [smem:[#allocation15 + $0x200]]
        %v1236 = vstv %s1235
        %v1237 = vadd.f32 %v1234, %v1236
        %v1238 = vadd.f32 %v1237, 0.0
        %vm1239 = vcmask 130048
        %v1240 = vsel %vm1239, %v1237, -inf
        %1241 = vmax.xlane.f32.xlu0 %v1240
        %v1242 = vpop.xlane.xlu0 %1241
        %v1243 = vsub.f32 %v1237, %v1242
        %v1244 = vmul.f32 %v1243, 1.442695
        %v1245 = vpow.pop %v1244
        %v1246 = vsel %vm1239, %v1245, 0.0
        %1247 = vadd.xlane.f32.xlu0 %v1246
        %v1248 = vpop.xlane.xlu0 %1247
        %v1249 = vrcp.pop %v1248
        %v1250 = vmul.f32 %v1245, %v1249
        %v1252 = vsel %vm684, %v912, 0
        %v1255 = vsel %vm684, %v918, 0
        %1257 = vmatprep.subr.mxu0 0.0
        %1258 = vmatpush1.xpose.msra.mxu0 0.0
        %1259 = vmatprep.subr.mxu0 0.0
        %1260 = vmatpush1.xpose.msra.mxu0 0.0
        %1261 = vmatprep.subr.mxu0 0.0
        %1262 = vmatpush1.xpose.msra.mxu0 0.0
        %1263 = vmatprep.subr.mxu0 0.0
        %1264 = vmatpush1.xpose.msra.mxu0 0.0
        %1265 = vmatprep.subr.mxu0 0.0
        %1266 = vmatpush1.xpose.msra.mxu0 0.0
        %1267 = vmatprep.subr.mxu0 0.0
        %1268 = vmatpush1.xpose.msra.mxu0 0.0
        %1269 = vmatprep.subr.mxu0 0.0
        %1270 = vmatpush1.xpose.msra.mxu0 0.0
        %1271 = vmatprep.subr.mxu0 0.0
        %1272 = vmatpush1.xpose.msra.mxu0 0.0
        %1273 = vmatprep.subr.mxu0 0.0
        %1274 = vmatpush1.xpose.msra.mxu0 0.0
        %1275 = vmatprep.subr.mxu0 0.0
        %1276 = vmatpush1.xpose.msra.mxu0 0.0
        %1277 = vmatprep.subr.mxu0 0.0
        %1278 = vmatpush1.xpose.msra.mxu0 0.0
        %1279 = vmatprep.subr.mxu0 0.0
        %1280 = vmatpush1.xpose.msra.mxu0 0.0
        %1281 = vmatprep.subr.mxu0 0.0
        %1282 = vmatpush1.xpose.msra.mxu0 0.0
        %1283 = vmatprep.subr.mxu0 0.0
        %1284 = vmatpush1.xpose.msra.mxu0 0.0
        %1285 = vmatprep.subr.mxu0 0.0
        %1286 = vmatpush1.xpose.msra.mxu0 %v1255
        %1287 = vmatprep.subr.mxu0 0.0
        %1288 = vmatpush1.xpose.msra.mxu0 %v1252
        %1289 = vmatprep.subr.mxu0 0.0
        %1290 = vmatpush2.xpose.msra.mxu0 0.0
        %1291 = vmatprep.subr.mxu0 0.0
        %1292 = vmatpush2.xpose.msra.mxu0 0.0
        %1293 = vmatprep.subr.mxu0 0.0
        %1294 = vmatpush2.xpose.msra.mxu0 0.0
        %1295 = vmatprep.subr.mxu0 0.0
        %1296 = vmatpush2.xpose.msra.mxu0 0.0
        %1297 = vmatprep.subr.mxu0 0.0
        %1298 = vmatpush2.xpose.msra.mxu0 0.0
        %1299 = vmatprep.subr.mxu0 0.0
        %1300 = vmatpush2.xpose.msra.mxu0 0.0
        %1301 = vmatprep.subr.mxu0 0.0
        %1302 = vmatpush2.xpose.msra.mxu0 0.0
        %1303 = vmatprep.subr.mxu0 0.0
        %1304 = vmatpush2.xpose.msra.mxu0 0.0
        %1305 = vmatprep.subr.mxu0 0.0
        %1306 = vmatpush2.xpose.msra.mxu0 0.0
        %1307 = vmatprep.subr.mxu0 0.0
        %1308 = vmatpush2.xpose.msra.mxu0 0.0
        %1309 = vmatprep.subr.mxu0 0.0
        %1310 = vmatpush2.xpose.msra.mxu0 0.0
        %1311 = vmatprep.subr.mxu0 0.0
        %1312 = vmatpush2.xpose.msra.mxu0 0.0
        %1313 = vmatprep.subr.mxu0 0.0
        %1314 = vmatpush2.xpose.msra.mxu0 0.0
        %1315 = vmatprep.subr.mxu0 0.0
        %1316 = vmatpush2.xpose.msra.mxu0 0.0
        %1317 = vmatprep.subr.mxu0 0.0
        %1318 = vmatpush2.xpose.msra.mxu0 0.0
        %1319 = vmatprep.subr.mxu0 0.0
        %1320 = vmatpush2.xpose.msra.mxu0 0.0
        %1321 = vmatprep.mubr.f32.mxu0 0.0
        %1322 = vmatmul.mubr.f32.gmra.mxu0 %v758
        %v1323 = vpop.f32.mrf.mxu0
        %v1324 = vadd.f32 0.0, %v1323
        %v1325 = vpop.f32.mrf.mxu0
        %1326 = vdwg.mxu0
        %s1327 = sld [smem:[#allocation15 + $0x80]]
        %s1328 = sld [smem:[#allocation15 + $0x90]]
        %s1329 = sld [smem:[#allocation15 + $0x140]]
        %s1330 = sld [smem:[#allocation15 + $0x1c0]]
        %v1331 = vstv %s1327
        %v1332 = vmul.f32 %v1324, %v1331
        %v1333 = vstv %s1328
        %v1334 = vmul.f32 %v681, %v1333
        %v1335 = vadd.f32 %v1332, %v1334
        %v1336 = vstv %s1329
        %v1337 = vadd.f32 %v1335, %v1336
        %v1338 = vmax.f32 %v1337, 0.0
        %v1339 = vstv %s1330
        %v1340 = vmul.f32 %v1338, %v1339
        %v1341 = vadd.f32 %v1340, 0.0
        %s1342 = sld [smem:[#allocation15 + $0x81]]
        %s1343 = sld [smem:[#allocation15 + $0x91]]
        %s1344 = sld [smem:[#allocation15 + $0x141]]
        %s1345 = sld [smem:[#allocation15 + $0x1c1]]
        %v1346 = vstv %s1342
        %v1347 = vmul.f32 %v1324, %v1346
        %v1348 = vstv %s1343
        %v1349 = vmul.f32 %v681, %v1348
        %v1350 = vadd.f32 %v1347, %v1349
        %v1351 = vstv %s1344
        %v1352 = vadd.f32 %v1350, %v1351
        %v1353 = vmax.f32 %v1352, 0.0
        %v1354 = vstv %s1345
        %v1355 = vmul.f32 %v1353, %v1354
        %v1356 = vadd.f32 %v1341, %v1355
        %s1357 = sld [smem:[#allocation15 + $0x82]]
        %s1358 = sld [smem:[#allocation15 + $0x92]]
        %s1359 = sld [smem:[#allocation15 + $0x142]]
        %s1360 = sld [smem:[#allocation15 + $0x1c2]]
        %v1361 = vstv %s1357
        %v1362 = vmul.f32 %v1324, %v1361
        %v1363 = vstv %s1358
        %v1364 = vmul.f32 %v681, %v1363
        %v1365 = vadd.f32 %v1362, %v1364
        %v1366 = vstv %s1359
        %v1367 = vadd.f32 %v1365, %v1366
        %v1368 = vmax.f32 %v1367, 0.0
        %v1369 = vstv %s1360
        %v1370 = vmul.f32 %v1368, %v1369
        %v1371 = vadd.f32 %v1356, %v1370
        %s1372 = sld [smem:[#allocation15 + $0x83]]
        %s1373 = sld [smem:[#allocation15 + $0x93]]
        %s1374 = sld [smem:[#allocation15 + $0x143]]
        %s1375 = sld [smem:[#allocation15 + $0x1c3]]
        %v1376 = vstv %s1372
        %v1377 = vmul.f32 %v1324, %v1376
        %v1378 = vstv %s1373
        %v1379 = vmul.f32 %v681, %v1378
        %v1380 = vadd.f32 %v1377, %v1379
        %v1381 = vstv %s1374
        %v1382 = vadd.f32 %v1380, %v1381
        %v1383 = vmax.f32 %v1382, 0.0
        %v1384 = vstv %s1375
        %v1385 = vmul.f32 %v1383, %v1384
        %v1386 = vadd.f32 %v1371, %v1385
        %s1387 = sld [smem:[#allocation15 + $0x84]]
        %s1388 = sld [smem:[#allocation15 + $0x94]]
        %s1389 = sld [smem:[#allocation15 + $0x144]]
        %s1390 = sld [smem:[#allocation15 + $0x1c4]]
        %v1391 = vstv %s1387
        %v1392 = vmul.f32 %v1324, %v1391
        %v1393 = vstv %s1388
        %v1394 = vmul.f32 %v681, %v1393
        %v1395 = vadd.f32 %v1392, %v1394
        %v1396 = vstv %s1389
        %v1397 = vadd.f32 %v1395, %v1396
        %v1398 = vmax.f32 %v1397, 0.0
        %v1399 = vstv %s1390
        %v1400 = vmul.f32 %v1398, %v1399
        %v1401 = vadd.f32 %v1386, %v1400
        %s1402 = sld [smem:[#allocation15 + $0x85]]
        %s1403 = sld [smem:[#allocation15 + $0x95]]
        %s1404 = sld [smem:[#allocation15 + $0x145]]
        %s1405 = sld [smem:[#allocation15 + $0x1c5]]
        %v1406 = vstv %s1402
        %v1407 = vmul.f32 %v1324, %v1406
        %v1408 = vstv %s1403
        %v1409 = vmul.f32 %v681, %v1408
        %v1410 = vadd.f32 %v1407, %v1409
        %v1411 = vstv %s1404
        %v1412 = vadd.f32 %v1410, %v1411
        %v1413 = vmax.f32 %v1412, 0.0
        %v1414 = vstv %s1405
        %v1415 = vmul.f32 %v1413, %v1414
        %v1416 = vadd.f32 %v1401, %v1415
        %s1417 = sld [smem:[#allocation15 + $0x86]]
        %s1418 = sld [smem:[#allocation15 + $0x96]]
        %s1419 = sld [smem:[#allocation15 + $0x146]]
        %s1420 = sld [smem:[#allocation15 + $0x1c6]]
        %v1421 = vstv %s1417
        %v1422 = vmul.f32 %v1324, %v1421
        %v1423 = vstv %s1418
        %v1424 = vmul.f32 %v681, %v1423
        %v1425 = vadd.f32 %v1422, %v1424
        %v1426 = vstv %s1419
        %v1427 = vadd.f32 %v1425, %v1426
        %v1428 = vmax.f32 %v1427, 0.0
        %v1429 = vstv %s1420
        %v1430 = vmul.f32 %v1428, %v1429
        %v1431 = vadd.f32 %v1416, %v1430
        %s1432 = sld [smem:[#allocation15 + $0x87]]
        %s1433 = sld [smem:[#allocation15 + $0x97]]
        %s1434 = sld [smem:[#allocation15 + $0x147]]
        %s1435 = sld [smem:[#allocation15 + $0x1c7]]
        %v1436 = vstv %s1432
        %v1437 = vmul.f32 %v1324, %v1436
        %v1438 = vstv %s1433
        %v1439 = vmul.f32 %v681, %v1438
        %v1440 = vadd.f32 %v1437, %v1439
        %v1441 = vstv %s1434
        %v1442 = vadd.f32 %v1440, %v1441
        %v1443 = vmax.f32 %v1442, 0.0
        %v1444 = vstv %s1435
        %v1445 = vmul.f32 %v1443, %v1444
        %v1446 = vadd.f32 %v1431, %v1445
        %s1447 = sld [smem:[#allocation15 + $0x88]]
        %s1448 = sld [smem:[#allocation15 + $0x98]]
        %s1449 = sld [smem:[#allocation15 + $0x148]]
        %s1450 = sld [smem:[#allocation15 + $0x1c8]]
        %v1451 = vstv %s1447
        %v1452 = vmul.f32 %v1324, %v1451
        %v1453 = vstv %s1448
        %v1454 = vmul.f32 %v681, %v1453
        %v1455 = vadd.f32 %v1452, %v1454
        %v1456 = vstv %s1449
        %v1457 = vadd.f32 %v1455, %v1456
        %v1458 = vmax.f32 %v1457, 0.0
        %v1459 = vstv %s1450
        %v1460 = vmul.f32 %v1458, %v1459
        %v1461 = vadd.f32 %v1446, %v1460
        %s1462 = sld [smem:[#allocation15 + $0x89]]
        %s1463 = sld [smem:[#allocation15 + $0x99]]
        %s1464 = sld [smem:[#allocation15 + $0x149]]
        %s1465 = sld [smem:[#allocation15 + $0x1c9]]
        %v1466 = vstv %s1462
        %v1467 = vmul.f32 %v1324, %v1466
        %v1468 = vstv %s1463
        %v1469 = vmul.f32 %v681, %v1468
        %v1470 = vadd.f32 %v1467, %v1469
        %v1471 = vstv %s1464
        %v1472 = vadd.f32 %v1470, %v1471
        %v1473 = vmax.f32 %v1472, 0.0
        %v1474 = vstv %s1465
        %v1475 = vmul.f32 %v1473, %v1474
        %v1476 = vadd.f32 %v1461, %v1475
        %s1477 = sld [smem:[#allocation15 + $0x8a]]
        %s1478 = sld [smem:[#allocation15 + $0x9a]]
        %s1479 = sld [smem:[#allocation15 + $0x14a]]
        %s1480 = sld [smem:[#allocation15 + $0x1ca]]
        %v1481 = vstv %s1477
        %v1482 = vmul.f32 %v1324, %v1481
        %v1483 = vstv %s1478
        %v1484 = vmul.f32 %v681, %v1483
        %v1485 = vadd.f32 %v1482, %v1484
        %v1486 = vstv %s1479
        %v1487 = vadd.f32 %v1485, %v1486
        %v1488 = vmax.f32 %v1487, 0.0
        %v1489 = vstv %s1480
        %v1490 = vmul.f32 %v1488, %v1489
        %v1491 = vadd.f32 %v1476, %v1490
        %s1492 = sld [smem:[#allocation15 + $0x8b]]
        %s1493 = sld [smem:[#allocation15 + $0x9b]]
        %s1494 = sld [smem:[#allocation15 + $0x14b]]
        %s1495 = sld [smem:[#allocation15 + $0x1cb]]
        %v1496 = vstv %s1492
        %v1497 = vmul.f32 %v1324, %v1496
        %v1498 = vstv %s1493
        %v1499 = vmul.f32 %v681, %v1498
        %v1500 = vadd.f32 %v1497, %v1499
        %v1501 = vstv %s1494
        %v1502 = vadd.f32 %v1500, %v1501
        %v1503 = vmax.f32 %v1502, 0.0
        %v1504 = vstv %s1495
        %v1505 = vmul.f32 %v1503, %v1504
        %v1506 = vadd.f32 %v1491, %v1505
        %s1507 = sld [smem:[#allocation15 + $0x8c]]
        %s1508 = sld [smem:[#allocation15 + $0x9c]]
        %s1509 = sld [smem:[#allocation15 + $0x14c]]
        %s1510 = sld [smem:[#allocation15 + $0x1cc]]
        %v1511 = vstv %s1507
        %v1512 = vmul.f32 %v1324, %v1511
        %v1513 = vstv %s1508
        %v1514 = vmul.f32 %v681, %v1513
        %v1515 = vadd.f32 %v1512, %v1514
        %v1516 = vstv %s1509
        %v1517 = vadd.f32 %v1515, %v1516
        %v1518 = vmax.f32 %v1517, 0.0
        %v1519 = vstv %s1510
        %v1520 = vmul.f32 %v1518, %v1519
        %v1521 = vadd.f32 %v1506, %v1520
        %s1522 = sld [smem:[#allocation15 + $0x8d]]
        %s1523 = sld [smem:[#allocation15 + $0x9d]]
        %s1524 = sld [smem:[#allocation15 + $0x14d]]
        %s1525 = sld [smem:[#allocation15 + $0x1cd]]
        %v1526 = vstv %s1522
        %v1527 = vmul.f32 %v1324, %v1526
        %v1528 = vstv %s1523
        %v1529 = vmul.f32 %v681, %v1528
        %v1530 = vadd.f32 %v1527, %v1529
        %v1531 = vstv %s1524
        %v1532 = vadd.f32 %v1530, %v1531
        %v1533 = vmax.f32 %v1532, 0.0
        %v1534 = vstv %s1525
        %v1535 = vmul.f32 %v1533, %v1534
        %v1536 = vadd.f32 %v1521, %v1535
        %s1537 = sld [smem:[#allocation15 + $0x8e]]
        %s1538 = sld [smem:[#allocation15 + $0x9e]]
        %s1539 = sld [smem:[#allocation15 + $0x14e]]
        %s1540 = sld [smem:[#allocation15 + $0x1ce]]
        %v1541 = vstv %s1537
        %v1542 = vmul.f32 %v1324, %v1541
        %v1543 = vstv %s1538
        %v1544 = vmul.f32 %v681, %v1543
        %v1545 = vadd.f32 %v1542, %v1544
        %v1546 = vstv %s1539
        %v1547 = vadd.f32 %v1545, %v1546
        %v1548 = vmax.f32 %v1547, 0.0
        %v1549 = vstv %s1540
        %v1550 = vmul.f32 %v1548, %v1549
        %v1551 = vadd.f32 %v1536, %v1550
        %s1552 = sld [smem:[#allocation15 + $0x8f]]
        %s1553 = sld [smem:[#allocation15 + $0x9f]]
        %s1554 = sld [smem:[#allocation15 + $0x14f]]
        %s1555 = sld [smem:[#allocation15 + $0x1cf]]
        %v1556 = vstv %s1552
        %v1557 = vmul.f32 %v1324, %v1556
        %v1558 = vstv %s1553
        %v1559 = vmul.f32 %v681, %v1558
        %v1560 = vadd.f32 %v1557, %v1559
        %v1561 = vstv %s1554
        %v1562 = vadd.f32 %v1560, %v1561
        %v1563 = vmax.f32 %v1562, 0.0
        %v1564 = vstv %s1555
        %v1565 = vmul.f32 %v1563, %v1564
        %v1566 = vadd.f32 %v1551, %v1565
        %s1567 = sld [smem:[#allocation15 + $0x204]]
        %v1568 = vstv %s1567
        %v1569 = vadd.f32 %v1566, %v1568
        %v1570 = vadd.f32 %v1569, 0.0
        %v1571 = vsel %vm1239, %v1569, -inf
        %v1572 = vrot.slane %v1571, 4
        %v1573 = vmax.f32 %v1571, %v1572
        %v1574 = vrot.slane %v1573, 2
        %v1575 = vmax.f32 %v1573, %v1574
        %v1576 = vrot.slane %v1575, 1
        %v1577 = vmax.f32 %v1575, %v1576
        %v1578 = vsub.f32 %v1569, %v1577
        %v1579 = vmul.f32 %v1578, 1.442695
        %v1580 = vpow.pop %v1579
        %v1581 = vsel %vm1239, %v1580, 0.0
        %v1582 = vrot.slane %v1581, 4
        %v1583 = vadd.f32 %v1581, %v1582
        %v1584 = vrot.slane %v1583, 2
        %v1585 = vadd.f32 %v1583, %v1584
        %v1586 = vrot.slane %v1585, 1
        %v1587 = vadd.f32 %v1585, %v1586
        %v1588 = vrcp.pop %v1587
        %v1589 = vmul.f32 %v1580, %v1588
        %1590 = vrot.lane.b32.xlu0 %v827, 96
        %v1591 = vpop.permute.xlu0 %1590
        %v1592 = vsel %vm684, %v1591, 0
        %1594 = vmatprep.subr.mxu0 0.0
        %1595 = vmatpush1.xpose.msra.mxu0 0.0
        %1596 = vmatprep.subr.mxu0 0.0
        %1597 = vmatpush1.xpose.msra.mxu0 0.0
        %1598 = vmatprep.subr.mxu0 0.0
        %1599 = vmatpush1.xpose.msra.mxu0 0.0
        %1600 = vmatprep.subr.mxu0 0.0
        %1601 = vmatpush1.xpose.msra.mxu0 0.0
        %1602 = vmatprep.subr.mxu0 0.0
        %1603 = vmatpush1.xpose.msra.mxu0 0.0
        %1604 = vmatprep.subr.mxu0 0.0
        %1605 = vmatpush1.xpose.msra.mxu0 0.0
        %1606 = vmatprep.subr.mxu0 0.0
        %1607 = vmatpush1.xpose.msra.mxu0 0.0
        %1608 = vmatprep.subr.mxu0 0.0
        %1609 = vmatpush1.xpose.msra.mxu0 0.0
        %1610 = vmatprep.subr.mxu0 0.0
        %1611 = vmatpush1.xpose.msra.mxu0 0.0
        %1612 = vmatprep.subr.mxu0 0.0
        %1613 = vmatpush1.xpose.msra.mxu0 0.0
        %1614 = vmatprep.subr.mxu0 0.0
        %1615 = vmatpush1.xpose.msra.mxu0 0.0
        %1616 = vmatprep.subr.mxu0 0.0
        %1617 = vmatpush1.xpose.msra.mxu0 0.0
        %1618 = vmatprep.subr.mxu0 0.0
        %1619 = vmatpush1.xpose.msra.mxu0 0.0
        %1620 = vmatprep.subr.mxu0 0.0
        %1621 = vmatpush1.xpose.msra.mxu0 0.0
        %1622 = vmatprep.subr.mxu0 0.0
        %1623 = vmatpush1.xpose.msra.mxu0 %v843
        %1624 = vmatprep.subr.mxu0 0.0
        %1625 = vmatpush1.xpose.msra.mxu0 %v840
        %1626 = vmatprep.subr.mxu0 0.0
        %1627 = vmatpush2.xpose.msra.mxu0 0.0
        %1628 = vmatprep.subr.mxu0 0.0
        %1629 = vmatpush2.xpose.msra.mxu0 0.0
        %1630 = vmatprep.subr.mxu0 0.0
        %1631 = vmatpush2.xpose.msra.mxu0 0.0
        %1632 = vmatprep.subr.mxu0 0.0
        %1633 = vmatpush2.xpose.msra.mxu0 0.0
        %1634 = vmatprep.subr.mxu0 0.0
        %1635 = vmatpush2.xpose.msra.mxu0 0.0
        %1636 = vmatprep.subr.mxu0 0.0
        %1637 = vmatpush2.xpose.msra.mxu0 0.0
        %1638 = vmatprep.subr.mxu0 0.0
        %1639 = vmatpush2.xpose.msra.mxu0 0.0
        %1640 = vmatprep.subr.mxu0 0.0
        %1641 = vmatpush2.xpose.msra.mxu0 0.0
        %1642 = vmatprep.subr.mxu0 0.0
        %1643 = vmatpush2.xpose.msra.mxu0 0.0
        %1644 = vmatprep.subr.mxu0 0.0
        %1645 = vmatpush2.xpose.msra.mxu0 0.0
        %1646 = vmatprep.subr.mxu0 0.0
        %1647 = vmatpush2.xpose.msra.mxu0 0.0
        %1648 = vmatprep.subr.mxu0 0.0
        %1649 = vmatpush2.xpose.msra.mxu0 0.0
        %1650 = vmatprep.subr.mxu0 0.0
        %1651 = vmatpush2.xpose.msra.mxu0 0.0
        %1652 = vmatprep.subr.mxu0 0.0
        %1653 = vmatpush2.xpose.msra.mxu0 0.0
        %1654 = vmatprep.subr.mxu0 0.0
        %1655 = vmatpush2.xpose.msra.mxu0 0.0
        %1656 = vmatprep.subr.mxu0 0.0
        %1657 = vmatpush2.xpose.msra.mxu0 0.0
        %1658 = vmatprep.mubr.f32.mxu0 0.0
        %1659 = vmatmul.mubr.f32.gmra.mxu0 %v1592
        %v1660 = vpop.f32.mrf.mxu0
        %v1661 = vadd.f32 0.0, %v1660
        %v1662 = vpop.f32.mrf.mxu0
        %1663 = vdwg.mxu0
        %s1664 = sld [smem:[#allocation15 + $0x20]]
        %s1665 = sld [smem:[#allocation15 + $0x30]]
        %s1666 = sld [smem:[#allocation15 + $0x110]]
        %s1667 = sld [smem:[#allocation15 + $0x190]]
        %v1668 = vstv %s1664
        %v1669 = vmul.f32 %v1661, %v1668
        %v1670 = vstv %s1665
        %v1671 = vmul.f32 %v681, %v1670
        %v1672 = vadd.f32 %v1669, %v1671
        %v1673 = vstv %s1666
        %v1674 = vadd.f32 %v1672, %v1673
        %v1675 = vmax.f32 %v1674, 0.0
        %v1676 = vstv %s1667
        %v1677 = vmul.f32 %v1675, %v1676
        %v1678 = vadd.f32 %v1677, 0.0
        %s1679 = sld [smem:[#allocation15 + $0x21]]
        %s1680 = sld [smem:[#allocation15 + $0x31]]
        %s1681 = sld [smem:[#allocation15 + $0x111]]
        %s1682 = sld [smem:[#allocation15 + $0x191]]
        %v1683 = vstv %s1679
        %v1684 = vmul.f32 %v1661, %v1683
        %v1685 = vstv %s1680
        %v1686 = vmul.f32 %v681, %v1685
        %v1687 = vadd.f32 %v1684, %v1686
        %v1688 = vstv %s1681
        %v1689 = vadd.f32 %v1687, %v1688
        %v1690 = vmax.f32 %v1689, 0.0
        %v1691 = vstv %s1682
        %v1692 = vmul.f32 %v1690, %v1691
        %v1693 = vadd.f32 %v1678, %v1692
        %s1694 = sld [smem:[#allocation15 + $0x22]]
        %s1695 = sld [smem:[#allocation15 + $0x32]]
        %s1696 = sld [smem:[#allocation15 + $0x112]]
        %s1697 = sld [smem:[#allocation15 + $0x192]]
        %v1698 = vstv %s1694
        %v1699 = vmul.f32 %v1661, %v1698
        %v1700 = vstv %s1695
        %v1701 = vmul.f32 %v681, %v1700
        %v1702 = vadd.f32 %v1699, %v1701
        %v1703 = vstv %s1696
        %v1704 = vadd.f32 %v1702, %v1703
        %v1705 = vmax.f32 %v1704, 0.0
        %v1706 = vstv %s1697
        %v1707 = vmul.f32 %v1705, %v1706
        %v1708 = vadd.f32 %v1693, %v1707
        %s1709 = sld [smem:[#allocation15 + $0x23]]
        %s1710 = sld [smem:[#allocation15 + $0x33]]
        %s1711 = sld [smem:[#allocation15 + $0x113]]
        %s1712 = sld [smem:[#allocation15 + $0x193]]
        %v1713 = vstv %s1709
        %v1714 = vmul.f32 %v1661, %v1713
        %v1715 = vstv %s1710
        %v1716 = vmul.f32 %v681, %v1715
        %v1717 = vadd.f32 %v1714, %v1716
        %v1718 = vstv %s1711
        %v1719 = vadd.f32 %v1717, %v1718
        %v1720 = vmax.f32 %v1719, 0.0
        %v1721 = vstv %s1712
        %v1722 = vmul.f32 %v1720, %v1721
        %v1723 = vadd.f32 %v1708, %v1722
        %s1724 = sld [smem:[#allocation15 + $0x24]]
        %s1725 = sld [smem:[#allocation15 + $0x34]]
        %s1726 = sld [smem:[#allocation15 + $0x114]]
        %s1727 = sld [smem:[#allocation15 + $0x194]]
        %v1728 = vstv %s1724
        %v1729 = vmul.f32 %v1661, %v1728
        %v1730 = vstv %s1725
        %v1731 = vmul.f32 %v681, %v1730
        %v1732 = vadd.f32 %v1729, %v1731
        %v1733 = vstv %s1726
        %v1734 = vadd.f32 %v1732, %v1733
        %v1735 = vmax.f32 %v1734, 0.0
        %v1736 = vstv %s1727
        %v1737 = vmul.f32 %v1735, %v1736
        %v1738 = vadd.f32 %v1723, %v1737
        %s1739 = sld [smem:[#allocation15 + $0x25]]
        %s1740 = sld [smem:[#allocation15 + $0x35]]
        %s1741 = sld [smem:[#allocation15 + $0x115]]
        %s1742 = sld [smem:[#allocation15 + $0x195]]
        %v1743 = vstv %s1739
        %v1744 = vmul.f32 %v1661, %v1743
        %v1745 = vstv %s1740
        %v1746 = vmul.f32 %v681, %v1745
        %v1747 = vadd.f32 %v1744, %v1746
        %v1748 = vstv %s1741
        %v1749 = vadd.f32 %v1747, %v1748
        %v1750 = vmax.f32 %v1749, 0.0
        %v1751 = vstv %s1742
        %v1752 = vmul.f32 %v1750, %v1751
        %v1753 = vadd.f32 %v1738, %v1752
        %s1754 = sld [smem:[#allocation15 + $0x26]]
        %s1755 = sld [smem:[#allocation15 + $0x36]]
        %s1756 = sld [smem:[#allocation15 + $0x116]]
        %s1757 = sld [smem:[#allocation15 + $0x196]]
        %v1758 = vstv %s1754
        %v1759 = vmul.f32 %v1661, %v1758
        %v1760 = vstv %s1755
        %v1761 = vmul.f32 %v681, %v1760
        %v1762 = vadd.f32 %v1759, %v1761
        %v1763 = vstv %s1756
        %v1764 = vadd.f32 %v1762, %v1763
        %v1765 = vmax.f32 %v1764, 0.0
        %v1766 = vstv %s1757
        %v1767 = vmul.f32 %v1765, %v1766
        %v1768 = vadd.f32 %v1753, %v1767
        %s1769 = sld [smem:[#allocation15 + $0x27]]
        %s1770 = sld [smem:[#allocation15 + $0x37]]
        %s1771 = sld [smem:[#allocation15 + $0x117]]
        %s1772 = sld [smem:[#allocation15 + $0x197]]
        %v1773 = vstv %s1769
        %v1774 = vmul.f32 %v1661, %v1773
        %v1775 = vstv %s1770
        %v1776 = vmul.f32 %v681, %v1775
        %v1777 = vadd.f32 %v1774, %v1776
        %v1778 = vstv %s1771
        %v1779 = vadd.f32 %v1777, %v1778
        %v1780 = vmax.f32 %v1779, 0.0
        %v1781 = vstv %s1772
        %v1782 = vmul.f32 %v1780, %v1781
        %v1783 = vadd.f32 %v1768, %v1782
        %s1784 = sld [smem:[#allocation15 + $0x28]]
        %s1785 = sld [smem:[#allocation15 + $0x38]]
        %s1786 = sld [smem:[#allocation15 + $0x118]]
        %s1787 = sld [smem:[#allocation15 + $0x198]]
        %v1788 = vstv %s1784
        %v1789 = vmul.f32 %v1661, %v1788
        %v1790 = vstv %s1785
        %v1791 = vmul.f32 %v681, %v1790
        %v1792 = vadd.f32 %v1789, %v1791
        %v1793 = vstv %s1786
        %v1794 = vadd.f32 %v1792, %v1793
        %v1795 = vmax.f32 %v1794, 0.0
        %v1796 = vstv %s1787
        %v1797 = vmul.f32 %v1795, %v1796
        %v1798 = vadd.f32 %v1783, %v1797
        %s1799 = sld [smem:[#allocation15 + $0x29]]
        %s1800 = sld [smem:[#allocation15 + $0x39]]
        %s1801 = sld [smem:[#allocation15 + $0x119]]
        %s1802 = sld [smem:[#allocation15 + $0x199]]
        %v1803 = vstv %s1799
        %v1804 = vmul.f32 %v1661, %v1803
        %v1805 = vstv %s1800
        %v1806 = vmul.f32 %v681, %v1805
        %v1807 = vadd.f32 %v1804, %v1806
        %v1808 = vstv %s1801
        %v1809 = vadd.f32 %v1807, %v1808
        %v1810 = vmax.f32 %v1809, 0.0
        %v1811 = vstv %s1802
        %v1812 = vmul.f32 %v1810, %v1811
        %v1813 = vadd.f32 %v1798, %v1812
        %s1814 = sld [smem:[#allocation15 + $0x2a]]
        %s1815 = sld [smem:[#allocation15 + $0x3a]]
        %s1816 = sld [smem:[#allocation15 + $0x11a]]
        %s1817 = sld [smem:[#allocation15 + $0x19a]]
        %v1818 = vstv %s1814
        %v1819 = vmul.f32 %v1661, %v1818
        %v1820 = vstv %s1815
        %v1821 = vmul.f32 %v681, %v1820
        %v1822 = vadd.f32 %v1819, %v1821
        %v1823 = vstv %s1816
        %v1824 = vadd.f32 %v1822, %v1823
        %v1825 = vmax.f32 %v1824, 0.0
        %v1826 = vstv %s1817
        %v1827 = vmul.f32 %v1825, %v1826
        %v1828 = vadd.f32 %v1813, %v1827
        %s1829 = sld [smem:[#allocation15 + $0x2b]]
        %s1830 = sld [smem:[#allocation15 + $0x3b]]
        %s1831 = sld [smem:[#allocation15 + $0x11b]]
        %s1832 = sld [smem:[#allocation15 + $0x19b]]
        %v1833 = vstv %s1829
        %v1834 = vmul.f32 %v1661, %v1833
        %v1835 = vstv %s1830
        %v1836 = vmul.f32 %v681, %v1835
        %v1837 = vadd.f32 %v1834, %v1836
        %v1838 = vstv %s1831
        %v1839 = vadd.f32 %v1837, %v1838
        %v1840 = vmax.f32 %v1839, 0.0
        %v1841 = vstv %s1832
        %v1842 = vmul.f32 %v1840, %v1841
        %v1843 = vadd.f32 %v1828, %v1842
        %s1844 = sld [smem:[#allocation15 + $0x2c]]
        %s1845 = sld [smem:[#allocation15 + $0x3c]]
        %s1846 = sld [smem:[#allocation15 + $0x11c]]
        %s1847 = sld [smem:[#allocation15 + $0x19c]]
        %v1848 = vstv %s1844
        %v1849 = vmul.f32 %v1661, %v1848
        %v1850 = vstv %s1845
        %v1851 = vmul.f32 %v681, %v1850
        %v1852 = vadd.f32 %v1849, %v1851
        %v1853 = vstv %s1846
        %v1854 = vadd.f32 %v1852, %v1853
        %v1855 = vmax.f32 %v1854, 0.0
        %v1856 = vstv %s1847
        %v1857 = vmul.f32 %v1855, %v1856
        %v1858 = vadd.f32 %v1843, %v1857
        %s1859 = sld [smem:[#allocation15 + $0x2d]]
        %s1860 = sld [smem:[#allocation15 + $0x3d]]
        %s1861 = sld [smem:[#allocation15 + $0x11d]]
        %s1862 = sld [smem:[#allocation15 + $0x19d]]
        %v1863 = vstv %s1859
        %v1864 = vmul.f32 %v1661, %v1863
        %v1865 = vstv %s1860
        %v1866 = vmul.f32 %v681, %v1865
        %v1867 = vadd.f32 %v1864, %v1866
        %v1868 = vstv %s1861
        %v1869 = vadd.f32 %v1867, %v1868
        %v1870 = vmax.f32 %v1869, 0.0
        %v1871 = vstv %s1862
        %v1872 = vmul.f32 %v1870, %v1871
        %v1873 = vadd.f32 %v1858, %v1872
        %s1874 = sld [smem:[#allocation15 + $0x2e]]
        %s1875 = sld [smem:[#allocation15 + $0x3e]]
        %s1876 = sld [smem:[#allocation15 + $0x11e]]
        %s1877 = sld [smem:[#allocation15 + $0x19e]]
        %v1878 = vstv %s1874
        %v1879 = vmul.f32 %v1661, %v1878
        %v1880 = vstv %s1875
        %v1881 = vmul.f32 %v681, %v1880
        %v1882 = vadd.f32 %v1879, %v1881
        %v1883 = vstv %s1876
        %v1884 = vadd.f32 %v1882, %v1883
        %v1885 = vmax.f32 %v1884, 0.0
        %v1886 = vstv %s1877
        %v1887 = vmul.f32 %v1885, %v1886
        %v1888 = vadd.f32 %v1873, %v1887
        %s1889 = sld [smem:[#allocation15 + $0x2f]]
        %s1890 = sld [smem:[#allocation15 + $0x3f]]
        %s1891 = sld [smem:[#allocation15 + $0x11f]]
        %s1892 = sld [smem:[#allocation15 + $0x19f]]
        %v1893 = vstv %s1889
        %v1894 = vmul.f32 %v1661, %v1893
        %v1895 = vstv %s1890
        %v1896 = vmul.f32 %v681, %v1895
        %v1897 = vadd.f32 %v1894, %v1896
        %v1898 = vstv %s1891
        %v1899 = vadd.f32 %v1897, %v1898
        %v1900 = vmax.f32 %v1899, 0.0
        %v1901 = vstv %s1892
        %v1902 = vmul.f32 %v1900, %v1901
        %v1903 = vadd.f32 %v1888, %v1902
        %s1904 = sld [smem:[#allocation15 + $0x201]]
        %v1905 = vstv %s1904
        %v1906 = vadd.f32 %v1903, %v1905
        %v1907 = vadd.f32 %v1238, %v1906
        %v1908 = vsel %vm1239, %v1906, -inf
        %1909 = vmax.xlane.f32.xlu0 %v1908
        %v1910 = vpop.xlane.xlu0 %1909
        %v1911 = vsub.f32 %v1906, %v1910
        %v1912 = vmul.f32 %v1911, 1.442695
        %v1913 = vpow.pop %v1912
        %v1914 = vsel %vm1239, %v1913, 0.0
        %1915 = vadd.xlane.f32.xlu0 %v1914
        %v1916 = vpop.xlane.xlu0 %1915
        %v1917 = vrcp.pop %v1916
        %v1918 = vmul.f32 %v1913, %v1917
        %1921 = vrot.lane.b32.xlu0 %v914, 96
        %v1922 = vpop.permute.xlu0 %1921
        %1923 = vrot.lane.b32.xlu0 %v920, 96
        %v1924 = vpop.permute.xlu0 %1923
        %v1928 = vsel %vm1239, %v1918, 0
        %1930 = vmatprep.subr.mxu0 0.0
        %1931 = vmatpush1.msra.mxu0 0.0
        %1932 = vmatprep.subr.mxu0 0.0
        %1933 = vmatpush1.msra.mxu0 0.0
        %1934 = vmatprep.subr.mxu0 0.0
        %1935 = vmatpush1.msra.mxu0 0.0
        %1936 = vmatprep.subr.mxu0 0.0
        %1937 = vmatpush1.msra.mxu0 0.0
        %1938 = vmatprep.subr.mxu0 0.0
        %1939 = vmatpush1.msra.mxu0 0.0
        %1940 = vmatprep.subr.mxu0 0.0
        %1941 = vmatpush1.msra.mxu0 0.0
        %1942 = vmatprep.subr.mxu0 0.0
        %1943 = vmatpush1.msra.mxu0 0.0
        %1944 = vmatprep.subr.mxu0 0.0
        %1945 = vmatpush1.msra.mxu0 0.0
        %1946 = vmatprep.subr.mxu0 0.0
        %1947 = vmatpush1.msra.mxu0 0.0
        %1948 = vmatprep.subr.mxu0 0.0
        %1949 = vmatpush1.msra.mxu0 0.0
        %1950 = vmatprep.subr.mxu0 0.0
        %1951 = vmatpush1.msra.mxu0 0.0
        %1952 = vmatprep.subr.mxu0 0.0
        %1953 = vmatpush1.msra.mxu0 0.0
        %1954 = vmatprep.subr.mxu0 0.0
        %1955 = vmatpush1.msra.mxu0 0.0
        %1956 = vmatprep.subr.mxu0 0.0
        %1957 = vmatpush1.msra.mxu0 0.0
        %1958 = vmatprep.subr.mxu0 0.0
        %1959 = vmatpush1.msra.mxu0 %v1924
        %1960 = vmatprep.subr.mxu0 0.0
        %1961 = vmatpush1.msra.mxu0 %v1922
        %1962 = vmatprep.subr.mxu0 0.0
        %1963 = vmatpush2.msra.mxu0 0.0
        %1964 = vmatprep.subr.mxu0 0.0
        %1965 = vmatpush2.msra.mxu0 0.0
        %1966 = vmatprep.subr.mxu0 0.0
        %1967 = vmatpush2.msra.mxu0 0.0
        %1968 = vmatprep.subr.mxu0 0.0
        %1969 = vmatpush2.msra.mxu0 0.0
        %1970 = vmatprep.subr.mxu0 0.0
        %1971 = vmatpush2.msra.mxu0 0.0
        %1972 = vmatprep.subr.mxu0 0.0
        %1973 = vmatpush2.msra.mxu0 0.0
        %1974 = vmatprep.subr.mxu0 0.0
        %1975 = vmatpush2.msra.mxu0 0.0
        %1976 = vmatprep.subr.mxu0 0.0
        %1977 = vmatpush2.msra.mxu0 0.0
        %1978 = vmatprep.subr.mxu0 0.0
        %1979 = vmatpush2.msra.mxu0 0.0
        %1980 = vmatprep.subr.mxu0 0.0
        %1981 = vmatpush2.msra.mxu0 0.0
        %1982 = vmatprep.subr.mxu0 0.0
        %1983 = vmatpush2.msra.mxu0 0.0
        %1984 = vmatprep.subr.mxu0 0.0
        %1985 = vmatpush2.msra.mxu0 0.0
        %1986 = vmatprep.subr.mxu0 0.0
        %1987 = vmatpush2.msra.mxu0 0.0
        %1988 = vmatprep.subr.mxu0 0.0
        %1989 = vmatpush2.msra.mxu0 0.0
        %1990 = vmatprep.subr.mxu0 0.0
        %1991 = vmatpush2.msra.mxu0 0.0
        %1992 = vmatprep.subr.mxu0 0.0
        %1993 = vmatpush2.msra.mxu0 0.0
        %1994 = vmatprep.mubr.f32.mxu0 0.0
        %1995 = vmatmul.mubr.f32.gmra.mxu0 %v1928
        %v1996 = vpop.f32.mrf.mxu0
        %v1997 = vadd.f32 0.0, %v1996
        %v1998 = vpop.f32.mrf.mxu0
        %1999 = vdwg.mxu0
        %v2001 = vsel %vm1239, %v1250, 0
        %2003 = vmatprep.subr.mxu0 0.0
        %2004 = vmatpush1.msra.mxu0 0.0
        %2005 = vmatprep.subr.mxu0 0.0
        %2006 = vmatpush1.msra.mxu0 0.0
        %2007 = vmatprep.subr.mxu0 0.0
        %2008 = vmatpush1.msra.mxu0 0.0
        %2009 = vmatprep.subr.mxu0 0.0
        %2010 = vmatpush1.msra.mxu0 0.0
        %2011 = vmatprep.subr.mxu0 0.0
        %2012 = vmatpush1.msra.mxu0 0.0
        %2013 = vmatprep.subr.mxu0 0.0
        %2014 = vmatpush1.msra.mxu0 0.0
        %2015 = vmatprep.subr.mxu0 0.0
        %2016 = vmatpush1.msra.mxu0 0.0
        %2017 = vmatprep.subr.mxu0 0.0
        %2018 = vmatpush1.msra.mxu0 0.0
        %2019 = vmatprep.subr.mxu0 0.0
        %2020 = vmatpush1.msra.mxu0 0.0
        %2021 = vmatprep.subr.mxu0 0.0
        %2022 = vmatpush1.msra.mxu0 0.0
        %2023 = vmatprep.subr.mxu0 0.0
        %2024 = vmatpush1.msra.mxu0 0.0
        %2025 = vmatprep.subr.mxu0 0.0
        %2026 = vmatpush1.msra.mxu0 0.0
        %2027 = vmatprep.subr.mxu0 0.0
        %2028 = vmatpush1.msra.mxu0 0.0
        %2029 = vmatprep.subr.mxu0 0.0
        %2030 = vmatpush1.msra.mxu0 0.0
        %2031 = vmatprep.subr.mxu0 0.0
        %2032 = vmatpush1.msra.mxu0 %v920
        %2033 = vmatprep.subr.mxu0 0.0
        %2034 = vmatpush1.msra.mxu0 %v914
        %2035 = vmatprep.subr.mxu0 0.0
        %2036 = vmatpush2.msra.mxu0 0.0
        %2037 = vmatprep.subr.mxu0 0.0
        %2038 = vmatpush2.msra.mxu0 0.0
        %2039 = vmatprep.subr.mxu0 0.0
        %2040 = vmatpush2.msra.mxu0 0.0
        %2041 = vmatprep.subr.mxu0 0.0
        %2042 = vmatpush2.msra.mxu0 0.0
        %2043 = vmatprep.subr.mxu0 0.0
        %2044 = vmatpush2.msra.mxu0 0.0
        %2045 = vmatprep.subr.mxu0 0.0
        %2046 = vmatpush2.msra.mxu0 0.0
        %2047 = vmatprep.subr.mxu0 0.0
        %2048 = vmatpush2.msra.mxu0 0.0
        %2049 = vmatprep.subr.mxu0 0.0
        %2050 = vmatpush2.msra.mxu0 0.0
        %2051 = vmatprep.subr.mxu0 0.0
        %2052 = vmatpush2.msra.mxu0 0.0
        %2053 = vmatprep.subr.mxu0 0.0
        %2054 = vmatpush2.msra.mxu0 0.0
        %2055 = vmatprep.subr.mxu0 0.0
        %2056 = vmatpush2.msra.mxu0 0.0
        %2057 = vmatprep.subr.mxu0 0.0
        %2058 = vmatpush2.msra.mxu0 0.0
        %2059 = vmatprep.subr.mxu0 0.0
        %2060 = vmatpush2.msra.mxu0 0.0
        %2061 = vmatprep.subr.mxu0 0.0
        %2062 = vmatpush2.msra.mxu0 0.0
        %2063 = vmatprep.subr.mxu0 0.0
        %2064 = vmatpush2.msra.mxu0 0.0
        %2065 = vmatprep.subr.mxu0 0.0
        %2066 = vmatpush2.msra.mxu0 0.0
        %2067 = vmatprep.mubr.f32.mxu0 0.0
        %2068 = vmatmul.mubr.f32.gmra.mxu0 %v2001
        %v2069 = vpop.f32.mrf.mxu0
        %v2070 = vadd.f32 %v1997, %v2069
        %v2071 = vpop.f32.mrf.mxu0
        %2072 = vdwg.mxu0
        %2073 = vrot.lane.b32.xlu0 %v912, 96
        %v2074 = vpop.permute.xlu0 %2073
        %2075 = vrot.lane.b32.xlu0 %v918, 96
        %v2076 = vpop.permute.xlu0 %2075
        %v2077 = vsel %vm684, %v2074, 0
        %v2079 = vsel %vm684, %v2076, 0
        %2081 = vmatprep.subr.mxu0 0.0
        %2082 = vmatpush1.xpose.msra.mxu0 0.0
        %2083 = vmatprep.subr.mxu0 0.0
        %2084 = vmatpush1.xpose.msra.mxu0 0.0
        %2085 = vmatprep.subr.mxu0 0.0
        %2086 = vmatpush1.xpose.msra.mxu0 0.0
        %2087 = vmatprep.subr.mxu0 0.0
        %2088 = vmatpush1.xpose.msra.mxu0 0.0
        %2089 = vmatprep.subr.mxu0 0.0
        %2090 = vmatpush1.xpose.msra.mxu0 0.0
        %2091 = vmatprep.subr.mxu0 0.0
        %2092 = vmatpush1.xpose.msra.mxu0 0.0
        %2093 = vmatprep.subr.mxu0 0.0
        %2094 = vmatpush1.xpose.msra.mxu0 0.0
        %2095 = vmatprep.subr.mxu0 0.0
        %2096 = vmatpush1.xpose.msra.mxu0 0.0
        %2097 = vmatprep.subr.mxu0 0.0
        %2098 = vmatpush1.xpose.msra.mxu0 0.0
        %2099 = vmatprep.subr.mxu0 0.0
        %2100 = vmatpush1.xpose.msra.mxu0 0.0
        %2101 = vmatprep.subr.mxu0 0.0
        %2102 = vmatpush1.xpose.msra.mxu0 0.0
        %2103 = vmatprep.subr.mxu0 0.0
        %2104 = vmatpush1.xpose.msra.mxu0 0.0
        %2105 = vmatprep.subr.mxu0 0.0
        %2106 = vmatpush1.xpose.msra.mxu0 0.0
        %2107 = vmatprep.subr.mxu0 0.0
        %2108 = vmatpush1.xpose.msra.mxu0 0.0
        %2109 = vmatprep.subr.mxu0 0.0
        %2110 = vmatpush1.xpose.msra.mxu0 %v2079
        %2111 = vmatprep.subr.mxu0 0.0
        %2112 = vmatpush1.xpose.msra.mxu0 %v2077
        %2113 = vmatprep.subr.mxu0 0.0
        %2114 = vmatpush2.xpose.msra.mxu0 0.0
        %2115 = vmatprep.subr.mxu0 0.0
        %2116 = vmatpush2.xpose.msra.mxu0 0.0
        %2117 = vmatprep.subr.mxu0 0.0
        %2118 = vmatpush2.xpose.msra.mxu0 0.0
        %2119 = vmatprep.subr.mxu0 0.0
        %2120 = vmatpush2.xpose.msra.mxu0 0.0
        %2121 = vmatprep.subr.mxu0 0.0
        %2122 = vmatpush2.xpose.msra.mxu0 0.0
        %2123 = vmatprep.subr.mxu0 0.0
        %2124 = vmatpush2.xpose.msra.mxu0 0.0
        %2125 = vmatprep.subr.mxu0 0.0
        %2126 = vmatpush2.xpose.msra.mxu0 0.0
        %2127 = vmatprep.subr.mxu0 0.0
        %2128 = vmatpush2.xpose.msra.mxu0 0.0
        %2129 = vmatprep.subr.mxu0 0.0
        %2130 = vmatpush2.xpose.msra.mxu0 0.0
        %2131 = vmatprep.subr.mxu0 0.0
        %2132 = vmatpush2.xpose.msra.mxu0 0.0
        %2133 = vmatprep.subr.mxu0 0.0
        %2134 = vmatpush2.xpose.msra.mxu0 0.0
        %2135 = vmatprep.subr.mxu0 0.0
        %2136 = vmatpush2.xpose.msra.mxu0 0.0
        %2137 = vmatprep.subr.mxu0 0.0
        %2138 = vmatpush2.xpose.msra.mxu0 0.0
        %2139 = vmatprep.subr.mxu0 0.0
        %2140 = vmatpush2.xpose.msra.mxu0 0.0
        %2141 = vmatprep.subr.mxu0 0.0
        %2142 = vmatpush2.xpose.msra.mxu0 0.0
        %2143 = vmatprep.subr.mxu0 0.0
        %2144 = vmatpush2.xpose.msra.mxu0 0.0
        %2145 = vmatprep.mubr.f32.mxu0 0.0
        %2146 = vmatmul.mubr.f32.gmra.mxu0 %v758
        %v2147 = vpop.f32.mrf.mxu0
        %v2148 = vadd.f32 0.0, %v2147
        %v2149 = vpop.f32.mrf.mxu0
        %2150 = vdwg.mxu0
        %s2151 = sld [smem:[#allocation15 + $0xa0]]
        %s2152 = sld [smem:[#allocation15 + $0xb0]]
        %s2153 = sld [smem:[#allocation15 + $0x150]]
        %s2154 = sld [smem:[#allocation15 + $0x1d0]]
        %v2155 = vstv %s2151
        %v2156 = vmul.f32 %v2148, %v2155
        %v2157 = vstv %s2152
        %v2158 = vmul.f32 %v681, %v2157
        %v2159 = vadd.f32 %v2156, %v2158
        %v2160 = vstv %s2153
        %v2161 = vadd.f32 %v2159, %v2160
        %v2162 = vmax.f32 %v2161, 0.0
        %v2163 = vstv %s2154
        %v2164 = vmul.f32 %v2162, %v2163
        %v2165 = vadd.f32 %v2164, 0.0
        %s2166 = sld [smem:[#allocation15 + $0xa1]]
        %s2167 = sld [smem:[#allocation15 + $0xb1]]
        %s2168 = sld [smem:[#allocation15 + $0x151]]
        %s2169 = sld [smem:[#allocation15 + $0x1d1]]
        %v2170 = vstv %s2166
        %v2171 = vmul.f32 %v2148, %v2170
        %v2172 = vstv %s2167
        %v2173 = vmul.f32 %v681, %v2172
        %v2174 = vadd.f32 %v2171, %v2173
        %v2175 = vstv %s2168
        %v2176 = vadd.f32 %v2174, %v2175
        %v2177 = vmax.f32 %v2176, 0.0
        %v2178 = vstv %s2169
        %v2179 = vmul.f32 %v2177, %v2178
        %v2180 = vadd.f32 %v2165, %v2179
        %s2181 = sld [smem:[#allocation15 + $0xa2]]
        %s2182 = sld [smem:[#allocation15 + $0xb2]]
        %s2183 = sld [smem:[#allocation15 + $0x152]]
        %s2184 = sld [smem:[#allocation15 + $0x1d2]]
        %v2185 = vstv %s2181
        %v2186 = vmul.f32 %v2148, %v2185
        %v2187 = vstv %s2182
        %v2188 = vmul.f32 %v681, %v2187
        %v2189 = vadd.f32 %v2186, %v2188
        %v2190 = vstv %s2183
        %v2191 = vadd.f32 %v2189, %v2190
        %v2192 = vmax.f32 %v2191, 0.0
        %v2193 = vstv %s2184
        %v2194 = vmul.f32 %v2192, %v2193
        %v2195 = vadd.f32 %v2180, %v2194
        %s2196 = sld [smem:[#allocation15 + $0xa3]]
        %s2197 = sld [smem:[#allocation15 + $0xb3]]
        %s2198 = sld [smem:[#allocation15 + $0x153]]
        %s2199 = sld [smem:[#allocation15 + $0x1d3]]
        %v2200 = vstv %s2196
        %v2201 = vmul.f32 %v2148, %v2200
        %v2202 = vstv %s2197
        %v2203 = vmul.f32 %v681, %v2202
        %v2204 = vadd.f32 %v2201, %v2203
        %v2205 = vstv %s2198
        %v2206 = vadd.f32 %v2204, %v2205
        %v2207 = vmax.f32 %v2206, 0.0
        %v2208 = vstv %s2199
        %v2209 = vmul.f32 %v2207, %v2208
        %v2210 = vadd.f32 %v2195, %v2209
        %s2211 = sld [smem:[#allocation15 + $0xa4]]
        %s2212 = sld [smem:[#allocation15 + $0xb4]]
        %s2213 = sld [smem:[#allocation15 + $0x154]]
        %s2214 = sld [smem:[#allocation15 + $0x1d4]]
        %v2215 = vstv %s2211
        %v2216 = vmul.f32 %v2148, %v2215
        %v2217 = vstv %s2212
        %v2218 = vmul.f32 %v681, %v2217
        %v2219 = vadd.f32 %v2216, %v2218
        %v2220 = vstv %s2213
        %v2221 = vadd.f32 %v2219, %v2220
        %v2222 = vmax.f32 %v2221, 0.0
        %v2223 = vstv %s2214
        %v2224 = vmul.f32 %v2222, %v2223
        %v2225 = vadd.f32 %v2210, %v2224
        %s2226 = sld [smem:[#allocation15 + $0xa5]]
        %s2227 = sld [smem:[#allocation15 + $0xb5]]
        %s2228 = sld [smem:[#allocation15 + $0x155]]
        %s2229 = sld [smem:[#allocation15 + $0x1d5]]
        %v2230 = vstv %s2226
        %v2231 = vmul.f32 %v2148, %v2230
        %v2232 = vstv %s2227
        %v2233 = vmul.f32 %v681, %v2232
        %v2234 = vadd.f32 %v2231, %v2233
        %v2235 = vstv %s2228
        %v2236 = vadd.f32 %v2234, %v2235
        %v2237 = vmax.f32 %v2236, 0.0
        %v2238 = vstv %s2229
        %v2239 = vmul.f32 %v2237, %v2238
        %v2240 = vadd.f32 %v2225, %v2239
        %s2241 = sld [smem:[#allocation15 + $0xa6]]
        %s2242 = sld [smem:[#allocation15 + $0xb6]]
        %s2243 = sld [smem:[#allocation15 + $0x156]]
        %s2244 = sld [smem:[#allocation15 + $0x1d6]]
        %v2245 = vstv %s2241
        %v2246 = vmul.f32 %v2148, %v2245
        %v2247 = vstv %s2242
        %v2248 = vmul.f32 %v681, %v2247
        %v2249 = vadd.f32 %v2246, %v2248
        %v2250 = vstv %s2243
        %v2251 = vadd.f32 %v2249, %v2250
        %v2252 = vmax.f32 %v2251, 0.0
        %v2253 = vstv %s2244
        %v2254 = vmul.f32 %v2252, %v2253
        %v2255 = vadd.f32 %v2240, %v2254
        %s2256 = sld [smem:[#allocation15 + $0xa7]]
        %s2257 = sld [smem:[#allocation15 + $0xb7]]
        %s2258 = sld [smem:[#allocation15 + $0x157]]
        %s2259 = sld [smem:[#allocation15 + $0x1d7]]
        %v2260 = vstv %s2256
        %v2261 = vmul.f32 %v2148, %v2260
        %v2262 = vstv %s2257
        %v2263 = vmul.f32 %v681, %v2262
        %v2264 = vadd.f32 %v2261, %v2263
        %v2265 = vstv %s2258
        %v2266 = vadd.f32 %v2264, %v2265
        %v2267 = vmax.f32 %v2266, 0.0
        %v2268 = vstv %s2259
        %v2269 = vmul.f32 %v2267, %v2268
        %v2270 = vadd.f32 %v2255, %v2269
        %s2271 = sld [smem:[#allocation15 + $0xa8]]
        %s2272 = sld [smem:[#allocation15 + $0xb8]]
        %s2273 = sld [smem:[#allocation15 + $0x158]]
        %s2274 = sld [smem:[#allocation15 + $0x1d8]]
        %v2275 = vstv %s2271
        %v2276 = vmul.f32 %v2148, %v2275
        %v2277 = vstv %s2272
        %v2278 = vmul.f32 %v681, %v2277
        %v2279 = vadd.f32 %v2276, %v2278
        %v2280 = vstv %s2273
        %v2281 = vadd.f32 %v2279, %v2280
        %v2282 = vmax.f32 %v2281, 0.0
        %v2283 = vstv %s2274
        %v2284 = vmul.f32 %v2282, %v2283
        %v2285 = vadd.f32 %v2270, %v2284
        %s2286 = sld [smem:[#allocation15 + $0xa9]]
        %s2287 = sld [smem:[#allocation15 + $0xb9]]
        %s2288 = sld [smem:[#allocation15 + $0x159]]
        %s2289 = sld [smem:[#allocation15 + $0x1d9]]
        %v2290 = vstv %s2286
        %v2291 = vmul.f32 %v2148, %v2290
        %v2292 = vstv %s2287
        %v2293 = vmul.f32 %v681, %v2292
        %v2294 = vadd.f32 %v2291, %v2293
        %v2295 = vstv %s2288
        %v2296 = vadd.f32 %v2294, %v2295
        %v2297 = vmax.f32 %v2296, 0.0
        %v2298 = vstv %s2289
        %v2299 = vmul.f32 %v2297, %v2298
        %v2300 = vadd.f32 %v2285, %v2299
        %s2301 = sld [smem:[#allocation15 + $0xaa]]
        %s2302 = sld [smem:[#allocation15 + $0xba]]
        %s2303 = sld [smem:[#allocation15 + $0x15a]]
        %s2304 = sld [smem:[#allocation15 + $0x1da]]
        %v2305 = vstv %s2301
        %v2306 = vmul.f32 %v2148, %v2305
        %v2307 = vstv %s2302
        %v2308 = vmul.f32 %v681, %v2307
        %v2309 = vadd.f32 %v2306, %v2308
        %v2310 = vstv %s2303
        %v2311 = vadd.f32 %v2309, %v2310
        %v2312 = vmax.f32 %v2311, 0.0
        %v2313 = vstv %s2304
        %v2314 = vmul.f32 %v2312, %v2313
        %v2315 = vadd.f32 %v2300, %v2314
        %s2316 = sld [smem:[#allocation15 + $0xab]]
        %s2317 = sld [smem:[#allocation15 + $0xbb]]
        %s2318 = sld [smem:[#allocation15 + $0x15b]]
        %s2319 = sld [smem:[#allocation15 + $0x1db]]
        %v2320 = vstv %s2316
        %v2321 = vmul.f32 %v2148, %v2320
        %v2322 = vstv %s2317
        %v2323 = vmul.f32 %v681, %v2322
        %v2324 = vadd.f32 %v2321, %v2323
        %v2325 = vstv %s2318
        %v2326 = vadd.f32 %v2324, %v2325
        %v2327 = vmax.f32 %v2326, 0.0
        %v2328 = vstv %s2319
        %v2329 = vmul.f32 %v2327, %v2328
        %v2330 = vadd.f32 %v2315, %v2329
        %s2331 = sld [smem:[#allocation15 + $0xac]]
        %s2332 = sld [smem:[#allocation15 + $0xbc]]
        %s2333 = sld [smem:[#allocation15 + $0x15c]]
        %s2334 = sld [smem:[#allocation15 + $0x1dc]]
        %v2335 = vstv %s2331
        %v2336 = vmul.f32 %v2148, %v2335
        %v2337 = vstv %s2332
        %v2338 = vmul.f32 %v681, %v2337
        %v2339 = vadd.f32 %v2336, %v2338
        %v2340 = vstv %s2333
        %v2341 = vadd.f32 %v2339, %v2340
        %v2342 = vmax.f32 %v2341, 0.0
        %v2343 = vstv %s2334
        %v2344 = vmul.f32 %v2342, %v2343
        %v2345 = vadd.f32 %v2330, %v2344
        %s2346 = sld [smem:[#allocation15 + $0xad]]
        %s2347 = sld [smem:[#allocation15 + $0xbd]]
        %s2348 = sld [smem:[#allocation15 + $0x15d]]
        %s2349 = sld [smem:[#allocation15 + $0x1dd]]
        %v2350 = vstv %s2346
        %v2351 = vmul.f32 %v2148, %v2350
        %v2352 = vstv %s2347
        %v2353 = vmul.f32 %v681, %v2352
        %v2354 = vadd.f32 %v2351, %v2353
        %v2355 = vstv %s2348
        %v2356 = vadd.f32 %v2354, %v2355
        %v2357 = vmax.f32 %v2356, 0.0
        %v2358 = vstv %s2349
        %v2359 = vmul.f32 %v2357, %v2358
        %v2360 = vadd.f32 %v2345, %v2359
        %s2361 = sld [smem:[#allocation15 + $0xae]]
        %s2362 = sld [smem:[#allocation15 + $0xbe]]
        %s2363 = sld [smem:[#allocation15 + $0x15e]]
        %s2364 = sld [smem:[#allocation15 + $0x1de]]
        %v2365 = vstv %s2361
        %v2366 = vmul.f32 %v2148, %v2365
        %v2367 = vstv %s2362
        %v2368 = vmul.f32 %v681, %v2367
        %v2369 = vadd.f32 %v2366, %v2368
        %v2370 = vstv %s2363
        %v2371 = vadd.f32 %v2369, %v2370
        %v2372 = vmax.f32 %v2371, 0.0
        %v2373 = vstv %s2364
        %v2374 = vmul.f32 %v2372, %v2373
        %v2375 = vadd.f32 %v2360, %v2374
        %s2376 = sld [smem:[#allocation15 + $0xaf]]
        %s2377 = sld [smem:[#allocation15 + $0xbf]]
        %s2378 = sld [smem:[#allocation15 + $0x15f]]
        %s2379 = sld [smem:[#allocation15 + $0x1df]]
        %v2380 = vstv %s2376
        %v2381 = vmul.f32 %v2148, %v2380
        %v2382 = vstv %s2377
        %v2383 = vmul.f32 %v681, %v2382
        %v2384 = vadd.f32 %v2381, %v2383
        %v2385 = vstv %s2378
        %v2386 = vadd.f32 %v2384, %v2385
        %v2387 = vmax.f32 %v2386, 0.0
        %v2388 = vstv %s2379
        %v2389 = vmul.f32 %v2387, %v2388
        %v2390 = vadd.f32 %v2375, %v2389
        %s2391 = sld [smem:[#allocation15 + $0x205]]
        %v2392 = vstv %s2391
        %v2393 = vadd.f32 %v2390, %v2392
        %v2394 = vadd.f32 %v1570, %v2393
        %v2395 = vsel %vm1239, %v2393, -inf
        %v2396 = vrot.slane %v2395, 4
        %v2397 = vmax.f32 %v2395, %v2396
        %v2398 = vrot.slane %v2397, 2
        %v2399 = vmax.f32 %v2397, %v2398
        %v2400 = vrot.slane %v2399, 1
        %v2401 = vmax.f32 %v2399, %v2400
        %v2402 = vsub.f32 %v2393, %v2401
        %v2403 = vmul.f32 %v2402, 1.442695
        %v2404 = vpow.pop %v2403
        %v2405 = vsel %vm1239, %v2404, 0.0
        %v2406 = vrot.slane %v2405, 4
        %v2407 = vadd.f32 %v2405, %v2406
        %v2408 = vrot.slane %v2407, 2
        %v2409 = vadd.f32 %v2407, %v2408
        %v2410 = vrot.slane %v2409, 1
        %v2411 = vadd.f32 %v2409, %v2410
        %v2412 = vrcp.pop %v2411
        %v2413 = vmul.f32 %v2404, %v2412
        %2414 = vxpose.xlu0.b32.start [1/16] %v2413, 128
        %2415 = vxpose.xlu0.b32.cont [2/16] 0.0, 128
        %2416 = vxpose.xlu0.b32.cont [3/16] 0.0, 128
        %2417 = vxpose.xlu0.b32.cont [4/16] 0.0, 128
        %2418 = vxpose.xlu0.b32.cont [5/16] 0.0, 128
        %2419 = vxpose.xlu0.b32.cont [6/16] 0.0, 128
        %2420 = vxpose.xlu0.b32.cont [7/16] 0.0, 128
        %2421 = vxpose.xlu0.b32.cont [8/16] 0.0, 128
        %2422 = vxpose.xlu0.b32.cont [9/16] 0.0, 128
        %2423 = vxpose.xlu0.b32.cont [10/16] 0.0, 128
        %2424 = vxpose.xlu0.b32.cont [11/16] 0.0, 128
        %2425 = vxpose.xlu0.b32.cont [12/16] 0.0, 128
        %2426 = vxpose.xlu0.b32.cont [13/16] 0.0, 128
        %2427 = vxpose.xlu0.b32.cont [14/16] 0.0, 128
        %2428 = vxpose.xlu0.b32.cont [15/16] 0.0, 128
        %2429 = vxpose.xlu0.b32.end [16/16] 0.0, 128
        %v2430 = vpop.trf.xlu0
        %v2431 = vpop.trf.xlu0
        %v2432 = vpop.trf.xlu0
        %v2433 = vpop.trf.xlu0
        %v2434 = vpop.trf.xlu0
        %v2435 = vpop.trf.xlu0
        %v2436 = vpop.trf.xlu0
        %v2437 = vpop.trf.xlu0
        %v2438 = vpop.trf.xlu0
        %v2439 = vpop.trf.xlu0
        %v2440 = vpop.trf.xlu0
        %v2441 = vpop.trf.xlu0
        %v2442 = vpop.trf.xlu0
        %v2443 = vpop.trf.xlu0
        %v2444 = vpop.trf.xlu0
        %v2445 = vpop.trf.xlu0
        %2447 = vrot.lane.b32.xlu0 %v829, 96
        %v2448 = vpop.permute.xlu0 %2447
        %vm2450 = vcmask 64512
        %v2452 = vsel %vm2450, %v2430, 0
        %v2455 = vsel %vm2450, %v2431, 0
        %2457 = vmatprep.subr.mxu0 0.0
        %2458 = vmatpush1.msra.mxu0 0.0
        %2459 = vmatprep.subr.mxu0 0.0
        %2460 = vmatpush1.msra.mxu0 0.0
        %2461 = vmatprep.subr.mxu0 0.0
        %2462 = vmatpush1.msra.mxu0 0.0
        %2463 = vmatprep.subr.mxu0 0.0
        %2464 = vmatpush1.msra.mxu0 0.0
        %2465 = vmatprep.subr.mxu0 0.0
        %2466 = vmatpush1.msra.mxu0 0.0
        %2467 = vmatprep.subr.mxu0 0.0
        %2468 = vmatpush1.msra.mxu0 0.0
        %2469 = vmatprep.subr.mxu0 0.0
        %2470 = vmatpush1.msra.mxu0 0.0
        %2471 = vmatprep.subr.mxu0 0.0
        %2472 = vmatpush1.msra.mxu0 0.0
        %2473 = vmatprep.subr.mxu0 0.0
        %2474 = vmatpush1.msra.mxu0 0.0
        %2475 = vmatprep.subr.mxu0 0.0
        %2476 = vmatpush1.msra.mxu0 0.0
        %2477 = vmatprep.subr.mxu0 0.0
        %2478 = vmatpush1.msra.mxu0 0.0
        %2479 = vmatprep.subr.mxu0 0.0
        %2480 = vmatpush1.msra.mxu0 0.0
        %2481 = vmatprep.subr.mxu0 0.0
        %2482 = vmatpush1.msra.mxu0 0.0
        %2483 = vmatprep.subr.mxu0 0.0
        %2484 = vmatpush1.msra.mxu0 0.0
        %2485 = vmatprep.subr.mxu0 0.0
        %2486 = vmatpush1.msra.mxu0 0.0
        %2487 = vmatprep.subr.mxu0 0.0
        %2488 = vmatpush1.msra.mxu0 %v2448
        %2489 = vmatprep.subr.mxu0 0.0
        %2490 = vmatpush2.msra.mxu0 0.0
        %2491 = vmatprep.subr.mxu0 0.0
        %2492 = vmatpush2.msra.mxu0 0.0
        %2493 = vmatprep.subr.mxu0 0.0
        %2494 = vmatpush2.msra.mxu0 0.0
        %2495 = vmatprep.subr.mxu0 0.0
        %2496 = vmatpush2.msra.mxu0 0.0
        %2497 = vmatprep.subr.mxu0 0.0
        %2498 = vmatpush2.msra.mxu0 0.0
        %2499 = vmatprep.subr.mxu0 0.0
        %2500 = vmatpush2.msra.mxu0 0.0
        %2501 = vmatprep.subr.mxu0 0.0
        %2502 = vmatpush2.msra.mxu0 0.0
        %2503 = vmatprep.subr.mxu0 0.0
        %2504 = vmatpush2.msra.mxu0 0.0
        %2505 = vmatprep.subr.mxu0 0.0
        %2506 = vmatpush2.msra.mxu0 0.0
        %2507 = vmatprep.subr.mxu0 0.0
        %2508 = vmatpush2.msra.mxu0 0.0
        %2509 = vmatprep.subr.mxu0 0.0
        %2510 = vmatpush2.msra.mxu0 0.0
        %2511 = vmatprep.subr.mxu0 0.0
        %2512 = vmatpush2.msra.mxu0 0.0
        %2513 = vmatprep.subr.mxu0 0.0
        %2514 = vmatpush2.msra.mxu0 0.0
        %2515 = vmatprep.subr.mxu0 0.0
        %2516 = vmatpush2.msra.mxu0 0.0
        %2517 = vmatprep.subr.mxu0 0.0
        %2518 = vmatpush2.msra.mxu0 0.0
        %2519 = vmatprep.subr.mxu0 0.0
        %2520 = vmatpush2.msra.mxu0 0.0
        %2521 = vmatprep.mubr.f32.mxu0 0.0
        %2522 = vmatmul.mubr.f32.gmra.mxu0 %v2452
        %v2523 = vpop.f32.mrf.mxu0
        %v2524 = vadd.f32 0.0, %v2523
        %v2525 = vpop.f32.mrf.mxu0
        %2526 = vmatprep.mubr.f32.mxu0 0.0
        %2527 = vmatmul.mubr.f32.gmra.mxu0 %v2455
        %v2528 = vpop.f32.mrf.mxu0
        %v2529 = vadd.f32 0.0, %v2528
        %v2530 = vpop.f32.mrf.mxu0
        %2531 = vdwg.mxu0
        %2532 = vxpose.xlu0.b32.start [1/16] %v1589, 128
        %2533 = vxpose.xlu0.b32.cont [2/16] 0.0, 128
        %2534 = vxpose.xlu0.b32.cont [3/16] 0.0, 128
        %2535 = vxpose.xlu0.b32.cont [4/16] 0.0, 128
        %2536 = vxpose.xlu0.b32.cont [5/16] 0.0, 128
        %2537 = vxpose.xlu0.b32.cont [6/16] 0.0, 128
        %2538 = vxpose.xlu0.b32.cont [7/16] 0.0, 128
        %2539 = vxpose.xlu0.b32.cont [8/16] 0.0, 128
        %2540 = vxpose.xlu0.b32.cont [9/16] 0.0, 128
        %2541 = vxpose.xlu0.b32.cont [10/16] 0.0, 128
        %2542 = vxpose.xlu0.b32.cont [11/16] 0.0, 128
        %2543 = vxpose.xlu0.b32.cont [12/16] 0.0, 128
        %2544 = vxpose.xlu0.b32.cont [13/16] 0.0, 128
        %2545 = vxpose.xlu0.b32.cont [14/16] 0.0, 128
        %2546 = vxpose.xlu0.b32.cont [15/16] 0.0, 128
        %2547 = vxpose.xlu0.b32.end [16/16] 0.0, 128
        %v2548 = vpop.trf.xlu0
        %v2549 = vpop.trf.xlu0
        %v2550 = vpop.trf.xlu0
        %v2551 = vpop.trf.xlu0
        %v2552 = vpop.trf.xlu0
        %v2553 = vpop.trf.xlu0
        %v2554 = vpop.trf.xlu0
        %v2555 = vpop.trf.xlu0
        %v2556 = vpop.trf.xlu0
        %v2557 = vpop.trf.xlu0
        %v2558 = vpop.trf.xlu0
        %v2559 = vpop.trf.xlu0
        %v2560 = vpop.trf.xlu0
        %v2561 = vpop.trf.xlu0
        %v2562 = vpop.trf.xlu0
        %v2563 = vpop.trf.xlu0
        %v2565 = vsel %vm2450, %v2548, 0
        %v2568 = vsel %vm2450, %v2549, 0
        %2570 = vmatprep.subr.mxu0 0.0
        %2571 = vmatpush1.msra.mxu0 0.0
        %2572 = vmatprep.subr.mxu0 0.0
        %2573 = vmatpush1.msra.mxu0 0.0
        %2574 = vmatprep.subr.mxu0 0.0
        %2575 = vmatpush1.msra.mxu0 0.0
        %2576 = vmatprep.subr.mxu0 0.0
        %2577 = vmatpush1.msra.mxu0 0.0
        %2578 = vmatprep.subr.mxu0 0.0
        %2579 = vmatpush1.msra.mxu0 0.0
        %2580 = vmatprep.subr.mxu0 0.0
        %2581 = vmatpush1.msra.mxu0 0.0
        %2582 = vmatprep.subr.mxu0 0.0
        %2583 = vmatpush1.msra.mxu0 0.0
        %2584 = vmatprep.subr.mxu0 0.0
        %2585 = vmatpush1.msra.mxu0 0.0
        %2586 = vmatprep.subr.mxu0 0.0
        %2587 = vmatpush1.msra.mxu0 0.0
        %2588 = vmatprep.subr.mxu0 0.0
        %2589 = vmatpush1.msra.mxu0 0.0
        %2590 = vmatprep.subr.mxu0 0.0
        %2591 = vmatpush1.msra.mxu0 0.0
        %2592 = vmatprep.subr.mxu0 0.0
        %2593 = vmatpush1.msra.mxu0 0.0
        %2594 = vmatprep.subr.mxu0 0.0
        %2595 = vmatpush1.msra.mxu0 0.0
        %2596 = vmatprep.subr.mxu0 0.0
        %2597 = vmatpush1.msra.mxu0 0.0
        %2598 = vmatprep.subr.mxu0 0.0
        %2599 = vmatpush1.msra.mxu0 0.0
        %2600 = vmatprep.subr.mxu0 0.0
        %2601 = vmatpush1.msra.mxu0 %v829
        %2602 = vmatprep.subr.mxu0 0.0
        %2603 = vmatpush2.msra.mxu0 0.0
        %2604 = vmatprep.subr.mxu0 0.0
        %2605 = vmatpush2.msra.mxu0 0.0
        %2606 = vmatprep.subr.mxu0 0.0
        %2607 = vmatpush2.msra.mxu0 0.0
        %2608 = vmatprep.subr.mxu0 0.0
        %2609 = vmatpush2.msra.mxu0 0.0
        %2610 = vmatprep.subr.mxu0 0.0
        %2611 = vmatpush2.msra.mxu0 0.0
        %2612 = vmatprep.subr.mxu0 0.0
        %2613 = vmatpush2.msra.mxu0 0.0
        %2614 = vmatprep.subr.mxu0 0.0
        %2615 = vmatpush2.msra.mxu0 0.0
        %2616 = vmatprep.subr.mxu0 0.0
        %2617 = vmatpush2.msra.mxu0 0.0
        %2618 = vmatprep.subr.mxu0 0.0
        %2619 = vmatpush2.msra.mxu0 0.0
        %2620 = vmatprep.subr.mxu0 0.0
        %2621 = vmatpush2.msra.mxu0 0.0
        %2622 = vmatprep.subr.mxu0 0.0
        %2623 = vmatpush2.msra.mxu0 0.0
        %2624 = vmatprep.subr.mxu0 0.0
        %2625 = vmatpush2.msra.mxu0 0.0
        %2626 = vmatprep.subr.mxu0 0.0
        %2627 = vmatpush2.msra.mxu0 0.0
        %2628 = vmatprep.subr.mxu0 0.0
        %2629 = vmatpush2.msra.mxu0 0.0
        %2630 = vmatprep.subr.mxu0 0.0
        %2631 = vmatpush2.msra.mxu0 0.0
        %2632 = vmatprep.subr.mxu0 0.0
        %2633 = vmatpush2.msra.mxu0 0.0
        %2634 = vmatprep.mubr.f32.mxu0 0.0
        %2635 = vmatmul.mubr.f32.gmra.mxu0 %v2565
        %v2636 = vpop.f32.mrf.mxu0
        %v2637 = vadd.f32 %v2524, %v2636
        %v2638 = vpop.f32.mrf.mxu0
        %2639 = vmatprep.mubr.f32.mxu0 0.0
        %2640 = vmatmul.mubr.f32.gmra.mxu0 %v2568
        %v2641 = vpop.f32.mrf.mxu0
        %v2642 = vadd.f32 %v2529, %v2641
        %v2643 = vpop.f32.mrf.mxu0
        %2644 = vdwg.mxu0
        %2645 = vrot.lane.b32.xlu0 %v827, 64
        %v2646 = vpop.permute.xlu0 %2645
        %v2647 = vsel %vm684, %v2646, 0
        %2649 = vmatprep.subr.mxu0 0.0
        %2650 = vmatpush1.xpose.msra.mxu0 0.0
        %2651 = vmatprep.subr.mxu0 0.0
        %2652 = vmatpush1.xpose.msra.mxu0 0.0
        %2653 = vmatprep.subr.mxu0 0.0
        %2654 = vmatpush1.xpose.msra.mxu0 0.0
        %2655 = vmatprep.subr.mxu0 0.0
        %2656 = vmatpush1.xpose.msra.mxu0 0.0
        %2657 = vmatprep.subr.mxu0 0.0
        %2658 = vmatpush1.xpose.msra.mxu0 0.0
        %2659 = vmatprep.subr.mxu0 0.0
        %2660 = vmatpush1.xpose.msra.mxu0 0.0
        %2661 = vmatprep.subr.mxu0 0.0
        %2662 = vmatpush1.xpose.msra.mxu0 0.0
        %2663 = vmatprep.subr.mxu0 0.0
        %2664 = vmatpush1.xpose.msra.mxu0 0.0
        %2665 = vmatprep.subr.mxu0 0.0
        %2666 = vmatpush1.xpose.msra.mxu0 0.0
        %2667 = vmatprep.subr.mxu0 0.0
        %2668 = vmatpush1.xpose.msra.mxu0 0.0
        %2669 = vmatprep.subr.mxu0 0.0
        %2670 = vmatpush1.xpose.msra.mxu0 0.0
        %2671 = vmatprep.subr.mxu0 0.0
        %2672 = vmatpush1.xpose.msra.mxu0 0.0
        %2673 = vmatprep.subr.mxu0 0.0
        %2674 = vmatpush1.xpose.msra.mxu0 0.0
        %2675 = vmatprep.subr.mxu0 0.0
        %2676 = vmatpush1.xpose.msra.mxu0 0.0
        %2677 = vmatprep.subr.mxu0 0.0
        %2678 = vmatpush1.xpose.msra.mxu0 %v843
        %2679 = vmatprep.subr.mxu0 0.0
        %2680 = vmatpush1.xpose.msra.mxu0 %v840
        %2681 = vmatprep.subr.mxu0 0.0
        %2682 = vmatpush2.xpose.msra.mxu0 0.0
        %2683 = vmatprep.subr.mxu0 0.0
        %2684 = vmatpush2.xpose.msra.mxu0 0.0
        %2685 = vmatprep.subr.mxu0 0.0
        %2686 = vmatpush2.xpose.msra.mxu0 0.0
        %2687 = vmatprep.subr.mxu0 0.0
        %2688 = vmatpush2.xpose.msra.mxu0 0.0
        %2689 = vmatprep.subr.mxu0 0.0
        %2690 = vmatpush2.xpose.msra.mxu0 0.0
        %2691 = vmatprep.subr.mxu0 0.0
        %2692 = vmatpush2.xpose.msra.mxu0 0.0
        %2693 = vmatprep.subr.mxu0 0.0
        %2694 = vmatpush2.xpose.msra.mxu0 0.0
        %2695 = vmatprep.subr.mxu0 0.0
        %2696 = vmatpush2.xpose.msra.mxu0 0.0
        %2697 = vmatprep.subr.mxu0 0.0
        %2698 = vmatpush2.xpose.msra.mxu0 0.0
        %2699 = vmatprep.subr.mxu0 0.0
        %2700 = vmatpush2.xpose.msra.mxu0 0.0
        %2701 = vmatprep.subr.mxu0 0.0
        %2702 = vmatpush2.xpose.msra.mxu0 0.0
        %2703 = vmatprep.subr.mxu0 0.0
        %2704 = vmatpush2.xpose.msra.mxu0 0.0
        %2705 = vmatprep.subr.mxu0 0.0
        %2706 = vmatpush2.xpose.msra.mxu0 0.0
        %2707 = vmatprep.subr.mxu0 0.0
        %2708 = vmatpush2.xpose.msra.mxu0 0.0
        %2709 = vmatprep.subr.mxu0 0.0
        %2710 = vmatpush2.xpose.msra.mxu0 0.0
        %2711 = vmatprep.subr.mxu0 0.0
        %2712 = vmatpush2.xpose.msra.mxu0 0.0
        %2713 = vmatprep.mubr.f32.mxu0 0.0
        %2714 = vmatmul.mubr.f32.gmra.mxu0 %v2647
        %v2715 = vpop.f32.mrf.mxu0
        %v2716 = vadd.f32 0.0, %v2715
        %v2717 = vpop.f32.mrf.mxu0
        %2718 = vdwg.mxu0
        %s2719 = sld [smem:[#allocation15 + $0x40]]
        %s2720 = sld [smem:[#allocation15 + $0x50]]
        %s2721 = sld [smem:[#allocation15 + $0x120]]
        %s2722 = sld [smem:[#allocation15 + $0x1a0]]
        %v2723 = vstv %s2719
        %v2724 = vmul.f32 %v2716, %v2723
        %v2725 = vstv %s2720
        %v2726 = vmul.f32 %v681, %v2725
        %v2727 = vadd.f32 %v2724, %v2726
        %v2728 = vstv %s2721
        %v2729 = vadd.f32 %v2727, %v2728
        %v2730 = vmax.f32 %v2729, 0.0
        %v2731 = vstv %s2722
        %v2732 = vmul.f32 %v2730, %v2731
        %v2733 = vadd.f32 %v2732, 0.0
        %s2734 = sld [smem:[#allocation15 + $0x41]]
        %s2735 = sld [smem:[#allocation15 + $0x51]]
        %s2736 = sld [smem:[#allocation15 + $0x121]]
        %s2737 = sld [smem:[#allocation15 + $0x1a1]]
        %v2738 = vstv %s2734
        %v2739 = vmul.f32 %v2716, %v2738
        %v2740 = vstv %s2735
        %v2741 = vmul.f32 %v681, %v2740
        %v2742 = vadd.f32 %v2739, %v2741
        %v2743 = vstv %s2736
        %v2744 = vadd.f32 %v2742, %v2743
        %v2745 = vmax.f32 %v2744, 0.0
        %v2746 = vstv %s2737
        %v2747 = vmul.f32 %v2745, %v2746
        %v2748 = vadd.f32 %v2733, %v2747
        %s2749 = sld [smem:[#allocation15 + $0x42]]
        %s2750 = sld [smem:[#allocation15 + $0x52]]
        %s2751 = sld [smem:[#allocation15 + $0x122]]
        %s2752 = sld [smem:[#allocation15 + $0x1a2]]
        %v2753 = vstv %s2749
        %v2754 = vmul.f32 %v2716, %v2753
        %v2755 = vstv %s2750
        %v2756 = vmul.f32 %v681, %v2755
        %v2757 = vadd.f32 %v2754, %v2756
        %v2758 = vstv %s2751
        %v2759 = vadd.f32 %v2757, %v2758
        %v2760 = vmax.f32 %v2759, 0.0
        %v2761 = vstv %s2752
        %v2762 = vmul.f32 %v2760, %v2761
        %v2763 = vadd.f32 %v2748, %v2762
        %s2764 = sld [smem:[#allocation15 + $0x43]]
        %s2765 = sld [smem:[#allocation15 + $0x53]]
        %s2766 = sld [smem:[#allocation15 + $0x123]]
        %s2767 = sld [smem:[#allocation15 + $0x1a3]]
        %v2768 = vstv %s2764
        %v2769 = vmul.f32 %v2716, %v2768
        %v2770 = vstv %s2765
        %v2771 = vmul.f32 %v681, %v2770
        %v2772 = vadd.f32 %v2769, %v2771
        %v2773 = vstv %s2766
        %v2774 = vadd.f32 %v2772, %v2773
        %v2775 = vmax.f32 %v2774, 0.0
        %v2776 = vstv %s2767
        %v2777 = vmul.f32 %v2775, %v2776
        %v2778 = vadd.f32 %v2763, %v2777
        %s2779 = sld [smem:[#allocation15 + $0x44]]
        %s2780 = sld [smem:[#allocation15 + $0x54]]
        %s2781 = sld [smem:[#allocation15 + $0x124]]
        %s2782 = sld [smem:[#allocation15 + $0x1a4]]
        %v2783 = vstv %s2779
        %v2784 = vmul.f32 %v2716, %v2783
        %v2785 = vstv %s2780
        %v2786 = vmul.f32 %v681, %v2785
        %v2787 = vadd.f32 %v2784, %v2786
        %v2788 = vstv %s2781
        %v2789 = vadd.f32 %v2787, %v2788
        %v2790 = vmax.f32 %v2789, 0.0
        %v2791 = vstv %s2782
        %v2792 = vmul.f32 %v2790, %v2791
        %v2793 = vadd.f32 %v2778, %v2792
        %s2794 = sld [smem:[#allocation15 + $0x45]]
        %s2795 = sld [smem:[#allocation15 + $0x55]]
        %s2796 = sld [smem:[#allocation15 + $0x125]]
        %s2797 = sld [smem:[#allocation15 + $0x1a5]]
        %v2798 = vstv %s2794
        %v2799 = vmul.f32 %v2716, %v2798
        %v2800 = vstv %s2795
        %v2801 = vmul.f32 %v681, %v2800
        %v2802 = vadd.f32 %v2799, %v2801
        %v2803 = vstv %s2796
        %v2804 = vadd.f32 %v2802, %v2803
        %v2805 = vmax.f32 %v2804, 0.0
        %v2806 = vstv %s2797
        %v2807 = vmul.f32 %v2805, %v2806
        %v2808 = vadd.f32 %v2793, %v2807
        %s2809 = sld [smem:[#allocation15 + $0x46]]
        %s2810 = sld [smem:[#allocation15 + $0x56]]
        %s2811 = sld [smem:[#allocation15 + $0x126]]
        %s2812 = sld [smem:[#allocation15 + $0x1a6]]
        %v2813 = vstv %s2809
        %v2814 = vmul.f32 %v2716, %v2813
        %v2815 = vstv %s2810
        %v2816 = vmul.f32 %v681, %v2815
        %v2817 = vadd.f32 %v2814, %v2816
        %v2818 = vstv %s2811
        %v2819 = vadd.f32 %v2817, %v2818
        %v2820 = vmax.f32 %v2819, 0.0
        %v2821 = vstv %s2812
        %v2822 = vmul.f32 %v2820, %v2821
        %v2823 = vadd.f32 %v2808, %v2822
        %s2824 = sld [smem:[#allocation15 + $0x47]]
        %s2825 = sld [smem:[#allocation15 + $0x57]]
        %s2826 = sld [smem:[#allocation15 + $0x127]]
        %s2827 = sld [smem:[#allocation15 + $0x1a7]]
        %v2828 = vstv %s2824
        %v2829 = vmul.f32 %v2716, %v2828
        %v2830 = vstv %s2825
        %v2831 = vmul.f32 %v681, %v2830
        %v2832 = vadd.f32 %v2829, %v2831
        %v2833 = vstv %s2826
        %v2834 = vadd.f32 %v2832, %v2833
        %v2835 = vmax.f32 %v2834, 0.0
        %v2836 = vstv %s2827
        %v2837 = vmul.f32 %v2835, %v2836
        %v2838 = vadd.f32 %v2823, %v2837
        %s2839 = sld [smem:[#allocation15 + $0x48]]
        %s2840 = sld [smem:[#allocation15 + $0x58]]
        %s2841 = sld [smem:[#allocation15 + $0x128]]
        %s2842 = sld [smem:[#allocation15 + $0x1a8]]
        %v2843 = vstv %s2839
        %v2844 = vmul.f32 %v2716, %v2843
        %v2845 = vstv %s2840
        %v2846 = vmul.f32 %v681, %v2845
        %v2847 = vadd.f32 %v2844, %v2846
        %v2848 = vstv %s2841
        %v2849 = vadd.f32 %v2847, %v2848
        %v2850 = vmax.f32 %v2849, 0.0
        %v2851 = vstv %s2842
        %v2852 = vmul.f32 %v2850, %v2851
        %v2853 = vadd.f32 %v2838, %v2852
        %s2854 = sld [smem:[#allocation15 + $0x49]]
        %s2855 = sld [smem:[#allocation15 + $0x59]]
        %s2856 = sld [smem:[#allocation15 + $0x129]]
        %s2857 = sld [smem:[#allocation15 + $0x1a9]]
        %v2858 = vstv %s2854
        %v2859 = vmul.f32 %v2716, %v2858
        %v2860 = vstv %s2855
        %v2861 = vmul.f32 %v681, %v2860
        %v2862 = vadd.f32 %v2859, %v2861
        %v2863 = vstv %s2856
        %v2864 = vadd.f32 %v2862, %v2863
        %v2865 = vmax.f32 %v2864, 0.0
        %v2866 = vstv %s2857
        %v2867 = vmul.f32 %v2865, %v2866
        %v2868 = vadd.f32 %v2853, %v2867
        %s2869 = sld [smem:[#allocation15 + $0x4a]]
        %s2870 = sld [smem:[#allocation15 + $0x5a]]
        %s2871 = sld [smem:[#allocation15 + $0x12a]]
        %s2872 = sld [smem:[#allocation15 + $0x1aa]]
        %v2873 = vstv %s2869
        %v2874 = vmul.f32 %v2716, %v2873
        %v2875 = vstv %s2870
        %v2876 = vmul.f32 %v681, %v2875
        %v2877 = vadd.f32 %v2874, %v2876
        %v2878 = vstv %s2871
        %v2879 = vadd.f32 %v2877, %v2878
        %v2880 = vmax.f32 %v2879, 0.0
        %v2881 = vstv %s2872
        %v2882 = vmul.f32 %v2880, %v2881
        %v2883 = vadd.f32 %v2868, %v2882
        %s2884 = sld [smem:[#allocation15 + $0x4b]]
        %s2885 = sld [smem:[#allocation15 + $0x5b]]
        %s2886 = sld [smem:[#allocation15 + $0x12b]]
        %s2887 = sld [smem:[#allocation15 + $0x1ab]]
        %v2888 = vstv %s2884
        %v2889 = vmul.f32 %v2716, %v2888
        %v2890 = vstv %s2885
        %v2891 = vmul.f32 %v681, %v2890
        %v2892 = vadd.f32 %v2889, %v2891
        %v2893 = vstv %s2886
        %v2894 = vadd.f32 %v2892, %v2893
        %v2895 = vmax.f32 %v2894, 0.0
        %v2896 = vstv %s2887
        %v2897 = vmul.f32 %v2895, %v2896
        %v2898 = vadd.f32 %v2883, %v2897
        %s2899 = sld [smem:[#allocation15 + $0x4c]]
        %s2900 = sld [smem:[#allocation15 + $0x5c]]
        %s2901 = sld [smem:[#allocation15 + $0x12c]]
        %s2902 = sld [smem:[#allocation15 + $0x1ac]]
        %v2903 = vstv %s2899
        %v2904 = vmul.f32 %v2716, %v2903
        %v2905 = vstv %s2900
        %v2906 = vmul.f32 %v681, %v2905
        %v2907 = vadd.f32 %v2904, %v2906
        %v2908 = vstv %s2901
        %v2909 = vadd.f32 %v2907, %v2908
        %v2910 = vmax.f32 %v2909, 0.0
        %v2911 = vstv %s2902
        %v2912 = vmul.f32 %v2910, %v2911
        %v2913 = vadd.f32 %v2898, %v2912
        %s2914 = sld [smem:[#allocation15 + $0x4d]]
        %s2915 = sld [smem:[#allocation15 + $0x5d]]
        %s2916 = sld [smem:[#allocation15 + $0x12d]]
        %s2917 = sld [smem:[#allocation15 + $0x1ad]]
        %v2918 = vstv %s2914
        %v2919 = vmul.f32 %v2716, %v2918
        %v2920 = vstv %s2915
        %v2921 = vmul.f32 %v681, %v2920
        %v2922 = vadd.f32 %v2919, %v2921
        %v2923 = vstv %s2916
        %v2924 = vadd.f32 %v2922, %v2923
        %v2925 = vmax.f32 %v2924, 0.0
        %v2926 = vstv %s2917
        %v2927 = vmul.f32 %v2925, %v2926
        %v2928 = vadd.f32 %v2913, %v2927
        %s2929 = sld [smem:[#allocation15 + $0x4e]]
        %s2930 = sld [smem:[#allocation15 + $0x5e]]
        %s2931 = sld [smem:[#allocation15 + $0x12e]]
        %s2932 = sld [smem:[#allocation15 + $0x1ae]]
        %v2933 = vstv %s2929
        %v2934 = vmul.f32 %v2716, %v2933
        %v2935 = vstv %s2930
        %v2936 = vmul.f32 %v681, %v2935
        %v2937 = vadd.f32 %v2934, %v2936
        %v2938 = vstv %s2931
        %v2939 = vadd.f32 %v2937, %v2938
        %v2940 = vmax.f32 %v2939, 0.0
        %v2941 = vstv %s2932
        %v2942 = vmul.f32 %v2940, %v2941
        %v2943 = vadd.f32 %v2928, %v2942
        %s2944 = sld [smem:[#allocation15 + $0x4f]]
        %s2945 = sld [smem:[#allocation15 + $0x5f]]
        %s2946 = sld [smem:[#allocation15 + $0x12f]]
        %s2947 = sld [smem:[#allocation15 + $0x1af]]
        %v2948 = vstv %s2944
        %v2949 = vmul.f32 %v2716, %v2948
        %v2950 = vstv %s2945
        %v2951 = vmul.f32 %v681, %v2950
        %v2952 = vadd.f32 %v2949, %v2951
        %v2953 = vstv %s2946
        %v2954 = vadd.f32 %v2952, %v2953
        %v2955 = vmax.f32 %v2954, 0.0
        %v2956 = vstv %s2947
        %v2957 = vmul.f32 %v2955, %v2956
        %v2958 = vadd.f32 %v2943, %v2957
        %s2959 = sld [smem:[#allocation15 + $0x202]]
        %v2960 = vstv %s2959
        %v2961 = vadd.f32 %v2958, %v2960
        %v2962 = vadd.f32 %v1907, %v2961
        %v2963 = vsel %vm1239, %v2961, -inf
        %2964 = vmax.xlane.f32.xlu0 %v2963
        %v2965 = vpop.xlane.xlu0 %2964
        %v2966 = vsub.f32 %v2961, %v2965
        %v2967 = vmul.f32 %v2966, 1.442695
        %v2968 = vpow.pop %v2967
        %v2969 = vsel %vm1239, %v2968, 0.0
        %2970 = vadd.xlane.f32.xlu0 %v2969
        %v2971 = vpop.xlane.xlu0 %2970
        %v2972 = vrcp.pop %v2971
        %v2973 = vmul.f32 %v2968, %v2972
        %2974 = vrot.lane.b32.xlu0 %v914, 64
        %v2975 = vpop.permute.xlu0 %2974
        %2976 = vrot.lane.b32.xlu0 %v920, 64
        %v2977 = vpop.permute.xlu0 %2976
        %v2981 = vsel %vm1239, %v2973, 0
        %2983 = vmatprep.subr.mxu0 0.0
        %2984 = vmatpush1.msra.mxu0 0.0
        %2985 = vmatprep.subr.mxu0 0.0
        %2986 = vmatpush1.msra.mxu0 0.0
        %2987 = vmatprep.subr.mxu0 0.0
        %2988 = vmatpush1.msra.mxu0 0.0
        %2989 = vmatprep.subr.mxu0 0.0
        %2990 = vmatpush1.msra.mxu0 0.0
        %2991 = vmatprep.subr.mxu0 0.0
        %2992 = vmatpush1.msra.mxu0 0.0
        %2993 = vmatprep.subr.mxu0 0.0
        %2994 = vmatpush1.msra.mxu0 0.0
        %2995 = vmatprep.subr.mxu0 0.0
        %2996 = vmatpush1.msra.mxu0 0.0
        %2997 = vmatprep.subr.mxu0 0.0
        %2998 = vmatpush1.msra.mxu0 0.0
        %2999 = vmatprep.subr.mxu0 0.0
        %3000 = vmatpush1.msra.mxu0 0.0
        %3001 = vmatprep.subr.mxu0 0.0
        %3002 = vmatpush1.msra.mxu0 0.0
        %3003 = vmatprep.subr.mxu0 0.0
        %3004 = vmatpush1.msra.mxu0 0.0
        %3005 = vmatprep.subr.mxu0 0.0
        %3006 = vmatpush1.msra.mxu0 0.0
        %3007 = vmatprep.subr.mxu0 0.0
        %3008 = vmatpush1.msra.mxu0 0.0
        %3009 = vmatprep.subr.mxu0 0.0
        %3010 = vmatpush1.msra.mxu0 0.0
        %3011 = vmatprep.subr.mxu0 0.0
        %3012 = vmatpush1.msra.mxu0 %v2977
        %3013 = vmatprep.subr.mxu0 0.0
        %3014 = vmatpush1.msra.mxu0 %v2975
        %3015 = vmatprep.subr.mxu0 0.0
        %3016 = vmatpush2.msra.mxu0 0.0
        %3017 = vmatprep.subr.mxu0 0.0
        %3018 = vmatpush2.msra.mxu0 0.0
        %3019 = vmatprep.subr.mxu0 0.0
        %3020 = vmatpush2.msra.mxu0 0.0
        %3021 = vmatprep.subr.mxu0 0.0
        %3022 = vmatpush2.msra.mxu0 0.0
        %3023 = vmatprep.subr.mxu0 0.0
        %3024 = vmatpush2.msra.mxu0 0.0
        %3025 = vmatprep.subr.mxu0 0.0
        %3026 = vmatpush2.msra.mxu0 0.0
        %3027 = vmatprep.subr.mxu0 0.0
        %3028 = vmatpush2.msra.mxu0 0.0
        %3029 = vmatprep.subr.mxu0 0.0
        %3030 = vmatpush2.msra.mxu0 0.0
        %3031 = vmatprep.subr.mxu0 0.0
        %3032 = vmatpush2.msra.mxu0 0.0
        %3033 = vmatprep.subr.mxu0 0.0
        %3034 = vmatpush2.msra.mxu0 0.0
        %3035 = vmatprep.subr.mxu0 0.0
        %3036 = vmatpush2.msra.mxu0 0.0
        %3037 = vmatprep.subr.mxu0 0.0
        %3038 = vmatpush2.msra.mxu0 0.0
        %3039 = vmatprep.subr.mxu0 0.0
        %3040 = vmatpush2.msra.mxu0 0.0
        %3041 = vmatprep.subr.mxu0 0.0
        %3042 = vmatpush2.msra.mxu0 0.0
        %3043 = vmatprep.subr.mxu0 0.0
        %3044 = vmatpush2.msra.mxu0 0.0
        %3045 = vmatprep.subr.mxu0 0.0
        %3046 = vmatpush2.msra.mxu0 0.0
        %3047 = vmatprep.mubr.f32.mxu0 0.0
        %3048 = vmatmul.mubr.f32.gmra.mxu0 %v2981
        %v3049 = vpop.f32.mrf.mxu0
        %v3050 = vadd.f32 0.0, %v3049
        %v3051 = vpop.f32.mrf.mxu0
        %3052 = vdwg.mxu0
        %v3053 = vadd.f32 %v2070, %v3050
        %3054 = vrot.lane.b32.xlu0 %v912, 64
        %v3055 = vpop.permute.xlu0 %3054
        %3056 = vrot.lane.b32.xlu0 %v918, 64
        %v3057 = vpop.permute.xlu0 %3056
        %v3058 = vsel %vm684, %v3055, 0
        %v3060 = vsel %vm684, %v3057, 0
        %3062 = vmatprep.subr.mxu0 0.0
        %3063 = vmatpush1.xpose.msra.mxu0 0.0
        %3064 = vmatprep.subr.mxu0 0.0
        %3065 = vmatpush1.xpose.msra.mxu0 0.0
        %3066 = vmatprep.subr.mxu0 0.0
        %3067 = vmatpush1.xpose.msra.mxu0 0.0
        %3068 = vmatprep.subr.mxu0 0.0
        %3069 = vmatpush1.xpose.msra.mxu0 0.0
        %3070 = vmatprep.subr.mxu0 0.0
        %3071 = vmatpush1.xpose.msra.mxu0 0.0
        %3072 = vmatprep.subr.mxu0 0.0
        %3073 = vmatpush1.xpose.msra.mxu0 0.0
        %3074 = vmatprep.subr.mxu0 0.0
        %3075 = vmatpush1.xpose.msra.mxu0 0.0
        %3076 = vmatprep.subr.mxu0 0.0
        %3077 = vmatpush1.xpose.msra.mxu0 0.0
        %3078 = vmatprep.subr.mxu0 0.0
        %3079 = vmatpush1.xpose.msra.mxu0 0.0
        %3080 = vmatprep.subr.mxu0 0.0
        %3081 = vmatpush1.xpose.msra.mxu0 0.0
        %3082 = vmatprep.subr.mxu0 0.0
        %3083 = vmatpush1.xpose.msra.mxu0 0.0
        %3084 = vmatprep.subr.mxu0 0.0
        %3085 = vmatpush1.xpose.msra.mxu0 0.0
        %3086 = vmatprep.subr.mxu0 0.0
        %3087 = vmatpush1.xpose.msra.mxu0 0.0
        %3088 = vmatprep.subr.mxu0 0.0
        %3089 = vmatpush1.xpose.msra.mxu0 0.0
        %3090 = vmatprep.subr.mxu0 0.0
        %3091 = vmatpush1.xpose.msra.mxu0 %v3060
        %3092 = vmatprep.subr.mxu0 0.0
        %3093 = vmatpush1.xpose.msra.mxu0 %v3058
        %3094 = vmatprep.subr.mxu0 0.0
        %3095 = vmatpush2.xpose.msra.mxu0 0.0
        %3096 = vmatprep.subr.mxu0 0.0
        %3097 = vmatpush2.xpose.msra.mxu0 0.0
        %3098 = vmatprep.subr.mxu0 0.0
        %3099 = vmatpush2.xpose.msra.mxu0 0.0
        %3100 = vmatprep.subr.mxu0 0.0
        %3101 = vmatpush2.xpose.msra.mxu0 0.0
        %3102 = vmatprep.subr.mxu0 0.0
        %3103 = vmatpush2.xpose.msra.mxu0 0.0
        %3104 = vmatprep.subr.mxu0 0.0
        %3105 = vmatpush2.xpose.msra.mxu0 0.0
        %3106 = vmatprep.subr.mxu0 0.0
        %3107 = vmatpush2.xpose.msra.mxu0 0.0
        %3108 = vmatprep.subr.mxu0 0.0
        %3109 = vmatpush2.xpose.msra.mxu0 0.0
        %3110 = vmatprep.subr.mxu0 0.0
        %3111 = vmatpush2.xpose.msra.mxu0 0.0
        %3112 = vmatprep.subr.mxu0 0.0
        %3113 = vmatpush2.xpose.msra.mxu0 0.0
        %3114 = vmatprep.subr.mxu0 0.0
        %3115 = vmatpush2.xpose.msra.mxu0 0.0
        %3116 = vmatprep.subr.mxu0 0.0
        %3117 = vmatpush2.xpose.msra.mxu0 0.0
        %3118 = vmatprep.subr.mxu0 0.0
        %3119 = vmatpush2.xpose.msra.mxu0 0.0
        %3120 = vmatprep.subr.mxu0 0.0
        %3121 = vmatpush2.xpose.msra.mxu0 0.0
        %3122 = vmatprep.subr.mxu0 0.0
        %3123 = vmatpush2.xpose.msra.mxu0 0.0
        %3124 = vmatprep.subr.mxu0 0.0
        %3125 = vmatpush2.xpose.msra.mxu0 0.0
        %3126 = vmatprep.mubr.f32.mxu0 0.0
        %3127 = vmatmul.mubr.f32.gmra.mxu0 %v758
        %v3128 = vpop.f32.mrf.mxu0
        %v3129 = vadd.f32 0.0, %v3128
        %v3130 = vpop.f32.mrf.mxu0
        %3131 = vdwg.mxu0
        %s3132 = sld [smem:[#allocation15 + $0xc0]]
        %s3133 = sld [smem:[#allocation15 + $0xd0]]
        %s3134 = sld [smem:[#allocation15 + $0x160]]
        %s3135 = sld [smem:[#allocation15 + $0x1e0]]
        %v3136 = vstv %s3132
        %v3137 = vmul.f32 %v3129, %v3136
        %v3138 = vstv %s3133
        %v3139 = vmul.f32 %v681, %v3138
        %v3140 = vadd.f32 %v3137, %v3139
        %v3141 = vstv %s3134
        %v3142 = vadd.f32 %v3140, %v3141
        %v3143 = vmax.f32 %v3142, 0.0
        %v3144 = vstv %s3135
        %v3145 = vmul.f32 %v3143, %v3144
        %v3146 = vadd.f32 %v3145, 0.0
        %s3147 = sld [smem:[#allocation15 + $0xc1]]
        %s3148 = sld [smem:[#allocation15 + $0xd1]]
        %s3149 = sld [smem:[#allocation15 + $0x161]]
        %s3150 = sld [smem:[#allocation15 + $0x1e1]]
        %v3151 = vstv %s3147
        %v3152 = vmul.f32 %v3129, %v3151
        %v3153 = vstv %s3148
        %v3154 = vmul.f32 %v681, %v3153
        %v3155 = vadd.f32 %v3152, %v3154
        %v3156 = vstv %s3149
        %v3157 = vadd.f32 %v3155, %v3156
        %v3158 = vmax.f32 %v3157, 0.0
        %v3159 = vstv %s3150
        %v3160 = vmul.f32 %v3158, %v3159
        %v3161 = vadd.f32 %v3146, %v3160
        %s3162 = sld [smem:[#allocation15 + $0xc2]]
        %s3163 = sld [smem:[#allocation15 + $0xd2]]
        %s3164 = sld [smem:[#allocation15 + $0x162]]
        %s3165 = sld [smem:[#allocation15 + $0x1e2]]
        %v3166 = vstv %s3162
        %v3167 = vmul.f32 %v3129, %v3166
        %v3168 = vstv %s3163
        %v3169 = vmul.f32 %v681, %v3168
        %v3170 = vadd.f32 %v3167, %v3169
        %v3171 = vstv %s3164
        %v3172 = vadd.f32 %v3170, %v3171
        %v3173 = vmax.f32 %v3172, 0.0
        %v3174 = vstv %s3165
        %v3175 = vmul.f32 %v3173, %v3174
        %v3176 = vadd.f32 %v3161, %v3175
        %s3177 = sld [smem:[#allocation15 + $0xc3]]
        %s3178 = sld [smem:[#allocation15 + $0xd3]]
        %s3179 = sld [smem:[#allocation15 + $0x163]]
        %s3180 = sld [smem:[#allocation15 + $0x1e3]]
        %v3181 = vstv %s3177
        %v3182 = vmul.f32 %v3129, %v3181
        %v3183 = vstv %s3178
        %v3184 = vmul.f32 %v681, %v3183
        %v3185 = vadd.f32 %v3182, %v3184
        %v3186 = vstv %s3179
        %v3187 = vadd.f32 %v3185, %v3186
        %v3188 = vmax.f32 %v3187, 0.0
        %v3189 = vstv %s3180
        %v3190 = vmul.f32 %v3188, %v3189
        %v3191 = vadd.f32 %v3176, %v3190
        %s3192 = sld [smem:[#allocation15 + $0xc4]]
        %s3193 = sld [smem:[#allocation15 + $0xd4]]
        %s3194 = sld [smem:[#allocation15 + $0x164]]
        %s3195 = sld [smem:[#allocation15 + $0x1e4]]
        %v3196 = vstv %s3192
        %v3197 = vmul.f32 %v3129, %v3196
        %v3198 = vstv %s3193
        %v3199 = vmul.f32 %v681, %v3198
        %v3200 = vadd.f32 %v3197, %v3199
        %v3201 = vstv %s3194
        %v3202 = vadd.f32 %v3200, %v3201
        %v3203 = vmax.f32 %v3202, 0.0
        %v3204 = vstv %s3195
        %v3205 = vmul.f32 %v3203, %v3204
        %v3206 = vadd.f32 %v3191, %v3205
        %s3207 = sld [smem:[#allocation15 + $0xc5]]
        %s3208 = sld [smem:[#allocation15 + $0xd5]]
        %s3209 = sld [smem:[#allocation15 + $0x165]]
        %s3210 = sld [smem:[#allocation15 + $0x1e5]]
        %v3211 = vstv %s3207
        %v3212 = vmul.f32 %v3129, %v3211
        %v3213 = vstv %s3208
        %v3214 = vmul.f32 %v681, %v3213
        %v3215 = vadd.f32 %v3212, %v3214
        %v3216 = vstv %s3209
        %v3217 = vadd.f32 %v3215, %v3216
        %v3218 = vmax.f32 %v3217, 0.0
        %v3219 = vstv %s3210
        %v3220 = vmul.f32 %v3218, %v3219
        %v3221 = vadd.f32 %v3206, %v3220
        %s3222 = sld [smem:[#allocation15 + $0xc6]]
        %s3223 = sld [smem:[#allocation15 + $0xd6]]
        %s3224 = sld [smem:[#allocation15 + $0x166]]
        %s3225 = sld [smem:[#allocation15 + $0x1e6]]
        %v3226 = vstv %s3222
        %v3227 = vmul.f32 %v3129, %v3226
        %v3228 = vstv %s3223
        %v3229 = vmul.f32 %v681, %v3228
        %v3230 = vadd.f32 %v3227, %v3229
        %v3231 = vstv %s3224
        %v3232 = vadd.f32 %v3230, %v3231
        %v3233 = vmax.f32 %v3232, 0.0
        %v3234 = vstv %s3225
        %v3235 = vmul.f32 %v3233, %v3234
        %v3236 = vadd.f32 %v3221, %v3235
        %s3237 = sld [smem:[#allocation15 + $0xc7]]
        %s3238 = sld [smem:[#allocation15 + $0xd7]]
        %s3239 = sld [smem:[#allocation15 + $0x167]]
        %s3240 = sld [smem:[#allocation15 + $0x1e7]]
        %v3241 = vstv %s3237
        %v3242 = vmul.f32 %v3129, %v3241
        %v3243 = vstv %s3238
        %v3244 = vmul.f32 %v681, %v3243
        %v3245 = vadd.f32 %v3242, %v3244
        %v3246 = vstv %s3239
        %v3247 = vadd.f32 %v3245, %v3246
        %v3248 = vmax.f32 %v3247, 0.0
        %v3249 = vstv %s3240
        %v3250 = vmul.f32 %v3248, %v3249
        %v3251 = vadd.f32 %v3236, %v3250
        %s3252 = sld [smem:[#allocation15 + $0xc8]]
        %s3253 = sld [smem:[#allocation15 + $0xd8]]
        %s3254 = sld [smem:[#allocation15 + $0x168]]
        %s3255 = sld [smem:[#allocation15 + $0x1e8]]
        %v3256 = vstv %s3252
        %v3257 = vmul.f32 %v3129, %v3256
        %v3258 = vstv %s3253
        %v3259 = vmul.f32 %v681, %v3258
        %v3260 = vadd.f32 %v3257, %v3259
        %v3261 = vstv %s3254
        %v3262 = vadd.f32 %v3260, %v3261
        %v3263 = vmax.f32 %v3262, 0.0
        %v3264 = vstv %s3255
        %v3265 = vmul.f32 %v3263, %v3264
        %v3266 = vadd.f32 %v3251, %v3265
        %s3267 = sld [smem:[#allocation15 + $0xc9]]
        %s3268 = sld [smem:[#allocation15 + $0xd9]]
        %s3269 = sld [smem:[#allocation15 + $0x169]]
        %s3270 = sld [smem:[#allocation15 + $0x1e9]]
        %v3271 = vstv %s3267
        %v3272 = vmul.f32 %v3129, %v3271
        %v3273 = vstv %s3268
        %v3274 = vmul.f32 %v681, %v3273
        %v3275 = vadd.f32 %v3272, %v3274
        %v3276 = vstv %s3269
        %v3277 = vadd.f32 %v3275, %v3276
        %v3278 = vmax.f32 %v3277, 0.0
        %v3279 = vstv %s3270
        %v3280 = vmul.f32 %v3278, %v3279
        %v3281 = vadd.f32 %v3266, %v3280
        %s3282 = sld [smem:[#allocation15 + $0xca]]
        %s3283 = sld [smem:[#allocation15 + $0xda]]
        %s3284 = sld [smem:[#allocation15 + $0x16a]]
        %s3285 = sld [smem:[#allocation15 + $0x1ea]]
        %v3286 = vstv %s3282
        %v3287 = vmul.f32 %v3129, %v3286
        %v3288 = vstv %s3283
        %v3289 = vmul.f32 %v681, %v3288
        %v3290 = vadd.f32 %v3287, %v3289
        %v3291 = vstv %s3284
        %v3292 = vadd.f32 %v3290, %v3291
        %v3293 = vmax.f32 %v3292, 0.0
        %v3294 = vstv %s3285
        %v3295 = vmul.f32 %v3293, %v3294
        %v3296 = vadd.f32 %v3281, %v3295
        %s3297 = sld [smem:[#allocation15 + $0xcb]]
        %s3298 = sld [smem:[#allocation15 + $0xdb]]
        %s3299 = sld [smem:[#allocation15 + $0x16b]]
        %s3300 = sld [smem:[#allocation15 + $0x1eb]]
        %v3301 = vstv %s3297
        %v3302 = vmul.f32 %v3129, %v3301
        %v3303 = vstv %s3298
        %v3304 = vmul.f32 %v681, %v3303
        %v3305 = vadd.f32 %v3302, %v3304
        %v3306 = vstv %s3299
        %v3307 = vadd.f32 %v3305, %v3306
        %v3308 = vmax.f32 %v3307, 0.0
        %v3309 = vstv %s3300
        %v3310 = vmul.f32 %v3308, %v3309
        %v3311 = vadd.f32 %v3296, %v3310
        %s3312 = sld [smem:[#allocation15 + $0xcc]]
        %s3313 = sld [smem:[#allocation15 + $0xdc]]
        %s3314 = sld [smem:[#allocation15 + $0x16c]]
        %s3315 = sld [smem:[#allocation15 + $0x1ec]]
        %v3316 = vstv %s3312
        %v3317 = vmul.f32 %v3129, %v3316
        %v3318 = vstv %s3313
        %v3319 = vmul.f32 %v681, %v3318
        %v3320 = vadd.f32 %v3317, %v3319
        %v3321 = vstv %s3314
        %v3322 = vadd.f32 %v3320, %v3321
        %v3323 = vmax.f32 %v3322, 0.0
        %v3324 = vstv %s3315
        %v3325 = vmul.f32 %v3323, %v3324
        %v3326 = vadd.f32 %v3311, %v3325
        %s3327 = sld [smem:[#allocation15 + $0xcd]]
        %s3328 = sld [smem:[#allocation15 + $0xdd]]
        %s3329 = sld [smem:[#allocation15 + $0x16d]]
        %s3330 = sld [smem:[#allocation15 + $0x1ed]]
        %v3331 = vstv %s3327
        %v3332 = vmul.f32 %v3129, %v3331
        %v3333 = vstv %s3328
        %v3334 = vmul.f32 %v681, %v3333
        %v3335 = vadd.f32 %v3332, %v3334
        %v3336 = vstv %s3329
        %v3337 = vadd.f32 %v3335, %v3336
        %v3338 = vmax.f32 %v3337, 0.0
        %v3339 = vstv %s3330
        %v3340 = vmul.f32 %v3338, %v3339
        %v3341 = vadd.f32 %v3326, %v3340
        %s3342 = sld [smem:[#allocation15 + $0xce]]
        %s3343 = sld [smem:[#allocation15 + $0xde]]
        %s3344 = sld [smem:[#allocation15 + $0x16e]]
        %s3345 = sld [smem:[#allocation15 + $0x1ee]]
        %v3346 = vstv %s3342
        %v3347 = vmul.f32 %v3129, %v3346
        %v3348 = vstv %s3343
        %v3349 = vmul.f32 %v681, %v3348
        %v3350 = vadd.f32 %v3347, %v3349
        %v3351 = vstv %s3344
        %v3352 = vadd.f32 %v3350, %v3351
        %v3353 = vmax.f32 %v3352, 0.0
        %v3354 = vstv %s3345
        %v3355 = vmul.f32 %v3353, %v3354
        %v3356 = vadd.f32 %v3341, %v3355
        %s3357 = sld [smem:[#allocation15 + $0xcf]]
        %s3358 = sld [smem:[#allocation15 + $0xdf]]
        %s3359 = sld [smem:[#allocation15 + $0x16f]]
        %s3360 = sld [smem:[#allocation15 + $0x1ef]]
        %v3361 = vstv %s3357
        %v3362 = vmul.f32 %v3129, %v3361
        %v3363 = vstv %s3358
        %v3364 = vmul.f32 %v681, %v3363
        %v3365 = vadd.f32 %v3362, %v3364
        %v3366 = vstv %s3359
        %v3367 = vadd.f32 %v3365, %v3366
        %v3368 = vmax.f32 %v3367, 0.0
        %v3369 = vstv %s3360
        %v3370 = vmul.f32 %v3368, %v3369
        %v3371 = vadd.f32 %v3356, %v3370
        %s3372 = sld [smem:[#allocation15 + $0x206]]
        %v3373 = vstv %s3372
        %v3374 = vadd.f32 %v3371, %v3373
        %v3375 = vadd.f32 %v2394, %v3374
        %v3376 = vsel %vm1239, %v3374, -inf
        %v3377 = vrot.slane %v3376, 4
        %v3378 = vmax.f32 %v3376, %v3377
        %v3379 = vrot.slane %v3378, 2
        %v3380 = vmax.f32 %v3378, %v3379
        %v3381 = vrot.slane %v3380, 1
        %v3382 = vmax.f32 %v3380, %v3381
        %v3383 = vsub.f32 %v3374, %v3382
        %v3384 = vmul.f32 %v3383, 1.442695
        %v3385 = vpow.pop %v3384
        %v3386 = vsel %vm1239, %v3385, 0.0
        %v3387 = vrot.slane %v3386, 4
        %v3388 = vadd.f32 %v3386, %v3387
        %v3389 = vrot.slane %v3388, 2
        %v3390 = vadd.f32 %v3388, %v3389
        %v3391 = vrot.slane %v3390, 1
        %v3392 = vadd.f32 %v3390, %v3391
        %v3393 = vrcp.pop %v3392
        %v3394 = vmul.f32 %v3385, %v3393
        %3395 = vxpose.xlu0.b32.start [1/16] %v3394, 128
        %3396 = vxpose.xlu0.b32.cont [2/16] 0.0, 128
        %3397 = vxpose.xlu0.b32.cont [3/16] 0.0, 128
        %3398 = vxpose.xlu0.b32.cont [4/16] 0.0, 128
        %3399 = vxpose.xlu0.b32.cont [5/16] 0.0, 128
        %3400 = vxpose.xlu0.b32.cont [6/16] 0.0, 128
        %3401 = vxpose.xlu0.b32.cont [7/16] 0.0, 128
        %3402 = vxpose.xlu0.b32.cont [8/16] 0.0, 128
        %3403 = vxpose.xlu0.b32.cont [9/16] 0.0, 128
        %3404 = vxpose.xlu0.b32.cont [10/16] 0.0, 128
        %3405 = vxpose.xlu0.b32.cont [11/16] 0.0, 128
        %3406 = vxpose.xlu0.b32.cont [12/16] 0.0, 128
        %3407 = vxpose.xlu0.b32.cont [13/16] 0.0, 128
        %3408 = vxpose.xlu0.b32.cont [14/16] 0.0, 128
        %3409 = vxpose.xlu0.b32.cont [15/16] 0.0, 128
        %3410 = vxpose.xlu0.b32.end [16/16] 0.0, 128
        %v3411 = vpop.trf.xlu0
        %v3412 = vpop.trf.xlu0
        %v3413 = vpop.trf.xlu0
        %v3414 = vpop.trf.xlu0
        %v3415 = vpop.trf.xlu0
        %v3416 = vpop.trf.xlu0
        %v3417 = vpop.trf.xlu0
        %v3418 = vpop.trf.xlu0
        %v3419 = vpop.trf.xlu0
        %v3420 = vpop.trf.xlu0
        %v3421 = vpop.trf.xlu0
        %v3422 = vpop.trf.xlu0
        %v3423 = vpop.trf.xlu0
        %v3424 = vpop.trf.xlu0
        %v3425 = vpop.trf.xlu0
        %v3426 = vpop.trf.xlu0
        %3427 = vrot.lane.b32.xlu0 %v829, 64
        %v3428 = vpop.permute.xlu0 %3427
        %v3431 = vsel %vm2450, %v3411, 0
        %v3434 = vsel %vm2450, %v3412, 0
        %3436 = vmatprep.subr.mxu0 0.0
        %3437 = vmatpush1.msra.mxu0 0.0
        %3438 = vmatprep.subr.mxu0 0.0
        %3439 = vmatpush1.msra.mxu0 0.0
        %3440 = vmatprep.subr.mxu0 0.0
        %3441 = vmatpush1.msra.mxu0 0.0
        %3442 = vmatprep.subr.mxu0 0.0
        %3443 = vmatpush1.msra.mxu0 0.0
        %3444 = vmatprep.subr.mxu0 0.0
        %3445 = vmatpush1.msra.mxu0 0.0
        %3446 = vmatprep.subr.mxu0 0.0
        %3447 = vmatpush1.msra.mxu0 0.0
        %3448 = vmatprep.subr.mxu0 0.0
        %3449 = vmatpush1.msra.mxu0 0.0
        %3450 = vmatprep.subr.mxu0 0.0
        %3451 = vmatpush1.msra.mxu0 0.0
        %3452 = vmatprep.subr.mxu0 0.0
        %3453 = vmatpush1.msra.mxu0 0.0
        %3454 = vmatprep.subr.mxu0 0.0
        %3455 = vmatpush1.msra.mxu0 0.0
        %3456 = vmatprep.subr.mxu0 0.0
        %3457 = vmatpush1.msra.mxu0 0.0
        %3458 = vmatprep.subr.mxu0 0.0
        %3459 = vmatpush1.msra.mxu0 0.0
        %3460 = vmatprep.subr.mxu0 0.0
        %3461 = vmatpush1.msra.mxu0 0.0
        %3462 = vmatprep.subr.mxu0 0.0
        %3463 = vmatpush1.msra.mxu0 0.0
        %3464 = vmatprep.subr.mxu0 0.0
        %3465 = vmatpush1.msra.mxu0 0.0
        %3466 = vmatprep.subr.mxu0 0.0
        %3467 = vmatpush1.msra.mxu0 %v3428
        %3468 = vmatprep.subr.mxu0 0.0
        %3469 = vmatpush2.msra.mxu0 0.0
        %3470 = vmatprep.subr.mxu0 0.0
        %3471 = vmatpush2.msra.mxu0 0.0
        %3472 = vmatprep.subr.mxu0 0.0
        %3473 = vmatpush2.msra.mxu0 0.0
        %3474 = vmatprep.subr.mxu0 0.0
        %3475 = vmatpush2.msra.mxu0 0.0
        %3476 = vmatprep.subr.mxu0 0.0
        %3477 = vmatpush2.msra.mxu0 0.0
        %3478 = vmatprep.subr.mxu0 0.0
        %3479 = vmatpush2.msra.mxu0 0.0
        %3480 = vmatprep.subr.mxu0 0.0
        %3481 = vmatpush2.msra.mxu0 0.0
        %3482 = vmatprep.subr.mxu0 0.0
        %3483 = vmatpush2.msra.mxu0 0.0
        %3484 = vmatprep.subr.mxu0 0.0
        %3485 = vmatpush2.msra.mxu0 0.0
        %3486 = vmatprep.subr.mxu0 0.0
        %3487 = vmatpush2.msra.mxu0 0.0
        %3488 = vmatprep.subr.mxu0 0.0
        %3489 = vmatpush2.msra.mxu0 0.0
        %3490 = vmatprep.subr.mxu0 0.0
        %3491 = vmatpush2.msra.mxu0 0.0
        %3492 = vmatprep.subr.mxu0 0.0
        %3493 = vmatpush2.msra.mxu0 0.0
        %3494 = vmatprep.subr.mxu0 0.0
        %3495 = vmatpush2.msra.mxu0 0.0
        %3496 = vmatprep.subr.mxu0 0.0
        %3497 = vmatpush2.msra.mxu0 0.0
        %3498 = vmatprep.subr.mxu0 0.0
        %3499 = vmatpush2.msra.mxu0 0.0
        %3500 = vmatprep.mubr.f32.mxu0 0.0
        %3501 = vmatmul.mubr.f32.gmra.mxu0 %v3431
        %v3502 = vpop.f32.mrf.mxu0
        %v3503 = vadd.f32 0.0, %v3502
        %v3504 = vpop.f32.mrf.mxu0
        %3505 = vmatprep.mubr.f32.mxu0 0.0
        %3506 = vmatmul.mubr.f32.gmra.mxu0 %v3434
        %v3507 = vpop.f32.mrf.mxu0
        %v3508 = vadd.f32 0.0, %v3507
        %v3509 = vpop.f32.mrf.mxu0
        %3510 = vdwg.mxu0
        %v3511 = vadd.f32 %v2637, %v3503
        %v3512 = vadd.f32 %v2642, %v3508
        %3513 = vrot.lane.b32.xlu0 %v827, 32
        %v3514 = vpop.permute.xlu0 %3513
        %v3515 = vsel %vm684, %v3514, 0
        %3517 = vmatprep.subr.mxu0 0.0
        %3518 = vmatpush1.xpose.msra.mxu0 0.0
        %3519 = vmatprep.subr.mxu0 0.0
        %3520 = vmatpush1.xpose.msra.mxu0 0.0
        %3521 = vmatprep.subr.mxu0 0.0
        %3522 = vmatpush1.xpose.msra.mxu0 0.0
        %3523 = vmatprep.subr.mxu0 0.0
        %3524 = vmatpush1.xpose.msra.mxu0 0.0
        %3525 = vmatprep.subr.mxu0 0.0
        %3526 = vmatpush1.xpose.msra.mxu0 0.0
        %3527 = vmatprep.subr.mxu0 0.0
        %3528 = vmatpush1.xpose.msra.mxu0 0.0
        %3529 = vmatprep.subr.mxu0 0.0
        %3530 = vmatpush1.xpose.msra.mxu0 0.0
        %3531 = vmatprep.subr.mxu0 0.0
        %3532 = vmatpush1.xpose.msra.mxu0 0.0
        %3533 = vmatprep.subr.mxu0 0.0
        %3534 = vmatpush1.xpose.msra.mxu0 0.0
        %3535 = vmatprep.subr.mxu0 0.0
        %3536 = vmatpush1.xpose.msra.mxu0 0.0
        %3537 = vmatprep.subr.mxu0 0.0
        %3538 = vmatpush1.xpose.msra.mxu0 0.0
        %3539 = vmatprep.subr.mxu0 0.0
        %3540 = vmatpush1.xpose.msra.mxu0 0.0
        %3541 = vmatprep.subr.mxu0 0.0
        %3542 = vmatpush1.xpose.msra.mxu0 0.0
        %3543 = vmatprep.subr.mxu0 0.0
        %3544 = vmatpush1.xpose.msra.mxu0 0.0
        %3545 = vmatprep.subr.mxu0 0.0
        %3546 = vmatpush1.xpose.msra.mxu0 %v843
        %3547 = vmatprep.subr.mxu0 0.0
        %3548 = vmatpush1.xpose.msra.mxu0 %v840
        %3549 = vmatprep.subr.mxu0 0.0
        %3550 = vmatpush2.xpose.msra.mxu0 0.0
        %3551 = vmatprep.subr.mxu0 0.0
        %3552 = vmatpush2.xpose.msra.mxu0 0.0
        %3553 = vmatprep.subr.mxu0 0.0
        %3554 = vmatpush2.xpose.msra.mxu0 0.0
        %3555 = vmatprep.subr.mxu0 0.0
        %3556 = vmatpush2.xpose.msra.mxu0 0.0
        %3557 = vmatprep.subr.mxu0 0.0
        %3558 = vmatpush2.xpose.msra.mxu0 0.0
        %3559 = vmatprep.subr.mxu0 0.0
        %3560 = vmatpush2.xpose.msra.mxu0 0.0
        %3561 = vmatprep.subr.mxu0 0.0
        %3562 = vmatpush2.xpose.msra.mxu0 0.0
        %3563 = vmatprep.subr.mxu0 0.0
        %3564 = vmatpush2.xpose.msra.mxu0 0.0
        %3565 = vmatprep.subr.mxu0 0.0
        %3566 = vmatpush2.xpose.msra.mxu0 0.0
        %3567 = vmatprep.subr.mxu0 0.0
        %3568 = vmatpush2.xpose.msra.mxu0 0.0
        %3569 = vmatprep.subr.mxu0 0.0
        %3570 = vmatpush2.xpose.msra.mxu0 0.0
        %3571 = vmatprep.subr.mxu0 0.0
        %3572 = vmatpush2.xpose.msra.mxu0 0.0
        %3573 = vmatprep.subr.mxu0 0.0
        %3574 = vmatpush2.xpose.msra.mxu0 0.0
        %3575 = vmatprep.subr.mxu0 0.0
        %3576 = vmatpush2.xpose.msra.mxu0 0.0
        %3577 = vmatprep.subr.mxu0 0.0
        %3578 = vmatpush2.xpose.msra.mxu0 0.0
        %3579 = vmatprep.subr.mxu0 0.0
        %3580 = vmatpush2.xpose.msra.mxu0 0.0
        %3581 = vmatprep.mubr.f32.mxu0 0.0
        %3582 = vmatmul.mubr.f32.gmra.mxu0 %v3515
        %v3583 = vpop.f32.mrf.mxu0
        %v3584 = vadd.f32 0.0, %v3583
        %v3585 = vpop.f32.mrf.mxu0
        %3586 = vdwg.mxu0
        %s3587 = sld [smem:[#allocation15 + $0x60]]
        %s3588 = sld [smem:[#allocation15 + $0x70]]
        %s3589 = sld [smem:[#allocation15 + $0x130]]
        %s3590 = sld [smem:[#allocation15 + $0x1b0]]
        %v3591 = vstv %s3587
        %v3592 = vmul.f32 %v3584, %v3591
        %v3593 = vstv %s3588
        %v3594 = vmul.f32 %v681, %v3593
        %v3595 = vadd.f32 %v3592, %v3594
        %v3596 = vstv %s3589
        %v3597 = vadd.f32 %v3595, %v3596
        %v3598 = vmax.f32 %v3597, 0.0
        %v3599 = vstv %s3590
        %v3600 = vmul.f32 %v3598, %v3599
        %v3601 = vadd.f32 %v3600, 0.0
        %s3602 = sld [smem:[#allocation15 + $0x61]]
        %s3603 = sld [smem:[#allocation15 + $0x71]]
        %s3604 = sld [smem:[#allocation15 + $0x131]]
        %s3605 = sld [smem:[#allocation15 + $0x1b1]]
        %v3606 = vstv %s3602
        %v3607 = vmul.f32 %v3584, %v3606
        %v3608 = vstv %s3603
        %v3609 = vmul.f32 %v681, %v3608
        %v3610 = vadd.f32 %v3607, %v3609
        %v3611 = vstv %s3604
        %v3612 = vadd.f32 %v3610, %v3611
        %v3613 = vmax.f32 %v3612, 0.0
        %v3614 = vstv %s3605
        %v3615 = vmul.f32 %v3613, %v3614
        %v3616 = vadd.f32 %v3601, %v3615
        %s3617 = sld [smem:[#allocation15 + $0x62]]
        %s3618 = sld [smem:[#allocation15 + $0x72]]
        %s3619 = sld [smem:[#allocation15 + $0x132]]
        %s3620 = sld [smem:[#allocation15 + $0x1b2]]
        %v3621 = vstv %s3617
        %v3622 = vmul.f32 %v3584, %v3621
        %v3623 = vstv %s3618
        %v3624 = vmul.f32 %v681, %v3623
        %v3625 = vadd.f32 %v3622, %v3624
        %v3626 = vstv %s3619
        %v3627 = vadd.f32 %v3625, %v3626
        %v3628 = vmax.f32 %v3627, 0.0
        %v3629 = vstv %s3620
        %v3630 = vmul.f32 %v3628, %v3629
        %v3631 = vadd.f32 %v3616, %v3630
        %s3632 = sld [smem:[#allocation15 + $0x63]]
        %s3633 = sld [smem:[#allocation15 + $0x73]]
        %s3634 = sld [smem:[#allocation15 + $0x133]]
        %s3635 = sld [smem:[#allocation15 + $0x1b3]]
        %v3636 = vstv %s3632
        %v3637 = vmul.f32 %v3584, %v3636
        %v3638 = vstv %s3633
        %v3639 = vmul.f32 %v681, %v3638
        %v3640 = vadd.f32 %v3637, %v3639
        %v3641 = vstv %s3634
        %v3642 = vadd.f32 %v3640, %v3641
        %v3643 = vmax.f32 %v3642, 0.0
        %v3644 = vstv %s3635
        %v3645 = vmul.f32 %v3643, %v3644
        %v3646 = vadd.f32 %v3631, %v3645
        %s3647 = sld [smem:[#allocation15 + $0x64]]
        %s3648 = sld [smem:[#allocation15 + $0x74]]
        %s3649 = sld [smem:[#allocation15 + $0x134]]
        %s3650 = sld [smem:[#allocation15 + $0x1b4]]
        %v3651 = vstv %s3647
        %v3652 = vmul.f32 %v3584, %v3651
        %v3653 = vstv %s3648
        %v3654 = vmul.f32 %v681, %v3653
        %v3655 = vadd.f32 %v3652, %v3654
        %v3656 = vstv %s3649
        %v3657 = vadd.f32 %v3655, %v3656
        %v3658 = vmax.f32 %v3657, 0.0
        %v3659 = vstv %s3650
        %v3660 = vmul.f32 %v3658, %v3659
        %v3661 = vadd.f32 %v3646, %v3660
        %s3662 = sld [smem:[#allocation15 + $0x65]]
        %s3663 = sld [smem:[#allocation15 + $0x75]]
        %s3664 = sld [smem:[#allocation15 + $0x135]]
        %s3665 = sld [smem:[#allocation15 + $0x1b5]]
        %v3666 = vstv %s3662
        %v3667 = vmul.f32 %v3584, %v3666
        %v3668 = vstv %s3663
        %v3669 = vmul.f32 %v681, %v3668
        %v3670 = vadd.f32 %v3667, %v3669
        %v3671 = vstv %s3664
        %v3672 = vadd.f32 %v3670, %v3671
        %v3673 = vmax.f32 %v3672, 0.0
        %v3674 = vstv %s3665
        %v3675 = vmul.f32 %v3673, %v3674
        %v3676 = vadd.f32 %v3661, %v3675
        %s3677 = sld [smem:[#allocation15 + $0x66]]
        %s3678 = sld [smem:[#allocation15 + $0x76]]
        %s3679 = sld [smem:[#allocation15 + $0x136]]
        %s3680 = sld [smem:[#allocation15 + $0x1b6]]
        %v3681 = vstv %s3677
        %v3682 = vmul.f32 %v3584, %v3681
        %v3683 = vstv %s3678
        %v3684 = vmul.f32 %v681, %v3683
        %v3685 = vadd.f32 %v3682, %v3684
        %v3686 = vstv %s3679
        %v3687 = vadd.f32 %v3685, %v3686
        %v3688 = vmax.f32 %v3687, 0.0
        %v3689 = vstv %s3680
        %v3690 = vmul.f32 %v3688, %v3689
        %v3691 = vadd.f32 %v3676, %v3690
        %s3692 = sld [smem:[#allocation15 + $0x67]]
        %s3693 = sld [smem:[#allocation15 + $0x77]]
        %s3694 = sld [smem:[#allocation15 + $0x137]]
        %s3695 = sld [smem:[#allocation15 + $0x1b7]]
        %v3696 = vstv %s3692
        %v3697 = vmul.f32 %v3584, %v3696
        %v3698 = vstv %s3693
        %v3699 = vmul.f32 %v681, %v3698
        %v3700 = vadd.f32 %v3697, %v3699
        %v3701 = vstv %s3694
        %v3702 = vadd.f32 %v3700, %v3701
        %v3703 = vmax.f32 %v3702, 0.0
        %v3704 = vstv %s3695
        %v3705 = vmul.f32 %v3703, %v3704
        %v3706 = vadd.f32 %v3691, %v3705
        %s3707 = sld [smem:[#allocation15 + $0x68]]
        %s3708 = sld [smem:[#allocation15 + $0x78]]
        %s3709 = sld [smem:[#allocation15 + $0x138]]
        %s3710 = sld [smem:[#allocation15 + $0x1b8]]
        %v3711 = vstv %s3707
        %v3712 = vmul.f32 %v3584, %v3711
        %v3713 = vstv %s3708
        %v3714 = vmul.f32 %v681, %v3713
        %v3715 = vadd.f32 %v3712, %v3714
        %v3716 = vstv %s3709
        %v3717 = vadd.f32 %v3715, %v3716
        %v3718 = vmax.f32 %v3717, 0.0
        %v3719 = vstv %s3710
        %v3720 = vmul.f32 %v3718, %v3719
        %v3721 = vadd.f32 %v3706, %v3720
        %s3722 = sld [smem:[#allocation15 + $0x69]]
        %s3723 = sld [smem:[#allocation15 + $0x79]]
        %s3724 = sld [smem:[#allocation15 + $0x139]]
        %s3725 = sld [smem:[#allocation15 + $0x1b9]]
        %v3726 = vstv %s3722
        %v3727 = vmul.f32 %v3584, %v3726
        %v3728 = vstv %s3723
        %v3729 = vmul.f32 %v681, %v3728
        %v3730 = vadd.f32 %v3727, %v3729
        %v3731 = vstv %s3724
        %v3732 = vadd.f32 %v3730, %v3731
        %v3733 = vmax.f32 %v3732, 0.0
        %v3734 = vstv %s3725
        %v3735 = vmul.f32 %v3733, %v3734
        %v3736 = vadd.f32 %v3721, %v3735
        %s3737 = sld [smem:[#allocation15 + $0x6a]]
        %s3738 = sld [smem:[#allocation15 + $0x7a]]
        %s3739 = sld [smem:[#allocation15 + $0x13a]]
        %s3740 = sld [smem:[#allocation15 + $0x1ba]]
        %v3741 = vstv %s3737
        %v3742 = vmul.f32 %v3584, %v3741
        %v3743 = vstv %s3738
        %v3744 = vmul.f32 %v681, %v3743
        %v3745 = vadd.f32 %v3742, %v3744
        %v3746 = vstv %s3739
        %v3747 = vadd.f32 %v3745, %v3746
        %v3748 = vmax.f32 %v3747, 0.0
        %v3749 = vstv %s3740
        %v3750 = vmul.f32 %v3748, %v3749
        %v3751 = vadd.f32 %v3736, %v3750
        %s3752 = sld [smem:[#allocation15 + $0x6b]]
        %s3753 = sld [smem:[#allocation15 + $0x7b]]
        %s3754 = sld [smem:[#allocation15 + $0x13b]]
        %s3755 = sld [smem:[#allocation15 + $0x1bb]]
        %v3756 = vstv %s3752
        %v3757 = vmul.f32 %v3584, %v3756
        %v3758 = vstv %s3753
        %v3759 = vmul.f32 %v681, %v3758
        %v3760 = vadd.f32 %v3757, %v3759
        %v3761 = vstv %s3754
        %v3762 = vadd.f32 %v3760, %v3761
        %v3763 = vmax.f32 %v3762, 0.0
        %v3764 = vstv %s3755
        %v3765 = vmul.f32 %v3763, %v3764
        %v3766 = vadd.f32 %v3751, %v3765
        %s3767 = sld [smem:[#allocation15 + $0x6c]]
        %s3768 = sld [smem:[#allocation15 + $0x7c]]
        %s3769 = sld [smem:[#allocation15 + $0x13c]]
        %s3770 = sld [smem:[#allocation15 + $0x1bc]]
        %v3771 = vstv %s3767
        %v3772 = vmul.f32 %v3584, %v3771
        %v3773 = vstv %s3768
        %v3774 = vmul.f32 %v681, %v3773
        %v3775 = vadd.f32 %v3772, %v3774
        %v3776 = vstv %s3769
        %v3777 = vadd.f32 %v3775, %v3776
        %v3778 = vmax.f32 %v3777, 0.0
        %v3779 = vstv %s3770
        %v3780 = vmul.f32 %v3778, %v3779
        %v3781 = vadd.f32 %v3766, %v3780
        %s3782 = sld [smem:[#allocation15 + $0x6d]]
        %s3783 = sld [smem:[#allocation15 + $0x7d]]
        %s3784 = sld [smem:[#allocation15 + $0x13d]]
        %s3785 = sld [smem:[#allocation15 + $0x1bd]]
        %v3786 = vstv %s3782
        %v3787 = vmul.f32 %v3584, %v3786
        %v3788 = vstv %s3783
        %v3789 = vmul.f32 %v681, %v3788
        %v3790 = vadd.f32 %v3787, %v3789
        %v3791 = vstv %s3784
        %v3792 = vadd.f32 %v3790, %v3791
        %v3793 = vmax.f32 %v3792, 0.0
        %v3794 = vstv %s3785
        %v3795 = vmul.f32 %v3793, %v3794
        %v3796 = vadd.f32 %v3781, %v3795
        %s3797 = sld [smem:[#allocation15 + $0x6e]]
        %s3798 = sld [smem:[#allocation15 + $0x7e]]
        %s3799 = sld [smem:[#allocation15 + $0x13e]]
        %s3800 = sld [smem:[#allocation15 + $0x1be]]
        %v3801 = vstv %s3797
        %v3802 = vmul.f32 %v3584, %v3801
        %v3803 = vstv %s3798
        %v3804 = vmul.f32 %v681, %v3803
        %v3805 = vadd.f32 %v3802, %v3804
        %v3806 = vstv %s3799
        %v3807 = vadd.f32 %v3805, %v3806
        %v3808 = vmax.f32 %v3807, 0.0
        %v3809 = vstv %s3800
        %v3810 = vmul.f32 %v3808, %v3809
        %v3811 = vadd.f32 %v3796, %v3810
        %s3812 = sld [smem:[#allocation15 + $0x6f]]
        %s3813 = sld [smem:[#allocation15 + $0x7f]]
        %s3814 = sld [smem:[#allocation15 + $0x13f]]
        %s3815 = sld [smem:[#allocation15 + $0x1bf]]
        %v3816 = vstv %s3812
        %v3817 = vmul.f32 %v3584, %v3816
        %v3818 = vstv %s3813
        %v3819 = vmul.f32 %v681, %v3818
        %v3820 = vadd.f32 %v3817, %v3819
        %v3821 = vstv %s3814
        %v3822 = vadd.f32 %v3820, %v3821
        %v3823 = vmax.f32 %v3822, 0.0
        %v3824 = vstv %s3815
        %v3825 = vmul.f32 %v3823, %v3824
        %v3826 = vadd.f32 %v3811, %v3825
        %s3827 = sld [smem:[#allocation15 + $0x203]]
        %v3828 = vstv %s3827
        %v3829 = vadd.f32 %v3826, %v3828
        %v3830 = vadd.f32 %v2962, %v3829
        %v3831 = vsel %vm1239, %v3829, -inf
        %3832 = vmax.xlane.f32.xlu0 %v3831
        %v3833 = vpop.xlane.xlu0 %3832
        %v3834 = vsub.f32 %v3829, %v3833
        %v3835 = vmul.f32 %v3834, 1.442695
        %v3836 = vpow.pop %v3835
        %v3837 = vsel %vm1239, %v3836, 0.0
        %3838 = vadd.xlane.f32.xlu0 %v3837
        %v3839 = vpop.xlane.xlu0 %3838
        %v3840 = vrcp.pop %v3839
        %v3841 = vmul.f32 %v3836, %v3840
        %3842 = vrot.lane.b32.xlu0 %v914, 32
        %v3843 = vpop.permute.xlu0 %3842
        %3844 = vrot.lane.b32.xlu0 %v920, 32
        %v3845 = vpop.permute.xlu0 %3844
        %v3849 = vsel %vm1239, %v3841, 0
        %3851 = vmatprep.subr.mxu0 0.0
        %3852 = vmatpush1.msra.mxu0 0.0
        %3853 = vmatprep.subr.mxu0 0.0
        %3854 = vmatpush1.msra.mxu0 0.0
        %3855 = vmatprep.subr.mxu0 0.0
        %3856 = vmatpush1.msra.mxu0 0.0
        %3857 = vmatprep.subr.mxu0 0.0
        %3858 = vmatpush1.msra.mxu0 0.0
        %3859 = vmatprep.subr.mxu0 0.0
        %3860 = vmatpush1.msra.mxu0 0.0
        %3861 = vmatprep.subr.mxu0 0.0
        %3862 = vmatpush1.msra.mxu0 0.0
        %3863 = vmatprep.subr.mxu0 0.0
        %3864 = vmatpush1.msra.mxu0 0.0
        %3865 = vmatprep.subr.mxu0 0.0
        %3866 = vmatpush1.msra.mxu0 0.0
        %3867 = vmatprep.subr.mxu0 0.0
        %3868 = vmatpush1.msra.mxu0 0.0
        %3869 = vmatprep.subr.mxu0 0.0
        %3870 = vmatpush1.msra.mxu0 0.0
        %3871 = vmatprep.subr.mxu0 0.0
        %3872 = vmatpush1.msra.mxu0 0.0
        %3873 = vmatprep.subr.mxu0 0.0
        %3874 = vmatpush1.msra.mxu0 0.0
        %3875 = vmatprep.subr.mxu0 0.0
        %3876 = vmatpush1.msra.mxu0 0.0
        %3877 = vmatprep.subr.mxu0 0.0
        %3878 = vmatpush1.msra.mxu0 0.0
        %3879 = vmatprep.subr.mxu0 0.0
        %3880 = vmatpush1.msra.mxu0 %v3845
        %3881 = vmatprep.subr.mxu0 0.0
        %3882 = vmatpush1.msra.mxu0 %v3843
        %3883 = vmatprep.subr.mxu0 0.0
        %3884 = vmatpush2.msra.mxu0 0.0
        %3885 = vmatprep.subr.mxu0 0.0
        %3886 = vmatpush2.msra.mxu0 0.0
        %3887 = vmatprep.subr.mxu0 0.0
        %3888 = vmatpush2.msra.mxu0 0.0
        %3889 = vmatprep.subr.mxu0 0.0
        %3890 = vmatpush2.msra.mxu0 0.0
        %3891 = vmatprep.subr.mxu0 0.0
        %3892 = vmatpush2.msra.mxu0 0.0
        %3893 = vmatprep.subr.mxu0 0.0
        %3894 = vmatpush2.msra.mxu0 0.0
        %3895 = vmatprep.subr.mxu0 0.0
        %3896 = vmatpush2.msra.mxu0 0.0
        %3897 = vmatprep.subr.mxu0 0.0
        %3898 = vmatpush2.msra.mxu0 0.0
        %3899 = vmatprep.subr.mxu0 0.0
        %3900 = vmatpush2.msra.mxu0 0.0
        %3901 = vmatprep.subr.mxu0 0.0
        %3902 = vmatpush2.msra.mxu0 0.0
        %3903 = vmatprep.subr.mxu0 0.0
        %3904 = vmatpush2.msra.mxu0 0.0
        %3905 = vmatprep.subr.mxu0 0.0
        %3906 = vmatpush2.msra.mxu0 0.0
        %3907 = vmatprep.subr.mxu0 0.0
        %3908 = vmatpush2.msra.mxu0 0.0
        %3909 = vmatprep.subr.mxu0 0.0
        %3910 = vmatpush2.msra.mxu0 0.0
        %3911 = vmatprep.subr.mxu0 0.0
        %3912 = vmatpush2.msra.mxu0 0.0
        %3913 = vmatprep.subr.mxu0 0.0
        %3914 = vmatpush2.msra.mxu0 0.0
        %3915 = vmatprep.mubr.f32.mxu0 0.0
        %3916 = vmatmul.mubr.f32.gmra.mxu0 %v3849
        %v3917 = vpop.f32.mrf.mxu0
        %v3918 = vadd.f32 0.0, %v3917
        %v3919 = vpop.f32.mrf.mxu0
        %3920 = vdwg.mxu0
        %v3921 = vadd.f32 %v3053, %v3918
        %3922 = vrot.lane.b32.xlu0 %v912, 32
        %v3923 = vpop.permute.xlu0 %3922
        %3924 = vrot.lane.b32.xlu0 %v918, 32
        %v3925 = vpop.permute.xlu0 %3924
        %v3926 = vsel %vm684, %v3923, 0
        %v3928 = vsel %vm684, %v3925, 0
        %3930 = vmatprep.subr.mxu0 0.0
        %3931 = vmatpush1.xpose.msra.mxu0 0.0
        %3932 = vmatprep.subr.mxu0 0.0
        %3933 = vmatpush1.xpose.msra.mxu0 0.0
        %3934 = vmatprep.subr.mxu0 0.0
        %3935 = vmatpush1.xpose.msra.mxu0 0.0
        %3936 = vmatprep.subr.mxu0 0.0
        %3937 = vmatpush1.xpose.msra.mxu0 0.0
        %3938 = vmatprep.subr.mxu0 0.0
        %3939 = vmatpush1.xpose.msra.mxu0 0.0
        %3940 = vmatprep.subr.mxu0 0.0
        %3941 = vmatpush1.xpose.msra.mxu0 0.0
        %3942 = vmatprep.subr.mxu0 0.0
        %3943 = vmatpush1.xpose.msra.mxu0 0.0
        %3944 = vmatprep.subr.mxu0 0.0
        %3945 = vmatpush1.xpose.msra.mxu0 0.0
        %3946 = vmatprep.subr.mxu0 0.0
        %3947 = vmatpush1.xpose.msra.mxu0 0.0
        %3948 = vmatprep.subr.mxu0 0.0
        %3949 = vmatpush1.xpose.msra.mxu0 0.0
        %3950 = vmatprep.subr.mxu0 0.0
        %3951 = vmatpush1.xpose.msra.mxu0 0.0
        %3952 = vmatprep.subr.mxu0 0.0
        %3953 = vmatpush1.xpose.msra.mxu0 0.0
        %3954 = vmatprep.subr.mxu0 0.0
        %3955 = vmatpush1.xpose.msra.mxu0 0.0
        %3956 = vmatprep.subr.mxu0 0.0
        %3957 = vmatpush1.xpose.msra.mxu0 0.0
        %3958 = vmatprep.subr.mxu0 0.0
        %3959 = vmatpush1.xpose.msra.mxu0 %v3928
        %3960 = vmatprep.subr.mxu0 0.0
        %3961 = vmatpush1.xpose.msra.mxu0 %v3926
        %3962 = vmatprep.subr.mxu0 0.0
        %3963 = vmatpush2.xpose.msra.mxu0 0.0
        %3964 = vmatprep.subr.mxu0 0.0
        %3965 = vmatpush2.xpose.msra.mxu0 0.0
        %3966 = vmatprep.subr.mxu0 0.0
        %3967 = vmatpush2.xpose.msra.mxu0 0.0
        %3968 = vmatprep.subr.mxu0 0.0
        %3969 = vmatpush2.xpose.msra.mxu0 0.0
        %3970 = vmatprep.subr.mxu0 0.0
        %3971 = vmatpush2.xpose.msra.mxu0 0.0
        %3972 = vmatprep.subr.mxu0 0.0
        %3973 = vmatpush2.xpose.msra.mxu0 0.0
        %3974 = vmatprep.subr.mxu0 0.0
        %3975 = vmatpush2.xpose.msra.mxu0 0.0
        %3976 = vmatprep.subr.mxu0 0.0
        %3977 = vmatpush2.xpose.msra.mxu0 0.0
        %3978 = vmatprep.subr.mxu0 0.0
        %3979 = vmatpush2.xpose.msra.mxu0 0.0
        %3980 = vmatprep.subr.mxu0 0.0
        %3981 = vmatpush2.xpose.msra.mxu0 0.0
        %3982 = vmatprep.subr.mxu0 0.0
        %3983 = vmatpush2.xpose.msra.mxu0 0.0
        %3984 = vmatprep.subr.mxu0 0.0
        %3985 = vmatpush2.xpose.msra.mxu0 0.0
        %3986 = vmatprep.subr.mxu0 0.0
        %3987 = vmatpush2.xpose.msra.mxu0 0.0
        %3988 = vmatprep.subr.mxu0 0.0
        %3989 = vmatpush2.xpose.msra.mxu0 0.0
        %3990 = vmatprep.subr.mxu0 0.0
        %3991 = vmatpush2.xpose.msra.mxu0 0.0
        %3992 = vmatprep.subr.mxu0 0.0
        %3993 = vmatpush2.xpose.msra.mxu0 0.0
        %3994 = vmatprep.mubr.f32.mxu0 0.0
        %3995 = vmatmul.mubr.f32.gmra.mxu0 %v758
        %v3996 = vpop.f32.mrf.mxu0
        %v3997 = vadd.f32 0.0, %v3996
        %v3998 = vpop.f32.mrf.mxu0
        %3999 = vdwg.mxu0
        %s4000 = sld [smem:[#allocation15 + $0xe0]]
        %s4001 = sld [smem:[#allocation15 + $0xf0]]
        %s4002 = sld [smem:[#allocation15 + $0x170]]
        %s4003 = sld [smem:[#allocation15 + $0x1f0]]
        %v4004 = vstv %s4000
        %v4005 = vmul.f32 %v3997, %v4004
        %v4006 = vstv %s4001
        %v4007 = vmul.f32 %v681, %v4006
        %v4008 = vadd.f32 %v4005, %v4007
        %v4009 = vstv %s4002
        %v4010 = vadd.f32 %v4008, %v4009
        %v4011 = vmax.f32 %v4010, 0.0
        %v4012 = vstv %s4003
        %v4013 = vmul.f32 %v4011, %v4012
        %v4014 = vadd.f32 %v4013, 0.0
        %s4015 = sld [smem:[#allocation15 + $0xe1]]
        %s4016 = sld [smem:[#allocation15 + $0xf1]]
        %s4017 = sld [smem:[#allocation15 + $0x171]]
        %s4018 = sld [smem:[#allocation15 + $0x1f1]]
        %v4019 = vstv %s4015
        %v4020 = vmul.f32 %v3997, %v4019
        %v4021 = vstv %s4016
        %v4022 = vmul.f32 %v681, %v4021
        %v4023 = vadd.f32 %v4020, %v4022
        %v4024 = vstv %s4017
        %v4025 = vadd.f32 %v4023, %v4024
        %v4026 = vmax.f32 %v4025, 0.0
        %v4027 = vstv %s4018
        %v4028 = vmul.f32 %v4026, %v4027
        %v4029 = vadd.f32 %v4014, %v4028
        %s4030 = sld [smem:[#allocation15 + $0xe2]]
        %s4031 = sld [smem:[#allocation15 + $0xf2]]
        %s4032 = sld [smem:[#allocation15 + $0x172]]
        %s4033 = sld [smem:[#allocation15 + $0x1f2]]
        %v4034 = vstv %s4030
        %v4035 = vmul.f32 %v3997, %v4034
        %v4036 = vstv %s4031
        %v4037 = vmul.f32 %v681, %v4036
        %v4038 = vadd.f32 %v4035, %v4037
        %v4039 = vstv %s4032
        %v4040 = vadd.f32 %v4038, %v4039
        %v4041 = vmax.f32 %v4040, 0.0
        %v4042 = vstv %s4033
        %v4043 = vmul.f32 %v4041, %v4042
        %v4044 = vadd.f32 %v4029, %v4043
        %s4045 = sld [smem:[#allocation15 + $0xe3]]
        %s4046 = sld [smem:[#allocation15 + $0xf3]]
        %s4047 = sld [smem:[#allocation15 + $0x173]]
        %s4048 = sld [smem:[#allocation15 + $0x1f3]]
        %v4049 = vstv %s4045
        %v4050 = vmul.f32 %v3997, %v4049
        %v4051 = vstv %s4046
        %v4052 = vmul.f32 %v681, %v4051
        %v4053 = vadd.f32 %v4050, %v4052
        %v4054 = vstv %s4047
        %v4055 = vadd.f32 %v4053, %v4054
        %v4056 = vmax.f32 %v4055, 0.0
        %v4057 = vstv %s4048
        %v4058 = vmul.f32 %v4056, %v4057
        %v4059 = vadd.f32 %v4044, %v4058
        %s4060 = sld [smem:[#allocation15 + $0xe4]]
        %s4061 = sld [smem:[#allocation15 + $0xf4]]
        %s4062 = sld [smem:[#allocation15 + $0x174]]
        %s4063 = sld [smem:[#allocation15 + $0x1f4]]
        %v4064 = vstv %s4060
        %v4065 = vmul.f32 %v3997, %v4064
        %v4066 = vstv %s4061
        %v4067 = vmul.f32 %v681, %v4066
        %v4068 = vadd.f32 %v4065, %v4067
        %v4069 = vstv %s4062
        %v4070 = vadd.f32 %v4068, %v4069
        %v4071 = vmax.f32 %v4070, 0.0
        %v4072 = vstv %s4063
        %v4073 = vmul.f32 %v4071, %v4072
        %v4074 = vadd.f32 %v4059, %v4073
        %s4075 = sld [smem:[#allocation15 + $0xe5]]
        %s4076 = sld [smem:[#allocation15 + $0xf5]]
        %s4077 = sld [smem:[#allocation15 + $0x175]]
        %s4078 = sld [smem:[#allocation15 + $0x1f5]]
        %v4079 = vstv %s4075
        %v4080 = vmul.f32 %v3997, %v4079
        %v4081 = vstv %s4076
        %v4082 = vmul.f32 %v681, %v4081
        %v4083 = vadd.f32 %v4080, %v4082
        %v4084 = vstv %s4077
        %v4085 = vadd.f32 %v4083, %v4084
        %v4086 = vmax.f32 %v4085, 0.0
        %v4087 = vstv %s4078
        %v4088 = vmul.f32 %v4086, %v4087
        %v4089 = vadd.f32 %v4074, %v4088
        %s4090 = sld [smem:[#allocation15 + $0xe6]]
        %s4091 = sld [smem:[#allocation15 + $0xf6]]
        %s4092 = sld [smem:[#allocation15 + $0x176]]
        %s4093 = sld [smem:[#allocation15 + $0x1f6]]
        %v4094 = vstv %s4090
        %v4095 = vmul.f32 %v3997, %v4094
        %v4096 = vstv %s4091
        %v4097 = vmul.f32 %v681, %v4096
        %v4098 = vadd.f32 %v4095, %v4097
        %v4099 = vstv %s4092
        %v4100 = vadd.f32 %v4098, %v4099
        %v4101 = vmax.f32 %v4100, 0.0
        %v4102 = vstv %s4093
        %v4103 = vmul.f32 %v4101, %v4102
        %v4104 = vadd.f32 %v4089, %v4103
        %s4105 = sld [smem:[#allocation15 + $0xe7]]
        %s4106 = sld [smem:[#allocation15 + $0xf7]]
        %s4107 = sld [smem:[#allocation15 + $0x177]]
        %s4108 = sld [smem:[#allocation15 + $0x1f7]]
        %v4109 = vstv %s4105
        %v4110 = vmul.f32 %v3997, %v4109
        %v4111 = vstv %s4106
        %v4112 = vmul.f32 %v681, %v4111
        %v4113 = vadd.f32 %v4110, %v4112
        %v4114 = vstv %s4107
        %v4115 = vadd.f32 %v4113, %v4114
        %v4116 = vmax.f32 %v4115, 0.0
        %v4117 = vstv %s4108
        %v4118 = vmul.f32 %v4116, %v4117
        %v4119 = vadd.f32 %v4104, %v4118
        %s4120 = sld [smem:[#allocation15 + $0xe8]]
        %s4121 = sld [smem:[#allocation15 + $0xf8]]
        %s4122 = sld [smem:[#allocation15 + $0x178]]
        %s4123 = sld [smem:[#allocation15 + $0x1f8]]
        %v4124 = vstv %s4120
        %v4125 = vmul.f32 %v3997, %v4124
        %v4126 = vstv %s4121
        %v4127 = vmul.f32 %v681, %v4126
        %v4128 = vadd.f32 %v4125, %v4127
        %v4129 = vstv %s4122
        %v4130 = vadd.f32 %v4128, %v4129
        %v4131 = vmax.f32 %v4130, 0.0
        %v4132 = vstv %s4123
        %v4133 = vmul.f32 %v4131, %v4132
        %v4134 = vadd.f32 %v4119, %v4133
        %s4135 = sld [smem:[#allocation15 + $0xe9]]
        %s4136 = sld [smem:[#allocation15 + $0xf9]]
        %s4137 = sld [smem:[#allocation15 + $0x179]]
        %s4138 = sld [smem:[#allocation15 + $0x1f9]]
        %v4139 = vstv %s4135
        %v4140 = vmul.f32 %v3997, %v4139
        %v4141 = vstv %s4136
        %v4142 = vmul.f32 %v681, %v4141
        %v4143 = vadd.f32 %v4140, %v4142
        %v4144 = vstv %s4137
        %v4145 = vadd.f32 %v4143, %v4144
        %v4146 = vmax.f32 %v4145, 0.0
        %v4147 = vstv %s4138
        %v4148 = vmul.f32 %v4146, %v4147
        %v4149 = vadd.f32 %v4134, %v4148
        %s4150 = sld [smem:[#allocation15 + $0xea]]
        %s4151 = sld [smem:[#allocation15 + $0xfa]]
        %s4152 = sld [smem:[#allocation15 + $0x17a]]
        %s4153 = sld [smem:[#allocation15 + $0x1fa]]
        %v4154 = vstv %s4150
        %v4155 = vmul.f32 %v3997, %v4154
        %v4156 = vstv %s4151
        %v4157 = vmul.f32 %v681, %v4156
        %v4158 = vadd.f32 %v4155, %v4157
        %v4159 = vstv %s4152
        %v4160 = vadd.f32 %v4158, %v4159
        %v4161 = vmax.f32 %v4160, 0.0
        %v4162 = vstv %s4153
        %v4163 = vmul.f32 %v4161, %v4162
        %v4164 = vadd.f32 %v4149, %v4163
        %s4165 = sld [smem:[#allocation15 + $0xeb]]
        %s4166 = sld [smem:[#allocation15 + $0xfb]]
        %s4167 = sld [smem:[#allocation15 + $0x17b]]
        %s4168 = sld [smem:[#allocation15 + $0x1fb]]
        %v4169 = vstv %s4165
        %v4170 = vmul.f32 %v3997, %v4169
        %v4171 = vstv %s4166
        %v4172 = vmul.f32 %v681, %v4171
        %v4173 = vadd.f32 %v4170, %v4172
        %v4174 = vstv %s4167
        %v4175 = vadd.f32 %v4173, %v4174
        %v4176 = vmax.f32 %v4175, 0.0
        %v4177 = vstv %s4168
        %v4178 = vmul.f32 %v4176, %v4177
        %v4179 = vadd.f32 %v4164, %v4178
        %s4180 = sld [smem:[#allocation15 + $0xec]]
        %s4181 = sld [smem:[#allocation15 + $0xfc]]
        %s4182 = sld [smem:[#allocation15 + $0x17c]]
        %s4183 = sld [smem:[#allocation15 + $0x1fc]]
        %v4184 = vstv %s4180
        %v4185 = vmul.f32 %v3997, %v4184
        %v4186 = vstv %s4181
        %v4187 = vmul.f32 %v681, %v4186
        %v4188 = vadd.f32 %v4185, %v4187
        %v4189 = vstv %s4182
        %v4190 = vadd.f32 %v4188, %v4189
        %v4191 = vmax.f32 %v4190, 0.0
        %v4192 = vstv %s4183
        %v4193 = vmul.f32 %v4191, %v4192
        %v4194 = vadd.f32 %v4179, %v4193
        %s4195 = sld [smem:[#allocation15 + $0xed]]
        %s4196 = sld [smem:[#allocation15 + $0xfd]]
        %s4197 = sld [smem:[#allocation15 + $0x17d]]
        %s4198 = sld [smem:[#allocation15 + $0x1fd]]
        %v4199 = vstv %s4195
        %v4200 = vmul.f32 %v3997, %v4199
        %v4201 = vstv %s4196
        %v4202 = vmul.f32 %v681, %v4201
        %v4203 = vadd.f32 %v4200, %v4202
        %v4204 = vstv %s4197
        %v4205 = vadd.f32 %v4203, %v4204
        %v4206 = vmax.f32 %v4205, 0.0
        %v4207 = vstv %s4198
        %v4208 = vmul.f32 %v4206, %v4207
        %v4209 = vadd.f32 %v4194, %v4208
        %s4210 = sld [smem:[#allocation15 + $0xee]]
        %s4211 = sld [smem:[#allocation15 + $0xfe]]
        %s4212 = sld [smem:[#allocation15 + $0x17e]]
        %s4213 = sld [smem:[#allocation15 + $0x1fe]]
        %v4214 = vstv %s4210
        %v4215 = vmul.f32 %v3997, %v4214
        %v4216 = vstv %s4211
        %v4217 = vmul.f32 %v681, %v4216
        %v4218 = vadd.f32 %v4215, %v4217
        %v4219 = vstv %s4212
        %v4220 = vadd.f32 %v4218, %v4219
        %v4221 = vmax.f32 %v4220, 0.0
        %v4222 = vstv %s4213
        %v4223 = vmul.f32 %v4221, %v4222
        %v4224 = vadd.f32 %v4209, %v4223
        %s4225 = sld [smem:[#allocation15 + $0xef]]
        %s4226 = sld [smem:[#allocation15 + $0xff]]
        %s4227 = sld [smem:[#allocation15 + $0x17f]]
        %s4228 = sld [smem:[#allocation15 + $0x1ff]]
        %v4229 = vstv %s4225
        %v4230 = vmul.f32 %v3997, %v4229
        %v4231 = vstv %s4226
        %v4232 = vmul.f32 %v681, %v4231
        %v4233 = vadd.f32 %v4230, %v4232
        %v4234 = vstv %s4227
        %v4235 = vadd.f32 %v4233, %v4234
        %v4236 = vmax.f32 %v4235, 0.0
        %v4237 = vstv %s4228
        %v4238 = vmul.f32 %v4236, %v4237
        %v4239 = vadd.f32 %v4224, %v4238
        %s4240 = sld [smem:[#allocation15 + $0x207]]
        %v4241 = vstv %s4240
        %v4242 = vadd.f32 %v4239, %v4241
        %v4243 = vadd.f32 %v3375, %v4242
        %v4244 = vsel %vm1239, %v4242, -inf
        %v4245 = vrot.slane %v4244, 4
        %v4246 = vmax.f32 %v4244, %v4245
        %v4247 = vrot.slane %v4246, 2
        %v4248 = vmax.f32 %v4246, %v4247
        %v4249 = vrot.slane %v4248, 1
        %v4250 = vmax.f32 %v4248, %v4249
        %v4251 = vsub.f32 %v4242, %v4250
        %v4252 = vmul.f32 %v4251, 1.442695
        %v4253 = vpow.pop %v4252
        %v4254 = vsel %vm1239, %v4253, 0.0
        %v4255 = vrot.slane %v4254, 4
        %v4256 = vadd.f32 %v4254, %v4255
        %v4257 = vrot.slane %v4256, 2
        %v4258 = vadd.f32 %v4256, %v4257
        %v4259 = vrot.slane %v4258, 1
        %v4260 = vadd.f32 %v4258, %v4259
        %v4261 = vrcp.pop %v4260
        %v4262 = vmul.f32 %v4253, %v4261
        %4263 = vxpose.xlu0.b32.start [1/16] %v4262, 128
        %4264 = vxpose.xlu0.b32.cont [2/16] 0.0, 128
        %4265 = vxpose.xlu0.b32.cont [3/16] 0.0, 128
        %4266 = vxpose.xlu0.b32.cont [4/16] 0.0, 128
        %4267 = vxpose.xlu0.b32.cont [5/16] 0.0, 128
        %4268 = vxpose.xlu0.b32.cont [6/16] 0.0, 128
        %4269 = vxpose.xlu0.b32.cont [7/16] 0.0, 128
        %4270 = vxpose.xlu0.b32.cont [8/16] 0.0, 128
        %4271 = vxpose.xlu0.b32.cont [9/16] 0.0, 128
        %4272 = vxpose.xlu0.b32.cont [10/16] 0.0, 128
        %4273 = vxpose.xlu0.b32.cont [11/16] 0.0, 128
        %4274 = vxpose.xlu0.b32.cont [12/16] 0.0, 128
        %4275 = vxpose.xlu0.b32.cont [13/16] 0.0, 128
        %4276 = vxpose.xlu0.b32.cont [14/16] 0.0, 128
        %4277 = vxpose.xlu0.b32.cont [15/16] 0.0, 128
        %4278 = vxpose.xlu0.b32.end [16/16] 0.0, 128
        %v4279 = vpop.trf.xlu0
        %v4280 = vpop.trf.xlu0
        %v4281 = vpop.trf.xlu0
        %v4282 = vpop.trf.xlu0
        %v4283 = vpop.trf.xlu0
        %v4284 = vpop.trf.xlu0
        %v4285 = vpop.trf.xlu0
        %v4286 = vpop.trf.xlu0
        %v4287 = vpop.trf.xlu0
        %v4288 = vpop.trf.xlu0
        %v4289 = vpop.trf.xlu0
        %v4290 = vpop.trf.xlu0
        %v4291 = vpop.trf.xlu0
        %v4292 = vpop.trf.xlu0
        %v4293 = vpop.trf.xlu0
        %v4294 = vpop.trf.xlu0
        %4295 = vrot.lane.b32.xlu0 %v829, 32
        %v4296 = vpop.permute.xlu0 %4295
        %v4299 = vsel %vm2450, %v4279, 0
        %v4302 = vsel %vm2450, %v4280, 0
        %4304 = vmatprep.subr.mxu0 0.0
        %4305 = vmatpush1.msra.mxu0 0.0
        %4306 = vmatprep.subr.mxu0 0.0
        %4307 = vmatpush1.msra.mxu0 0.0
        %4308 = vmatprep.subr.mxu0 0.0
        %4309 = vmatpush1.msra.mxu0 0.0
        %4310 = vmatprep.subr.mxu0 0.0
        %4311 = vmatpush1.msra.mxu0 0.0
        %4312 = vmatprep.subr.mxu0 0.0
        %4313 = vmatpush1.msra.mxu0 0.0
        %4314 = vmatprep.subr.mxu0 0.0
        %4315 = vmatpush1.msra.mxu0 0.0
        %4316 = vmatprep.subr.mxu0 0.0
        %4317 = vmatpush1.msra.mxu0 0.0
        %4318 = vmatprep.subr.mxu0 0.0
        %4319 = vmatpush1.msra.mxu0 0.0
        %4320 = vmatprep.subr.mxu0 0.0
        %4321 = vmatpush1.msra.mxu0 0.0
        %4322 = vmatprep.subr.mxu0 0.0
        %4323 = vmatpush1.msra.mxu0 0.0
        %4324 = vmatprep.subr.mxu0 0.0
        %4325 = vmatpush1.msra.mxu0 0.0
        %4326 = vmatprep.subr.mxu0 0.0
        %4327 = vmatpush1.msra.mxu0 0.0
        %4328 = vmatprep.subr.mxu0 0.0
        %4329 = vmatpush1.msra.mxu0 0.0
        %4330 = vmatprep.subr.mxu0 0.0
        %4331 = vmatpush1.msra.mxu0 0.0
        %4332 = vmatprep.subr.mxu0 0.0
        %4333 = vmatpush1.msra.mxu0 0.0
        %4334 = vmatprep.subr.mxu0 0.0
        %4335 = vmatpush1.msra.mxu0 %v4296
        %4336 = vmatprep.subr.mxu0 0.0
        %4337 = vmatpush2.msra.mxu0 0.0
        %4338 = vmatprep.subr.mxu0 0.0
        %4339 = vmatpush2.msra.mxu0 0.0
        %4340 = vmatprep.subr.mxu0 0.0
        %4341 = vmatpush2.msra.mxu0 0.0
        %4342 = vmatprep.subr.mxu0 0.0
        %4343 = vmatpush2.msra.mxu0 0.0
        %4344 = vmatprep.subr.mxu0 0.0
        %4345 = vmatpush2.msra.mxu0 0.0
        %4346 = vmatprep.subr.mxu0 0.0
        %4347 = vmatpush2.msra.mxu0 0.0
        %4348 = vmatprep.subr.mxu0 0.0
        %4349 = vmatpush2.msra.mxu0 0.0
        %4350 = vmatprep.subr.mxu0 0.0
        %4351 = vmatpush2.msra.mxu0 0.0
        %4352 = vmatprep.subr.mxu0 0.0
        %4353 = vmatpush2.msra.mxu0 0.0
        %4354 = vmatprep.subr.mxu0 0.0
        %4355 = vmatpush2.msra.mxu0 0.0
        %4356 = vmatprep.subr.mxu0 0.0
        %4357 = vmatpush2.msra.mxu0 0.0
        %4358 = vmatprep.subr.mxu0 0.0
        %4359 = vmatpush2.msra.mxu0 0.0
        %4360 = vmatprep.subr.mxu0 0.0
        %4361 = vmatpush2.msra.mxu0 0.0
        %4362 = vmatprep.subr.mxu0 0.0
        %4363 = vmatpush2.msra.mxu0 0.0
        %4364 = vmatprep.subr.mxu0 0.0
        %4365 = vmatpush2.msra.mxu0 0.0
        %4366 = vmatprep.subr.mxu0 0.0
        %4367 = vmatpush2.msra.mxu0 0.0
        %4368 = vmatprep.mubr.f32.mxu0 0.0
        %4369 = vmatmul.mubr.f32.gmra.mxu0 %v4299
        %v4370 = vpop.f32.mrf.mxu0
        %v4371 = vadd.f32 0.0, %v4370
        %v4372 = vpop.f32.mrf.mxu0
        %4373 = vmatprep.mubr.f32.mxu0 0.0
        %4374 = vmatmul.mubr.f32.gmra.mxu0 %v4302
        %v4375 = vpop.f32.mrf.mxu0
        %v4376 = vadd.f32 0.0, %v4375
        %v4377 = vpop.f32.mrf.mxu0
        %4378 = vdwg.mxu0
        %v4379 = vadd.f32 %v3511, %v4371
        %v4380 = vadd.f32 %v3512, %v4376
        %v4381 = vld [vmem:[%s5] sm:$0x1]
        %v4382 = vlaneseq
        %v4383 = vshrl.u32 %v4382, 7
        %v4384 = vsub.s32 0, %v4383
        %v4385 = vrot.slane %v4381, %v4384
        %v4386 = vadd.f32 %v3921, %v4385
        %v4387 = vld [vmem:[%s5 + $0x1] sm:$0x1]
        %v4388 = vlaneseq
        %v4389 = vshrl.u32 %v4388, 7
        %v4390 = vsub.s32 0, %v4389
        %v4391 = vrot.slane %v4387, %v4390
        %v4392 = vadd.f32 %v4379, %v4391
        %v4393 = vadd.f32 %v4380, %v4391
        %v4394 = vadd.f32 %v678, %v4386
        %v4395 = vld [vmem:[%s6 + $0x1] sm:$0x1]
        %v4396 = vld [vmem:[%s7 + $0x1] sm:$0x1]
        %v4397 = vsel %vm684, %v4394, 0.0
        %4398 = vadd.xlane.f32.xlu0 %v4397
        %v4399 = vpop.xlane.xlu0 %4398
        %v4400 = vmul.f32 %v4399, %v688
        %v4401 = vsub.f32 %v4394, %v4400
        %v4402 = vmul.f32 %v4401, %v4401
        %v4403 = vsel %vm684, %v4402, 0.0
        %4404 = vadd.xlane.f32.xlu0 %v4403
        %v4405 = vpop.xlane.xlu0 %4404
        %v4406 = vmul.f32 %v4405, %v688
        %v4407 = vadd.f32 %v4406, 1e-05
        %v4408 = vrsqrt.pop %v4407
        %v4409 = vmul.f32 %v4401, %v4408
        %v4410 = vlaneseq
        %v4411 = vshrl.u32 %v4410, 7
        %v4412 = vsub.s32 0, %v4411
        %v4413 = vrot.slane %v4395, %v4412
        %v4414 = vmul.f32 %v4409, %v4413
        %v4415 = vlaneseq
        %v4416 = vshrl.u32 %v4415, 7
        %v4417 = vsub.s32 0, %v4416
        %v4418 = vrot.slane %v4396, %v4417
        %v4419 = vadd.f32 %v4414, %v4418
        %v4420 = vld [vmem:[#allocation12] sm:$0xff]
        %v4421 = vld [vmem:[#allocation12 + $0x8] sm:$0xff]
        %v4422 = vld [vmem:[#allocation12 + $0x10] sm:$0xff]
        %v4423 = vld [vmem:[#allocation12 + $0x18] sm:$0xff]
        %v4424 = vld [vmem:[%s9] sm:$0x1]
        %v4425 = vlaneseq
        %v4426 = vshrl.u32 %v4425, 7
        %v4427 = vsub.s32 0, %v4426
        %v4428 = vrot.slane %v4424, %v4427
        %v4430 = vsel %vm684, %v4419, 0
        %4432 = vmatprep.subr.mxu0 0.0
        %4433 = vmatpush1.msra.mxu0 0.0
        %4434 = vmatprep.subr.mxu0 0.0
        %4435 = vmatpush1.msra.mxu0 0.0
        %4436 = vmatprep.subr.mxu0 0.0
        %4437 = vmatpush1.msra.mxu0 0.0
        %4438 = vmatprep.subr.mxu0 0.0
        %4439 = vmatpush1.msra.mxu0 0.0
        %4440 = vmatprep.subr.mxu0 0.0
        %4441 = vmatpush1.msra.mxu0 0.0
        %4442 = vmatprep.subr.mxu0 0.0
        %4443 = vmatpush1.msra.mxu0 0.0
        %4444 = vmatprep.subr.mxu0 0.0
        %4445 = vmatpush1.msra.mxu0 0.0
        %4446 = vmatprep.subr.mxu0 0.0
        %4447 = vmatpush1.msra.mxu0 0.0
        %4448 = vmatprep.subr.mxu0 0.0
        %4449 = vmatpush1.msra.mxu0 0.0
        %4450 = vmatprep.subr.mxu0 0.0
        %4451 = vmatpush1.msra.mxu0 0.0
        %4452 = vmatprep.subr.mxu0 0.0
        %4453 = vmatpush1.msra.mxu0 0.0
        %4454 = vmatprep.subr.mxu0 0.0
        %4455 = vmatpush1.msra.mxu0 0.0
        %4456 = vmatprep.subr.mxu0 0.0
        %4457 = vmatpush1.msra.mxu0 %v4423
        %4458 = vmatprep.subr.mxu0 0.0
        %4459 = vmatpush1.msra.mxu0 %v4422
        %4460 = vmatprep.subr.mxu0 0.0
        %4461 = vmatpush1.msra.mxu0 %v4421
        %4462 = vmatprep.subr.mxu0 0.0
        %4463 = vmatpush1.msra.mxu0 %v4420
        %4464 = vmatprep.subr.mxu0 0.0
        %4465 = vmatpush2.msra.mxu0 0.0
        %4466 = vmatprep.subr.mxu0 0.0
        %4467 = vmatpush2.msra.mxu0 0.0
        %4468 = vmatprep.subr.mxu0 0.0
        %4469 = vmatpush2.msra.mxu0 0.0
        %4470 = vmatprep.subr.mxu0 0.0
        %4471 = vmatpush2.msra.mxu0 0.0
        %4472 = vmatprep.subr.mxu0 0.0
        %4473 = vmatpush2.msra.mxu0 0.0
        %4474 = vmatprep.subr.mxu0 0.0
        %4475 = vmatpush2.msra.mxu0 0.0
        %4476 = vmatprep.subr.mxu0 0.0
        %4477 = vmatpush2.msra.mxu0 0.0
        %4478 = vmatprep.subr.mxu0 0.0
        %4479 = vmatpush2.msra.mxu0 0.0
        %4480 = vmatprep.subr.mxu0 0.0
        %4481 = vmatpush2.msra.mxu0 0.0
        %4482 = vmatprep.subr.mxu0 0.0
        %4483 = vmatpush2.msra.mxu0 0.0
        %4484 = vmatprep.subr.mxu0 0.0
        %4485 = vmatpush2.msra.mxu0 0.0
        %4486 = vmatprep.subr.mxu0 0.0
        %4487 = vmatpush2.msra.mxu0 0.0
        %4488 = vmatprep.subr.mxu0 0.0
        %4489 = vmatpush2.msra.mxu0 0.0
        %4490 = vmatprep.subr.mxu0 0.0
        %4491 = vmatpush2.msra.mxu0 0.0
        %4492 = vmatprep.subr.mxu0 0.0
        %4493 = vmatpush2.msra.mxu0 0.0
        %4494 = vmatprep.subr.mxu0 0.0
        %4495 = vmatpush2.msra.mxu0 0.0
        %4496 = vmatprep.mubr.f32.mxu0 0.0
        %4497 = vmatmul.mubr.f32.gmra.mxu0 %v4430
        %v4498 = vpop.f32.mrf.mxu0
        %v4499 = vadd.f32 %v4428, %v4498
        %v4500 = vpop.f32.mrf.mxu0
        %4501 = vdwg.mxu0
        %v4502 = vmax.f32 %v4499, 0.0
        %v4503 = vld [vmem:[#allocation14] sm:$0xff]
        %v4504 = vld [vmem:[#allocation14 + $0x8] sm:$0xff]
        %v4505 = vld [vmem:[#allocation14 + $0x10] sm:$0xff]
        %v4506 = vld [vmem:[#allocation14 + $0x18] sm:$0xff]
        %v4507 = vld [vmem:[#allocation14 + $0x20] sm:$0xff]
        %v4508 = vld [vmem:[#allocation14 + $0x28] sm:$0xff]
        %v4509 = vld [vmem:[#allocation14 + $0x30] sm:$0xff]
        %v4510 = vld [vmem:[#allocation14 + $0x38] sm:$0xff]
        %v4511 = vld [vmem:[%s11] sm:$0x1]
        %v4512 = vlaneseq
        %v4513 = vshrl.u32 %v4512, 7
        %v4514 = vsub.s32 0, %v4513
        %v4515 = vrot.slane %v4511, %v4514
        %vm4516 = vcmask 523264
        %v4518 = vsel %vm4516, %v4502, 0
        %4520 = vmatprep.subr.mxu0 0.0
        %4521 = vmatpush1.msra.mxu0 0.0
        %4522 = vmatprep.subr.mxu0 0.0
        %4523 = vmatpush1.msra.mxu0 0.0
        %4524 = vmatprep.subr.mxu0 0.0
        %4525 = vmatpush1.msra.mxu0 0.0
        %4526 = vmatprep.subr.mxu0 0.0
        %4527 = vmatpush1.msra.mxu0 0.0
        %4528 = vmatprep.subr.mxu0 0.0
        %4529 = vmatpush1.msra.mxu0 0.0
        %4530 = vmatprep.subr.mxu0 0.0
        %4531 = vmatpush1.msra.mxu0 0.0
        %4532 = vmatprep.subr.mxu0 0.0
        %4533 = vmatpush1.msra.mxu0 0.0
        %4534 = vmatprep.subr.mxu0 0.0
        %4535 = vmatpush1.msra.mxu0 0.0
        %4536 = vmatprep.subr.mxu0 0.0
        %4537 = vmatpush1.msra.mxu0 %v4510
        %4538 = vmatprep.subr.mxu0 0.0
        %4539 = vmatpush1.msra.mxu0 %v4509
        %4540 = vmatprep.subr.mxu0 0.0
        %4541 = vmatpush1.msra.mxu0 %v4508
        %4542 = vmatprep.subr.mxu0 0.0
        %4543 = vmatpush1.msra.mxu0 %v4507
        %4544 = vmatprep.subr.mxu0 0.0
        %4545 = vmatpush1.msra.mxu0 %v4506
        %4546 = vmatprep.subr.mxu0 0.0
        %4547 = vmatpush1.msra.mxu0 %v4505
        %4548 = vmatprep.subr.mxu0 0.0
        %4549 = vmatpush1.msra.mxu0 %v4504
        %4550 = vmatprep.subr.mxu0 0.0
        %4551 = vmatpush1.msra.mxu0 %v4503
        %4552 = vmatprep.subr.mxu0 0.0
        %4553 = vmatpush2.msra.mxu0 0.0
        %4554 = vmatprep.subr.mxu0 0.0
        %4555 = vmatpush2.msra.mxu0 0.0
        %4556 = vmatprep.subr.mxu0 0.0
        %4557 = vmatpush2.msra.mxu0 0.0
        %4558 = vmatprep.subr.mxu0 0.0
        %4559 = vmatpush2.msra.mxu0 0.0
        %4560 = vmatprep.subr.mxu0 0.0
        %4561 = vmatpush2.msra.mxu0 0.0
        %4562 = vmatprep.subr.mxu0 0.0
        %4563 = vmatpush2.msra.mxu0 0.0
        %4564 = vmatprep.subr.mxu0 0.0
        %4565 = vmatpush2.msra.mxu0 0.0
        %4566 = vmatprep.subr.mxu0 0.0
        %4567 = vmatpush2.msra.mxu0 0.0
        %4568 = vmatprep.subr.mxu0 0.0
        %4569 = vmatpush2.msra.mxu0 0.0
        %4570 = vmatprep.subr.mxu0 0.0
        %4571 = vmatpush2.msra.mxu0 0.0
        %4572 = vmatprep.subr.mxu0 0.0
        %4573 = vmatpush2.msra.mxu0 0.0
        %4574 = vmatprep.subr.mxu0 0.0
        %4575 = vmatpush2.msra.mxu0 0.0
        %4576 = vmatprep.subr.mxu0 0.0
        %4577 = vmatpush2.msra.mxu0 0.0
        %4578 = vmatprep.subr.mxu0 0.0
        %4579 = vmatpush2.msra.mxu0 0.0
        %4580 = vmatprep.subr.mxu0 0.0
        %4581 = vmatpush2.msra.mxu0 0.0
        %4582 = vmatprep.subr.mxu0 0.0
        %4583 = vmatpush2.msra.mxu0 0.0
        %4584 = vmatprep.mubr.f32.mxu0 0.0
        %4585 = vmatmul.mubr.f32.gmra.mxu0 %v4518
        %v4586 = vpop.f32.mrf.mxu0
        %v4587 = vadd.f32 %v4515, %v4586
        %v4588 = vpop.f32.mrf.mxu0
        %4589 = vdwg.mxu0
        %v4590 = vadd.f32 %v4587, %v4394
        %v4591 = vadd.f32 %v679, %v4392
        %v4592 = vadd.f32 %v680, %v4393
        %v4593 = vld [vmem:[%s6 + $0x3] sm:$0x1]
        %v4594 = vld [vmem:[%s7 + $0x3] sm:$0x1]
        %v4595 = vsel %vm684, %v4591, 0.0
        %4596 = vadd.xlane.f32.xlu0 %v4595
        %v4597 = vpop.xlane.xlu0 %4596
        %v4598 = vsel %vm684, %v4592, 0.0
        %4599 = vadd.xlane.f32.xlu0 %v4598
        %v4600 = vpop.xlane.xlu0 %4599
        %v4601 = vmul.f32 %v4597, %v688
        %v4602 = vmul.f32 %v4600, %v688
        %v4603 = vsub.f32 %v4591, %v4601
        %v4604 = vsub.f32 %v4592, %v4602
        %v4605 = vmul.f32 %v4603, %v4603
        %v4606 = vmul.f32 %v4604, %v4604
        %v4607 = vsel %vm684, %v4605, 0.0
        %4608 = vadd.xlane.f32.xlu0 %v4607
        %v4609 = vpop.xlane.xlu0 %4608
        %v4610 = vsel %vm684, %v4606, 0.0
        %4611 = vadd.xlane.f32.xlu0 %v4610
        %v4612 = vpop.xlane.xlu0 %4611
        %v4613 = vmul.f32 %v4609, %v688
        %v4614 = vmul.f32 %v4612, %v688
        %v4615 = vadd.f32 %v4613, 1e-05
        %v4616 = vadd.f32 %v4614, 1e-05
        %v4617 = vrsqrt.pop %v4615
        %v4618 = vrsqrt.pop %v4616
        %v4619 = vmul.f32 %v4603, %v4617
        %v4620 = vmul.f32 %v4604, %v4618
        %v4621 = vlaneseq
        %v4622 = vshrl.u32 %v4621, 7
        %v4623 = vsub.s32 0, %v4622
        %v4624 = vrot.slane %v4593, %v4623
        %v4625 = vmul.f32 %v4619, %v4624
        %v4626 = vmul.f32 %v4620, %v4624
        %v4627 = vlaneseq
        %v4628 = vshrl.u32 %v4627, 7
        %v4629 = vsub.s32 0, %v4628
        %v4630 = vrot.slane %v4594, %v4629
        %v4631 = vadd.f32 %v4625, %v4630
        %v4632 = vadd.f32 %v4626, %v4630
        %s4633 = scalar_lea.vmem [#allocation12], 32
        %v4634 = vld [vmem:[%s4633] sm:$0xff]
        %v4635 = vld [vmem:[%s4633 + $0x8] sm:$0xff]
        %v4636 = vld [vmem:[%s4633 + $0x10] sm:$0xff]
        %v4637 = vld [vmem:[%s4633 + $0x18] sm:$0xff]
        %v4638 = vld [vmem:[%s9 + $0x1] sm:$0x1]
        %v4639 = vlaneseq
        %v4640 = vshrl.u32 %v4639, 7
        %v4641 = vsub.s32 0, %v4640
        %v4642 = vrot.slane %v4638, %v4641
        %v4644 = vsel %vm684, %v4631, 0
        %v4647 = vsel %vm684, %v4632, 0
        %4649 = vmatprep.subr.mxu0 0.0
        %4650 = vmatpush1.msra.mxu0 0.0
        %4651 = vmatprep.subr.mxu0 0.0
        %4652 = vmatpush1.msra.mxu0 0.0
        %4653 = vmatprep.subr.mxu0 0.0
        %4654 = vmatpush1.msra.mxu0 0.0
        %4655 = vmatprep.subr.mxu0 0.0
        %4656 = vmatpush1.msra.mxu0 0.0
        %4657 = vmatprep.subr.mxu0 0.0
        %4658 = vmatpush1.msra.mxu0 0.0
        %4659 = vmatprep.subr.mxu0 0.0
        %4660 = vmatpush1.msra.mxu0 0.0
        %4661 = vmatprep.subr.mxu0 0.0
        %4662 = vmatpush1.msra.mxu0 0.0
        %4663 = vmatprep.subr.mxu0 0.0
        %4664 = vmatpush1.msra.mxu0 0.0
        %4665 = vmatprep.subr.mxu0 0.0
        %4666 = vmatpush1.msra.mxu0 0.0
        %4667 = vmatprep.subr.mxu0 0.0
        %4668 = vmatpush1.msra.mxu0 0.0
        %4669 = vmatprep.subr.mxu0 0.0
        %4670 = vmatpush1.msra.mxu0 0.0
        %4671 = vmatprep.subr.mxu0 0.0
        %4672 = vmatpush1.msra.mxu0 0.0
        %4673 = vmatprep.subr.mxu0 0.0
        %4674 = vmatpush1.msra.mxu0 %v4637
        %4675 = vmatprep.subr.mxu0 0.0
        %4676 = vmatpush1.msra.mxu0 %v4636
        %4677 = vmatprep.subr.mxu0 0.0
        %4678 = vmatpush1.msra.mxu0 %v4635
        %4679 = vmatprep.subr.mxu0 0.0
        %4680 = vmatpush1.msra.mxu0 %v4634
        %4681 = vmatprep.subr.mxu0 0.0
        %4682 = vmatpush2.msra.mxu0 0.0
        %4683 = vmatprep.subr.mxu0 0.0
        %4684 = vmatpush2.msra.mxu0 0.0
        %4685 = vmatprep.subr.mxu0 0.0
        %4686 = vmatpush2.msra.mxu0 0.0
        %4687 = vmatprep.subr.mxu0 0.0
        %4688 = vmatpush2.msra.mxu0 0.0
        %4689 = vmatprep.subr.mxu0 0.0
        %4690 = vmatpush2.msra.mxu0 0.0
        %4691 = vmatprep.subr.mxu0 0.0
        %4692 = vmatpush2.msra.mxu0 0.0
        %4693 = vmatprep.subr.mxu0 0.0
        %4694 = vmatpush2.msra.mxu0 0.0
        %4695 = vmatprep.subr.mxu0 0.0
        %4696 = vmatpush2.msra.mxu0 0.0
        %4697 = vmatprep.subr.mxu0 0.0
        %4698 = vmatpush2.msra.mxu0 0.0
        %4699 = vmatprep.subr.mxu0 0.0
        %4700 = vmatpush2.msra.mxu0 0.0
        %4701 = vmatprep.subr.mxu0 0.0
        %4702 = vmatpush2.msra.mxu0 0.0
        %4703 = vmatprep.subr.mxu0 0.0
        %4704 = vmatpush2.msra.mxu0 0.0
        %4705 = vmatprep.subr.mxu0 0.0
        %4706 = vmatpush2.msra.mxu0 0.0
        %4707 = vmatprep.subr.mxu0 0.0
        %4708 = vmatpush2.msra.mxu0 0.0
        %4709 = vmatprep.subr.mxu0 0.0
        %4710 = vmatpush2.msra.mxu0 0.0
        %4711 = vmatprep.subr.mxu0 0.0
        %4712 = vmatpush2.msra.mxu0 0.0
        %4713 = vmatprep.mubr.f32.mxu0 0.0
        %4714 = vmatmul.mubr.f32.gmra.mxu0 %v4644
        %v4715 = vpop.f32.mrf.mxu0
        %v4716 = vadd.f32 %v4642, %v4715
        %v4717 = vpop.f32.mrf.mxu0
        %4718 = vmatprep.mubr.f32.mxu0 0.0
        %4719 = vmatmul.mubr.f32.gmra.mxu0 %v4647
        %v4720 = vpop.f32.mrf.mxu0
        %v4721 = vadd.f32 %v4642, %v4720
        %v4722 = vpop.f32.mrf.mxu0
        %4723 = vdwg.mxu0
        %v4724 = vmax.f32 %v4716, 0.0
        %v4725 = vmax.f32 %v4721, 0.0
        %s4726 = scalar_lea.vmem [#allocation14], 64
        %v4727 = vld [vmem:[%s4726] sm:$0xff]
        %v4728 = vld [vmem:[%s4726 + $0x8] sm:$0xff]
        %v4729 = vld [vmem:[%s4726 + $0x10] sm:$0xff]
        %v4730 = vld [vmem:[%s4726 + $0x18] sm:$0xff]
        %v4731 = vld [vmem:[%s4726 + $0x20] sm:$0xff]
        %v4732 = vld [vmem:[%s4726 + $0x28] sm:$0xff]
        %v4733 = vld [vmem:[%s4726 + $0x30] sm:$0xff]
        %v4734 = vld [vmem:[%s4726 + $0x38] sm:$0xff]
        %v4735 = vld [vmem:[%s11 + $0x1] sm:$0x1]
        %v4736 = vlaneseq
        %v4737 = vshrl.u32 %v4736, 7
        %v4738 = vsub.s32 0, %v4737
        %v4739 = vrot.slane %v4735, %v4738
        %v4741 = vsel %vm4516, %v4724, 0
        %v4744 = vsel %vm4516, %v4725, 0
        %4746 = vmatprep.subr.mxu0 0.0
        %4747 = vmatpush1.msra.mxu0 0.0
        %4748 = vmatprep.subr.mxu0 0.0
        %4749 = vmatpush1.msra.mxu0 0.0
        %4750 = vmatprep.subr.mxu0 0.0
        %4751 = vmatpush1.msra.mxu0 0.0
        %4752 = vmatprep.subr.mxu0 0.0
        %4753 = vmatpush1.msra.mxu0 0.0
        %4754 = vmatprep.subr.mxu0 0.0
        %4755 = vmatpush1.msra.mxu0 0.0
        %4756 = vmatprep.subr.mxu0 0.0
        %4757 = vmatpush1.msra.mxu0 0.0
        %4758 = vmatprep.subr.mxu0 0.0
        %4759 = vmatpush1.msra.mxu0 0.0
        %4760 = vmatprep.subr.mxu0 0.0
        %4761 = vmatpush1.msra.mxu0 0.0
        %4762 = vmatprep.subr.mxu0 0.0
        %4763 = vmatpush1.msra.mxu0 %v4734
        %4764 = vmatprep.subr.mxu0 0.0
        %4765 = vmatpush1.msra.mxu0 %v4733
        %4766 = vmatprep.subr.mxu0 0.0
        %4767 = vmatpush1.msra.mxu0 %v4732
        %4768 = vmatprep.subr.mxu0 0.0
        %4769 = vmatpush1.msra.mxu0 %v4731
        %4770 = vmatprep.subr.mxu0 0.0
        %4771 = vmatpush1.msra.mxu0 %v4730
        %4772 = vmatprep.subr.mxu0 0.0
        %4773 = vmatpush1.msra.mxu0 %v4729
        %4774 = vmatprep.subr.mxu0 0.0
        %4775 = vmatpush1.msra.mxu0 %v4728
        %4776 = vmatprep.subr.mxu0 0.0
        %4777 = vmatpush1.msra.mxu0 %v4727
        %4778 = vmatprep.subr.mxu0 0.0
        %4779 = vmatpush2.msra.mxu0 0.0
        %4780 = vmatprep.subr.mxu0 0.0
        %4781 = vmatpush2.msra.mxu0 0.0
        %4782 = vmatprep.subr.mxu0 0.0
        %4783 = vmatpush2.msra.mxu0 0.0
        %4784 = vmatprep.subr.mxu0 0.0
        %4785 = vmatpush2.msra.mxu0 0.0
        %4786 = vmatprep.subr.mxu0 0.0
        %4787 = vmatpush2.msra.mxu0 0.0
        %4788 = vmatprep.subr.mxu0 0.0
        %4789 = vmatpush2.msra.mxu0 0.0
        %4790 = vmatprep.subr.mxu0 0.0
        %4791 = vmatpush2.msra.mxu0 0.0
        %4792 = vmatprep.subr.mxu0 0.0
        %4793 = vmatpush2.msra.mxu0 0.0
        %4794 = vmatprep.subr.mxu0 0.0
        %4795 = vmatpush2.msra.mxu0 0.0
        %4796 = vmatprep.subr.mxu0 0.0
        %4797 = vmatpush2.msra.mxu0 0.0
        %4798 = vmatprep.subr.mxu0 0.0
        %4799 = vmatpush2.msra.mxu0 0.0
        %4800 = vmatprep.subr.mxu0 0.0
        %4801 = vmatpush2.msra.mxu0 0.0
        %4802 = vmatprep.subr.mxu0 0.0
        %4803 = vmatpush2.msra.mxu0 0.0
        %4804 = vmatprep.subr.mxu0 0.0
        %4805 = vmatpush2.msra.mxu0 0.0
        %4806 = vmatprep.subr.mxu0 0.0
        %4807 = vmatpush2.msra.mxu0 0.0
        %4808 = vmatprep.subr.mxu0 0.0
        %4809 = vmatpush2.msra.mxu0 0.0
        %4810 = vmatprep.mubr.f32.mxu0 0.0
        %4811 = vmatmul.mubr.f32.gmra.mxu0 %v4741
        %v4812 = vpop.f32.mrf.mxu0
        %v4813 = vadd.f32 %v4739, %v4812
        %v4814 = vpop.f32.mrf.mxu0
        %4815 = vmatprep.mubr.f32.mxu0 0.0
        %4816 = vmatmul.mubr.f32.gmra.mxu0 %v4744
        %v4817 = vpop.f32.mrf.mxu0
        %v4818 = vadd.f32 %v4739, %v4817
        %v4819 = vpop.f32.mrf.mxu0
        %4820 = vdwg.mxu0
        %v4821 = vadd.f32 %v4813, %v4591
        %v4822 = vadd.f32 %v4818, %v4592
        %4823 = vst.msk [vmem:[%s659] sm:$0xff] %vm684, %v4590
        %4824 = vst.msk [vmem:[%s666] sm:$0xff] %vm684, %v4821
        %4825 = vst.msk [vmem:[%s666 + $0x8] sm:$0xff] %vm684, %v4822
        %v4826 = vstv %s675
        %v4827 = vmul.f32 %v3830, %v4826
        %v4828 = vstv %s677
        %v4829 = vmul.f32 %v4243, %v4828
        %v4830 = vadd.f32 %v4827, %v4829
        %4831 = vst.msk [vmem:[%s673] sm:$0xff] %vm1239, %v4830
        %s4832 = sand.u32 %s338, 1
        %s4833 = scalar_lea.sflag [#allocation4], %s4832
        %s4834 = sand.u32 %s338, 1
        %s4835 = smul.addr %s4834, 8
        %s4836 = scalar_lea.vmem [#allocation16], %s4835
        %s4837 = sand.u32 %s42, 1
        %s4838 = scalar_lea.sflag [#allocation18], %s4837
        %s4839 = sand.u32 %s364, 1
        %s4840 = smul.addr %s4839, 16
        %s4841 = scalar_lea.vmem [#allocation17], %s4840
        %s4842 = sand.u32 %s42, 1
        %s4843 = scalar_lea.sflag [#allocation18], %s4842
        %s4844 = sand.u32 %s390, 1
        %s4845 = smul.addr %s4844, 8
        %s4846 = scalar_lea.vmem [#allocation19], %s4845
        // Predicated region
        $region105: #{_lambda_.1} parent=71 // pred_check
          %p4847 = pneg %p348
        $region106: #{_lambda_.1} parent=71 // pred_check_branch
          %4849 = sbr.rel (%p4847) target = $region108
        $region107: #{_lambda_.1} parent=71 // pred_region
          %s4851 = ssub.s32 128, 128
          %4852 = vsyncadd %s4833, %s4851
          %s4853 = smul.addr %s42, 128
          %s4854 = scalar_lea.hbm %s13, %s4853
          %s4856 = sshll.u32 %s4836, 4
          %s4857 = int_to_ptr.vmem [resolvable:$true] %s4856
          %4859 = dma.vmem_to_hbm [thread:$0]  %s4857, 128, %s4854, %s4833
        $region108: #{_lambda_.1} parent=71 // pred_fallthru
          _
        // Predicated region
        $region109: #{_lambda_.1} parent=71 // pred_check
          %p4860 = pneg %p374
        $region110: #{_lambda_.1} parent=71 // pred_check_branch
          %4862 = sbr.rel (%p4860) target = $region112
        $region111: #{_lambda_.1} parent=71 // pred_region
          %s4864 = ssub.s32 256, 256
          %4865 = vsyncadd %s4838, %s4864
          %s4866 = smul.addr %s42, 2
          %s4867 = smul.addr %s4866, 128
          %s4868 = scalar_lea.hbm %s14, %s4867
          %s4869 = sshll.u32 %s4841, 4
          %s4870 = int_to_ptr.vmem [resolvable:$true] %s4869
          %4875 = dma.vmem_to_hbm [thread:$0]  %s4870, 256, %s4868, %s4838, 128, 128, 8
        $region112: #{_lambda_.1} parent=71 // pred_fallthru
          _
        // Predicated region
        $region113: #{_lambda_.1} parent=71 // pred_check
          %p4876 = pneg %p400
        $region114: #{_lambda_.1} parent=71 // pred_check_branch
          %4878 = sbr.rel (%p4876) target = $region116
        $region115: #{_lambda_.1} parent=71 // pred_region
          %s4880 = ssub.s32 128, 128
          %4881 = vsyncadd %s4843, %s4880
          %s4882 = smul.addr %s42, 128
          %s4883 = scalar_lea.hbm %s15, %s4882
          %s4885 = sshll.u32 %s4846, 4
          %s4886 = int_to_ptr.vmem [resolvable:$true] %s4885
          %4888 = dma.vmem_to_hbm [thread:$0]  %s4886, 128, %s4883, %s4843
        $region116: #{_lambda_.1} parent=71 // pred_fallthru
          _
      $region72: #{_lambda_.1} parent=5 // pred_fallthru
        _
      %p4889 = scmp.le.s32.totalorder 2, %s37
      // Predicated region
      $region117: #{_lambda_.1} parent=5 // pred_check
        %p4890 = pneg %p4889
      $region118: #{_lambda_.1} parent=5 // pred_check_branch
        %4892 = sbr.rel (%p4890) target = $region120
      $region119: #{_lambda_.1} parent=5 // pred_region
        %s4893 = ssub.s32 %s37, 2
        // Predicated region
        $region121: #{_lambda_.1} parent=119 // pred_check
          %p4894 = pneg %p354
        $region122: #{_lambda_.1} parent=119 // pred_check_branch
          %4896 = sbr.rel (%p4894) target = $region124
        $region123: #{_lambda_.1} parent=119 // pred_region
          %s4897 = sand.u32 %s339, 1
          %s4898 = scalar_lea.sflag [#allocation4], %s4897
          %s4899 = sand.u32 %s339, 1
          %s4900 = smul.addr %s4899, 8
          %s4901 = scalar_lea.vmem [#allocation16], %s4900
          %4902 = dma.done %s4898, 128
        $region124: #{_lambda_.1} parent=119 // pred_fallthru
          _
        // Predicated region
        $region125: #{_lambda_.1} parent=119 // pred_check
          %p4903 = pneg %p380
        $region126: #{_lambda_.1} parent=119 // pred_check_branch
          %4905 = sbr.rel (%p4903) target = $region128
        $region127: #{_lambda_.1} parent=119 // pred_region
          %s4906 = sand.u32 %s43, 1
          %s4907 = scalar_lea.sflag [#allocation18], %s4906
          %s4908 = sand.u32 %s365, 1
          %s4909 = smul.addr %s4908, 16
          %s4910 = scalar_lea.vmem [#allocation17], %s4909
          %4911 = dma.done %s4907, 256
        $region128: #{_lambda_.1} parent=119 // pred_fallthru
          _
        // Predicated region
        $region129: #{_lambda_.1} parent=119 // pred_check
          %p4912 = pneg %p406
        $region130: #{_lambda_.1} parent=119 // pred_check_branch
          %4914 = sbr.rel (%p4912) target = $region132
        $region131: #{_lambda_.1} parent=119 // pred_region
          %s4915 = sand.u32 %s43, 1
          %s4916 = scalar_lea.sflag [#allocation18], %s4915
          %s4917 = sand.u32 %s391, 1
          %s4918 = smul.addr %s4917, 8
          %s4919 = scalar_lea.vmem [#allocation19], %s4918
          %4920 = dma.done %s4916, 128
        $region132: #{_lambda_.1} parent=119 // pred_fallthru
          _
      $region120: #{_lambda_.1} parent=5 // pred_fallthru
        _
    $region6: #{_lambda_.1} parent=1 // loop_footer
      %s41 = sadd.s32 1, %s37
    $region7: #{_lambda_.1} parent=1 // loop_footer_branch
      %36 = sbr.rel target = $region3
    $region8: #{_lambda_.1} parent=1 // loop_exit
      _
    %4921 = vsyncpa [#allocation3], 1
    %s4922 = scalar_lea.sflag [#allocation3], 1
    %4923 = vsyncpa %s4922, 1
    %4924 = vsyncpa [#allocation7], 1
    %s4925 = scalar_lea.sflag [#allocation7], 1
    %4926 = vsyncpa %s4925, 1
    %4927 = vsyncpa [#allocation10], 1
    %4928 = vsyncpa [#allocation13], 1
    %4929 = vsyncpa [#allocation4], 1
    %s4930 = scalar_lea.sflag [#allocation4], 1
    %4931 = vsyncpa %s4930, 1
    %4932 = vsyncpa [#allocation18], 1
    %s4933 = scalar_lea.sflag [#allocation18], 1
    %4934 = vsyncpa %s4933, 1
    %4935 = vsyncpa [#allocation5], 1
    %s4936 = scalar_lea.sflag [#allocation5], 1
    %4937 = vsyncpa %s4936, 1

</llo_original>
